<compile_context>
chip_gen: v6e
topology: v6e:2x2x1
jax: 0.10.0
libtpu: 0.0.40
codegen_flags: <defaults>
</compile_context>

<pallas_src>
import math
import functools

import jax
import jax.numpy as jnp
from jax import lax
from jax.experimental import pallas as pl
from jax.experimental.pallas import tpu as pltpu

BN_EPS = 1e-5  # nn.BatchNorm2d default eps


# ------------------------- fused Pallas kernel -------------------------

def _residual_block_kernel(xp_ref, w1_ref, w2_ref, bn_ref,
                           o_ref, col_ref, pad_ref, *, B, H, W, C):
    f32 = jnp.float32
    M = B * H * W
    inv_m = 1.0 / M

    def im2col(src_ref):
        # One relayout pass over the zero-padded VMEM tile: the 9 shifted taps are
        # written side-by-side in the lane dim (tap-major, channel-minor) so the
        # whole conv becomes a single K = 9*C MXU matmul.
        for t in range(9):
            i, j = divmod(t, 3)
            col_ref[:, :, :, t * C:(t + 1) * C] = src_ref[:, i:i + H, j:j + W, :]
        # Collapse leading dims only (lane dim unchanged) -> layout-free reshape.
        return col_ref[...].reshape(M, 9 * C)

    def bn_scale_shift(a, gamma, beta):
        # training-mode BatchNorm2d: one-pass batch stats (biased variance),
        # folded affine -> single multiply-add application.
        s = jnp.sum(a, axis=0, keepdims=True)
        ss = jnp.sum(a * a, axis=0, keepdims=True)
        mean = s * inv_m
        var = ss * inv_m - mean * mean
        scale = lax.rsqrt(var + BN_EPS) * gamma
        shift = beta - mean * scale
        return scale, shift

    g1, be1 = bn_ref[0:1, :], bn_ref[1:2, :]
    g2, be2 = bn_ref[2:3, :], bn_ref[3:4, :]

    # ---- conv1 (single K=9C matmul, f32 accumulation) -> BN1 -> ReLU ----
    a1 = jnp.dot(im2col(xp_ref), w1_ref[...], preferred_element_type=f32)
    sc1, sh1 = bn_scale_shift(a1, g1, be1)
    h = jnp.maximum(a1 * sc1 + sh1, 0.0)

    # ---- re-pad the intermediate in VMEM: zero ONLY the 1-pixel halo ----
    zrow = jnp.zeros((B, 1, W + 2, C), f32)
    zcol = jnp.zeros((B, H + 2, 1, C), f32)
    pad_ref[:, 0:1, :, :] = zrow
    pad_ref[:, H + 1:H + 2, :, :] = zrow
    pad_ref[:, :, 0:1, :] = zcol
    pad_ref[:, :, W + 1:W + 2, :] = zcol
    pad_ref[:, 1:H + 1, 1:W + 1, :] = h.reshape(B, H, W, C)  # interior written once

    # ---- conv2 (single matmul, reuses the im2col scratch) -> BN2 ----
    a2 = jnp.dot(im2col(pad_ref), w2_ref[...], preferred_element_type=f32)
    sc2, sh2 = bn_scale_shift(a2, g2, be2)

    # ---- residual add + final ReLU ----
    x_res = xp_ref[:, 1:H + 1, 1:W + 1, :].reshape(M, C)
    o_ref[...] = jnp.maximum(a2 * sc2 + sh2 + x_res, 0.0).astype(o_ref.dtype)


# ------------------------- wrapper -------------------------

def _pad_up(n, m):
    return ((n + m - 1) // m) * m


def _padded_bytes(shape, itemsize=4):
    # (8, 128) tiling on the last two dims, leading dims multiply.
    lead = 1
    for d in shape[:-2]:
        lead *= d
    return lead * _pad_up(shape[-2], 8) * _pad_up(shape[-1], 128) * itemsize


def _vmem_budget(B, C, H, W):
    M = B * H * W
    bufs = [
        (B, H + 2, W + 2, C),    # padded input
        (9 * C, C), (9 * C, C),  # conv weights
        (4, C),                  # packed BN params
        (M, C),                  # output
        (B, H, W, 9 * C),        # im2col scratch
        (B, H + 2, W + 2, C),    # re-padded intermediate scratch
    ]
    footprint = sum(_padded_bytes(s) for s in bufs)
    # 4x headroom for compiler temporaries; floor 16 MiB, stay below v7x's 64 MiB.
    return int(min(48 * 1024 * 1024, max(16 * 1024 * 1024, 4 * footprint)))


def residual_block(params, x):
    B, C, H, W = x.shape
    M = B * H * W

    # NCHW -> NHWC, zero-pad spatially by 1 (single padded tensor into the kernel).
    x_nhwc = jnp.transpose(x, (0, 2, 3, 1))
    xp = jnp.pad(x_nhwc, ((0, 0), (1, 1), (1, 1), (0, 0)))

    # HWIO conv weights [3,3,Cin,Cout] -> [9*Cin, Cout] (tap-major, channel-minor:
    # matches the im2col column order built in-kernel).
    w1 = params["w1"].reshape(9 * C, C)
    w2 = params["w2"].reshape(9 * C, C)

    # Conv biases are NOT passed: per-channel bias right before training-mode BN
    # cancels exactly.  Pack the 4 remaining per-channel vectors into one array.
    bn_pack = jnp.stack([params["g1"], params["be1"],
                         params["g2"], params["be2"]])  # (4, C)

    out_mc = pl.pallas_call(
        functools.partial(_residual_block_kernel, B=B, H=H, W=W, C=C),
        out_shape=jax.ShapeDtypeStruct((M, C), x.dtype),
        scratch_shapes=[
            pltpu.VMEM((B, H, W, 9 * C), jnp.float32),      # im2col (shared by both convs)
            pltpu.VMEM((B, H + 2, W + 2, C), jnp.float32),  # padded intermediate
        ],
        compiler_params=pltpu.CompilerParams(
            vmem_limit_bytes=_vmem_budget(B, C, H, W)),
    )(xp, w1, w2, bn_pack)

    return jnp.transpose(out_mc.reshape(B, H, W, C), (0, 3, 1, 2))


# ------------------------- parameters -------------------------

def init_params(key, C):
    k1, k2, k3, k4 = jax.random.split(key, 4)

    def conv_w(k):
        return jax.random.normal(k, (3, 3, C, C), jnp.float32) / math.sqrt(9 * C)

    return {
        "w1": conv_w(k1),
        "b1": jax.random.normal(k2, (C,), jnp.float32) * 0.1,
        "w2": conv_w(k3),
        "b2": jax.random.normal(k4, (C,), jnp.float32) * 0.1,
        # BatchNorm2d defaults: weight=1, bias=0 (training mode -> batch stats)
        "g1": jnp.ones((C,), jnp.float32), "be1": jnp.zeros((C,), jnp.float32),
        "g2": jnp.ones((C,), jnp.float32), "be2": jnp.zeros((C,), jnp.float32),
    }


# ------------------------- pure-JAX reference -------------------------

def reference(params, x):
    hp = lax.Precision.HIGHEST
    xn = jnp.transpose(x, (0, 2, 3, 1)).astype(jnp.float32)

    def conv(a, w, b):
        y = lax.conv_general_dilated(
            a, w, window_strides=(1, 1), padding=((1, 1), (1, 1)),
            dimension_numbers=("NHWC", "HWIO", "NHWC"), precision=hp)
        return y + b[None, None, None, :]

    def bn(y, g, be):
        mu = jnp.mean(y, axis=(0, 1, 2), keepdims=True)
        var = jnp.mean((y - mu) ** 2, axis=(0, 1, 2), keepdims=True)
        return ((y - mu) / jnp.sqrt(var + BN_EPS)
                * g[None, None, None, :] + be[None, None, None, :])

    h = jax.nn.relu(bn(conv(xn, params["w1"], params["b1"]),
                       params["g1"], params["be1"]))
    h2 = bn(conv(h, params["w2"], params["b2"]), params["g2"], params["be2"])
    out = jax.nn.relu(h2 + xn)
    return jnp.transpose(out, (0, 3, 1, 2))


if __name__ == "__main__":
    B, C, H, W = 2, 32, 16, 16
    key = jax.random.PRNGKey(0)
    kx, kp = jax.random.split(key)
    x = jax.random.normal(kx, (B, C, H, W), jnp.float32)
    params = init_params(kp, C)

    out = jax.block_until_ready(residual_block(params, x))
    assert out.shape == (B, C, H, W), out.shape

    ref = jax.block_until_ready(reference(params, x))
    assert bool(jnp.all(jnp.isfinite(out)))
    err = float(jnp.max(jnp.abs(out - ref)))
    assert bool(jnp.allclose(out, ref, atol=1e-2, rtol=1e-2)), err

    print("KERNEL_OK")
</pallas_src>

<mosaic_0001>
module attributes {stable_mosaic.version = 11 : i64} {
  func.func @_residual_block_kernel(%arg0: memref<2x18x18x32xf32, #tpu.memory_space<vmem>>, %arg1: memref<288x32xf32, #tpu.memory_space<vmem>>, %arg2: memref<288x32xf32, #tpu.memory_space<vmem>>, %arg3: memref<4x32xf32, #tpu.memory_space<vmem>>, %arg4: memref<512x32xf32, #tpu.memory_space<vmem>>, %arg5: memref<2x16x16x288xf32, #tpu.memory_space<vmem>>, %arg6: memref<2x18x18x32xf32, #tpu.memory_space<vmem>>) attributes {dimension_semantics = [], scalar_prefetch = 0 : i64, scratch_operands = 2 : i64, tpu.core_type = #tpu.core_type<tc>} {
    %c0 = arith.constant 0 : index
    %c0_0 = arith.constant 0 : index
    %0 = vector.load %arg3[%c0, %c0_0] : memref<4x32xf32, #tpu.memory_space<vmem>>, vector<1x32xf32>
    %c1 = arith.constant 1 : index
    %c0_1 = arith.constant 0 : index
    %1 = vector.load %arg3[%c1, %c0_1] : memref<4x32xf32, #tpu.memory_space<vmem>>, vector<1x32xf32>
    %c2 = arith.constant 2 : index
    %c0_2 = arith.constant 0 : index
    %2 = vector.load %arg3[%c2, %c0_2] : memref<4x32xf32, #tpu.memory_space<vmem>>, vector<1x32xf32>
    %c3 = arith.constant 3 : index
    %c0_3 = arith.constant 0 : index
    %3 = vector.load %arg3[%c3, %c0_3] : memref<4x32xf32, #tpu.memory_space<vmem>>, vector<1x32xf32>
    %c0_4 = arith.constant 0 : index
    %c0_5 = arith.constant 0 : index
    %c0_6 = arith.constant 0 : index
    %c0_7 = arith.constant 0 : index
    %4 = vector.load %arg0[%c0_4, %c0_5, %c0_6, %c0_7] : memref<2x18x18x32xf32, #tpu.memory_space<vmem>>, vector<2x16x16x32xf32>
    %c0_8 = arith.constant 0 : index
    %c0_9 = arith.constant 0 : index
    %c0_10 = arith.constant 0 : index
    %c0_11 = arith.constant 0 : index
    %5 = vector.load %arg5[%c0_8, %c0_9, %c0_10, %c0_11] : memref<2x16x16x288xf32, #tpu.memory_space<vmem>>, vector<2x16x16x32xf32>
    tpu.vector_store %arg5[%c0_8, %c0_9, %c0_10, %c0_11], %4 {strides = array<i32>} : memref<2x16x16x288xf32, #tpu.memory_space<vmem>>, vector<2x16x16x32xf32>,
    %c0_12 = arith.constant 0 : index
    %c0_13 = arith.constant 0 : index
    %c1_14 = arith.constant 1 : index
    %c0_15 = arith.constant 0 : index
    %6 = vector.load %arg0[%c0_12, %c0_13, %c1_14, %c0_15] : memref<2x18x18x32xf32, #tpu.memory_space<vmem>>, vector<2x16x16x32xf32>
    %c0_16 = arith.constant 0 : index
    %c0_17 = arith.constant 0 : index
    %c0_18 = arith.constant 0 : index
    %c32 = arith.constant 32 : index
    %7 = vector.load %arg5[%c0_16, %c0_17, %c0_18, %c32] : memref<2x16x16x288xf32, #tpu.memory_space<vmem>>, vector<2x16x16x32xf32>
    tpu.vector_store %arg5[%c0_16, %c0_17, %c0_18, %c32], %6 {strides = array<i32>} : memref<2x16x16x288xf32, #tpu.memory_space<vmem>>, vector<2x16x16x32xf32>,
    %c0_19 = arith.constant 0 : index
    %c0_20 = arith.constant 0 : index
    %c2_21 = arith.constant 2 : index
    %c0_22 = arith.constant 0 : index
    %8 = vector.load %arg0[%c0_19, %c0_20, %c2_21, %c0_22] : memref<2x18x18x32xf32, #tpu.memory_space<vmem>>, vector<2x16x16x32xf32>
    %c0_23 = arith.constant 0 : index
    %c0_24 = arith.constant 0 : index
    %c0_25 = arith.constant 0 : index
    %c64 = arith.constant 64 : index
    %9 = vector.load %arg5[%c0_23, %c0_24, %c0_25, %c64] : memref<2x16x16x288xf32, #tpu.memory_space<vmem>>, vector<2x16x16x32xf32>
    tpu.vector_store %arg5[%c0_23, %c0_24, %c0_25, %c64], %8 {strides = array<i32>} : memref<2x16x16x288xf32, #tpu.memory_space<vmem>>, vector<2x16x16x32xf32>,
    %c0_26 = arith.constant 0 : index
    %c1_27 = arith.constant 1 : index
    %c0_28 = arith.constant 0 : index
    %c0_29 = arith.constant 0 : index
    %10 = vector.load %arg0[%c0_26, %c1_27, %c0_28, %c0_29] : memref<2x18x18x32xf32, #tpu.memory_space<vmem>>, vector<2x16x16x32xf32>
    %c0_30 = arith.constant 0 : index
    %c0_31 = arith.constant 0 : index
    %c0_32 = arith.constant 0 : index
    %c96 = arith.constant 96 : index
    %11 = vector.load %arg5[%c0_30, %c0_31, %c0_32, %c96] : memref<2x16x16x288xf32, #tpu.memory_space<vmem>>, vector<2x16x16x32xf32>
    tpu.vector_store %arg5[%c0_30, %c0_31, %c0_32, %c96], %10 {strides = array<i32>} : memref<2x16x16x288xf32, #tpu.memory_space<vmem>>, vector<2x16x16x32xf32>,
    %c0_33 = arith.constant 0 : index
    %c1_34 = arith.constant 1 : index
    %c1_35 = arith.constant 1 : index
    %c0_36 = arith.constant 0 : index
    %12 = vector.load %arg0[%c0_33, %c1_34, %c1_35, %c0_36] : memref<2x18x18x32xf32, #tpu.memory_space<vmem>>, vector<2x16x16x32xf32>
    %c0_37 = arith.constant 0 : index
    %c0_38 = arith.constant 0 : index
    %c0_39 = arith.constant 0 : index
    %c128 = arith.constant 128 : index
    %13 = vector.load %arg5[%c0_37, %c0_38, %c0_39, %c128] : memref<2x16x16x288xf32, #tpu.memory_space<vmem>>, vector<2x16x16x32xf32>
    tpu.vector_store %arg5[%c0_37, %c0_38, %c0_39, %c128], %12 {strides = array<i32>} : memref<2x16x16x288xf32, #tpu.memory_space<vmem>>, vector<2x16x16x32xf32>,
    %c0_40 = arith.constant 0 : index
    %c1_41 = arith.constant 1 : index
    %c2_42 = arith.constant 2 : index
    %c0_43 = arith.constant 0 : index
    %14 = vector.load %arg0[%c0_40, %c1_41, %c2_42, %c0_43] : memref<2x18x18x32xf32, #tpu.memory_space<vmem>>, vector<2x16x16x32xf32>
    %c0_44 = arith.constant 0 : index
    %c0_45 = arith.constant 0 : index
    %c0_46 = arith.constant 0 : index
    %c160 = arith.constant 160 : index
    %15 = vector.load %arg5[%c0_44, %c0_45, %c0_46, %c160] : memref<2x16x16x288xf32, #tpu.memory_space<vmem>>, vector<2x16x16x32xf32>
    tpu.vector_store %arg5[%c0_44, %c0_45, %c0_46, %c160], %14 {strides = array<i32>} : memref<2x16x16x288xf32, #tpu.memory_space<vmem>>, vector<2x16x16x32xf32>,
    %c0_47 = arith.constant 0 : index
    %c2_48 = arith.constant 2 : index
    %c0_49 = arith.constant 0 : index
    %c0_50 = arith.constant 0 : index
    %16 = vector.load %arg0[%c0_47, %c2_48, %c0_49, %c0_50] : memref<2x18x18x32xf32, #tpu.memory_space<vmem>>, vector<2x16x16x32xf32>
    %c0_51 = arith.constant 0 : index
    %c0_52 = arith.constant 0 : index
    %c0_53 = arith.constant 0 : index
    %c192 = arith.constant 192 : index
    %17 = vector.load %arg5[%c0_51, %c0_52, %c0_53, %c192] : memref<2x16x16x288xf32, #tpu.memory_space<vmem>>, vector<2x16x16x32xf32>
    tpu.vector_store %arg5[%c0_51, %c0_52, %c0_53, %c192], %16 {strides = array<i32>} : memref<2x16x16x288xf32, #tpu.memory_space<vmem>>, vector<2x16x16x32xf32>,
    %c0_54 = arith.constant 0 : index
    %c2_55 = arith.constant 2 : index
    %c1_56 = arith.constant 1 : index
    %c0_57 = arith.constant 0 : index
    %18 = vector.load %arg0[%c0_54, %c2_55, %c1_56, %c0_57] : memref<2x18x18x32xf32, #tpu.memory_space<vmem>>, vector<2x16x16x32xf32>
    %c0_58 = arith.constant 0 : index
    %c0_59 = arith.constant 0 : index
    %c0_60 = arith.constant 0 : index
    %c224 = arith.constant 224 : index
    %19 = vector.load %arg5[%c0_58, %c0_59, %c0_60, %c224] : memref<2x16x16x288xf32, #tpu.memory_space<vmem>>, vector<2x16x16x32xf32>
    tpu.vector_store %arg5[%c0_58, %c0_59, %c0_60, %c224], %18 {strides = array<i32>} : memref<2x16x16x288xf32, #tpu.memory_space<vmem>>, vector<2x16x16x32xf32>,
    %c0_61 = arith.constant 0 : index
    %c2_62 = arith.constant 2 : index
    %c2_63 = arith.constant 2 : index
    %c0_64 = arith.constant 0 : index
    %20 = vector.load %arg0[%c0_61, %c2_62, %c2_63, %c0_64] : memref<2x18x18x32xf32, #tpu.memory_space<vmem>>, vector<2x16x16x32xf32>
    %c0_65 = arith.constant 0 : index
    %c0_66 = arith.constant 0 : index
    %c0_67 = arith.constant 0 : index
    %c256 = arith.constant 256 : index
    %21 = vector.load %arg5[%c0_65, %c0_66, %c0_67, %c256] : memref<2x16x16x288xf32, #tpu.memory_space<vmem>>, vector<2x16x16x32xf32>
    tpu.vector_store %arg5[%c0_65, %c0_66, %c0_67, %c256], %20 {strides = array<i32>} : memref<2x16x16x288xf32, #tpu.memory_space<vmem>>, vector<2x16x16x32xf32>,
    %c0_68 = arith.constant 0 : index
    %c0_69 = arith.constant 0 : index
    %c0_70 = arith.constant 0 : index
    %c0_71 = arith.constant 0 : index
    %22 = vector.load %arg5[%c0_68, %c0_69, %c0_70, %c0_71] : memref<2x16x16x288xf32, #tpu.memory_space<vmem>>, vector<2x16x16x288xf32>
    %23 = vector.shape_cast %22 : vector<2x16x16x288xf32> to vector<512x288xf32>
    %c0_72 = arith.constant 0 : index
    %c0_73 = arith.constant 0 : index
    %24 = vector.load %arg1[%c0_72, %c0_73] : memref<288x32xf32, #tpu.memory_space<vmem>>, vector<288x32xf32>
    %cst = arith.constant dense<0.000000e+00> : vector<512x32xf32>
    %25 = tpu.matmul %23, %24, %cst {dimension_numbers = #tpu.dot_dimension_numbers<[1], [0], [0], [1], [0, 0, 1, 1], [], []>} : vector<512x288xf32>, vector<288x32xf32>, vector<512x32xf32> -> vector<512x32xf32>
    %cst_74 = arith.constant dense<0.000000e+00> : vector<32xf32>
    %26 = vector.multi_reduction <add>, %25, %cst_74 [0] : vector<512x32xf32> to vector<32xf32>
    %27 = vector.shape_cast %26 : vector<32xf32> to vector<1x32xf32>
    %28 = arith.mulf %25, %25 : vector<512x32xf32>
    %cst_75 = arith.constant dense<0.000000e+00> : vector<32xf32>
    %29 = vector.multi_reduction <add>, %28, %cst_75 [0] : vector<512x32xf32> to vector<32xf32>
    %30 = vector.shape_cast %29 : vector<32xf32> to vector<1x32xf32>
    %cst_76 = arith.constant 0.001953125 : f32
    %31 = vector.broadcast %cst_76 : f32 to vector<1x32xf32>
    %32 = arith.mulf %27, %31 : vector<1x32xf32>
    %cst_77 = arith.constant 0.001953125 : f32
    %33 = vector.broadcast %cst_77 : f32 to vector<1x32xf32>
    %34 = arith.mulf %30, %33 : vector<1x32xf32>
    %35 = arith.mulf %32, %32 : vector<1x32xf32>
    %36 = arith.subf %34, %35 : vector<1x32xf32>
    %cst_78 = arith.constant 9.99999974E-6 : f32
    %37 = vector.broadcast %cst_78 : f32 to vector<1x32xf32>
    %38 = arith.addf %36, %37 : vector<1x32xf32>
    %39 = math.rsqrt %38 : vector<1x32xf32>
    %40 = arith.mulf %39, %0 : vector<1x32xf32>
    %41 = arith.mulf %32, %40 : vector<1x32xf32>
    %42 = arith.subf %1, %41 : vector<1x32xf32>
    %43 = vector.broadcast %40 : vector<1x32xf32> to vector<512x32xf32>
    %44 = arith.mulf %25, %43 : vector<512x32xf32>
    %45 = vector.broadcast %42 : vector<1x32xf32> to vector<512x32xf32>
    %46 = arith.addf %44, %45 : vector<512x32xf32>
    %cst_79 = arith.constant 0.000000e+00 : f32
    %47 = vector.broadcast %cst_79 : f32 to vector<512x32xf32>
    %48 = arith.maximumf %46, %47 : vector<512x32xf32>
    %cst_80 = arith.constant 0.000000e+00 : f32
    %49 = vector.broadcast %cst_80 : f32 to vector<2x1x18x32xf32>
    %cst_81 = arith.constant 0.000000e+00 : f32
    %50 = vector.broadcast %cst_81 : f32 to vector<2x18x1x32xf32>
    %c0_82 = arith.constant 0 : index
    %c0_83 = arith.constant 0 : index
    %c0_84 = arith.constant 0 : index
    %c0_85 = arith.constant 0 : index
    %51 = vector.load %arg6[%c0_82, %c0_83, %c0_84, %c0_85] : memref<2x18x18x32xf32, #tpu.memory_space<vmem>>, vector<2x1x18x32xf32>
    tpu.vector_store %arg6[%c0_82, %c0_83, %c0_84, %c0_85], %49 {strides = array<i32>} : memref<2x18x18x32xf32, #tpu.memory_space<vmem>>, vector<2x1x18x32xf32>,
    %c0_86 = arith.constant 0 : index
    %c17 = arith.constant 17 : index
    %c0_87 = arith.constant 0 : index
    %c0_88 = arith.constant 0 : index
    %52 = vector.load %arg6[%c0_86, %c17, %c0_87, %c0_88] : memref<2x18x18x32xf32, #tpu.memory_space<vmem>>, vector<2x1x18x32xf32>
    tpu.vector_store %arg6[%c0_86, %c17, %c0_87, %c0_88], %49 {strides = array<i32>} : memref<2x18x18x32xf32, #tpu.memory_space<vmem>>, vector<2x1x18x32xf32>,
    %c0_89 = arith.constant 0 : index
    %c0_90 = arith.constant 0 : index
    %c0_91 = arith.constant 0 : index
    %c0_92 = arith.constant 0 : index
    %53 = vector.load %arg6[%c0_89, %c0_90, %c0_91, %c0_92] : memref<2x18x18x32xf32, #tpu.memory_space<vmem>>, vector<2x18x1x32xf32>
    tpu.vector_store %arg6[%c0_89, %c0_90, %c0_91, %c0_92], %50 {strides = array<i32>} : memref<2x18x18x32xf32, #tpu.memory_space<vmem>>, vector<2x18x1x32xf32>,
    %c0_93 = arith.constant 0 : index
    %c0_94 = arith.constant 0 : index
    %c17_95 = arith.constant 17 : index
    %c0_96 = arith.constant 0 : index
    %54 = vector.load %arg6[%c0_93, %c0_94, %c17_95, %c0_96] : memref<2x18x18x32xf32, #tpu.memory_space<vmem>>, vector<2x18x1x32xf32>
    tpu.vector_store %arg6[%c0_93, %c0_94, %c17_95, %c0_96], %50 {strides = array<i32>} : memref<2x18x18x32xf32, #tpu.memory_space<vmem>>, vector<2x18x1x32xf32>,
    %55 = vector.shape_cast %48 : vector<512x32xf32> to vector<2x16x16x32xf32>
    %c0_97 = arith.constant 0 : index
    %c1_98 = arith.constant 1 : index
    %c1_99 = arith.constant 1 : index
    %c0_100 = arith.constant 0 : index
    %56 = vector.load %arg6[%c0_97, %c1_98, %c1_99, %c0_100] : memref<2x18x18x32xf32, #tpu.memory_space<vmem>>, vector<2x16x16x32xf32>
    tpu.vector_store %arg6[%c0_97, %c1_98, %c1_99, %c0_100], %55 {strides = array<i32>} : memref<2x18x18x32xf32, #tpu.memory_space<vmem>>, vector<2x16x16x32xf32>,
    %c0_101 = arith.constant 0 : index
    %c0_102 = arith.constant 0 : index
    %c0_103 = arith.constant 0 : index
    %c0_104 = arith.constant 0 : index
    %57 = vector.load %arg6[%c0_101, %c0_102, %c0_103, %c0_104] : memref<2x18x18x32xf32, #tpu.memory_space<vmem>>, vector<2x16x16x32xf32>
    %c0_105 = arith.constant 0 : index
    %c0_106 = arith.constant 0 : index
    %c0_107 = arith.constant 0 : index
    %c0_108 = arith.constant 0 : index
    %58 = vector.load %arg5[%c0_105, %c0_106, %c0_107, %c0_108] : memref<2x16x16x288xf32, #tpu.memory_space<vmem>>, vector<2x16x16x32xf32>
    tpu.vector_store %arg5[%c0_105, %c0_106, %c0_107, %c0_108], %57 {strides = array<i32>} : memref<2x16x16x288xf32, #tpu.memory_space<vmem>>, vector<2x16x16x32xf32>,
    %c0_109 = arith.constant 0 : index
    %c0_110 = arith.constant 0 : index
    %c1_111 = arith.constant 1 : index
    %c0_112 = arith.constant 0 : index
    %59 = vector.load %arg6[%c0_109, %c0_110, %c1_111, %c0_112] : memref<2x18x18x32xf32, #tpu.memory_space<vmem>>, vector<2x16x16x32xf32>
    %c0_113 = arith.constant 0 : index
    %c0_114 = arith.constant 0 : index
    %c0_115 = arith.constant 0 : index
    %c32_116 = arith.constant 32 : index
    %60 = vector.load %arg5[%c0_113, %c0_114, %c0_115, %c32_116] : memref<2x16x16x288xf32, #tpu.memory_space<vmem>>, vector<2x16x16x32xf32>
    tpu.vector_store %arg5[%c0_113, %c0_114, %c0_115, %c32_116], %59 {strides = array<i32>} : memref<2x16x16x288xf32, #tpu.memory_space<vmem>>, vector<2x16x16x32xf32>,
    %c0_117 = arith.constant 0 : index
    %c0_118 = arith.constant 0 : index
    %c2_119 = arith.constant 2 : index
    %c0_120 = arith.constant 0 : index
    %61 = vector.load %arg6[%c0_117, %c0_118, %c2_119, %c0_120] : memref<2x18x18x32xf32, #tpu.memory_space<vmem>>, vector<2x16x16x32xf32>
    %c0_121 = arith.constant 0 : index
    %c0_122 = arith.constant 0 : index
    %c0_123 = arith.constant 0 : index
    %c64_124 = arith.constant 64 : index
    %62 = vector.load %arg5[%c0_121, %c0_122, %c0_123, %c64_124] : memref<2x16x16x288xf32, #tpu.memory_space<vmem>>, vector<2x16x16x32xf32>
    tpu.vector_store %arg5[%c0_121, %c0_122, %c0_123, %c64_124], %61 {strides = array<i32>} : memref<2x16x16x288xf32, #tpu.memory_space<vmem>>, vector<2x16x16x32xf32>,
    %c0_125 = arith.constant 0 : index
    %c1_126 = arith.constant 1 : index
    %c0_127 = arith.constant 0 : index
    %c0_128 = arith.constant 0 : index
    %63 = vector.load %arg6[%c0_125, %c1_126, %c0_127, %c0_128] : memref<2x18x18x32xf32, #tpu.memory_space<vmem>>, vector<2x16x16x32xf32>
    %c0_129 = arith.constant 0 : index
    %c0_130 = arith.constant 0 : index
    %c0_131 = arith.constant 0 : index
    %c96_132 = arith.constant 96 : index
    %64 = vector.load %arg5[%c0_129, %c0_130, %c0_131, %c96_132] : memref<2x16x16x288xf32, #tpu.memory_space<vmem>>, vector<2x16x16x32xf32>
    tpu.vector_store %arg5[%c0_129, %c0_130, %c0_131, %c96_132], %63 {strides = array<i32>} : memref<2x16x16x288xf32, #tpu.memory_space<vmem>>, vector<2x16x16x32xf32>,
    %c0_133 = arith.constant 0 : index
    %c1_134 = arith.constant 1 : index
    %c1_135 = arith.constant 1 : index
    %c0_136 = arith.constant 0 : index
    %65 = vector.load %arg6[%c0_133, %c1_134, %c1_135, %c0_136] : memref<2x18x18x32xf32, #tpu.memory_space<vmem>>, vector<2x16x16x32xf32>
    %c0_137 = arith.constant 0 : index
    %c0_138 = arith.constant 0 : index
    %c0_139 = arith.constant 0 : index
    %c128_140 = arith.constant 128 : index
    %66 = vector.load %arg5[%c0_137, %c0_138, %c0_139, %c128_140] : memref<2x16x16x288xf32, #tpu.memory_space<vmem>>, vector<2x16x16x32xf32>
    tpu.vector_store %arg5[%c0_137, %c0_138, %c0_139, %c128_140], %65 {strides = array<i32>} : memref<2x16x16x288xf32, #tpu.memory_space<vmem>>, vector<2x16x16x32xf32>,
    %c0_141 = arith.constant 0 : index
    %c1_142 = arith.constant 1 : index
    %c2_143 = arith.constant 2 : index
    %c0_144 = arith.constant 0 : index
    %67 = vector.load %arg6[%c0_141, %c1_142, %c2_143, %c0_144] : memref<2x18x18x32xf32, #tpu.memory_space<vmem>>, vector<2x16x16x32xf32>
    %c0_145 = arith.constant 0 : index
    %c0_146 = arith.constant 0 : index
    %c0_147 = arith.constant 0 : index
    %c160_148 = arith.constant 160 : index
    %68 = vector.load %arg5[%c0_145, %c0_146, %c0_147, %c160_148] : memref<2x16x16x288xf32, #tpu.memory_space<vmem>>, vector<2x16x16x32xf32>
    tpu.vector_store %arg5[%c0_145, %c0_146, %c0_147, %c160_148], %67 {strides = array<i32>} : memref<2x16x16x288xf32, #tpu.memory_space<vmem>>, vector<2x16x16x32xf32>,
    %c0_149 = arith.constant 0 : index
    %c2_150 = arith.constant 2 : index
    %c0_151 = arith.constant 0 : index
    %c0_152 = arith.constant 0 : index
    %69 = vector.load %arg6[%c0_149, %c2_150, %c0_151, %c0_152] : memref<2x18x18x32xf32, #tpu.memory_space<vmem>>, vector<2x16x16x32xf32>
    %c0_153 = arith.constant 0 : index
    %c0_154 = arith.constant 0 : index
    %c0_155 = arith.constant 0 : index
    %c192_156 = arith.constant 192 : index
    %70 = vector.load %arg5[%c0_153, %c0_154, %c0_155, %c192_156] : memref<2x16x16x288xf32, #tpu.memory_space<vmem>>, vector<2x16x16x32xf32>
    tpu.vector_store %arg5[%c0_153, %c0_154, %c0_155, %c192_156], %69 {strides = array<i32>} : memref<2x16x16x288xf32, #tpu.memory_space<vmem>>, vector<2x16x16x32xf32>,
    %c0_157 = arith.constant 0 : index
    %c2_158 = arith.constant 2 : index
    %c1_159 = arith.constant 1 : index
    %c0_160 = arith.constant 0 : index
    %71 = vector.load %arg6[%c0_157, %c2_158, %c1_159, %c0_160] : memref<2x18x18x32xf32, #tpu.memory_space<vmem>>, vector<2x16x16x32xf32>
    %c0_161 = arith.constant 0 : index
    %c0_162 = arith.constant 0 : index
    %c0_163 = arith.constant 0 : index
    %c224_164 = arith.constant 224 : index
    %72 = vector.load %arg5[%c0_161, %c0_162, %c0_163, %c224_164] : memref<2x16x16x288xf32, #tpu.memory_space<vmem>>, vector<2x16x16x32xf32>
    tpu.vector_store %arg5[%c0_161, %c0_162, %c0_163, %c224_164], %71 {strides = array<i32>} : memref<2x16x16x288xf32, #tpu.memory_space<vmem>>, vector<2x16x16x32xf32>,
    %c0_165 = arith.constant 0 : index
    %c2_166 = arith.constant 2 : index
    %c2_167 = arith.constant 2 : index
    %c0_168 = arith.constant 0 : index
    %73 = vector.load %arg6[%c0_165, %c2_166, %c2_167, %c0_168] : memref<2x18x18x32xf32, #tpu.memory_space<vmem>>, vector<2x16x16x32xf32>
    %c0_169 = arith.constant 0 : index
    %c0_170 = arith.constant 0 : index
    %c0_171 = arith.constant 0 : index
    %c256_172 = arith.constant 256 : index
    %74 = vector.load %arg5[%c0_169, %c0_170, %c0_171, %c256_172] : memref<2x16x16x288xf32, #tpu.memory_space<vmem>>, vector<2x16x16x32xf32>
    tpu.vector_store %arg5[%c0_169, %c0_170, %c0_171, %c256_172], %73 {strides = array<i32>} : memref<2x16x16x288xf32, #tpu.memory_space<vmem>>, vector<2x16x16x32xf32>,
    %c0_173 = arith.constant 0 : index
    %c0_174 = arith.constant 0 : index
    %c0_175 = arith.constant 0 : index
    %c0_176 = arith.constant 0 : index
    %75 = vector.load %arg5[%c0_173, %c0_174, %c0_175, %c0_176] : memref<2x16x16x288xf32, #tpu.memory_space<vmem>>, vector<2x16x16x288xf32>
    %76 = vector.shape_cast %75 : vector<2x16x16x288xf32> to vector<512x288xf32>
    %c0_177 = arith.constant 0 : index
    %c0_178 = arith.constant 0 : index
    %77 = vector.load %arg2[%c0_177, %c0_178] : memref<288x32xf32, #tpu.memory_space<vmem>>, vector<288x32xf32>
    %cst_179 = arith.constant dense<0.000000e+00> : vector<512x32xf32>
    %78 = tpu.matmul %76, %77, %cst_179 {dimension_numbers = #tpu.dot_dimension_numbers<[1], [0], [0], [1], [0, 0, 1, 1], [], []>} : vector<512x288xf32>, vector<288x32xf32>, vector<512x32xf32> -> vector<512x32xf32>
    %cst_180 = arith.constant dense<0.000000e+00> : vector<32xf32>
    %79 = vector.multi_reduction <add>, %78, %cst_180 [0] : vector<512x32xf32> to vector<32xf32>
    %80 = vector.shape_cast %79 : vector<32xf32> to vector<1x32xf32>
    %81 = arith.mulf %78, %78 : vector<512x32xf32>
    %cst_181 = arith.constant dense<0.000000e+00> : vector<32xf32>
    %82 = vector.multi_reduction <add>, %81, %cst_181 [0] : vector<512x32xf32> to vector<32xf32>
    %83 = vector.shape_cast %82 : vector<32xf32> to vector<1x32xf32>
    %cst_182 = arith.constant 0.001953125 : f32
    %84 = vector.broadcast %cst_182 : f32 to vector<1x32xf32>
    %85 = arith.mulf %80, %84 : vector<1x32xf32>
    %cst_183 = arith.constant 0.001953125 : f32
    %86 = vector.broadcast %cst_183 : f32 to vector<1x32xf32>
    %87 = arith.mulf %83, %86 : vector<1x32xf32>
    %88 = arith.mulf %85, %85 : vector<1x32xf32>
    %89 = arith.subf %87, %88 : vector<1x32xf32>
    %cst_184 = arith.constant 9.99999974E-6 : f32
    %90 = vector.broadcast %cst_184 : f32 to vector<1x32xf32>
    %91 = arith.addf %89, %90 : vector<1x32xf32>
    %92 = math.rsqrt %91 : vector<1x32xf32>
    %93 = arith.mulf %92, %2 : vector<1x32xf32>
    %94 = arith.mulf %85, %93 : vector<1x32xf32>
    %95 = arith.subf %3, %94 : vector<1x32xf32>
    %c0_185 = arith.constant 0 : index
    %c1_186 = arith.constant 1 : index
    %c1_187 = arith.constant 1 : index
    %c0_188 = arith.constant 0 : index
    %96 = vector.load %arg0[%c0_185, %c1_186, %c1_187, %c0_188] : memref<2x18x18x32xf32, #tpu.memory_space<vmem>>, vector<2x16x16x32xf32>
    %97 = vector.shape_cast %96 : vector<2x16x16x32xf32> to vector<512x32xf32>
    %98 = vector.broadcast %93 : vector<1x32xf32> to vector<512x32xf32>
    %99 = arith.mulf %78, %98 : vector<512x32xf32>
    %100 = vector.broadcast %95 : vector<1x32xf32> to vector<512x32xf32>
    %101 = arith.addf %99, %100 : vector<512x32xf32>
    %102 = arith.addf %101, %97 : vector<512x32xf32>
    %cst_189 = arith.constant 0.000000e+00 : f32
    %103 = vector.broadcast %cst_189 : f32 to vector<512x32xf32>
    %104 = arith.maximumf %102, %103 : vector<512x32xf32>
    %c0_190 = arith.constant 0 : index
    %c0_191 = arith.constant 0 : index
    %105 = vector.load %arg4[%c0_190, %c0_191] : memref<512x32xf32, #tpu.memory_space<vmem>>, vector<512x32xf32>
    tpu.vector_store %arg4[%c0_190, %c0_191], %104 {strides = array<i32>} : memref<512x32xf32, #tpu.memory_space<vmem>>, vector<512x32xf32>,
    return
  }
}

</mosaic_0001>

<llo_original>
// kernel: tpu_custom_call.1
$region0: #{tpu_custom_call.1}
  #allocation0 [shape = 'u32[]', space=smem, size = 0x4, offset = 0x4, fixed_abs, tag = 'smem constant byte address 0x4 - core index']
  #allocation1 [shape = 'u32[144,128]{1,0:T(1,128)}', space=vmem, size = 0x12000, scoped, tag = 'internal scratch']
  #allocation2 [shape = 'f32[2,16,16,288]{3,2,1,0:T(8,128)}', space=vmem, size = 0xc0000, scoped, tag = 'scratch operand']
  #allocation3 [shape = 'f32[2,18,18,32]{3,2,1,0:T(8,128)}', space=vmem, size = 0x6c000, scoped, tag = 'scratch operand']
  %s0 = inlined_call_operand.vmem [shape: f32[2,18,18,32], index: 0, kind: input, shape index: {}]
  %s1 = inlined_call_operand.vmem [shape: f32[288,32], index: 1, kind: input, shape index: {}]
  %s2 = inlined_call_operand.vmem [shape: f32[288,32], index: 2, kind: input, shape index: {}]
  %s3 = inlined_call_operand.vmem [shape: f32[4,32], index: 3, kind: input, shape index: {}]
  %s4 = inlined_call_operand.vmem [shape: f32[512,32], index: 4, kind: output, shape index: {}]
  %s5 = sld [smem:[#allocation0]]
  $region26: #{tpu_custom_call.1} parent=0
    _
  %s7 = ssub.s32 1, %s5
  %s8 = scalar_select 0, %s7, %s5
  // Predicated region
  $region2: #{tpu_custom_call.1} parent=0 // pred_check
    _
  $region3: #{tpu_custom_call.1} parent=0 // pred_check_branch
    %10 = sbr.rel (0) target = $region5
  $region4: #{tpu_custom_call.1} parent=0 // pred_region
    _
  $region5: #{tpu_custom_call.1} parent=0 // pred_fallthru
    _
  // Predicated region
  $region6: #{tpu_custom_call.1} parent=0 // pred_check
    _
  $region7: #{tpu_custom_call.1} parent=0 // pred_check_branch
    %12 = sbr.rel (0) target = $region9
  $region8: #{tpu_custom_call.1} parent=0 // pred_region
    _
  $region9: #{tpu_custom_call.1} parent=0 // pred_fallthru
    _
  // Predicated region
  $region10: #{tpu_custom_call.1} parent=0 // pred_check
    _
  $region11: #{tpu_custom_call.1} parent=0 // pred_check_branch
    %14 = sbr.rel (0) target = $region13
  $region12: #{tpu_custom_call.1} parent=0 // pred_region
    _
  $region13: #{tpu_custom_call.1} parent=0 // pred_fallthru
    _
  // Predicated region
  $region14: #{tpu_custom_call.1} parent=0 // pred_check
    _
  $region15: #{tpu_custom_call.1} parent=0 // pred_check_branch
    %16 = sbr.rel (0) target = $region17
  $region16: #{tpu_custom_call.1} parent=0 // pred_region
    _
  $region17: #{tpu_custom_call.1} parent=0 // pred_fallthru
    _
  %v17 = vld [vmem:[%s3] sm:$0x1]
  %v18 = vld [vmem:[%s3 + $0x1] sm:$0x1]
  %v19 = vld [vmem:[%s3 + $0x2] sm:$0x1]
  %v20 = vld [vmem:[%s3 + $0x3] sm:$0x1]
  %v21 = vld [vmem:[%s0] sm:$0xff]
  %v22 = vld [vmem:[%s0 + $0x8] sm:$0xff]
  %v23 = vld [vmem:[%s0 + $0x18] sm:$0xff]
  %v24 = vld [vmem:[%s0 + $0x20] sm:$0xff]
  %v25 = vld [vmem:[%s0 + $0x30] sm:$0xff]
  %v26 = vld [vmem:[%s0 + $0x38] sm:$0xff]
  %v27 = vld [vmem:[%s0 + $0x48] sm:$0xff]
  %v28 = vld [vmem:[%s0 + $0x50] sm:$0xff]
  %v29 = vld [vmem:[%s0 + $0x60] sm:$0xff]
  %v30 = vld [vmem:[%s0 + $0x68] sm:$0xff]
  %v31 = vld [vmem:[%s0 + $0x78] sm:$0xff]
  %v32 = vld [vmem:[%s0 + $0x80] sm:$0xff]
  %v33 = vld [vmem:[%s0 + $0x90] sm:$0xff]
  %v34 = vld [vmem:[%s0 + $0x98] sm:$0xff]
  %v35 = vld [vmem:[%s0 + $0xa8] sm:$0xff]
  %v36 = vld [vmem:[%s0 + $0xb0] sm:$0xff]
  %v37 = vld [vmem:[%s0 + $0xc0] sm:$0xff]
  %v38 = vld [vmem:[%s0 + $0xc8] sm:$0xff]
  %v39 = vld [vmem:[%s0 + $0xd8] sm:$0xff]
  %v40 = vld [vmem:[%s0 + $0xe0] sm:$0xff]
  %v41 = vld [vmem:[%s0 + $0xf0] sm:$0xff]
  %v42 = vld [vmem:[%s0 + $0xf8] sm:$0xff]
  %v43 = vld [vmem:[%s0 + $0x108] sm:$0xff]
  %v44 = vld [vmem:[%s0 + $0x110] sm:$0xff]
  %v45 = vld [vmem:[%s0 + $0x120] sm:$0xff]
  %v46 = vld [vmem:[%s0 + $0x128] sm:$0xff]
  %v47 = vld [vmem:[%s0 + $0x138] sm:$0xff]
  %v48 = vld [vmem:[%s0 + $0x140] sm:$0xff]
  %v49 = vld [vmem:[%s0 + $0x150] sm:$0xff]
  %v50 = vld [vmem:[%s0 + $0x158] sm:$0xff]
  %v51 = vld [vmem:[%s0 + $0x168] sm:$0xff]
  %v52 = vld [vmem:[%s0 + $0x170] sm:$0xff]
  %v53 = vld [vmem:[%s0 + $0x1b0] sm:$0xff]
  %v54 = vld [vmem:[%s0 + $0x1b8] sm:$0xff]
  %v55 = vld [vmem:[%s0 + $0x1c8] sm:$0xff]
  %v56 = vld [vmem:[%s0 + $0x1d0] sm:$0xff]
  %v57 = vld [vmem:[%s0 + $0x1e0] sm:$0xff]
  %v58 = vld [vmem:[%s0 + $0x1e8] sm:$0xff]
  %v59 = vld [vmem:[%s0 + $0x1f8] sm:$0xff]
  %v60 = vld [vmem:[%s0 + $0x200] sm:$0xff]
  %v61 = vld [vmem:[%s0 + $0x210] sm:$0xff]
  %v62 = vld [vmem:[%s0 + $0x218] sm:$0xff]
  %v63 = vld [vmem:[%s0 + $0x228] sm:$0xff]
  %v64 = vld [vmem:[%s0 + $0x230] sm:$0xff]
  %v65 = vld [vmem:[%s0 + $0x240] sm:$0xff]
  %v66 = vld [vmem:[%s0 + $0x248] sm:$0xff]
  %v67 = vld [vmem:[%s0 + $0x258] sm:$0xff]
  %v68 = vld [vmem:[%s0 + $0x260] sm:$0xff]
  %v69 = vld [vmem:[%s0 + $0x270] sm:$0xff]
  %v70 = vld [vmem:[%s0 + $0x278] sm:$0xff]
  %v71 = vld [vmem:[%s0 + $0x288] sm:$0xff]
  %v72 = vld [vmem:[%s0 + $0x290] sm:$0xff]
  %v73 = vld [vmem:[%s0 + $0x2a0] sm:$0xff]
  %v74 = vld [vmem:[%s0 + $0x2a8] sm:$0xff]
  %v75 = vld [vmem:[%s0 + $0x2b8] sm:$0xff]
  %v76 = vld [vmem:[%s0 + $0x2c0] sm:$0xff]
  %v77 = vld [vmem:[%s0 + $0x2d0] sm:$0xff]
  %v78 = vld [vmem:[%s0 + $0x2d8] sm:$0xff]
  %v79 = vld [vmem:[%s0 + $0x2e8] sm:$0xff]
  %v80 = vld [vmem:[%s0 + $0x2f0] sm:$0xff]
  %v81 = vld [vmem:[%s0 + $0x300] sm:$0xff]
  %v82 = vld [vmem:[%s0 + $0x308] sm:$0xff]
  %v83 = vld [vmem:[%s0 + $0x318] sm:$0xff]
  %v84 = vld [vmem:[%s0 + $0x320] sm:$0xff]
  %vm85 = vcmask 261120
  %86 = vst.msk [vmem:[#allocation2] sm:$0xff] %vm85, %v21
  %87 = vst.msk [vmem:[#allocation2 + $0x18] sm:$0xff] %vm85, %v22
  %88 = vst.msk [vmem:[#allocation2 + $0x30] sm:$0xff] %vm85, %v23
  %89 = vst.msk [vmem:[#allocation2 + $0x48] sm:$0xff] %vm85, %v24
  %90 = vst.msk [vmem:[#allocation2 + $0x60] sm:$0xff] %vm85, %v25
  %91 = vst.msk [vmem:[#allocation2 + $0x78] sm:$0xff] %vm85, %v26
  %92 = vst.msk [vmem:[#allocation2 + $0x90] sm:$0xff] %vm85, %v27
  %93 = vst.msk [vmem:[#allocation2 + $0xa8] sm:$0xff] %vm85, %v28
  %94 = vst.msk [vmem:[#allocation2 + $0xc0] sm:$0xff] %vm85, %v29
  %95 = vst.msk [vmem:[#allocation2 + $0xd8] sm:$0xff] %vm85, %v30
  %96 = vst.msk [vmem:[#allocation2 + $0xf0] sm:$0xff] %vm85, %v31
  %97 = vst.msk [vmem:[#allocation2 + $0x108] sm:$0xff] %vm85, %v32
  %98 = vst.msk [vmem:[#allocation2 + $0x120] sm:$0xff] %vm85, %v33
  %99 = vst.msk [vmem:[#allocation2 + $0x138] sm:$0xff] %vm85, %v34
  %100 = vst.msk [vmem:[#allocation2 + $0x150] sm:$0xff] %vm85, %v35
  %101 = vst.msk [vmem:[#allocation2 + $0x168] sm:$0xff] %vm85, %v36
  %102 = vst.msk [vmem:[#allocation2 + $0x180] sm:$0xff] %vm85, %v37
  %103 = vst.msk [vmem:[#allocation2 + $0x198] sm:$0xff] %vm85, %v38
  %104 = vst.msk [vmem:[#allocation2 + $0x1b0] sm:$0xff] %vm85, %v39
  %105 = vst.msk [vmem:[#allocation2 + $0x1c8] sm:$0xff] %vm85, %v40
  %106 = vst.msk [vmem:[#allocation2 + $0x1e0] sm:$0xff] %vm85, %v41
  %107 = vst.msk [vmem:[#allocation2 + $0x1f8] sm:$0xff] %vm85, %v42
  %108 = vst.msk [vmem:[#allocation2 + $0x210] sm:$0xff] %vm85, %v43
  %109 = vst.msk [vmem:[#allocation2 + $0x228] sm:$0xff] %vm85, %v44
  %110 = vst.msk [vmem:[#allocation2 + $0x240] sm:$0xff] %vm85, %v45
  %111 = vst.msk [vmem:[#allocation2 + $0x258] sm:$0xff] %vm85, %v46
  %112 = vst.msk [vmem:[#allocation2 + $0x270] sm:$0xff] %vm85, %v47
  %113 = vst.msk [vmem:[#allocation2 + $0x288] sm:$0xff] %vm85, %v48
  %114 = vst.msk [vmem:[#allocation2 + $0x2a0] sm:$0xff] %vm85, %v49
  %115 = vst.msk [vmem:[#allocation2 + $0x2b8] sm:$0xff] %vm85, %v50
  %116 = vst.msk [vmem:[#allocation2 + $0x2d0] sm:$0xff] %vm85, %v51
  %117 = vst.msk [vmem:[#allocation2 + $0x2e8] sm:$0xff] %vm85, %v52
  %118 = vst.msk [vmem:[#allocation2 + $0x300] sm:$0xff] %vm85, %v53
  %119 = vst.msk [vmem:[#allocation2 + $0x318] sm:$0xff] %vm85, %v54
  %120 = vst.msk [vmem:[#allocation2 + $0x330] sm:$0xff] %vm85, %v55
  %121 = vst.msk [vmem:[#allocation2 + $0x348] sm:$0xff] %vm85, %v56
  %122 = vst.msk [vmem:[#allocation2 + $0x360] sm:$0xff] %vm85, %v57
  %123 = vst.msk [vmem:[#allocation2 + $0x378] sm:$0xff] %vm85, %v58
  %124 = vst.msk [vmem:[#allocation2 + $0x390] sm:$0xff] %vm85, %v59
  %125 = vst.msk [vmem:[#allocation2 + $0x3a8] sm:$0xff] %vm85, %v60
  %126 = vst.msk [vmem:[#allocation2 + $0x3c0] sm:$0xff] %vm85, %v61
  %127 = vst.msk [vmem:[#allocation2 + $0x3d8] sm:$0xff] %vm85, %v62
  %128 = vst.msk [vmem:[#allocation2 + $0x3f0] sm:$0xff] %vm85, %v63
  %129 = vst.msk [vmem:[#allocation2 + $0x408] sm:$0xff] %vm85, %v64
  %130 = vst.msk [vmem:[#allocation2 + $0x420] sm:$0xff] %vm85, %v65
  %131 = vst.msk [vmem:[#allocation2 + $0x438] sm:$0xff] %vm85, %v66
  %132 = vst.msk [vmem:[#allocation2 + $0x450] sm:$0xff] %vm85, %v67
  %133 = vst.msk [vmem:[#allocation2 + $0x468] sm:$0xff] %vm85, %v68
  %134 = vst.msk [vmem:[#allocation2 + $0x480] sm:$0xff] %vm85, %v69
  %135 = vst.msk [vmem:[#allocation2 + $0x498] sm:$0xff] %vm85, %v70
  %136 = vst.msk [vmem:[#allocation2 + $0x4b0] sm:$0xff] %vm85, %v71
  %137 = vst.msk [vmem:[#allocation2 + $0x4c8] sm:$0xff] %vm85, %v72
  %138 = vst.msk [vmem:[#allocation2 + $0x4e0] sm:$0xff] %vm85, %v73
  %139 = vst.msk [vmem:[#allocation2 + $0x4f8] sm:$0xff] %vm85, %v74
  %140 = vst.msk [vmem:[#allocation2 + $0x510] sm:$0xff] %vm85, %v75
  %141 = vst.msk [vmem:[#allocation2 + $0x528] sm:$0xff] %vm85, %v76
  %142 = vst.msk [vmem:[#allocation2 + $0x540] sm:$0xff] %vm85, %v77
  %143 = vst.msk [vmem:[#allocation2 + $0x558] sm:$0xff] %vm85, %v78
  %144 = vst.msk [vmem:[#allocation2 + $0x570] sm:$0xff] %vm85, %v79
  %145 = vst.msk [vmem:[#allocation2 + $0x588] sm:$0xff] %vm85, %v80
  %146 = vst.msk [vmem:[#allocation2 + $0x5a0] sm:$0xff] %vm85, %v81
  %147 = vst.msk [vmem:[#allocation2 + $0x5b8] sm:$0xff] %vm85, %v82
  %148 = vst.msk [vmem:[#allocation2 + $0x5d0] sm:$0xff] %vm85, %v83
  %149 = vst.msk [vmem:[#allocation2 + $0x5e8] sm:$0xff] %vm85, %v84
  %v150 = vld [vmem:[%s0 + $0x1] sm:$0xff]
  %v151 = vld [vmem:[%s0 + $0x9] sm:$0xff]
  %v152 = vld [vmem:[%s0 + $0x19] sm:$0xff]
  %v153 = vld [vmem:[%s0 + $0x21] sm:$0xff]
  %v154 = vld [vmem:[%s0 + $0x31] sm:$0xff]
  %v155 = vld [vmem:[%s0 + $0x39] sm:$0xff]
  %v156 = vld [vmem:[%s0 + $0x49] sm:$0xff]
  %v157 = vld [vmem:[%s0 + $0x51] sm:$0xff]
  %v158 = vld [vmem:[%s0 + $0x61] sm:$0xff]
  %v159 = vld [vmem:[%s0 + $0x69] sm:$0xff]
  %v160 = vld [vmem:[%s0 + $0x79] sm:$0xff]
  %v161 = vld [vmem:[%s0 + $0x81] sm:$0xff]
  %v162 = vld [vmem:[%s0 + $0x91] sm:$0xff]
  %v163 = vld [vmem:[%s0 + $0x99] sm:$0xff]
  %v164 = vld [vmem:[%s0 + $0xa9] sm:$0xff]
  %v165 = vld [vmem:[%s0 + $0xb1] sm:$0xff]
  %v166 = vld [vmem:[%s0 + $0xc1] sm:$0xff]
  %v167 = vld [vmem:[%s0 + $0xc9] sm:$0xff]
  %v168 = vld [vmem:[%s0 + $0xd9] sm:$0xff]
  %v169 = vld [vmem:[%s0 + $0xe1] sm:$0xff]
  %v170 = vld [vmem:[%s0 + $0xf1] sm:$0xff]
  %v171 = vld [vmem:[%s0 + $0xf9] sm:$0xff]
  %v172 = vld [vmem:[%s0 + $0x109] sm:$0xff]
  %v173 = vld [vmem:[%s0 + $0x111] sm:$0xff]
  %v174 = vld [vmem:[%s0 + $0x121] sm:$0xff]
  %v175 = vld [vmem:[%s0 + $0x129] sm:$0xff]
  %v176 = vld [vmem:[%s0 + $0x139] sm:$0xff]
  %v177 = vld [vmem:[%s0 + $0x141] sm:$0xff]
  %v178 = vld [vmem:[%s0 + $0x151] sm:$0xff]
  %v179 = vld [vmem:[%s0 + $0x159] sm:$0xff]
  %v180 = vld [vmem:[%s0 + $0x169] sm:$0xff]
  %v181 = vld [vmem:[%s0 + $0x171] sm:$0xff]
  %v182 = vld [vmem:[%s0 + $0x1b1] sm:$0xff]
  %v183 = vld [vmem:[%s0 + $0x1b9] sm:$0xff]
  %v184 = vld [vmem:[%s0 + $0x1c9] sm:$0xff]
  %v185 = vld [vmem:[%s0 + $0x1d1] sm:$0xff]
  %v186 = vld [vmem:[%s0 + $0x1e1] sm:$0xff]
  %v187 = vld [vmem:[%s0 + $0x1e9] sm:$0xff]
  %v188 = vld [vmem:[%s0 + $0x1f9] sm:$0xff]
  %v189 = vld [vmem:[%s0 + $0x201] sm:$0xff]
  %v190 = vld [vmem:[%s0 + $0x211] sm:$0xff]
  %v191 = vld [vmem:[%s0 + $0x219] sm:$0xff]
  %v192 = vld [vmem:[%s0 + $0x229] sm:$0xff]
  %v193 = vld [vmem:[%s0 + $0x231] sm:$0xff]
  %v194 = vld [vmem:[%s0 + $0x241] sm:$0xff]
  %v195 = vld [vmem:[%s0 + $0x249] sm:$0xff]
  %v196 = vld [vmem:[%s0 + $0x259] sm:$0xff]
  %v197 = vld [vmem:[%s0 + $0x261] sm:$0xff]
  %v198 = vld [vmem:[%s0 + $0x271] sm:$0xff]
  %v199 = vld [vmem:[%s0 + $0x279] sm:$0xff]
  %v200 = vld [vmem:[%s0 + $0x289] sm:$0xff]
  %v201 = vld [vmem:[%s0 + $0x291] sm:$0xff]
  %v202 = vld [vmem:[%s0 + $0x2a1] sm:$0xff]
  %v203 = vld [vmem:[%s0 + $0x2a9] sm:$0xff]
  %v204 = vld [vmem:[%s0 + $0x2b9] sm:$0xff]
  %v205 = vld [vmem:[%s0 + $0x2c1] sm:$0xff]
  %v206 = vld [vmem:[%s0 + $0x2d1] sm:$0xff]
  %v207 = vld [vmem:[%s0 + $0x2d9] sm:$0xff]
  %v208 = vld [vmem:[%s0 + $0x2e9] sm:$0xff]
  %v209 = vld [vmem:[%s0 + $0x2f1] sm:$0xff]
  %v210 = vld [vmem:[%s0 + $0x301] sm:$0xff]
  %v211 = vld [vmem:[%s0 + $0x309] sm:$0xff]
  %v212 = vld [vmem:[%s0 + $0x319] sm:$0xff]
  %v213 = vld [vmem:[%s0 + $0x321] sm:$0xff]
  %278 = vrot.lane.b32.xlu0 %v150, 32
  %v279 = vpop.permute.xlu0 %278
  %280 = vrot.lane.b32.xlu0 %v151, 32
  %v281 = vpop.permute.xlu0 %280
  %282 = vrot.lane.b32.xlu0 %v152, 32
  %v283 = vpop.permute.xlu0 %282
  %284 = vrot.lane.b32.xlu0 %v153, 32
  %v285 = vpop.permute.xlu0 %284
  %286 = vrot.lane.b32.xlu0 %v154, 32
  %v287 = vpop.permute.xlu0 %286
  %288 = vrot.lane.b32.xlu0 %v155, 32
  %v289 = vpop.permute.xlu0 %288
  %290 = vrot.lane.b32.xlu0 %v156, 32
  %v291 = vpop.permute.xlu0 %290
  %292 = vrot.lane.b32.xlu0 %v157, 32
  %v293 = vpop.permute.xlu0 %292
  %294 = vrot.lane.b32.xlu0 %v158, 32
  %v295 = vpop.permute.xlu0 %294
  %296 = vrot.lane.b32.xlu0 %v159, 32
  %v297 = vpop.permute.xlu0 %296
  %298 = vrot.lane.b32.xlu0 %v160, 32
  %v299 = vpop.permute.xlu0 %298
  %300 = vrot.lane.b32.xlu0 %v161, 32
  %v301 = vpop.permute.xlu0 %300
  %302 = vrot.lane.b32.xlu0 %v162, 32
  %v303 = vpop.permute.xlu0 %302
  %304 = vrot.lane.b32.xlu0 %v163, 32
  %v305 = vpop.permute.xlu0 %304
  %306 = vrot.lane.b32.xlu0 %v164, 32
  %v307 = vpop.permute.xlu0 %306
  %308 = vrot.lane.b32.xlu0 %v165, 32
  %v309 = vpop.permute.xlu0 %308
  %310 = vrot.lane.b32.xlu0 %v166, 32
  %v311 = vpop.permute.xlu0 %310
  %312 = vrot.lane.b32.xlu0 %v167, 32
  %v313 = vpop.permute.xlu0 %312
  %314 = vrot.lane.b32.xlu0 %v168, 32
  %v315 = vpop.permute.xlu0 %314
  %316 = vrot.lane.b32.xlu0 %v169, 32
  %v317 = vpop.permute.xlu0 %316
  %318 = vrot.lane.b32.xlu0 %v170, 32
  %v319 = vpop.permute.xlu0 %318
  %320 = vrot.lane.b32.xlu0 %v171, 32
  %v321 = vpop.permute.xlu0 %320
  %322 = vrot.lane.b32.xlu0 %v172, 32
  %v323 = vpop.permute.xlu0 %322
  %324 = vrot.lane.b32.xlu0 %v173, 32
  %v325 = vpop.permute.xlu0 %324
  %326 = vrot.lane.b32.xlu0 %v174, 32
  %v327 = vpop.permute.xlu0 %326
  %328 = vrot.lane.b32.xlu0 %v175, 32
  %v329 = vpop.permute.xlu0 %328
  %330 = vrot.lane.b32.xlu0 %v176, 32
  %v331 = vpop.permute.xlu0 %330
  %332 = vrot.lane.b32.xlu0 %v177, 32
  %v333 = vpop.permute.xlu0 %332
  %334 = vrot.lane.b32.xlu0 %v178, 32
  %v335 = vpop.permute.xlu0 %334
  %336 = vrot.lane.b32.xlu0 %v179, 32
  %v337 = vpop.permute.xlu0 %336
  %338 = vrot.lane.b32.xlu0 %v180, 32
  %v339 = vpop.permute.xlu0 %338
  %340 = vrot.lane.b32.xlu0 %v181, 32
  %v341 = vpop.permute.xlu0 %340
  %342 = vrot.lane.b32.xlu0 %v182, 32
  %v343 = vpop.permute.xlu0 %342
  %344 = vrot.lane.b32.xlu0 %v183, 32
  %v345 = vpop.permute.xlu0 %344
  %346 = vrot.lane.b32.xlu0 %v184, 32
  %v347 = vpop.permute.xlu0 %346
  %348 = vrot.lane.b32.xlu0 %v185, 32
  %v349 = vpop.permute.xlu0 %348
  %350 = vrot.lane.b32.xlu0 %v186, 32
  %v351 = vpop.permute.xlu0 %350
  %352 = vrot.lane.b32.xlu0 %v187, 32
  %v353 = vpop.permute.xlu0 %352
  %354 = vrot.lane.b32.xlu0 %v188, 32
  %v355 = vpop.permute.xlu0 %354
  %356 = vrot.lane.b32.xlu0 %v189, 32
  %v357 = vpop.permute.xlu0 %356
  %358 = vrot.lane.b32.xlu0 %v190, 32
  %v359 = vpop.permute.xlu0 %358
  %360 = vrot.lane.b32.xlu0 %v191, 32
  %v361 = vpop.permute.xlu0 %360
  %362 = vrot.lane.b32.xlu0 %v192, 32
  %v363 = vpop.permute.xlu0 %362
  %364 = vrot.lane.b32.xlu0 %v193, 32
  %v365 = vpop.permute.xlu0 %364
  %366 = vrot.lane.b32.xlu0 %v194, 32
  %v367 = vpop.permute.xlu0 %366
  %368 = vrot.lane.b32.xlu0 %v195, 32
  %v369 = vpop.permute.xlu0 %368
  %370 = vrot.lane.b32.xlu0 %v196, 32
  %v371 = vpop.permute.xlu0 %370
  %372 = vrot.lane.b32.xlu0 %v197, 32
  %v373 = vpop.permute.xlu0 %372
  %374 = vrot.lane.b32.xlu0 %v198, 32
  %v375 = vpop.permute.xlu0 %374
  %376 = vrot.lane.b32.xlu0 %v199, 32
  %v377 = vpop.permute.xlu0 %376
  %378 = vrot.lane.b32.xlu0 %v200, 32
  %v379 = vpop.permute.xlu0 %378
  %380 = vrot.lane.b32.xlu0 %v201, 32
  %v381 = vpop.permute.xlu0 %380
  %382 = vrot.lane.b32.xlu0 %v202, 32
  %v383 = vpop.permute.xlu0 %382
  %384 = vrot.lane.b32.xlu0 %v203, 32
  %v385 = vpop.permute.xlu0 %384
  %386 = vrot.lane.b32.xlu0 %v204, 32
  %v387 = vpop.permute.xlu0 %386
  %388 = vrot.lane.b32.xlu0 %v205, 32
  %v389 = vpop.permute.xlu0 %388
  %390 = vrot.lane.b32.xlu0 %v206, 32
  %v391 = vpop.permute.xlu0 %390
  %392 = vrot.lane.b32.xlu0 %v207, 32
  %v393 = vpop.permute.xlu0 %392
  %394 = vrot.lane.b32.xlu0 %v208, 32
  %v395 = vpop.permute.xlu0 %394
  %396 = vrot.lane.b32.xlu0 %v209, 32
  %v397 = vpop.permute.xlu0 %396
  %398 = vrot.lane.b32.xlu0 %v210, 32
  %v399 = vpop.permute.xlu0 %398
  %400 = vrot.lane.b32.xlu0 %v211, 32
  %v401 = vpop.permute.xlu0 %400
  %402 = vrot.lane.b32.xlu0 %v212, 32
  %v403 = vpop.permute.xlu0 %402
  %404 = vrot.lane.b32.xlu0 %v213, 32
  %v405 = vpop.permute.xlu0 %404
  %vm470 = vcmask 523520
  %471 = vst.msk [vmem:[#allocation2] sm:$0xff] %vm470, %v279
  %472 = vst.msk [vmem:[#allocation2 + $0x18] sm:$0xff] %vm470, %v281
  %473 = vst.msk [vmem:[#allocation2 + $0x30] sm:$0xff] %vm470, %v283
  %474 = vst.msk [vmem:[#allocation2 + $0x48] sm:$0xff] %vm470, %v285
  %475 = vst.msk [vmem:[#allocation2 + $0x60] sm:$0xff] %vm470, %v287
  %476 = vst.msk [vmem:[#allocation2 + $0x78] sm:$0xff] %vm470, %v289
  %477 = vst.msk [vmem:[#allocation2 + $0x90] sm:$0xff] %vm470, %v291
  %478 = vst.msk [vmem:[#allocation2 + $0xa8] sm:$0xff] %vm470, %v293
  %479 = vst.msk [vmem:[#allocation2 + $0xc0] sm:$0xff] %vm470, %v295
  %480 = vst.msk [vmem:[#allocation2 + $0xd8] sm:$0xff] %vm470, %v297
  %481 = vst.msk [vmem:[#allocation2 + $0xf0] sm:$0xff] %vm470, %v299
  %482 = vst.msk [vmem:[#allocation2 + $0x108] sm:$0xff] %vm470, %v301
  %483 = vst.msk [vmem:[#allocation2 + $0x120] sm:$0xff] %vm470, %v303
  %484 = vst.msk [vmem:[#allocation2 + $0x138] sm:$0xff] %vm470, %v305
  %485 = vst.msk [vmem:[#allocation2 + $0x150] sm:$0xff] %vm470, %v307
  %486 = vst.msk [vmem:[#allocation2 + $0x168] sm:$0xff] %vm470, %v309
  %487 = vst.msk [vmem:[#allocation2 + $0x180] sm:$0xff] %vm470, %v311
  %488 = vst.msk [vmem:[#allocation2 + $0x198] sm:$0xff] %vm470, %v313
  %489 = vst.msk [vmem:[#allocation2 + $0x1b0] sm:$0xff] %vm470, %v315
  %490 = vst.msk [vmem:[#allocation2 + $0x1c8] sm:$0xff] %vm470, %v317
  %491 = vst.msk [vmem:[#allocation2 + $0x1e0] sm:$0xff] %vm470, %v319
  %492 = vst.msk [vmem:[#allocation2 + $0x1f8] sm:$0xff] %vm470, %v321
  %493 = vst.msk [vmem:[#allocation2 + $0x210] sm:$0xff] %vm470, %v323
  %494 = vst.msk [vmem:[#allocation2 + $0x228] sm:$0xff] %vm470, %v325
  %495 = vst.msk [vmem:[#allocation2 + $0x240] sm:$0xff] %vm470, %v327
  %496 = vst.msk [vmem:[#allocation2 + $0x258] sm:$0xff] %vm470, %v329
  %497 = vst.msk [vmem:[#allocation2 + $0x270] sm:$0xff] %vm470, %v331
  %498 = vst.msk [vmem:[#allocation2 + $0x288] sm:$0xff] %vm470, %v333
  %499 = vst.msk [vmem:[#allocation2 + $0x2a0] sm:$0xff] %vm470, %v335
  %500 = vst.msk [vmem:[#allocation2 + $0x2b8] sm:$0xff] %vm470, %v337
  %501 = vst.msk [vmem:[#allocation2 + $0x2d0] sm:$0xff] %vm470, %v339
  %502 = vst.msk [vmem:[#allocation2 + $0x2e8] sm:$0xff] %vm470, %v341
  %503 = vst.msk [vmem:[#allocation2 + $0x300] sm:$0xff] %vm470, %v343
  %504 = vst.msk [vmem:[#allocation2 + $0x318] sm:$0xff] %vm470, %v345
  %505 = vst.msk [vmem:[#allocation2 + $0x330] sm:$0xff] %vm470, %v347
  %506 = vst.msk [vmem:[#allocation2 + $0x348] sm:$0xff] %vm470, %v349
  %507 = vst.msk [vmem:[#allocation2 + $0x360] sm:$0xff] %vm470, %v351
  %508 = vst.msk [vmem:[#allocation2 + $0x378] sm:$0xff] %vm470, %v353
  %509 = vst.msk [vmem:[#allocation2 + $0x390] sm:$0xff] %vm470, %v355
  %510 = vst.msk [vmem:[#allocation2 + $0x3a8] sm:$0xff] %vm470, %v357
  %511 = vst.msk [vmem:[#allocation2 + $0x3c0] sm:$0xff] %vm470, %v359
  %512 = vst.msk [vmem:[#allocation2 + $0x3d8] sm:$0xff] %vm470, %v361
  %513 = vst.msk [vmem:[#allocation2 + $0x3f0] sm:$0xff] %vm470, %v363
  %514 = vst.msk [vmem:[#allocation2 + $0x408] sm:$0xff] %vm470, %v365
  %515 = vst.msk [vmem:[#allocation2 + $0x420] sm:$0xff] %vm470, %v367
  %516 = vst.msk [vmem:[#allocation2 + $0x438] sm:$0xff] %vm470, %v369
  %517 = vst.msk [vmem:[#allocation2 + $0x450] sm:$0xff] %vm470, %v371
  %518 = vst.msk [vmem:[#allocation2 + $0x468] sm:$0xff] %vm470, %v373
  %519 = vst.msk [vmem:[#allocation2 + $0x480] sm:$0xff] %vm470, %v375
  %520 = vst.msk [vmem:[#allocation2 + $0x498] sm:$0xff] %vm470, %v377
  %521 = vst.msk [vmem:[#allocation2 + $0x4b0] sm:$0xff] %vm470, %v379
  %522 = vst.msk [vmem:[#allocation2 + $0x4c8] sm:$0xff] %vm470, %v381
  %523 = vst.msk [vmem:[#allocation2 + $0x4e0] sm:$0xff] %vm470, %v383
  %524 = vst.msk [vmem:[#allocation2 + $0x4f8] sm:$0xff] %vm470, %v385
  %525 = vst.msk [vmem:[#allocation2 + $0x510] sm:$0xff] %vm470, %v387
  %526 = vst.msk [vmem:[#allocation2 + $0x528] sm:$0xff] %vm470, %v389
  %527 = vst.msk [vmem:[#allocation2 + $0x540] sm:$0xff] %vm470, %v391
  %528 = vst.msk [vmem:[#allocation2 + $0x558] sm:$0xff] %vm470, %v393
  %529 = vst.msk [vmem:[#allocation2 + $0x570] sm:$0xff] %vm470, %v395
  %530 = vst.msk [vmem:[#allocation2 + $0x588] sm:$0xff] %vm470, %v397
  %531 = vst.msk [vmem:[#allocation2 + $0x5a0] sm:$0xff] %vm470, %v399
  %532 = vst.msk [vmem:[#allocation2 + $0x5b8] sm:$0xff] %vm470, %v401
  %533 = vst.msk [vmem:[#allocation2 + $0x5d0] sm:$0xff] %vm470, %v403
  %534 = vst.msk [vmem:[#allocation2 + $0x5e8] sm:$0xff] %vm470, %v405
  %v535 = vld [vmem:[%s0 + $0x2] sm:$0xff]
  %v536 = vld [vmem:[%s0 + $0xa] sm:$0xff]
  %v537 = vld [vmem:[%s0 + $0x1a] sm:$0xff]
  %v538 = vld [vmem:[%s0 + $0x22] sm:$0xff]
  %v539 = vld [vmem:[%s0 + $0x32] sm:$0xff]
  %v540 = vld [vmem:[%s0 + $0x3a] sm:$0xff]
  %v541 = vld [vmem:[%s0 + $0x4a] sm:$0xff]
  %v542 = vld [vmem:[%s0 + $0x52] sm:$0xff]
  %v543 = vld [vmem:[%s0 + $0x62] sm:$0xff]
  %v544 = vld [vmem:[%s0 + $0x6a] sm:$0xff]
  %v545 = vld [vmem:[%s0 + $0x7a] sm:$0xff]
  %v546 = vld [vmem:[%s0 + $0x82] sm:$0xff]
  %v547 = vld [vmem:[%s0 + $0x92] sm:$0xff]
  %v548 = vld [vmem:[%s0 + $0x9a] sm:$0xff]
  %v549 = vld [vmem:[%s0 + $0xaa] sm:$0xff]
  %v550 = vld [vmem:[%s0 + $0xb2] sm:$0xff]
  %v551 = vld [vmem:[%s0 + $0xc2] sm:$0xff]
  %v552 = vld [vmem:[%s0 + $0xca] sm:$0xff]
  %v553 = vld [vmem:[%s0 + $0xda] sm:$0xff]
  %v554 = vld [vmem:[%s0 + $0xe2] sm:$0xff]
  %v555 = vld [vmem:[%s0 + $0xf2] sm:$0xff]
  %v556 = vld [vmem:[%s0 + $0xfa] sm:$0xff]
  %v557 = vld [vmem:[%s0 + $0x10a] sm:$0xff]
  %v558 = vld [vmem:[%s0 + $0x112] sm:$0xff]
  %v559 = vld [vmem:[%s0 + $0x122] sm:$0xff]
  %v560 = vld [vmem:[%s0 + $0x12a] sm:$0xff]
  %v561 = vld [vmem:[%s0 + $0x13a] sm:$0xff]
  %v562 = vld [vmem:[%s0 + $0x142] sm:$0xff]
  %v563 = vld [vmem:[%s0 + $0x152] sm:$0xff]
  %v564 = vld [vmem:[%s0 + $0x15a] sm:$0xff]
  %v565 = vld [vmem:[%s0 + $0x16a] sm:$0xff]
  %v566 = vld [vmem:[%s0 + $0x172] sm:$0xff]
  %v567 = vld [vmem:[%s0 + $0x1b2] sm:$0xff]
  %v568 = vld [vmem:[%s0 + $0x1ba] sm:$0xff]
  %v569 = vld [vmem:[%s0 + $0x1ca] sm:$0xff]
  %v570 = vld [vmem:[%s0 + $0x1d2] sm:$0xff]
  %v571 = vld [vmem:[%s0 + $0x1e2] sm:$0xff]
  %v572 = vld [vmem:[%s0 + $0x1ea] sm:$0xff]
  %v573 = vld [vmem:[%s0 + $0x1fa] sm:$0xff]
  %v574 = vld [vmem:[%s0 + $0x202] sm:$0xff]
  %v575 = vld [vmem:[%s0 + $0x212] sm:$0xff]
  %v576 = vld [vmem:[%s0 + $0x21a] sm:$0xff]
  %v577 = vld [vmem:[%s0 + $0x22a] sm:$0xff]
  %v578 = vld [vmem:[%s0 + $0x232] sm:$0xff]
  %v579 = vld [vmem:[%s0 + $0x242] sm:$0xff]
  %v580 = vld [vmem:[%s0 + $0x24a] sm:$0xff]
  %v581 = vld [vmem:[%s0 + $0x25a] sm:$0xff]
  %v582 = vld [vmem:[%s0 + $0x262] sm:$0xff]
  %v583 = vld [vmem:[%s0 + $0x272] sm:$0xff]
  %v584 = vld [vmem:[%s0 + $0x27a] sm:$0xff]
  %v585 = vld [vmem:[%s0 + $0x28a] sm:$0xff]
  %v586 = vld [vmem:[%s0 + $0x292] sm:$0xff]
  %v587 = vld [vmem:[%s0 + $0x2a2] sm:$0xff]
  %v588 = vld [vmem:[%s0 + $0x2aa] sm:$0xff]
  %v589 = vld [vmem:[%s0 + $0x2ba] sm:$0xff]
  %v590 = vld [vmem:[%s0 + $0x2c2] sm:$0xff]
  %v591 = vld [vmem:[%s0 + $0x2d2] sm:$0xff]
  %v592 = vld [vmem:[%s0 + $0x2da] sm:$0xff]
  %v593 = vld [vmem:[%s0 + $0x2ea] sm:$0xff]
  %v594 = vld [vmem:[%s0 + $0x2f2] sm:$0xff]
  %v595 = vld [vmem:[%s0 + $0x302] sm:$0xff]
  %v596 = vld [vmem:[%s0 + $0x30a] sm:$0xff]
  %v597 = vld [vmem:[%s0 + $0x31a] sm:$0xff]
  %v598 = vld [vmem:[%s0 + $0x322] sm:$0xff]
  %663 = vrot.lane.b32.xlu0 %v535, 64
  %v664 = vpop.permute.xlu0 %663
  %665 = vrot.lane.b32.xlu0 %v536, 64
  %v666 = vpop.permute.xlu0 %665
  %667 = vrot.lane.b32.xlu0 %v537, 64
  %v668 = vpop.permute.xlu0 %667
  %669 = vrot.lane.b32.xlu0 %v538, 64
  %v670 = vpop.permute.xlu0 %669
  %671 = vrot.lane.b32.xlu0 %v539, 64
  %v672 = vpop.permute.xlu0 %671
  %673 = vrot.lane.b32.xlu0 %v540, 64
  %v674 = vpop.permute.xlu0 %673
  %675 = vrot.lane.b32.xlu0 %v541, 64
  %v676 = vpop.permute.xlu0 %675
  %677 = vrot.lane.b32.xlu0 %v542, 64
  %v678 = vpop.permute.xlu0 %677
  %679 = vrot.lane.b32.xlu0 %v543, 64
  %v680 = vpop.permute.xlu0 %679
  %681 = vrot.lane.b32.xlu0 %v544, 64
  %v682 = vpop.permute.xlu0 %681
  %683 = vrot.lane.b32.xlu0 %v545, 64
  %v684 = vpop.permute.xlu0 %683
  %685 = vrot.lane.b32.xlu0 %v546, 64
  %v686 = vpop.permute.xlu0 %685
  %687 = vrot.lane.b32.xlu0 %v547, 64
  %v688 = vpop.permute.xlu0 %687
  %689 = vrot.lane.b32.xlu0 %v548, 64
  %v690 = vpop.permute.xlu0 %689
  %691 = vrot.lane.b32.xlu0 %v549, 64
  %v692 = vpop.permute.xlu0 %691
  %693 = vrot.lane.b32.xlu0 %v550, 64
  %v694 = vpop.permute.xlu0 %693
  %695 = vrot.lane.b32.xlu0 %v551, 64
  %v696 = vpop.permute.xlu0 %695
  %697 = vrot.lane.b32.xlu0 %v552, 64
  %v698 = vpop.permute.xlu0 %697
  %699 = vrot.lane.b32.xlu0 %v553, 64
  %v700 = vpop.permute.xlu0 %699
  %701 = vrot.lane.b32.xlu0 %v554, 64
  %v702 = vpop.permute.xlu0 %701
  %703 = vrot.lane.b32.xlu0 %v555, 64
  %v704 = vpop.permute.xlu0 %703
  %705 = vrot.lane.b32.xlu0 %v556, 64
  %v706 = vpop.permute.xlu0 %705
  %707 = vrot.lane.b32.xlu0 %v557, 64
  %v708 = vpop.permute.xlu0 %707
  %709 = vrot.lane.b32.xlu0 %v558, 64
  %v710 = vpop.permute.xlu0 %709
  %711 = vrot.lane.b32.xlu0 %v559, 64
  %v712 = vpop.permute.xlu0 %711
  %713 = vrot.lane.b32.xlu0 %v560, 64
  %v714 = vpop.permute.xlu0 %713
  %715 = vrot.lane.b32.xlu0 %v561, 64
  %v716 = vpop.permute.xlu0 %715
  %717 = vrot.lane.b32.xlu0 %v562, 64
  %v718 = vpop.permute.xlu0 %717
  %719 = vrot.lane.b32.xlu0 %v563, 64
  %v720 = vpop.permute.xlu0 %719
  %721 = vrot.lane.b32.xlu0 %v564, 64
  %v722 = vpop.permute.xlu0 %721
  %723 = vrot.lane.b32.xlu0 %v565, 64
  %v724 = vpop.permute.xlu0 %723
  %725 = vrot.lane.b32.xlu0 %v566, 64
  %v726 = vpop.permute.xlu0 %725
  %727 = vrot.lane.b32.xlu0 %v567, 64
  %v728 = vpop.permute.xlu0 %727
  %729 = vrot.lane.b32.xlu0 %v568, 64
  %v730 = vpop.permute.xlu0 %729
  %731 = vrot.lane.b32.xlu0 %v569, 64
  %v732 = vpop.permute.xlu0 %731
  %733 = vrot.lane.b32.xlu0 %v570, 64
  %v734 = vpop.permute.xlu0 %733
  %735 = vrot.lane.b32.xlu0 %v571, 64
  %v736 = vpop.permute.xlu0 %735
  %737 = vrot.lane.b32.xlu0 %v572, 64
  %v738 = vpop.permute.xlu0 %737
  %739 = vrot.lane.b32.xlu0 %v573, 64
  %v740 = vpop.permute.xlu0 %739
  %741 = vrot.lane.b32.xlu0 %v574, 64
  %v742 = vpop.permute.xlu0 %741
  %743 = vrot.lane.b32.xlu0 %v575, 64
  %v744 = vpop.permute.xlu0 %743
  %745 = vrot.lane.b32.xlu0 %v576, 64
  %v746 = vpop.permute.xlu0 %745
  %747 = vrot.lane.b32.xlu0 %v577, 64
  %v748 = vpop.permute.xlu0 %747
  %749 = vrot.lane.b32.xlu0 %v578, 64
  %v750 = vpop.permute.xlu0 %749
  %751 = vrot.lane.b32.xlu0 %v579, 64
  %v752 = vpop.permute.xlu0 %751
  %753 = vrot.lane.b32.xlu0 %v580, 64
  %v754 = vpop.permute.xlu0 %753
  %755 = vrot.lane.b32.xlu0 %v581, 64
  %v756 = vpop.permute.xlu0 %755
  %757 = vrot.lane.b32.xlu0 %v582, 64
  %v758 = vpop.permute.xlu0 %757
  %759 = vrot.lane.b32.xlu0 %v583, 64
  %v760 = vpop.permute.xlu0 %759
  %761 = vrot.lane.b32.xlu0 %v584, 64
  %v762 = vpop.permute.xlu0 %761
  %763 = vrot.lane.b32.xlu0 %v585, 64
  %v764 = vpop.permute.xlu0 %763
  %765 = vrot.lane.b32.xlu0 %v586, 64
  %v766 = vpop.permute.xlu0 %765
  %767 = vrot.lane.b32.xlu0 %v587, 64
  %v768 = vpop.permute.xlu0 %767
  %769 = vrot.lane.b32.xlu0 %v588, 64
  %v770 = vpop.permute.xlu0 %769
  %771 = vrot.lane.b32.xlu0 %v589, 64
  %v772 = vpop.permute.xlu0 %771
  %773 = vrot.lane.b32.xlu0 %v590, 64
  %v774 = vpop.permute.xlu0 %773
  %775 = vrot.lane.b32.xlu0 %v591, 64
  %v776 = vpop.permute.xlu0 %775
  %777 = vrot.lane.b32.xlu0 %v592, 64
  %v778 = vpop.permute.xlu0 %777
  %779 = vrot.lane.b32.xlu0 %v593, 64
  %v780 = vpop.permute.xlu0 %779
  %781 = vrot.lane.b32.xlu0 %v594, 64
  %v782 = vpop.permute.xlu0 %781
  %783 = vrot.lane.b32.xlu0 %v595, 64
  %v784 = vpop.permute.xlu0 %783
  %785 = vrot.lane.b32.xlu0 %v596, 64
  %v786 = vpop.permute.xlu0 %785
  %787 = vrot.lane.b32.xlu0 %v597, 64
  %v788 = vpop.permute.xlu0 %787
  %789 = vrot.lane.b32.xlu0 %v598, 64
  %v790 = vpop.permute.xlu0 %789
  %vm855 = vcmask 785920
  %856 = vst.msk [vmem:[#allocation2] sm:$0xff] %vm855, %v664
  %857 = vst.msk [vmem:[#allocation2 + $0x18] sm:$0xff] %vm855, %v666
  %858 = vst.msk [vmem:[#allocation2 + $0x30] sm:$0xff] %vm855, %v668
  %859 = vst.msk [vmem:[#allocation2 + $0x48] sm:$0xff] %vm855, %v670
  %860 = vst.msk [vmem:[#allocation2 + $0x60] sm:$0xff] %vm855, %v672
  %861 = vst.msk [vmem:[#allocation2 + $0x78] sm:$0xff] %vm855, %v674
  %862 = vst.msk [vmem:[#allocation2 + $0x90] sm:$0xff] %vm855, %v676
  %863 = vst.msk [vmem:[#allocation2 + $0xa8] sm:$0xff] %vm855, %v678
  %864 = vst.msk [vmem:[#allocation2 + $0xc0] sm:$0xff] %vm855, %v680
  %865 = vst.msk [vmem:[#allocation2 + $0xd8] sm:$0xff] %vm855, %v682
  %866 = vst.msk [vmem:[#allocation2 + $0xf0] sm:$0xff] %vm855, %v684
  %867 = vst.msk [vmem:[#allocation2 + $0x108] sm:$0xff] %vm855, %v686
  %868 = vst.msk [vmem:[#allocation2 + $0x120] sm:$0xff] %vm855, %v688
  %869 = vst.msk [vmem:[#allocation2 + $0x138] sm:$0xff] %vm855, %v690
  %870 = vst.msk [vmem:[#allocation2 + $0x150] sm:$0xff] %vm855, %v692
  %871 = vst.msk [vmem:[#allocation2 + $0x168] sm:$0xff] %vm855, %v694
  %872 = vst.msk [vmem:[#allocation2 + $0x180] sm:$0xff] %vm855, %v696
  %873 = vst.msk [vmem:[#allocation2 + $0x198] sm:$0xff] %vm855, %v698
  %874 = vst.msk [vmem:[#allocation2 + $0x1b0] sm:$0xff] %vm855, %v700
  %875 = vst.msk [vmem:[#allocation2 + $0x1c8] sm:$0xff] %vm855, %v702
  %876 = vst.msk [vmem:[#allocation2 + $0x1e0] sm:$0xff] %vm855, %v704
  %877 = vst.msk [vmem:[#allocation2 + $0x1f8] sm:$0xff] %vm855, %v706
  %878 = vst.msk [vmem:[#allocation2 + $0x210] sm:$0xff] %vm855, %v708
  %879 = vst.msk [vmem:[#allocation2 + $0x228] sm:$0xff] %vm855, %v710
  %880 = vst.msk [vmem:[#allocation2 + $0x240] sm:$0xff] %vm855, %v712
  %881 = vst.msk [vmem:[#allocation2 + $0x258] sm:$0xff] %vm855, %v714
  %882 = vst.msk [vmem:[#allocation2 + $0x270] sm:$0xff] %vm855, %v716
  %883 = vst.msk [vmem:[#allocation2 + $0x288] sm:$0xff] %vm855, %v718
  %884 = vst.msk [vmem:[#allocation2 + $0x2a0] sm:$0xff] %vm855, %v720
  %885 = vst.msk [vmem:[#allocation2 + $0x2b8] sm:$0xff] %vm855, %v722
  %886 = vst.msk [vmem:[#allocation2 + $0x2d0] sm:$0xff] %vm855, %v724
  %887 = vst.msk [vmem:[#allocation2 + $0x2e8] sm:$0xff] %vm855, %v726
  %888 = vst.msk [vmem:[#allocation2 + $0x300] sm:$0xff] %vm855, %v728
  %889 = vst.msk [vmem:[#allocation2 + $0x318] sm:$0xff] %vm855, %v730
  %890 = vst.msk [vmem:[#allocation2 + $0x330] sm:$0xff] %vm855, %v732
  %891 = vst.msk [vmem:[#allocation2 + $0x348] sm:$0xff] %vm855, %v734
  %892 = vst.msk [vmem:[#allocation2 + $0x360] sm:$0xff] %vm855, %v736
  %893 = vst.msk [vmem:[#allocation2 + $0x378] sm:$0xff] %vm855, %v738
  %894 = vst.msk [vmem:[#allocation2 + $0x390] sm:$0xff] %vm855, %v740
  %895 = vst.msk [vmem:[#allocation2 + $0x3a8] sm:$0xff] %vm855, %v742
  %896 = vst.msk [vmem:[#allocation2 + $0x3c0] sm:$0xff] %vm855, %v744
  %897 = vst.msk [vmem:[#allocation2 + $0x3d8] sm:$0xff] %vm855, %v746
  %898 = vst.msk [vmem:[#allocation2 + $0x3f0] sm:$0xff] %vm855, %v748
  %899 = vst.msk [vmem:[#allocation2 + $0x408] sm:$0xff] %vm855, %v750
  %900 = vst.msk [vmem:[#allocation2 + $0x420] sm:$0xff] %vm855, %v752
  %901 = vst.msk [vmem:[#allocation2 + $0x438] sm:$0xff] %vm855, %v754
  %902 = vst.msk [vmem:[#allocation2 + $0x450] sm:$0xff] %vm855, %v756
  %903 = vst.msk [vmem:[#allocation2 + $0x468] sm:$0xff] %vm855, %v758
  %904 = vst.msk [vmem:[#allocation2 + $0x480] sm:$0xff] %vm855, %v760
  %905 = vst.msk [vmem:[#allocation2 + $0x498] sm:$0xff] %vm855, %v762
  %906 = vst.msk [vmem:[#allocation2 + $0x4b0] sm:$0xff] %vm855, %v764
  %907 = vst.msk [vmem:[#allocation2 + $0x4c8] sm:$0xff] %vm855, %v766
  %908 = vst.msk [vmem:[#allocation2 + $0x4e0] sm:$0xff] %vm855, %v768
  %909 = vst.msk [vmem:[#allocation2 + $0x4f8] sm:$0xff] %vm855, %v770
  %910 = vst.msk [vmem:[#allocation2 + $0x510] sm:$0xff] %vm855, %v772
  %911 = vst.msk [vmem:[#allocation2 + $0x528] sm:$0xff] %vm855, %v774
  %912 = vst.msk [vmem:[#allocation2 + $0x540] sm:$0xff] %vm855, %v776
  %913 = vst.msk [vmem:[#allocation2 + $0x558] sm:$0xff] %vm855, %v778
  %914 = vst.msk [vmem:[#allocation2 + $0x570] sm:$0xff] %vm855, %v780
  %915 = vst.msk [vmem:[#allocation2 + $0x588] sm:$0xff] %vm855, %v782
  %916 = vst.msk [vmem:[#allocation2 + $0x5a0] sm:$0xff] %vm855, %v784
  %917 = vst.msk [vmem:[#allocation2 + $0x5b8] sm:$0xff] %vm855, %v786
  %918 = vst.msk [vmem:[#allocation2 + $0x5d0] sm:$0xff] %vm855, %v788
  %919 = vst.msk [vmem:[#allocation2 + $0x5e8] sm:$0xff] %vm855, %v790
  %s920 = scalar_lea.vmem %s0, 24
  %v921 = vld [vmem:[%s920] sm:$0xff]
  %v922 = vld [vmem:[%s920 + $0x8] sm:$0xff]
  %v923 = vld [vmem:[%s920 + $0x18] sm:$0xff]
  %v924 = vld [vmem:[%s920 + $0x20] sm:$0xff]
  %v925 = vld [vmem:[%s920 + $0x30] sm:$0xff]
  %v926 = vld [vmem:[%s920 + $0x38] sm:$0xff]
  %v927 = vld [vmem:[%s920 + $0x48] sm:$0xff]
  %v928 = vld [vmem:[%s920 + $0x50] sm:$0xff]
  %v929 = vld [vmem:[%s920 + $0x60] sm:$0xff]
  %v930 = vld [vmem:[%s920 + $0x68] sm:$0xff]
  %v931 = vld [vmem:[%s920 + $0x78] sm:$0xff]
  %v932 = vld [vmem:[%s920 + $0x80] sm:$0xff]
  %v933 = vld [vmem:[%s920 + $0x90] sm:$0xff]
  %v934 = vld [vmem:[%s920 + $0x98] sm:$0xff]
  %v935 = vld [vmem:[%s920 + $0xa8] sm:$0xff]
  %v936 = vld [vmem:[%s920 + $0xb0] sm:$0xff]
  %v937 = vld [vmem:[%s920 + $0xc0] sm:$0xff]
  %v938 = vld [vmem:[%s920 + $0xc8] sm:$0xff]
  %v939 = vld [vmem:[%s920 + $0xd8] sm:$0xff]
  %v940 = vld [vmem:[%s920 + $0xe0] sm:$0xff]
  %v941 = vld [vmem:[%s920 + $0xf0] sm:$0xff]
  %v942 = vld [vmem:[%s920 + $0xf8] sm:$0xff]
  %v943 = vld [vmem:[%s920 + $0x108] sm:$0xff]
  %v944 = vld [vmem:[%s920 + $0x110] sm:$0xff]
  %v945 = vld [vmem:[%s920 + $0x120] sm:$0xff]
  %v946 = vld [vmem:[%s920 + $0x128] sm:$0xff]
  %v947 = vld [vmem:[%s920 + $0x138] sm:$0xff]
  %v948 = vld [vmem:[%s920 + $0x140] sm:$0xff]
  %v949 = vld [vmem:[%s920 + $0x150] sm:$0xff]
  %v950 = vld [vmem:[%s920 + $0x158] sm:$0xff]
  %v951 = vld [vmem:[%s920 + $0x168] sm:$0xff]
  %v952 = vld [vmem:[%s920 + $0x170] sm:$0xff]
  %v953 = vld [vmem:[%s920 + $0x1b0] sm:$0xff]
  %v954 = vld [vmem:[%s920 + $0x1b8] sm:$0xff]
  %v955 = vld [vmem:[%s920 + $0x1c8] sm:$0xff]
  %v956 = vld [vmem:[%s920 + $0x1d0] sm:$0xff]
  %v957 = vld [vmem:[%s920 + $0x1e0] sm:$0xff]
  %v958 = vld [vmem:[%s920 + $0x1e8] sm:$0xff]
  %v959 = vld [vmem:[%s920 + $0x1f8] sm:$0xff]
  %v960 = vld [vmem:[%s920 + $0x200] sm:$0xff]
  %v961 = vld [vmem:[%s920 + $0x210] sm:$0xff]
  %v962 = vld [vmem:[%s920 + $0x218] sm:$0xff]
  %v963 = vld [vmem:[%s920 + $0x228] sm:$0xff]
  %v964 = vld [vmem:[%s920 + $0x230] sm:$0xff]
  %v965 = vld [vmem:[%s920 + $0x240] sm:$0xff]
  %v966 = vld [vmem:[%s920 + $0x248] sm:$0xff]
  %v967 = vld [vmem:[%s920 + $0x258] sm:$0xff]
  %v968 = vld [vmem:[%s920 + $0x260] sm:$0xff]
  %v969 = vld [vmem:[%s920 + $0x270] sm:$0xff]
  %v970 = vld [vmem:[%s920 + $0x278] sm:$0xff]
  %v971 = vld [vmem:[%s920 + $0x288] sm:$0xff]
  %v972 = vld [vmem:[%s920 + $0x290] sm:$0xff]
  %v973 = vld [vmem:[%s920 + $0x2a0] sm:$0xff]
  %v974 = vld [vmem:[%s920 + $0x2a8] sm:$0xff]
  %v975 = vld [vmem:[%s920 + $0x2b8] sm:$0xff]
  %v976 = vld [vmem:[%s920 + $0x2c0] sm:$0xff]
  %v977 = vld [vmem:[%s920 + $0x2d0] sm:$0xff]
  %v978 = vld [vmem:[%s920 + $0x2d8] sm:$0xff]
  %v979 = vld [vmem:[%s920 + $0x2e8] sm:$0xff]
  %v980 = vld [vmem:[%s920 + $0x2f0] sm:$0xff]
  %v981 = vld [vmem:[%s920 + $0x300] sm:$0xff]
  %v982 = vld [vmem:[%s920 + $0x308] sm:$0xff]
  %v983 = vld [vmem:[%s920 + $0x318] sm:$0xff]
  %v984 = vld [vmem:[%s920 + $0x320] sm:$0xff]
  %1049 = vrot.lane.b32.xlu0 %v921, 96
  %v1050 = vpop.permute.xlu0 %1049
  %1051 = vrot.lane.b32.xlu0 %v922, 96
  %v1052 = vpop.permute.xlu0 %1051
  %1053 = vrot.lane.b32.xlu0 %v923, 96
  %v1054 = vpop.permute.xlu0 %1053
  %1055 = vrot.lane.b32.xlu0 %v924, 96
  %v1056 = vpop.permute.xlu0 %1055
  %1057 = vrot.lane.b32.xlu0 %v925, 96
  %v1058 = vpop.permute.xlu0 %1057
  %1059 = vrot.lane.b32.xlu0 %v926, 96
  %v1060 = vpop.permute.xlu0 %1059
  %1061 = vrot.lane.b32.xlu0 %v927, 96
  %v1062 = vpop.permute.xlu0 %1061
  %1063 = vrot.lane.b32.xlu0 %v928, 96
  %v1064 = vpop.permute.xlu0 %1063
  %1065 = vrot.lane.b32.xlu0 %v929, 96
  %v1066 = vpop.permute.xlu0 %1065
  %1067 = vrot.lane.b32.xlu0 %v930, 96
  %v1068 = vpop.permute.xlu0 %1067
  %1069 = vrot.lane.b32.xlu0 %v931, 96
  %v1070 = vpop.permute.xlu0 %1069
  %1071 = vrot.lane.b32.xlu0 %v932, 96
  %v1072 = vpop.permute.xlu0 %1071
  %1073 = vrot.lane.b32.xlu0 %v933, 96
  %v1074 = vpop.permute.xlu0 %1073
  %1075 = vrot.lane.b32.xlu0 %v934, 96
  %v1076 = vpop.permute.xlu0 %1075
  %1077 = vrot.lane.b32.xlu0 %v935, 96
  %v1078 = vpop.permute.xlu0 %1077
  %1079 = vrot.lane.b32.xlu0 %v936, 96
  %v1080 = vpop.permute.xlu0 %1079
  %1081 = vrot.lane.b32.xlu0 %v937, 96
  %v1082 = vpop.permute.xlu0 %1081
  %1083 = vrot.lane.b32.xlu0 %v938, 96
  %v1084 = vpop.permute.xlu0 %1083
  %1085 = vrot.lane.b32.xlu0 %v939, 96
  %v1086 = vpop.permute.xlu0 %1085
  %1087 = vrot.lane.b32.xlu0 %v940, 96
  %v1088 = vpop.permute.xlu0 %1087
  %1089 = vrot.lane.b32.xlu0 %v941, 96
  %v1090 = vpop.permute.xlu0 %1089
  %1091 = vrot.lane.b32.xlu0 %v942, 96
  %v1092 = vpop.permute.xlu0 %1091
  %1093 = vrot.lane.b32.xlu0 %v943, 96
  %v1094 = vpop.permute.xlu0 %1093
  %1095 = vrot.lane.b32.xlu0 %v944, 96
  %v1096 = vpop.permute.xlu0 %1095
  %1097 = vrot.lane.b32.xlu0 %v945, 96
  %v1098 = vpop.permute.xlu0 %1097
  %1099 = vrot.lane.b32.xlu0 %v946, 96
  %v1100 = vpop.permute.xlu0 %1099
  %1101 = vrot.lane.b32.xlu0 %v947, 96
  %v1102 = vpop.permute.xlu0 %1101
  %1103 = vrot.lane.b32.xlu0 %v948, 96
  %v1104 = vpop.permute.xlu0 %1103
  %1105 = vrot.lane.b32.xlu0 %v949, 96
  %v1106 = vpop.permute.xlu0 %1105
  %1107 = vrot.lane.b32.xlu0 %v950, 96
  %v1108 = vpop.permute.xlu0 %1107
  %1109 = vrot.lane.b32.xlu0 %v951, 96
  %v1110 = vpop.permute.xlu0 %1109
  %1111 = vrot.lane.b32.xlu0 %v952, 96
  %v1112 = vpop.permute.xlu0 %1111
  %1113 = vrot.lane.b32.xlu0 %v953, 96
  %v1114 = vpop.permute.xlu0 %1113
  %1115 = vrot.lane.b32.xlu0 %v954, 96
  %v1116 = vpop.permute.xlu0 %1115
  %1117 = vrot.lane.b32.xlu0 %v955, 96
  %v1118 = vpop.permute.xlu0 %1117
  %1119 = vrot.lane.b32.xlu0 %v956, 96
  %v1120 = vpop.permute.xlu0 %1119
  %1121 = vrot.lane.b32.xlu0 %v957, 96
  %v1122 = vpop.permute.xlu0 %1121
  %1123 = vrot.lane.b32.xlu0 %v958, 96
  %v1124 = vpop.permute.xlu0 %1123
  %1125 = vrot.lane.b32.xlu0 %v959, 96
  %v1126 = vpop.permute.xlu0 %1125
  %1127 = vrot.lane.b32.xlu0 %v960, 96
  %v1128 = vpop.permute.xlu0 %1127
  %1129 = vrot.lane.b32.xlu0 %v961, 96
  %v1130 = vpop.permute.xlu0 %1129
  %1131 = vrot.lane.b32.xlu0 %v962, 96
  %v1132 = vpop.permute.xlu0 %1131
  %1133 = vrot.lane.b32.xlu0 %v963, 96
  %v1134 = vpop.permute.xlu0 %1133
  %1135 = vrot.lane.b32.xlu0 %v964, 96
  %v1136 = vpop.permute.xlu0 %1135
  %1137 = vrot.lane.b32.xlu0 %v965, 96
  %v1138 = vpop.permute.xlu0 %1137
  %1139 = vrot.lane.b32.xlu0 %v966, 96
  %v1140 = vpop.permute.xlu0 %1139
  %1141 = vrot.lane.b32.xlu0 %v967, 96
  %v1142 = vpop.permute.xlu0 %1141
  %1143 = vrot.lane.b32.xlu0 %v968, 96
  %v1144 = vpop.permute.xlu0 %1143
  %1145 = vrot.lane.b32.xlu0 %v969, 96
  %v1146 = vpop.permute.xlu0 %1145
  %1147 = vrot.lane.b32.xlu0 %v970, 96
  %v1148 = vpop.permute.xlu0 %1147
  %1149 = vrot.lane.b32.xlu0 %v971, 96
  %v1150 = vpop.permute.xlu0 %1149
  %1151 = vrot.lane.b32.xlu0 %v972, 96
  %v1152 = vpop.permute.xlu0 %1151
  %1153 = vrot.lane.b32.xlu0 %v973, 96
  %v1154 = vpop.permute.xlu0 %1153
  %1155 = vrot.lane.b32.xlu0 %v974, 96
  %v1156 = vpop.permute.xlu0 %1155
  %1157 = vrot.lane.b32.xlu0 %v975, 96
  %v1158 = vpop.permute.xlu0 %1157
  %1159 = vrot.lane.b32.xlu0 %v976, 96
  %v1160 = vpop.permute.xlu0 %1159
  %1161 = vrot.lane.b32.xlu0 %v977, 96
  %v1162 = vpop.permute.xlu0 %1161
  %1163 = vrot.lane.b32.xlu0 %v978, 96
  %v1164 = vpop.permute.xlu0 %1163
  %1165 = vrot.lane.b32.xlu0 %v979, 96
  %v1166 = vpop.permute.xlu0 %1165
  %1167 = vrot.lane.b32.xlu0 %v980, 96
  %v1168 = vpop.permute.xlu0 %1167
  %1169 = vrot.lane.b32.xlu0 %v981, 96
  %v1170 = vpop.permute.xlu0 %1169
  %1171 = vrot.lane.b32.xlu0 %v982, 96
  %v1172 = vpop.permute.xlu0 %1171
  %1173 = vrot.lane.b32.xlu0 %v983, 96
  %v1174 = vpop.permute.xlu0 %1173
  %1175 = vrot.lane.b32.xlu0 %v984, 96
  %v1176 = vpop.permute.xlu0 %1175
  %vm1241 = vcmask 1048320
  %1242 = vst.msk [vmem:[#allocation2] sm:$0xff] %vm1241, %v1050
  %1243 = vst.msk [vmem:[#allocation2 + $0x18] sm:$0xff] %vm1241, %v1052
  %1244 = vst.msk [vmem:[#allocation2 + $0x30] sm:$0xff] %vm1241, %v1054
  %1245 = vst.msk [vmem:[#allocation2 + $0x48] sm:$0xff] %vm1241, %v1056
  %1246 = vst.msk [vmem:[#allocation2 + $0x60] sm:$0xff] %vm1241, %v1058
  %1247 = vst.msk [vmem:[#allocation2 + $0x78] sm:$0xff] %vm1241, %v1060
  %1248 = vst.msk [vmem:[#allocation2 + $0x90] sm:$0xff] %vm1241, %v1062
  %1249 = vst.msk [vmem:[#allocation2 + $0xa8] sm:$0xff] %vm1241, %v1064
  %1250 = vst.msk [vmem:[#allocation2 + $0xc0] sm:$0xff] %vm1241, %v1066
  %1251 = vst.msk [vmem:[#allocation2 + $0xd8] sm:$0xff] %vm1241, %v1068
  %1252 = vst.msk [vmem:[#allocation2 + $0xf0] sm:$0xff] %vm1241, %v1070
  %1253 = vst.msk [vmem:[#allocation2 + $0x108] sm:$0xff] %vm1241, %v1072
  %1254 = vst.msk [vmem:[#allocation2 + $0x120] sm:$0xff] %vm1241, %v1074
  %1255 = vst.msk [vmem:[#allocation2 + $0x138] sm:$0xff] %vm1241, %v1076
  %1256 = vst.msk [vmem:[#allocation2 + $0x150] sm:$0xff] %vm1241, %v1078
  %1257 = vst.msk [vmem:[#allocation2 + $0x168] sm:$0xff] %vm1241, %v1080
  %1258 = vst.msk [vmem:[#allocation2 + $0x180] sm:$0xff] %vm1241, %v1082
  %1259 = vst.msk [vmem:[#allocation2 + $0x198] sm:$0xff] %vm1241, %v1084
  %1260 = vst.msk [vmem:[#allocation2 + $0x1b0] sm:$0xff] %vm1241, %v1086
  %1261 = vst.msk [vmem:[#allocation2 + $0x1c8] sm:$0xff] %vm1241, %v1088
  %1262 = vst.msk [vmem:[#allocation2 + $0x1e0] sm:$0xff] %vm1241, %v1090
  %1263 = vst.msk [vmem:[#allocation2 + $0x1f8] sm:$0xff] %vm1241, %v1092
  %1264 = vst.msk [vmem:[#allocation2 + $0x210] sm:$0xff] %vm1241, %v1094
  %1265 = vst.msk [vmem:[#allocation2 + $0x228] sm:$0xff] %vm1241, %v1096
  %1266 = vst.msk [vmem:[#allocation2 + $0x240] sm:$0xff] %vm1241, %v1098
  %1267 = vst.msk [vmem:[#allocation2 + $0x258] sm:$0xff] %vm1241, %v1100
  %1268 = vst.msk [vmem:[#allocation2 + $0x270] sm:$0xff] %vm1241, %v1102
  %1269 = vst.msk [vmem:[#allocation2 + $0x288] sm:$0xff] %vm1241, %v1104
  %1270 = vst.msk [vmem:[#allocation2 + $0x2a0] sm:$0xff] %vm1241, %v1106
  %1271 = vst.msk [vmem:[#allocation2 + $0x2b8] sm:$0xff] %vm1241, %v1108
  %1272 = vst.msk [vmem:[#allocation2 + $0x2d0] sm:$0xff] %vm1241, %v1110
  %1273 = vst.msk [vmem:[#allocation2 + $0x2e8] sm:$0xff] %vm1241, %v1112
  %1274 = vst.msk [vmem:[#allocation2 + $0x300] sm:$0xff] %vm1241, %v1114
  %1275 = vst.msk [vmem:[#allocation2 + $0x318] sm:$0xff] %vm1241, %v1116
  %1276 = vst.msk [vmem:[#allocation2 + $0x330] sm:$0xff] %vm1241, %v1118
  %1277 = vst.msk [vmem:[#allocation2 + $0x348] sm:$0xff] %vm1241, %v1120
  %1278 = vst.msk [vmem:[#allocation2 + $0x360] sm:$0xff] %vm1241, %v1122
  %1279 = vst.msk [vmem:[#allocation2 + $0x378] sm:$0xff] %vm1241, %v1124
  %1280 = vst.msk [vmem:[#allocation2 + $0x390] sm:$0xff] %vm1241, %v1126
  %1281 = vst.msk [vmem:[#allocation2 + $0x3a8] sm:$0xff] %vm1241, %v1128
  %1282 = vst.msk [vmem:[#allocation2 + $0x3c0] sm:$0xff] %vm1241, %v1130
  %1283 = vst.msk [vmem:[#allocation2 + $0x3d8] sm:$0xff] %vm1241, %v1132
  %1284 = vst.msk [vmem:[#allocation2 + $0x3f0] sm:$0xff] %vm1241, %v1134
  %1285 = vst.msk [vmem:[#allocation2 + $0x408] sm:$0xff] %vm1241, %v1136
  %1286 = vst.msk [vmem:[#allocation2 + $0x420] sm:$0xff] %vm1241, %v1138
  %1287 = vst.msk [vmem:[#allocation2 + $0x438] sm:$0xff] %vm1241, %v1140
  %1288 = vst.msk [vmem:[#allocation2 + $0x450] sm:$0xff] %vm1241, %v1142
  %1289 = vst.msk [vmem:[#allocation2 + $0x468] sm:$0xff] %vm1241, %v1144
  %1290 = vst.msk [vmem:[#allocation2 + $0x480] sm:$0xff] %vm1241, %v1146
  %1291 = vst.msk [vmem:[#allocation2 + $0x498] sm:$0xff] %vm1241, %v1148
  %1292 = vst.msk [vmem:[#allocation2 + $0x4b0] sm:$0xff] %vm1241, %v1150
  %1293 = vst.msk [vmem:[#allocation2 + $0x4c8] sm:$0xff] %vm1241, %v1152
  %1294 = vst.msk [vmem:[#allocation2 + $0x4e0] sm:$0xff] %vm1241, %v1154
  %1295 = vst.msk [vmem:[#allocation2 + $0x4f8] sm:$0xff] %vm1241, %v1156
  %1296 = vst.msk [vmem:[#allocation2 + $0x510] sm:$0xff] %vm1241, %v1158
  %1297 = vst.msk [vmem:[#allocation2 + $0x528] sm:$0xff] %vm1241, %v1160
  %1298 = vst.msk [vmem:[#allocation2 + $0x540] sm:$0xff] %vm1241, %v1162
  %1299 = vst.msk [vmem:[#allocation2 + $0x558] sm:$0xff] %vm1241, %v1164
  %1300 = vst.msk [vmem:[#allocation2 + $0x570] sm:$0xff] %vm1241, %v1166
  %1301 = vst.msk [vmem:[#allocation2 + $0x588] sm:$0xff] %vm1241, %v1168
  %1302 = vst.msk [vmem:[#allocation2 + $0x5a0] sm:$0xff] %vm1241, %v1170
  %1303 = vst.msk [vmem:[#allocation2 + $0x5b8] sm:$0xff] %vm1241, %v1172
  %1304 = vst.msk [vmem:[#allocation2 + $0x5d0] sm:$0xff] %vm1241, %v1174
  %1305 = vst.msk [vmem:[#allocation2 + $0x5e8] sm:$0xff] %vm1241, %v1176
  %v1306 = vld [vmem:[%s920 + $0x1] sm:$0xff]
  %v1307 = vld [vmem:[%s920 + $0x9] sm:$0xff]
  %v1308 = vld [vmem:[%s920 + $0x19] sm:$0xff]
  %v1309 = vld [vmem:[%s920 + $0x21] sm:$0xff]
  %v1310 = vld [vmem:[%s920 + $0x31] sm:$0xff]
  %v1311 = vld [vmem:[%s920 + $0x39] sm:$0xff]
  %v1312 = vld [vmem:[%s920 + $0x49] sm:$0xff]
  %v1313 = vld [vmem:[%s920 + $0x51] sm:$0xff]
  %v1314 = vld [vmem:[%s920 + $0x61] sm:$0xff]
  %v1315 = vld [vmem:[%s920 + $0x69] sm:$0xff]
  %v1316 = vld [vmem:[%s920 + $0x79] sm:$0xff]
  %v1317 = vld [vmem:[%s920 + $0x81] sm:$0xff]
  %v1318 = vld [vmem:[%s920 + $0x91] sm:$0xff]
  %v1319 = vld [vmem:[%s920 + $0x99] sm:$0xff]
  %v1320 = vld [vmem:[%s920 + $0xa9] sm:$0xff]
  %v1321 = vld [vmem:[%s920 + $0xb1] sm:$0xff]
  %v1322 = vld [vmem:[%s920 + $0xc1] sm:$0xff]
  %v1323 = vld [vmem:[%s920 + $0xc9] sm:$0xff]
  %v1324 = vld [vmem:[%s920 + $0xd9] sm:$0xff]
  %v1325 = vld [vmem:[%s920 + $0xe1] sm:$0xff]
  %v1326 = vld [vmem:[%s920 + $0xf1] sm:$0xff]
  %v1327 = vld [vmem:[%s920 + $0xf9] sm:$0xff]
  %v1328 = vld [vmem:[%s920 + $0x109] sm:$0xff]
  %v1329 = vld [vmem:[%s920 + $0x111] sm:$0xff]
  %v1330 = vld [vmem:[%s920 + $0x121] sm:$0xff]
  %v1331 = vld [vmem:[%s920 + $0x129] sm:$0xff]
  %v1332 = vld [vmem:[%s920 + $0x139] sm:$0xff]
  %v1333 = vld [vmem:[%s920 + $0x141] sm:$0xff]
  %v1334 = vld [vmem:[%s920 + $0x151] sm:$0xff]
  %v1335 = vld [vmem:[%s920 + $0x159] sm:$0xff]
  %v1336 = vld [vmem:[%s920 + $0x169] sm:$0xff]
  %v1337 = vld [vmem:[%s920 + $0x171] sm:$0xff]
  %v1338 = vld [vmem:[%s920 + $0x1b1] sm:$0xff]
  %v1339 = vld [vmem:[%s920 + $0x1b9] sm:$0xff]
  %v1340 = vld [vmem:[%s920 + $0x1c9] sm:$0xff]
  %v1341 = vld [vmem:[%s920 + $0x1d1] sm:$0xff]
  %v1342 = vld [vmem:[%s920 + $0x1e1] sm:$0xff]
  %v1343 = vld [vmem:[%s920 + $0x1e9] sm:$0xff]
  %v1344 = vld [vmem:[%s920 + $0x1f9] sm:$0xff]
  %v1345 = vld [vmem:[%s920 + $0x201] sm:$0xff]
  %v1346 = vld [vmem:[%s920 + $0x211] sm:$0xff]
  %v1347 = vld [vmem:[%s920 + $0x219] sm:$0xff]
  %v1348 = vld [vmem:[%s920 + $0x229] sm:$0xff]
  %v1349 = vld [vmem:[%s920 + $0x231] sm:$0xff]
  %v1350 = vld [vmem:[%s920 + $0x241] sm:$0xff]
  %v1351 = vld [vmem:[%s920 + $0x249] sm:$0xff]
  %v1352 = vld [vmem:[%s920 + $0x259] sm:$0xff]
  %v1353 = vld [vmem:[%s920 + $0x261] sm:$0xff]
  %v1354 = vld [vmem:[%s920 + $0x271] sm:$0xff]
  %v1355 = vld [vmem:[%s920 + $0x279] sm:$0xff]
  %v1356 = vld [vmem:[%s920 + $0x289] sm:$0xff]
  %v1357 = vld [vmem:[%s920 + $0x291] sm:$0xff]
  %v1358 = vld [vmem:[%s920 + $0x2a1] sm:$0xff]
  %v1359 = vld [vmem:[%s920 + $0x2a9] sm:$0xff]
  %v1360 = vld [vmem:[%s920 + $0x2b9] sm:$0xff]
  %v1361 = vld [vmem:[%s920 + $0x2c1] sm:$0xff]
  %v1362 = vld [vmem:[%s920 + $0x2d1] sm:$0xff]
  %v1363 = vld [vmem:[%s920 + $0x2d9] sm:$0xff]
  %v1364 = vld [vmem:[%s920 + $0x2e9] sm:$0xff]
  %v1365 = vld [vmem:[%s920 + $0x2f1] sm:$0xff]
  %v1366 = vld [vmem:[%s920 + $0x301] sm:$0xff]
  %v1367 = vld [vmem:[%s920 + $0x309] sm:$0xff]
  %v1368 = vld [vmem:[%s920 + $0x319] sm:$0xff]
  %v1369 = vld [vmem:[%s920 + $0x321] sm:$0xff]
  %1370 = vst.msk [vmem:[#allocation2 + $0x8] sm:$0xff] %vm85, %v1306
  %1371 = vst.msk [vmem:[#allocation2 + $0x20] sm:$0xff] %vm85, %v1307
  %1372 = vst.msk [vmem:[#allocation2 + $0x38] sm:$0xff] %vm85, %v1308
  %1373 = vst.msk [vmem:[#allocation2 + $0x50] sm:$0xff] %vm85, %v1309
  %1374 = vst.msk [vmem:[#allocation2 + $0x68] sm:$0xff] %vm85, %v1310
  %1375 = vst.msk [vmem:[#allocation2 + $0x80] sm:$0xff] %vm85, %v1311
  %1376 = vst.msk [vmem:[#allocation2 + $0x98] sm:$0xff] %vm85, %v1312
  %1377 = vst.msk [vmem:[#allocation2 + $0xb0] sm:$0xff] %vm85, %v1313
  %1378 = vst.msk [vmem:[#allocation2 + $0xc8] sm:$0xff] %vm85, %v1314
  %1379 = vst.msk [vmem:[#allocation2 + $0xe0] sm:$0xff] %vm85, %v1315
  %1380 = vst.msk [vmem:[#allocation2 + $0xf8] sm:$0xff] %vm85, %v1316
  %1381 = vst.msk [vmem:[#allocation2 + $0x110] sm:$0xff] %vm85, %v1317
  %1382 = vst.msk [vmem:[#allocation2 + $0x128] sm:$0xff] %vm85, %v1318
  %1383 = vst.msk [vmem:[#allocation2 + $0x140] sm:$0xff] %vm85, %v1319
  %1384 = vst.msk [vmem:[#allocation2 + $0x158] sm:$0xff] %vm85, %v1320
  %1385 = vst.msk [vmem:[#allocation2 + $0x170] sm:$0xff] %vm85, %v1321
  %1386 = vst.msk [vmem:[#allocation2 + $0x188] sm:$0xff] %vm85, %v1322
  %1387 = vst.msk [vmem:[#allocation2 + $0x1a0] sm:$0xff] %vm85, %v1323
  %1388 = vst.msk [vmem:[#allocation2 + $0x1b8] sm:$0xff] %vm85, %v1324
  %1389 = vst.msk [vmem:[#allocation2 + $0x1d0] sm:$0xff] %vm85, %v1325
  %1390 = vst.msk [vmem:[#allocation2 + $0x1e8] sm:$0xff] %vm85, %v1326
  %1391 = vst.msk [vmem:[#allocation2 + $0x200] sm:$0xff] %vm85, %v1327
  %1392 = vst.msk [vmem:[#allocation2 + $0x218] sm:$0xff] %vm85, %v1328
  %1393 = vst.msk [vmem:[#allocation2 + $0x230] sm:$0xff] %vm85, %v1329
  %1394 = vst.msk [vmem:[#allocation2 + $0x248] sm:$0xff] %vm85, %v1330
  %1395 = vst.msk [vmem:[#allocation2 + $0x260] sm:$0xff] %vm85, %v1331
  %1396 = vst.msk [vmem:[#allocation2 + $0x278] sm:$0xff] %vm85, %v1332
  %1397 = vst.msk [vmem:[#allocation2 + $0x290] sm:$0xff] %vm85, %v1333
  %1398 = vst.msk [vmem:[#allocation2 + $0x2a8] sm:$0xff] %vm85, %v1334
  %1399 = vst.msk [vmem:[#allocation2 + $0x2c0] sm:$0xff] %vm85, %v1335
  %1400 = vst.msk [vmem:[#allocation2 + $0x2d8] sm:$0xff] %vm85, %v1336
  %1401 = vst.msk [vmem:[#allocation2 + $0x2f0] sm:$0xff] %vm85, %v1337
  %1402 = vst.msk [vmem:[#allocation2 + $0x308] sm:$0xff] %vm85, %v1338
  %1403 = vst.msk [vmem:[#allocation2 + $0x320] sm:$0xff] %vm85, %v1339
  %1404 = vst.msk [vmem:[#allocation2 + $0x338] sm:$0xff] %vm85, %v1340
  %1405 = vst.msk [vmem:[#allocation2 + $0x350] sm:$0xff] %vm85, %v1341
  %1406 = vst.msk [vmem:[#allocation2 + $0x368] sm:$0xff] %vm85, %v1342
  %1407 = vst.msk [vmem:[#allocation2 + $0x380] sm:$0xff] %vm85, %v1343
  %1408 = vst.msk [vmem:[#allocation2 + $0x398] sm:$0xff] %vm85, %v1344
  %1409 = vst.msk [vmem:[#allocation2 + $0x3b0] sm:$0xff] %vm85, %v1345
  %1410 = vst.msk [vmem:[#allocation2 + $0x3c8] sm:$0xff] %vm85, %v1346
  %1411 = vst.msk [vmem:[#allocation2 + $0x3e0] sm:$0xff] %vm85, %v1347
  %1412 = vst.msk [vmem:[#allocation2 + $0x3f8] sm:$0xff] %vm85, %v1348
  %1413 = vst.msk [vmem:[#allocation2 + $0x410] sm:$0xff] %vm85, %v1349
  %1414 = vst.msk [vmem:[#allocation2 + $0x428] sm:$0xff] %vm85, %v1350
  %1415 = vst.msk [vmem:[#allocation2 + $0x440] sm:$0xff] %vm85, %v1351
  %1416 = vst.msk [vmem:[#allocation2 + $0x458] sm:$0xff] %vm85, %v1352
  %1417 = vst.msk [vmem:[#allocation2 + $0x470] sm:$0xff] %vm85, %v1353
  %1418 = vst.msk [vmem:[#allocation2 + $0x488] sm:$0xff] %vm85, %v1354
  %1419 = vst.msk [vmem:[#allocation2 + $0x4a0] sm:$0xff] %vm85, %v1355
  %1420 = vst.msk [vmem:[#allocation2 + $0x4b8] sm:$0xff] %vm85, %v1356
  %1421 = vst.msk [vmem:[#allocation2 + $0x4d0] sm:$0xff] %vm85, %v1357
  %1422 = vst.msk [vmem:[#allocation2 + $0x4e8] sm:$0xff] %vm85, %v1358
  %1423 = vst.msk [vmem:[#allocation2 + $0x500] sm:$0xff] %vm85, %v1359
  %1424 = vst.msk [vmem:[#allocation2 + $0x518] sm:$0xff] %vm85, %v1360
  %1425 = vst.msk [vmem:[#allocation2 + $0x530] sm:$0xff] %vm85, %v1361
  %1426 = vst.msk [vmem:[#allocation2 + $0x548] sm:$0xff] %vm85, %v1362
  %1427 = vst.msk [vmem:[#allocation2 + $0x560] sm:$0xff] %vm85, %v1363
  %1428 = vst.msk [vmem:[#allocation2 + $0x578] sm:$0xff] %vm85, %v1364
  %1429 = vst.msk [vmem:[#allocation2 + $0x590] sm:$0xff] %vm85, %v1365
  %1430 = vst.msk [vmem:[#allocation2 + $0x5a8] sm:$0xff] %vm85, %v1366
  %1431 = vst.msk [vmem:[#allocation2 + $0x5c0] sm:$0xff] %vm85, %v1367
  %1432 = vst.msk [vmem:[#allocation2 + $0x5d8] sm:$0xff] %vm85, %v1368
  %1433 = vst.msk [vmem:[#allocation2 + $0x5f0] sm:$0xff] %vm85, %v1369
  %v1434 = vld [vmem:[%s920 + $0x2] sm:$0xff]
  %v1435 = vld [vmem:[%s920 + $0xa] sm:$0xff]
  %v1436 = vld [vmem:[%s920 + $0x1a] sm:$0xff]
  %v1437 = vld [vmem:[%s920 + $0x22] sm:$0xff]
  %v1438 = vld [vmem:[%s920 + $0x32] sm:$0xff]
  %v1439 = vld [vmem:[%s920 + $0x3a] sm:$0xff]
  %v1440 = vld [vmem:[%s920 + $0x4a] sm:$0xff]
  %v1441 = vld [vmem:[%s920 + $0x52] sm:$0xff]
  %v1442 = vld [vmem:[%s920 + $0x62] sm:$0xff]
  %v1443 = vld [vmem:[%s920 + $0x6a] sm:$0xff]
  %v1444 = vld [vmem:[%s920 + $0x7a] sm:$0xff]
  %v1445 = vld [vmem:[%s920 + $0x82] sm:$0xff]
  %v1446 = vld [vmem:[%s920 + $0x92] sm:$0xff]
  %v1447 = vld [vmem:[%s920 + $0x9a] sm:$0xff]
  %v1448 = vld [vmem:[%s920 + $0xaa] sm:$0xff]
  %v1449 = vld [vmem:[%s920 + $0xb2] sm:$0xff]
  %v1450 = vld [vmem:[%s920 + $0xc2] sm:$0xff]
  %v1451 = vld [vmem:[%s920 + $0xca] sm:$0xff]
  %v1452 = vld [vmem:[%s920 + $0xda] sm:$0xff]
  %v1453 = vld [vmem:[%s920 + $0xe2] sm:$0xff]
  %v1454 = vld [vmem:[%s920 + $0xf2] sm:$0xff]
  %v1455 = vld [vmem:[%s920 + $0xfa] sm:$0xff]
  %v1456 = vld [vmem:[%s920 + $0x10a] sm:$0xff]
  %v1457 = vld [vmem:[%s920 + $0x112] sm:$0xff]
  %v1458 = vld [vmem:[%s920 + $0x122] sm:$0xff]
  %v1459 = vld [vmem:[%s920 + $0x12a] sm:$0xff]
  %v1460 = vld [vmem:[%s920 + $0x13a] sm:$0xff]
  %v1461 = vld [vmem:[%s920 + $0x142] sm:$0xff]
  %v1462 = vld [vmem:[%s920 + $0x152] sm:$0xff]
  %v1463 = vld [vmem:[%s920 + $0x15a] sm:$0xff]
  %v1464 = vld [vmem:[%s920 + $0x16a] sm:$0xff]
  %v1465 = vld [vmem:[%s920 + $0x172] sm:$0xff]
  %v1466 = vld [vmem:[%s920 + $0x1b2] sm:$0xff]
  %v1467 = vld [vmem:[%s920 + $0x1ba] sm:$0xff]
  %v1468 = vld [vmem:[%s920 + $0x1ca] sm:$0xff]
  %v1469 = vld [vmem:[%s920 + $0x1d2] sm:$0xff]
  %v1470 = vld [vmem:[%s920 + $0x1e2] sm:$0xff]
  %v1471 = vld [vmem:[%s920 + $0x1ea] sm:$0xff]
  %v1472 = vld [vmem:[%s920 + $0x1fa] sm:$0xff]
  %v1473 = vld [vmem:[%s920 + $0x202] sm:$0xff]
  %v1474 = vld [vmem:[%s920 + $0x212] sm:$0xff]
  %v1475 = vld [vmem:[%s920 + $0x21a] sm:$0xff]
  %v1476 = vld [vmem:[%s920 + $0x22a] sm:$0xff]
  %v1477 = vld [vmem:[%s920 + $0x232] sm:$0xff]
  %v1478 = vld [vmem:[%s920 + $0x242] sm:$0xff]
  %v1479 = vld [vmem:[%s920 + $0x24a] sm:$0xff]
  %v1480 = vld [vmem:[%s920 + $0x25a] sm:$0xff]
  %v1481 = vld [vmem:[%s920 + $0x262] sm:$0xff]
  %v1482 = vld [vmem:[%s920 + $0x272] sm:$0xff]
  %v1483 = vld [vmem:[%s920 + $0x27a] sm:$0xff]
  %v1484 = vld [vmem:[%s920 + $0x28a] sm:$0xff]
  %v1485 = vld [vmem:[%s920 + $0x292] sm:$0xff]
  %v1486 = vld [vmem:[%s920 + $0x2a2] sm:$0xff]
  %v1487 = vld [vmem:[%s920 + $0x2aa] sm:$0xff]
  %v1488 = vld [vmem:[%s920 + $0x2ba] sm:$0xff]
  %v1489 = vld [vmem:[%s920 + $0x2c2] sm:$0xff]
  %v1490 = vld [vmem:[%s920 + $0x2d2] sm:$0xff]
  %v1491 = vld [vmem:[%s920 + $0x2da] sm:$0xff]
  %v1492 = vld [vmem:[%s920 + $0x2ea] sm:$0xff]
  %v1493 = vld [vmem:[%s920 + $0x2f2] sm:$0xff]
  %v1494 = vld [vmem:[%s920 + $0x302] sm:$0xff]
  %v1495 = vld [vmem:[%s920 + $0x30a] sm:$0xff]
  %v1496 = vld [vmem:[%s920 + $0x31a] sm:$0xff]
  %v1497 = vld [vmem:[%s920 + $0x322] sm:$0xff]
  %1562 = vrot.lane.b32.xlu0 %v1434, 32
  %v1563 = vpop.permute.xlu0 %1562
  %1564 = vrot.lane.b32.xlu0 %v1435, 32
  %v1565 = vpop.permute.xlu0 %1564
  %1566 = vrot.lane.b32.xlu0 %v1436, 32
  %v1567 = vpop.permute.xlu0 %1566
  %1568 = vrot.lane.b32.xlu0 %v1437, 32
  %v1569 = vpop.permute.xlu0 %1568
  %1570 = vrot.lane.b32.xlu0 %v1438, 32
  %v1571 = vpop.permute.xlu0 %1570
  %1572 = vrot.lane.b32.xlu0 %v1439, 32
  %v1573 = vpop.permute.xlu0 %1572
  %1574 = vrot.lane.b32.xlu0 %v1440, 32
  %v1575 = vpop.permute.xlu0 %1574
  %1576 = vrot.lane.b32.xlu0 %v1441, 32
  %v1577 = vpop.permute.xlu0 %1576
  %1578 = vrot.lane.b32.xlu0 %v1442, 32
  %v1579 = vpop.permute.xlu0 %1578
  %1580 = vrot.lane.b32.xlu0 %v1443, 32
  %v1581 = vpop.permute.xlu0 %1580
  %1582 = vrot.lane.b32.xlu0 %v1444, 32
  %v1583 = vpop.permute.xlu0 %1582
  %1584 = vrot.lane.b32.xlu0 %v1445, 32
  %v1585 = vpop.permute.xlu0 %1584
  %1586 = vrot.lane.b32.xlu0 %v1446, 32
  %v1587 = vpop.permute.xlu0 %1586
  %1588 = vrot.lane.b32.xlu0 %v1447, 32
  %v1589 = vpop.permute.xlu0 %1588
  %1590 = vrot.lane.b32.xlu0 %v1448, 32
  %v1591 = vpop.permute.xlu0 %1590
  %1592 = vrot.lane.b32.xlu0 %v1449, 32
  %v1593 = vpop.permute.xlu0 %1592
  %1594 = vrot.lane.b32.xlu0 %v1450, 32
  %v1595 = vpop.permute.xlu0 %1594
  %1596 = vrot.lane.b32.xlu0 %v1451, 32
  %v1597 = vpop.permute.xlu0 %1596
  %1598 = vrot.lane.b32.xlu0 %v1452, 32
  %v1599 = vpop.permute.xlu0 %1598
  %1600 = vrot.lane.b32.xlu0 %v1453, 32
  %v1601 = vpop.permute.xlu0 %1600
  %1602 = vrot.lane.b32.xlu0 %v1454, 32
  %v1603 = vpop.permute.xlu0 %1602
  %1604 = vrot.lane.b32.xlu0 %v1455, 32
  %v1605 = vpop.permute.xlu0 %1604
  %1606 = vrot.lane.b32.xlu0 %v1456, 32
  %v1607 = vpop.permute.xlu0 %1606
  %1608 = vrot.lane.b32.xlu0 %v1457, 32
  %v1609 = vpop.permute.xlu0 %1608
  %1610 = vrot.lane.b32.xlu0 %v1458, 32
  %v1611 = vpop.permute.xlu0 %1610
  %1612 = vrot.lane.b32.xlu0 %v1459, 32
  %v1613 = vpop.permute.xlu0 %1612
  %1614 = vrot.lane.b32.xlu0 %v1460, 32
  %v1615 = vpop.permute.xlu0 %1614
  %1616 = vrot.lane.b32.xlu0 %v1461, 32
  %v1617 = vpop.permute.xlu0 %1616
  %1618 = vrot.lane.b32.xlu0 %v1462, 32
  %v1619 = vpop.permute.xlu0 %1618
  %1620 = vrot.lane.b32.xlu0 %v1463, 32
  %v1621 = vpop.permute.xlu0 %1620
  %1622 = vrot.lane.b32.xlu0 %v1464, 32
  %v1623 = vpop.permute.xlu0 %1622
  %1624 = vrot.lane.b32.xlu0 %v1465, 32
  %v1625 = vpop.permute.xlu0 %1624
  %1626 = vrot.lane.b32.xlu0 %v1466, 32
  %v1627 = vpop.permute.xlu0 %1626
  %1628 = vrot.lane.b32.xlu0 %v1467, 32
  %v1629 = vpop.permute.xlu0 %1628
  %1630 = vrot.lane.b32.xlu0 %v1468, 32
  %v1631 = vpop.permute.xlu0 %1630
  %1632 = vrot.lane.b32.xlu0 %v1469, 32
  %v1633 = vpop.permute.xlu0 %1632
  %1634 = vrot.lane.b32.xlu0 %v1470, 32
  %v1635 = vpop.permute.xlu0 %1634
  %1636 = vrot.lane.b32.xlu0 %v1471, 32
  %v1637 = vpop.permute.xlu0 %1636
  %1638 = vrot.lane.b32.xlu0 %v1472, 32
  %v1639 = vpop.permute.xlu0 %1638
  %1640 = vrot.lane.b32.xlu0 %v1473, 32
  %v1641 = vpop.permute.xlu0 %1640
  %1642 = vrot.lane.b32.xlu0 %v1474, 32
  %v1643 = vpop.permute.xlu0 %1642
  %1644 = vrot.lane.b32.xlu0 %v1475, 32
  %v1645 = vpop.permute.xlu0 %1644
  %1646 = vrot.lane.b32.xlu0 %v1476, 32
  %v1647 = vpop.permute.xlu0 %1646
  %1648 = vrot.lane.b32.xlu0 %v1477, 32
  %v1649 = vpop.permute.xlu0 %1648
  %1650 = vrot.lane.b32.xlu0 %v1478, 32
  %v1651 = vpop.permute.xlu0 %1650
  %1652 = vrot.lane.b32.xlu0 %v1479, 32
  %v1653 = vpop.permute.xlu0 %1652
  %1654 = vrot.lane.b32.xlu0 %v1480, 32
  %v1655 = vpop.permute.xlu0 %1654
  %1656 = vrot.lane.b32.xlu0 %v1481, 32
  %v1657 = vpop.permute.xlu0 %1656
  %1658 = vrot.lane.b32.xlu0 %v1482, 32
  %v1659 = vpop.permute.xlu0 %1658
  %1660 = vrot.lane.b32.xlu0 %v1483, 32
  %v1661 = vpop.permute.xlu0 %1660
  %1662 = vrot.lane.b32.xlu0 %v1484, 32
  %v1663 = vpop.permute.xlu0 %1662
  %1664 = vrot.lane.b32.xlu0 %v1485, 32
  %v1665 = vpop.permute.xlu0 %1664
  %1666 = vrot.lane.b32.xlu0 %v1486, 32
  %v1667 = vpop.permute.xlu0 %1666
  %1668 = vrot.lane.b32.xlu0 %v1487, 32
  %v1669 = vpop.permute.xlu0 %1668
  %1670 = vrot.lane.b32.xlu0 %v1488, 32
  %v1671 = vpop.permute.xlu0 %1670
  %1672 = vrot.lane.b32.xlu0 %v1489, 32
  %v1673 = vpop.permute.xlu0 %1672
  %1674 = vrot.lane.b32.xlu0 %v1490, 32
  %v1675 = vpop.permute.xlu0 %1674
  %1676 = vrot.lane.b32.xlu0 %v1491, 32
  %v1677 = vpop.permute.xlu0 %1676
  %1678 = vrot.lane.b32.xlu0 %v1492, 32
  %v1679 = vpop.permute.xlu0 %1678
  %1680 = vrot.lane.b32.xlu0 %v1493, 32
  %v1681 = vpop.permute.xlu0 %1680
  %1682 = vrot.lane.b32.xlu0 %v1494, 32
  %v1683 = vpop.permute.xlu0 %1682
  %1684 = vrot.lane.b32.xlu0 %v1495, 32
  %v1685 = vpop.permute.xlu0 %1684
  %1686 = vrot.lane.b32.xlu0 %v1496, 32
  %v1687 = vpop.permute.xlu0 %1686
  %1688 = vrot.lane.b32.xlu0 %v1497, 32
  %v1689 = vpop.permute.xlu0 %1688
  %1754 = vst.msk [vmem:[#allocation2 + $0x8] sm:$0xff] %vm470, %v1563
  %1755 = vst.msk [vmem:[#allocation2 + $0x20] sm:$0xff] %vm470, %v1565
  %1756 = vst.msk [vmem:[#allocation2 + $0x38] sm:$0xff] %vm470, %v1567
  %1757 = vst.msk [vmem:[#allocation2 + $0x50] sm:$0xff] %vm470, %v1569
  %1758 = vst.msk [vmem:[#allocation2 + $0x68] sm:$0xff] %vm470, %v1571
  %1759 = vst.msk [vmem:[#allocation2 + $0x80] sm:$0xff] %vm470, %v1573
  %1760 = vst.msk [vmem:[#allocation2 + $0x98] sm:$0xff] %vm470, %v1575
  %1761 = vst.msk [vmem:[#allocation2 + $0xb0] sm:$0xff] %vm470, %v1577
  %1762 = vst.msk [vmem:[#allocation2 + $0xc8] sm:$0xff] %vm470, %v1579
  %1763 = vst.msk [vmem:[#allocation2 + $0xe0] sm:$0xff] %vm470, %v1581
  %1764 = vst.msk [vmem:[#allocation2 + $0xf8] sm:$0xff] %vm470, %v1583
  %1765 = vst.msk [vmem:[#allocation2 + $0x110] sm:$0xff] %vm470, %v1585
  %1766 = vst.msk [vmem:[#allocation2 + $0x128] sm:$0xff] %vm470, %v1587
  %1767 = vst.msk [vmem:[#allocation2 + $0x140] sm:$0xff] %vm470, %v1589
  %1768 = vst.msk [vmem:[#allocation2 + $0x158] sm:$0xff] %vm470, %v1591
  %1769 = vst.msk [vmem:[#allocation2 + $0x170] sm:$0xff] %vm470, %v1593
  %1770 = vst.msk [vmem:[#allocation2 + $0x188] sm:$0xff] %vm470, %v1595
  %1771 = vst.msk [vmem:[#allocation2 + $0x1a0] sm:$0xff] %vm470, %v1597
  %1772 = vst.msk [vmem:[#allocation2 + $0x1b8] sm:$0xff] %vm470, %v1599
  %1773 = vst.msk [vmem:[#allocation2 + $0x1d0] sm:$0xff] %vm470, %v1601
  %1774 = vst.msk [vmem:[#allocation2 + $0x1e8] sm:$0xff] %vm470, %v1603
  %1775 = vst.msk [vmem:[#allocation2 + $0x200] sm:$0xff] %vm470, %v1605
  %1776 = vst.msk [vmem:[#allocation2 + $0x218] sm:$0xff] %vm470, %v1607
  %1777 = vst.msk [vmem:[#allocation2 + $0x230] sm:$0xff] %vm470, %v1609
  %1778 = vst.msk [vmem:[#allocation2 + $0x248] sm:$0xff] %vm470, %v1611
  %1779 = vst.msk [vmem:[#allocation2 + $0x260] sm:$0xff] %vm470, %v1613
  %1780 = vst.msk [vmem:[#allocation2 + $0x278] sm:$0xff] %vm470, %v1615
  %1781 = vst.msk [vmem:[#allocation2 + $0x290] sm:$0xff] %vm470, %v1617
  %1782 = vst.msk [vmem:[#allocation2 + $0x2a8] sm:$0xff] %vm470, %v1619
  %1783 = vst.msk [vmem:[#allocation2 + $0x2c0] sm:$0xff] %vm470, %v1621
  %1784 = vst.msk [vmem:[#allocation2 + $0x2d8] sm:$0xff] %vm470, %v1623
  %1785 = vst.msk [vmem:[#allocation2 + $0x2f0] sm:$0xff] %vm470, %v1625
  %1786 = vst.msk [vmem:[#allocation2 + $0x308] sm:$0xff] %vm470, %v1627
  %1787 = vst.msk [vmem:[#allocation2 + $0x320] sm:$0xff] %vm470, %v1629
  %1788 = vst.msk [vmem:[#allocation2 + $0x338] sm:$0xff] %vm470, %v1631
  %1789 = vst.msk [vmem:[#allocation2 + $0x350] sm:$0xff] %vm470, %v1633
  %1790 = vst.msk [vmem:[#allocation2 + $0x368] sm:$0xff] %vm470, %v1635
  %1791 = vst.msk [vmem:[#allocation2 + $0x380] sm:$0xff] %vm470, %v1637
  %1792 = vst.msk [vmem:[#allocation2 + $0x398] sm:$0xff] %vm470, %v1639
  %1793 = vst.msk [vmem:[#allocation2 + $0x3b0] sm:$0xff] %vm470, %v1641
  %1794 = vst.msk [vmem:[#allocation2 + $0x3c8] sm:$0xff] %vm470, %v1643
  %1795 = vst.msk [vmem:[#allocation2 + $0x3e0] sm:$0xff] %vm470, %v1645
  %1796 = vst.msk [vmem:[#allocation2 + $0x3f8] sm:$0xff] %vm470, %v1647
  %1797 = vst.msk [vmem:[#allocation2 + $0x410] sm:$0xff] %vm470, %v1649
  %1798 = vst.msk [vmem:[#allocation2 + $0x428] sm:$0xff] %vm470, %v1651
  %1799 = vst.msk [vmem:[#allocation2 + $0x440] sm:$0xff] %vm470, %v1653
  %1800 = vst.msk [vmem:[#allocation2 + $0x458] sm:$0xff] %vm470, %v1655
  %1801 = vst.msk [vmem:[#allocation2 + $0x470] sm:$0xff] %vm470, %v1657
  %1802 = vst.msk [vmem:[#allocation2 + $0x488] sm:$0xff] %vm470, %v1659
  %1803 = vst.msk [vmem:[#allocation2 + $0x4a0] sm:$0xff] %vm470, %v1661
  %1804 = vst.msk [vmem:[#allocation2 + $0x4b8] sm:$0xff] %vm470, %v1663
  %1805 = vst.msk [vmem:[#allocation2 + $0x4d0] sm:$0xff] %vm470, %v1665
  %1806 = vst.msk [vmem:[#allocation2 + $0x4e8] sm:$0xff] %vm470, %v1667
  %1807 = vst.msk [vmem:[#allocation2 + $0x500] sm:$0xff] %vm470, %v1669
  %1808 = vst.msk [vmem:[#allocation2 + $0x518] sm:$0xff] %vm470, %v1671
  %1809 = vst.msk [vmem:[#allocation2 + $0x530] sm:$0xff] %vm470, %v1673
  %1810 = vst.msk [vmem:[#allocation2 + $0x548] sm:$0xff] %vm470, %v1675
  %1811 = vst.msk [vmem:[#allocation2 + $0x560] sm:$0xff] %vm470, %v1677
  %1812 = vst.msk [vmem:[#allocation2 + $0x578] sm:$0xff] %vm470, %v1679
  %1813 = vst.msk [vmem:[#allocation2 + $0x590] sm:$0xff] %vm470, %v1681
  %1814 = vst.msk [vmem:[#allocation2 + $0x5a8] sm:$0xff] %vm470, %v1683
  %1815 = vst.msk [vmem:[#allocation2 + $0x5c0] sm:$0xff] %vm470, %v1685
  %1816 = vst.msk [vmem:[#allocation2 + $0x5d8] sm:$0xff] %vm470, %v1687
  %1817 = vst.msk [vmem:[#allocation2 + $0x5f0] sm:$0xff] %vm470, %v1689
  %s1818 = scalar_lea.vmem %s0, 48
  %v1819 = vld [vmem:[%s1818] sm:$0xff]
  %v1820 = vld [vmem:[%s1818 + $0x8] sm:$0xff]
  %v1821 = vld [vmem:[%s1818 + $0x18] sm:$0xff]
  %v1822 = vld [vmem:[%s1818 + $0x20] sm:$0xff]
  %v1823 = vld [vmem:[%s1818 + $0x30] sm:$0xff]
  %v1824 = vld [vmem:[%s1818 + $0x38] sm:$0xff]
  %v1825 = vld [vmem:[%s1818 + $0x48] sm:$0xff]
  %v1826 = vld [vmem:[%s1818 + $0x50] sm:$0xff]
  %v1827 = vld [vmem:[%s1818 + $0x60] sm:$0xff]
  %v1828 = vld [vmem:[%s1818 + $0x68] sm:$0xff]
  %v1829 = vld [vmem:[%s1818 + $0x78] sm:$0xff]
  %v1830 = vld [vmem:[%s1818 + $0x80] sm:$0xff]
  %v1831 = vld [vmem:[%s1818 + $0x90] sm:$0xff]
  %v1832 = vld [vmem:[%s1818 + $0x98] sm:$0xff]
  %v1833 = vld [vmem:[%s1818 + $0xa8] sm:$0xff]
  %v1834 = vld [vmem:[%s1818 + $0xb0] sm:$0xff]
  %v1835 = vld [vmem:[%s1818 + $0xc0] sm:$0xff]
  %v1836 = vld [vmem:[%s1818 + $0xc8] sm:$0xff]
  %v1837 = vld [vmem:[%s1818 + $0xd8] sm:$0xff]
  %v1838 = vld [vmem:[%s1818 + $0xe0] sm:$0xff]
  %v1839 = vld [vmem:[%s1818 + $0xf0] sm:$0xff]
  %v1840 = vld [vmem:[%s1818 + $0xf8] sm:$0xff]
  %v1841 = vld [vmem:[%s1818 + $0x108] sm:$0xff]
  %v1842 = vld [vmem:[%s1818 + $0x110] sm:$0xff]
  %v1843 = vld [vmem:[%s1818 + $0x120] sm:$0xff]
  %v1844 = vld [vmem:[%s1818 + $0x128] sm:$0xff]
  %v1845 = vld [vmem:[%s1818 + $0x138] sm:$0xff]
  %v1846 = vld [vmem:[%s1818 + $0x140] sm:$0xff]
  %v1847 = vld [vmem:[%s1818 + $0x150] sm:$0xff]
  %v1848 = vld [vmem:[%s1818 + $0x158] sm:$0xff]
  %v1849 = vld [vmem:[%s1818 + $0x168] sm:$0xff]
  %v1850 = vld [vmem:[%s1818 + $0x170] sm:$0xff]
  %v1851 = vld [vmem:[%s1818 + $0x1b0] sm:$0xff]
  %v1852 = vld [vmem:[%s1818 + $0x1b8] sm:$0xff]
  %v1853 = vld [vmem:[%s1818 + $0x1c8] sm:$0xff]
  %v1854 = vld [vmem:[%s1818 + $0x1d0] sm:$0xff]
  %v1855 = vld [vmem:[%s1818 + $0x1e0] sm:$0xff]
  %v1856 = vld [vmem:[%s1818 + $0x1e8] sm:$0xff]
  %v1857 = vld [vmem:[%s1818 + $0x1f8] sm:$0xff]
  %v1858 = vld [vmem:[%s1818 + $0x200] sm:$0xff]
  %v1859 = vld [vmem:[%s1818 + $0x210] sm:$0xff]
  %v1860 = vld [vmem:[%s1818 + $0x218] sm:$0xff]
  %v1861 = vld [vmem:[%s1818 + $0x228] sm:$0xff]
  %v1862 = vld [vmem:[%s1818 + $0x230] sm:$0xff]
  %v1863 = vld [vmem:[%s1818 + $0x240] sm:$0xff]
  %v1864 = vld [vmem:[%s1818 + $0x248] sm:$0xff]
  %v1865 = vld [vmem:[%s1818 + $0x258] sm:$0xff]
  %v1866 = vld [vmem:[%s1818 + $0x260] sm:$0xff]
  %v1867 = vld [vmem:[%s1818 + $0x270] sm:$0xff]
  %v1868 = vld [vmem:[%s1818 + $0x278] sm:$0xff]
  %v1869 = vld [vmem:[%s1818 + $0x288] sm:$0xff]
  %v1870 = vld [vmem:[%s1818 + $0x290] sm:$0xff]
  %v1871 = vld [vmem:[%s1818 + $0x2a0] sm:$0xff]
  %v1872 = vld [vmem:[%s1818 + $0x2a8] sm:$0xff]
  %v1873 = vld [vmem:[%s1818 + $0x2b8] sm:$0xff]
  %v1874 = vld [vmem:[%s1818 + $0x2c0] sm:$0xff]
  %v1875 = vld [vmem:[%s1818 + $0x2d0] sm:$0xff]
  %v1876 = vld [vmem:[%s1818 + $0x2d8] sm:$0xff]
  %v1877 = vld [vmem:[%s1818 + $0x2e8] sm:$0xff]
  %v1878 = vld [vmem:[%s1818 + $0x2f0] sm:$0xff]
  %v1879 = vld [vmem:[%s1818 + $0x300] sm:$0xff]
  %v1880 = vld [vmem:[%s1818 + $0x308] sm:$0xff]
  %v1881 = vld [vmem:[%s1818 + $0x318] sm:$0xff]
  %v1882 = vld [vmem:[%s1818 + $0x320] sm:$0xff]
  %1947 = vrot.lane.b32.xlu0 %v1819, 64
  %v1948 = vpop.permute.xlu0 %1947
  %1949 = vrot.lane.b32.xlu0 %v1820, 64
  %v1950 = vpop.permute.xlu0 %1949
  %1951 = vrot.lane.b32.xlu0 %v1821, 64
  %v1952 = vpop.permute.xlu0 %1951
  %1953 = vrot.lane.b32.xlu0 %v1822, 64
  %v1954 = vpop.permute.xlu0 %1953
  %1955 = vrot.lane.b32.xlu0 %v1823, 64
  %v1956 = vpop.permute.xlu0 %1955
  %1957 = vrot.lane.b32.xlu0 %v1824, 64
  %v1958 = vpop.permute.xlu0 %1957
  %1959 = vrot.lane.b32.xlu0 %v1825, 64
  %v1960 = vpop.permute.xlu0 %1959
  %1961 = vrot.lane.b32.xlu0 %v1826, 64
  %v1962 = vpop.permute.xlu0 %1961
  %1963 = vrot.lane.b32.xlu0 %v1827, 64
  %v1964 = vpop.permute.xlu0 %1963
  %1965 = vrot.lane.b32.xlu0 %v1828, 64
  %v1966 = vpop.permute.xlu0 %1965
  %1967 = vrot.lane.b32.xlu0 %v1829, 64
  %v1968 = vpop.permute.xlu0 %1967
  %1969 = vrot.lane.b32.xlu0 %v1830, 64
  %v1970 = vpop.permute.xlu0 %1969
  %1971 = vrot.lane.b32.xlu0 %v1831, 64
  %v1972 = vpop.permute.xlu0 %1971
  %1973 = vrot.lane.b32.xlu0 %v1832, 64
  %v1974 = vpop.permute.xlu0 %1973
  %1975 = vrot.lane.b32.xlu0 %v1833, 64
  %v1976 = vpop.permute.xlu0 %1975
  %1977 = vrot.lane.b32.xlu0 %v1834, 64
  %v1978 = vpop.permute.xlu0 %1977
  %1979 = vrot.lane.b32.xlu0 %v1835, 64
  %v1980 = vpop.permute.xlu0 %1979
  %1981 = vrot.lane.b32.xlu0 %v1836, 64
  %v1982 = vpop.permute.xlu0 %1981
  %1983 = vrot.lane.b32.xlu0 %v1837, 64
  %v1984 = vpop.permute.xlu0 %1983
  %1985 = vrot.lane.b32.xlu0 %v1838, 64
  %v1986 = vpop.permute.xlu0 %1985
  %1987 = vrot.lane.b32.xlu0 %v1839, 64
  %v1988 = vpop.permute.xlu0 %1987
  %1989 = vrot.lane.b32.xlu0 %v1840, 64
  %v1990 = vpop.permute.xlu0 %1989
  %1991 = vrot.lane.b32.xlu0 %v1841, 64
  %v1992 = vpop.permute.xlu0 %1991
  %1993 = vrot.lane.b32.xlu0 %v1842, 64
  %v1994 = vpop.permute.xlu0 %1993
  %1995 = vrot.lane.b32.xlu0 %v1843, 64
  %v1996 = vpop.permute.xlu0 %1995
  %1997 = vrot.lane.b32.xlu0 %v1844, 64
  %v1998 = vpop.permute.xlu0 %1997
  %1999 = vrot.lane.b32.xlu0 %v1845, 64
  %v2000 = vpop.permute.xlu0 %1999
  %2001 = vrot.lane.b32.xlu0 %v1846, 64
  %v2002 = vpop.permute.xlu0 %2001
  %2003 = vrot.lane.b32.xlu0 %v1847, 64
  %v2004 = vpop.permute.xlu0 %2003
  %2005 = vrot.lane.b32.xlu0 %v1848, 64
  %v2006 = vpop.permute.xlu0 %2005
  %2007 = vrot.lane.b32.xlu0 %v1849, 64
  %v2008 = vpop.permute.xlu0 %2007
  %2009 = vrot.lane.b32.xlu0 %v1850, 64
  %v2010 = vpop.permute.xlu0 %2009
  %2011 = vrot.lane.b32.xlu0 %v1851, 64
  %v2012 = vpop.permute.xlu0 %2011
  %2013 = vrot.lane.b32.xlu0 %v1852, 64
  %v2014 = vpop.permute.xlu0 %2013
  %2015 = vrot.lane.b32.xlu0 %v1853, 64
  %v2016 = vpop.permute.xlu0 %2015
  %2017 = vrot.lane.b32.xlu0 %v1854, 64
  %v2018 = vpop.permute.xlu0 %2017
  %2019 = vrot.lane.b32.xlu0 %v1855, 64
  %v2020 = vpop.permute.xlu0 %2019
  %2021 = vrot.lane.b32.xlu0 %v1856, 64
  %v2022 = vpop.permute.xlu0 %2021
  %2023 = vrot.lane.b32.xlu0 %v1857, 64
  %v2024 = vpop.permute.xlu0 %2023
  %2025 = vrot.lane.b32.xlu0 %v1858, 64
  %v2026 = vpop.permute.xlu0 %2025
  %2027 = vrot.lane.b32.xlu0 %v1859, 64
  %v2028 = vpop.permute.xlu0 %2027
  %2029 = vrot.lane.b32.xlu0 %v1860, 64
  %v2030 = vpop.permute.xlu0 %2029
  %2031 = vrot.lane.b32.xlu0 %v1861, 64
  %v2032 = vpop.permute.xlu0 %2031
  %2033 = vrot.lane.b32.xlu0 %v1862, 64
  %v2034 = vpop.permute.xlu0 %2033
  %2035 = vrot.lane.b32.xlu0 %v1863, 64
  %v2036 = vpop.permute.xlu0 %2035
  %2037 = vrot.lane.b32.xlu0 %v1864, 64
  %v2038 = vpop.permute.xlu0 %2037
  %2039 = vrot.lane.b32.xlu0 %v1865, 64
  %v2040 = vpop.permute.xlu0 %2039
  %2041 = vrot.lane.b32.xlu0 %v1866, 64
  %v2042 = vpop.permute.xlu0 %2041
  %2043 = vrot.lane.b32.xlu0 %v1867, 64
  %v2044 = vpop.permute.xlu0 %2043
  %2045 = vrot.lane.b32.xlu0 %v1868, 64
  %v2046 = vpop.permute.xlu0 %2045
  %2047 = vrot.lane.b32.xlu0 %v1869, 64
  %v2048 = vpop.permute.xlu0 %2047
  %2049 = vrot.lane.b32.xlu0 %v1870, 64
  %v2050 = vpop.permute.xlu0 %2049
  %2051 = vrot.lane.b32.xlu0 %v1871, 64
  %v2052 = vpop.permute.xlu0 %2051
  %2053 = vrot.lane.b32.xlu0 %v1872, 64
  %v2054 = vpop.permute.xlu0 %2053
  %2055 = vrot.lane.b32.xlu0 %v1873, 64
  %v2056 = vpop.permute.xlu0 %2055
  %2057 = vrot.lane.b32.xlu0 %v1874, 64
  %v2058 = vpop.permute.xlu0 %2057
  %2059 = vrot.lane.b32.xlu0 %v1875, 64
  %v2060 = vpop.permute.xlu0 %2059
  %2061 = vrot.lane.b32.xlu0 %v1876, 64
  %v2062 = vpop.permute.xlu0 %2061
  %2063 = vrot.lane.b32.xlu0 %v1877, 64
  %v2064 = vpop.permute.xlu0 %2063
  %2065 = vrot.lane.b32.xlu0 %v1878, 64
  %v2066 = vpop.permute.xlu0 %2065
  %2067 = vrot.lane.b32.xlu0 %v1879, 64
  %v2068 = vpop.permute.xlu0 %2067
  %2069 = vrot.lane.b32.xlu0 %v1880, 64
  %v2070 = vpop.permute.xlu0 %2069
  %2071 = vrot.lane.b32.xlu0 %v1881, 64
  %v2072 = vpop.permute.xlu0 %2071
  %2073 = vrot.lane.b32.xlu0 %v1882, 64
  %v2074 = vpop.permute.xlu0 %2073
  %2139 = vst.msk [vmem:[#allocation2 + $0x8] sm:$0xff] %vm855, %v1948
  %2140 = vst.msk [vmem:[#allocation2 + $0x20] sm:$0xff] %vm855, %v1950
  %2141 = vst.msk [vmem:[#allocation2 + $0x38] sm:$0xff] %vm855, %v1952
  %2142 = vst.msk [vmem:[#allocation2 + $0x50] sm:$0xff] %vm855, %v1954
  %2143 = vst.msk [vmem:[#allocation2 + $0x68] sm:$0xff] %vm855, %v1956
  %2144 = vst.msk [vmem:[#allocation2 + $0x80] sm:$0xff] %vm855, %v1958
  %2145 = vst.msk [vmem:[#allocation2 + $0x98] sm:$0xff] %vm855, %v1960
  %2146 = vst.msk [vmem:[#allocation2 + $0xb0] sm:$0xff] %vm855, %v1962
  %2147 = vst.msk [vmem:[#allocation2 + $0xc8] sm:$0xff] %vm855, %v1964
  %2148 = vst.msk [vmem:[#allocation2 + $0xe0] sm:$0xff] %vm855, %v1966
  %2149 = vst.msk [vmem:[#allocation2 + $0xf8] sm:$0xff] %vm855, %v1968
  %2150 = vst.msk [vmem:[#allocation2 + $0x110] sm:$0xff] %vm855, %v1970
  %2151 = vst.msk [vmem:[#allocation2 + $0x128] sm:$0xff] %vm855, %v1972
  %2152 = vst.msk [vmem:[#allocation2 + $0x140] sm:$0xff] %vm855, %v1974
  %2153 = vst.msk [vmem:[#allocation2 + $0x158] sm:$0xff] %vm855, %v1976
  %2154 = vst.msk [vmem:[#allocation2 + $0x170] sm:$0xff] %vm855, %v1978
  %2155 = vst.msk [vmem:[#allocation2 + $0x188] sm:$0xff] %vm855, %v1980
  %2156 = vst.msk [vmem:[#allocation2 + $0x1a0] sm:$0xff] %vm855, %v1982
  %2157 = vst.msk [vmem:[#allocation2 + $0x1b8] sm:$0xff] %vm855, %v1984
  %2158 = vst.msk [vmem:[#allocation2 + $0x1d0] sm:$0xff] %vm855, %v1986
  %2159 = vst.msk [vmem:[#allocation2 + $0x1e8] sm:$0xff] %vm855, %v1988
  %2160 = vst.msk [vmem:[#allocation2 + $0x200] sm:$0xff] %vm855, %v1990
  %2161 = vst.msk [vmem:[#allocation2 + $0x218] sm:$0xff] %vm855, %v1992
  %2162 = vst.msk [vmem:[#allocation2 + $0x230] sm:$0xff] %vm855, %v1994
  %2163 = vst.msk [vmem:[#allocation2 + $0x248] sm:$0xff] %vm855, %v1996
  %2164 = vst.msk [vmem:[#allocation2 + $0x260] sm:$0xff] %vm855, %v1998
  %2165 = vst.msk [vmem:[#allocation2 + $0x278] sm:$0xff] %vm855, %v2000
  %2166 = vst.msk [vmem:[#allocation2 + $0x290] sm:$0xff] %vm855, %v2002
  %2167 = vst.msk [vmem:[#allocation2 + $0x2a8] sm:$0xff] %vm855, %v2004
  %2168 = vst.msk [vmem:[#allocation2 + $0x2c0] sm:$0xff] %vm855, %v2006
  %2169 = vst.msk [vmem:[#allocation2 + $0x2d8] sm:$0xff] %vm855, %v2008
  %2170 = vst.msk [vmem:[#allocation2 + $0x2f0] sm:$0xff] %vm855, %v2010
  %2171 = vst.msk [vmem:[#allocation2 + $0x308] sm:$0xff] %vm855, %v2012
  %2172 = vst.msk [vmem:[#allocation2 + $0x320] sm:$0xff] %vm855, %v2014
  %2173 = vst.msk [vmem:[#allocation2 + $0x338] sm:$0xff] %vm855, %v2016
  %2174 = vst.msk [vmem:[#allocation2 + $0x350] sm:$0xff] %vm855, %v2018
  %2175 = vst.msk [vmem:[#allocation2 + $0x368] sm:$0xff] %vm855, %v2020
  %2176 = vst.msk [vmem:[#allocation2 + $0x380] sm:$0xff] %vm855, %v2022
  %2177 = vst.msk [vmem:[#allocation2 + $0x398] sm:$0xff] %vm855, %v2024
  %2178 = vst.msk [vmem:[#allocation2 + $0x3b0] sm:$0xff] %vm855, %v2026
  %2179 = vst.msk [vmem:[#allocation2 + $0x3c8] sm:$0xff] %vm855, %v2028
  %2180 = vst.msk [vmem:[#allocation2 + $0x3e0] sm:$0xff] %vm855, %v2030
  %2181 = vst.msk [vmem:[#allocation2 + $0x3f8] sm:$0xff] %vm855, %v2032
  %2182 = vst.msk [vmem:[#allocation2 + $0x410] sm:$0xff] %vm855, %v2034
  %2183 = vst.msk [vmem:[#allocation2 + $0x428] sm:$0xff] %vm855, %v2036
  %2184 = vst.msk [vmem:[#allocation2 + $0x440] sm:$0xff] %vm855, %v2038
  %2185 = vst.msk [vmem:[#allocation2 + $0x458] sm:$0xff] %vm855, %v2040
  %2186 = vst.msk [vmem:[#allocation2 + $0x470] sm:$0xff] %vm855, %v2042
  %2187 = vst.msk [vmem:[#allocation2 + $0x488] sm:$0xff] %vm855, %v2044
  %2188 = vst.msk [vmem:[#allocation2 + $0x4a0] sm:$0xff] %vm855, %v2046
  %2189 = vst.msk [vmem:[#allocation2 + $0x4b8] sm:$0xff] %vm855, %v2048
  %2190 = vst.msk [vmem:[#allocation2 + $0x4d0] sm:$0xff] %vm855, %v2050
  %2191 = vst.msk [vmem:[#allocation2 + $0x4e8] sm:$0xff] %vm855, %v2052
  %2192 = vst.msk [vmem:[#allocation2 + $0x500] sm:$0xff] %vm855, %v2054
  %2193 = vst.msk [vmem:[#allocation2 + $0x518] sm:$0xff] %vm855, %v2056
  %2194 = vst.msk [vmem:[#allocation2 + $0x530] sm:$0xff] %vm855, %v2058
  %2195 = vst.msk [vmem:[#allocation2 + $0x548] sm:$0xff] %vm855, %v2060
  %2196 = vst.msk [vmem:[#allocation2 + $0x560] sm:$0xff] %vm855, %v2062
  %2197 = vst.msk [vmem:[#allocation2 + $0x578] sm:$0xff] %vm855, %v2064
  %2198 = vst.msk [vmem:[#allocation2 + $0x590] sm:$0xff] %vm855, %v2066
  %2199 = vst.msk [vmem:[#allocation2 + $0x5a8] sm:$0xff] %vm855, %v2068
  %2200 = vst.msk [vmem:[#allocation2 + $0x5c0] sm:$0xff] %vm855, %v2070
  %2201 = vst.msk [vmem:[#allocation2 + $0x5d8] sm:$0xff] %vm855, %v2072
  %2202 = vst.msk [vmem:[#allocation2 + $0x5f0] sm:$0xff] %vm855, %v2074
  %v2203 = vld [vmem:[%s1818 + $0x1] sm:$0xff]
  %v2204 = vld [vmem:[%s1818 + $0x9] sm:$0xff]
  %v2205 = vld [vmem:[%s1818 + $0x19] sm:$0xff]
  %v2206 = vld [vmem:[%s1818 + $0x21] sm:$0xff]
  %v2207 = vld [vmem:[%s1818 + $0x31] sm:$0xff]
  %v2208 = vld [vmem:[%s1818 + $0x39] sm:$0xff]
  %v2209 = vld [vmem:[%s1818 + $0x49] sm:$0xff]
  %v2210 = vld [vmem:[%s1818 + $0x51] sm:$0xff]
  %v2211 = vld [vmem:[%s1818 + $0x61] sm:$0xff]
  %v2212 = vld [vmem:[%s1818 + $0x69] sm:$0xff]
  %v2213 = vld [vmem:[%s1818 + $0x79] sm:$0xff]
  %v2214 = vld [vmem:[%s1818 + $0x81] sm:$0xff]
  %v2215 = vld [vmem:[%s1818 + $0x91] sm:$0xff]
  %v2216 = vld [vmem:[%s1818 + $0x99] sm:$0xff]
  %v2217 = vld [vmem:[%s1818 + $0xa9] sm:$0xff]
  %v2218 = vld [vmem:[%s1818 + $0xb1] sm:$0xff]
  %v2219 = vld [vmem:[%s1818 + $0xc1] sm:$0xff]
  %v2220 = vld [vmem:[%s1818 + $0xc9] sm:$0xff]
  %v2221 = vld [vmem:[%s1818 + $0xd9] sm:$0xff]
  %v2222 = vld [vmem:[%s1818 + $0xe1] sm:$0xff]
  %v2223 = vld [vmem:[%s1818 + $0xf1] sm:$0xff]
  %v2224 = vld [vmem:[%s1818 + $0xf9] sm:$0xff]
  %v2225 = vld [vmem:[%s1818 + $0x109] sm:$0xff]
  %v2226 = vld [vmem:[%s1818 + $0x111] sm:$0xff]
  %v2227 = vld [vmem:[%s1818 + $0x121] sm:$0xff]
  %v2228 = vld [vmem:[%s1818 + $0x129] sm:$0xff]
  %v2229 = vld [vmem:[%s1818 + $0x139] sm:$0xff]
  %v2230 = vld [vmem:[%s1818 + $0x141] sm:$0xff]
  %v2231 = vld [vmem:[%s1818 + $0x151] sm:$0xff]
  %v2232 = vld [vmem:[%s1818 + $0x159] sm:$0xff]
  %v2233 = vld [vmem:[%s1818 + $0x169] sm:$0xff]
  %v2234 = vld [vmem:[%s1818 + $0x171] sm:$0xff]
  %v2235 = vld [vmem:[%s1818 + $0x1b1] sm:$0xff]
  %v2236 = vld [vmem:[%s1818 + $0x1b9] sm:$0xff]
  %v2237 = vld [vmem:[%s1818 + $0x1c9] sm:$0xff]
  %v2238 = vld [vmem:[%s1818 + $0x1d1] sm:$0xff]
  %v2239 = vld [vmem:[%s1818 + $0x1e1] sm:$0xff]
  %v2240 = vld [vmem:[%s1818 + $0x1e9] sm:$0xff]
  %v2241 = vld [vmem:[%s1818 + $0x1f9] sm:$0xff]
  %v2242 = vld [vmem:[%s1818 + $0x201] sm:$0xff]
  %v2243 = vld [vmem:[%s1818 + $0x211] sm:$0xff]
  %v2244 = vld [vmem:[%s1818 + $0x219] sm:$0xff]
  %v2245 = vld [vmem:[%s1818 + $0x229] sm:$0xff]
  %v2246 = vld [vmem:[%s1818 + $0x231] sm:$0xff]
  %v2247 = vld [vmem:[%s1818 + $0x241] sm:$0xff]
  %v2248 = vld [vmem:[%s1818 + $0x249] sm:$0xff]
  %v2249 = vld [vmem:[%s1818 + $0x259] sm:$0xff]
  %v2250 = vld [vmem:[%s1818 + $0x261] sm:$0xff]
  %v2251 = vld [vmem:[%s1818 + $0x271] sm:$0xff]
  %v2252 = vld [vmem:[%s1818 + $0x279] sm:$0xff]
  %v2253 = vld [vmem:[%s1818 + $0x289] sm:$0xff]
  %v2254 = vld [vmem:[%s1818 + $0x291] sm:$0xff]
  %v2255 = vld [vmem:[%s1818 + $0x2a1] sm:$0xff]
  %v2256 = vld [vmem:[%s1818 + $0x2a9] sm:$0xff]
  %v2257 = vld [vmem:[%s1818 + $0x2b9] sm:$0xff]
  %v2258 = vld [vmem:[%s1818 + $0x2c1] sm:$0xff]
  %v2259 = vld [vmem:[%s1818 + $0x2d1] sm:$0xff]
  %v2260 = vld [vmem:[%s1818 + $0x2d9] sm:$0xff]
  %v2261 = vld [vmem:[%s1818 + $0x2e9] sm:$0xff]
  %v2262 = vld [vmem:[%s1818 + $0x2f1] sm:$0xff]
  %v2263 = vld [vmem:[%s1818 + $0x301] sm:$0xff]
  %v2264 = vld [vmem:[%s1818 + $0x309] sm:$0xff]
  %v2265 = vld [vmem:[%s1818 + $0x319] sm:$0xff]
  %v2266 = vld [vmem:[%s1818 + $0x321] sm:$0xff]
  %2331 = vrot.lane.b32.xlu0 %v2203, 96
  %v2332 = vpop.permute.xlu0 %2331
  %2333 = vrot.lane.b32.xlu0 %v2204, 96
  %v2334 = vpop.permute.xlu0 %2333
  %2335 = vrot.lane.b32.xlu0 %v2205, 96
  %v2336 = vpop.permute.xlu0 %2335
  %2337 = vrot.lane.b32.xlu0 %v2206, 96
  %v2338 = vpop.permute.xlu0 %2337
  %2339 = vrot.lane.b32.xlu0 %v2207, 96
  %v2340 = vpop.permute.xlu0 %2339
  %2341 = vrot.lane.b32.xlu0 %v2208, 96
  %v2342 = vpop.permute.xlu0 %2341
  %2343 = vrot.lane.b32.xlu0 %v2209, 96
  %v2344 = vpop.permute.xlu0 %2343
  %2345 = vrot.lane.b32.xlu0 %v2210, 96
  %v2346 = vpop.permute.xlu0 %2345
  %2347 = vrot.lane.b32.xlu0 %v2211, 96
  %v2348 = vpop.permute.xlu0 %2347
  %2349 = vrot.lane.b32.xlu0 %v2212, 96
  %v2350 = vpop.permute.xlu0 %2349
  %2351 = vrot.lane.b32.xlu0 %v2213, 96
  %v2352 = vpop.permute.xlu0 %2351
  %2353 = vrot.lane.b32.xlu0 %v2214, 96
  %v2354 = vpop.permute.xlu0 %2353
  %2355 = vrot.lane.b32.xlu0 %v2215, 96
  %v2356 = vpop.permute.xlu0 %2355
  %2357 = vrot.lane.b32.xlu0 %v2216, 96
  %v2358 = vpop.permute.xlu0 %2357
  %2359 = vrot.lane.b32.xlu0 %v2217, 96
  %v2360 = vpop.permute.xlu0 %2359
  %2361 = vrot.lane.b32.xlu0 %v2218, 96
  %v2362 = vpop.permute.xlu0 %2361
  %2363 = vrot.lane.b32.xlu0 %v2219, 96
  %v2364 = vpop.permute.xlu0 %2363
  %2365 = vrot.lane.b32.xlu0 %v2220, 96
  %v2366 = vpop.permute.xlu0 %2365
  %2367 = vrot.lane.b32.xlu0 %v2221, 96
  %v2368 = vpop.permute.xlu0 %2367
  %2369 = vrot.lane.b32.xlu0 %v2222, 96
  %v2370 = vpop.permute.xlu0 %2369
  %2371 = vrot.lane.b32.xlu0 %v2223, 96
  %v2372 = vpop.permute.xlu0 %2371
  %2373 = vrot.lane.b32.xlu0 %v2224, 96
  %v2374 = vpop.permute.xlu0 %2373
  %2375 = vrot.lane.b32.xlu0 %v2225, 96
  %v2376 = vpop.permute.xlu0 %2375
  %2377 = vrot.lane.b32.xlu0 %v2226, 96
  %v2378 = vpop.permute.xlu0 %2377
  %2379 = vrot.lane.b32.xlu0 %v2227, 96
  %v2380 = vpop.permute.xlu0 %2379
  %2381 = vrot.lane.b32.xlu0 %v2228, 96
  %v2382 = vpop.permute.xlu0 %2381
  %2383 = vrot.lane.b32.xlu0 %v2229, 96
  %v2384 = vpop.permute.xlu0 %2383
  %2385 = vrot.lane.b32.xlu0 %v2230, 96
  %v2386 = vpop.permute.xlu0 %2385
  %2387 = vrot.lane.b32.xlu0 %v2231, 96
  %v2388 = vpop.permute.xlu0 %2387
  %2389 = vrot.lane.b32.xlu0 %v2232, 96
  %v2390 = vpop.permute.xlu0 %2389
  %2391 = vrot.lane.b32.xlu0 %v2233, 96
  %v2392 = vpop.permute.xlu0 %2391
  %2393 = vrot.lane.b32.xlu0 %v2234, 96
  %v2394 = vpop.permute.xlu0 %2393
  %2395 = vrot.lane.b32.xlu0 %v2235, 96
  %v2396 = vpop.permute.xlu0 %2395
  %2397 = vrot.lane.b32.xlu0 %v2236, 96
  %v2398 = vpop.permute.xlu0 %2397
  %2399 = vrot.lane.b32.xlu0 %v2237, 96
  %v2400 = vpop.permute.xlu0 %2399
  %2401 = vrot.lane.b32.xlu0 %v2238, 96
  %v2402 = vpop.permute.xlu0 %2401
  %2403 = vrot.lane.b32.xlu0 %v2239, 96
  %v2404 = vpop.permute.xlu0 %2403
  %2405 = vrot.lane.b32.xlu0 %v2240, 96
  %v2406 = vpop.permute.xlu0 %2405
  %2407 = vrot.lane.b32.xlu0 %v2241, 96
  %v2408 = vpop.permute.xlu0 %2407
  %2409 = vrot.lane.b32.xlu0 %v2242, 96
  %v2410 = vpop.permute.xlu0 %2409
  %2411 = vrot.lane.b32.xlu0 %v2243, 96
  %v2412 = vpop.permute.xlu0 %2411
  %2413 = vrot.lane.b32.xlu0 %v2244, 96
  %v2414 = vpop.permute.xlu0 %2413
  %2415 = vrot.lane.b32.xlu0 %v2245, 96
  %v2416 = vpop.permute.xlu0 %2415
  %2417 = vrot.lane.b32.xlu0 %v2246, 96
  %v2418 = vpop.permute.xlu0 %2417
  %2419 = vrot.lane.b32.xlu0 %v2247, 96
  %v2420 = vpop.permute.xlu0 %2419
  %2421 = vrot.lane.b32.xlu0 %v2248, 96
  %v2422 = vpop.permute.xlu0 %2421
  %2423 = vrot.lane.b32.xlu0 %v2249, 96
  %v2424 = vpop.permute.xlu0 %2423
  %2425 = vrot.lane.b32.xlu0 %v2250, 96
  %v2426 = vpop.permute.xlu0 %2425
  %2427 = vrot.lane.b32.xlu0 %v2251, 96
  %v2428 = vpop.permute.xlu0 %2427
  %2429 = vrot.lane.b32.xlu0 %v2252, 96
  %v2430 = vpop.permute.xlu0 %2429
  %2431 = vrot.lane.b32.xlu0 %v2253, 96
  %v2432 = vpop.permute.xlu0 %2431
  %2433 = vrot.lane.b32.xlu0 %v2254, 96
  %v2434 = vpop.permute.xlu0 %2433
  %2435 = vrot.lane.b32.xlu0 %v2255, 96
  %v2436 = vpop.permute.xlu0 %2435
  %2437 = vrot.lane.b32.xlu0 %v2256, 96
  %v2438 = vpop.permute.xlu0 %2437
  %2439 = vrot.lane.b32.xlu0 %v2257, 96
  %v2440 = vpop.permute.xlu0 %2439
  %2441 = vrot.lane.b32.xlu0 %v2258, 96
  %v2442 = vpop.permute.xlu0 %2441
  %2443 = vrot.lane.b32.xlu0 %v2259, 96
  %v2444 = vpop.permute.xlu0 %2443
  %2445 = vrot.lane.b32.xlu0 %v2260, 96
  %v2446 = vpop.permute.xlu0 %2445
  %2447 = vrot.lane.b32.xlu0 %v2261, 96
  %v2448 = vpop.permute.xlu0 %2447
  %2449 = vrot.lane.b32.xlu0 %v2262, 96
  %v2450 = vpop.permute.xlu0 %2449
  %2451 = vrot.lane.b32.xlu0 %v2263, 96
  %v2452 = vpop.permute.xlu0 %2451
  %2453 = vrot.lane.b32.xlu0 %v2264, 96
  %v2454 = vpop.permute.xlu0 %2453
  %2455 = vrot.lane.b32.xlu0 %v2265, 96
  %v2456 = vpop.permute.xlu0 %2455
  %2457 = vrot.lane.b32.xlu0 %v2266, 96
  %v2458 = vpop.permute.xlu0 %2457
  %2523 = vst.msk [vmem:[#allocation2 + $0x8] sm:$0xff] %vm1241, %v2332
  %2524 = vst.msk [vmem:[#allocation2 + $0x20] sm:$0xff] %vm1241, %v2334
  %2525 = vst.msk [vmem:[#allocation2 + $0x38] sm:$0xff] %vm1241, %v2336
  %2526 = vst.msk [vmem:[#allocation2 + $0x50] sm:$0xff] %vm1241, %v2338
  %2527 = vst.msk [vmem:[#allocation2 + $0x68] sm:$0xff] %vm1241, %v2340
  %2528 = vst.msk [vmem:[#allocation2 + $0x80] sm:$0xff] %vm1241, %v2342
  %2529 = vst.msk [vmem:[#allocation2 + $0x98] sm:$0xff] %vm1241, %v2344
  %2530 = vst.msk [vmem:[#allocation2 + $0xb0] sm:$0xff] %vm1241, %v2346
  %2531 = vst.msk [vmem:[#allocation2 + $0xc8] sm:$0xff] %vm1241, %v2348
  %2532 = vst.msk [vmem:[#allocation2 + $0xe0] sm:$0xff] %vm1241, %v2350
  %2533 = vst.msk [vmem:[#allocation2 + $0xf8] sm:$0xff] %vm1241, %v2352
  %2534 = vst.msk [vmem:[#allocation2 + $0x110] sm:$0xff] %vm1241, %v2354
  %2535 = vst.msk [vmem:[#allocation2 + $0x128] sm:$0xff] %vm1241, %v2356
  %2536 = vst.msk [vmem:[#allocation2 + $0x140] sm:$0xff] %vm1241, %v2358
  %2537 = vst.msk [vmem:[#allocation2 + $0x158] sm:$0xff] %vm1241, %v2360
  %2538 = vst.msk [vmem:[#allocation2 + $0x170] sm:$0xff] %vm1241, %v2362
  %2539 = vst.msk [vmem:[#allocation2 + $0x188] sm:$0xff] %vm1241, %v2364
  %2540 = vst.msk [vmem:[#allocation2 + $0x1a0] sm:$0xff] %vm1241, %v2366
  %2541 = vst.msk [vmem:[#allocation2 + $0x1b8] sm:$0xff] %vm1241, %v2368
  %2542 = vst.msk [vmem:[#allocation2 + $0x1d0] sm:$0xff] %vm1241, %v2370
  %2543 = vst.msk [vmem:[#allocation2 + $0x1e8] sm:$0xff] %vm1241, %v2372
  %2544 = vst.msk [vmem:[#allocation2 + $0x200] sm:$0xff] %vm1241, %v2374
  %2545 = vst.msk [vmem:[#allocation2 + $0x218] sm:$0xff] %vm1241, %v2376
  %2546 = vst.msk [vmem:[#allocation2 + $0x230] sm:$0xff] %vm1241, %v2378
  %2547 = vst.msk [vmem:[#allocation2 + $0x248] sm:$0xff] %vm1241, %v2380
  %2548 = vst.msk [vmem:[#allocation2 + $0x260] sm:$0xff] %vm1241, %v2382
  %2549 = vst.msk [vmem:[#allocation2 + $0x278] sm:$0xff] %vm1241, %v2384
  %2550 = vst.msk [vmem:[#allocation2 + $0x290] sm:$0xff] %vm1241, %v2386
  %2551 = vst.msk [vmem:[#allocation2 + $0x2a8] sm:$0xff] %vm1241, %v2388
  %2552 = vst.msk [vmem:[#allocation2 + $0x2c0] sm:$0xff] %vm1241, %v2390
  %2553 = vst.msk [vmem:[#allocation2 + $0x2d8] sm:$0xff] %vm1241, %v2392
  %2554 = vst.msk [vmem:[#allocation2 + $0x2f0] sm:$0xff] %vm1241, %v2394
  %2555 = vst.msk [vmem:[#allocation2 + $0x308] sm:$0xff] %vm1241, %v2396
  %2556 = vst.msk [vmem:[#allocation2 + $0x320] sm:$0xff] %vm1241, %v2398
  %2557 = vst.msk [vmem:[#allocation2 + $0x338] sm:$0xff] %vm1241, %v2400
  %2558 = vst.msk [vmem:[#allocation2 + $0x350] sm:$0xff] %vm1241, %v2402
  %2559 = vst.msk [vmem:[#allocation2 + $0x368] sm:$0xff] %vm1241, %v2404
  %2560 = vst.msk [vmem:[#allocation2 + $0x380] sm:$0xff] %vm1241, %v2406
  %2561 = vst.msk [vmem:[#allocation2 + $0x398] sm:$0xff] %vm1241, %v2408
  %2562 = vst.msk [vmem:[#allocation2 + $0x3b0] sm:$0xff] %vm1241, %v2410
  %2563 = vst.msk [vmem:[#allocation2 + $0x3c8] sm:$0xff] %vm1241, %v2412
  %2564 = vst.msk [vmem:[#allocation2 + $0x3e0] sm:$0xff] %vm1241, %v2414
  %2565 = vst.msk [vmem:[#allocation2 + $0x3f8] sm:$0xff] %vm1241, %v2416
  %2566 = vst.msk [vmem:[#allocation2 + $0x410] sm:$0xff] %vm1241, %v2418
  %2567 = vst.msk [vmem:[#allocation2 + $0x428] sm:$0xff] %vm1241, %v2420
  %2568 = vst.msk [vmem:[#allocation2 + $0x440] sm:$0xff] %vm1241, %v2422
  %2569 = vst.msk [vmem:[#allocation2 + $0x458] sm:$0xff] %vm1241, %v2424
  %2570 = vst.msk [vmem:[#allocation2 + $0x470] sm:$0xff] %vm1241, %v2426
  %2571 = vst.msk [vmem:[#allocation2 + $0x488] sm:$0xff] %vm1241, %v2428
  %2572 = vst.msk [vmem:[#allocation2 + $0x4a0] sm:$0xff] %vm1241, %v2430
  %2573 = vst.msk [vmem:[#allocation2 + $0x4b8] sm:$0xff] %vm1241, %v2432
  %2574 = vst.msk [vmem:[#allocation2 + $0x4d0] sm:$0xff] %vm1241, %v2434
  %2575 = vst.msk [vmem:[#allocation2 + $0x4e8] sm:$0xff] %vm1241, %v2436
  %2576 = vst.msk [vmem:[#allocation2 + $0x500] sm:$0xff] %vm1241, %v2438
  %2577 = vst.msk [vmem:[#allocation2 + $0x518] sm:$0xff] %vm1241, %v2440
  %2578 = vst.msk [vmem:[#allocation2 + $0x530] sm:$0xff] %vm1241, %v2442
  %2579 = vst.msk [vmem:[#allocation2 + $0x548] sm:$0xff] %vm1241, %v2444
  %2580 = vst.msk [vmem:[#allocation2 + $0x560] sm:$0xff] %vm1241, %v2446
  %2581 = vst.msk [vmem:[#allocation2 + $0x578] sm:$0xff] %vm1241, %v2448
  %2582 = vst.msk [vmem:[#allocation2 + $0x590] sm:$0xff] %vm1241, %v2450
  %2583 = vst.msk [vmem:[#allocation2 + $0x5a8] sm:$0xff] %vm1241, %v2452
  %2584 = vst.msk [vmem:[#allocation2 + $0x5c0] sm:$0xff] %vm1241, %v2454
  %2585 = vst.msk [vmem:[#allocation2 + $0x5d8] sm:$0xff] %vm1241, %v2456
  %2586 = vst.msk [vmem:[#allocation2 + $0x5f0] sm:$0xff] %vm1241, %v2458
  %v2587 = vld [vmem:[%s1818 + $0x2] sm:$0xff]
  %v2588 = vld [vmem:[%s1818 + $0xa] sm:$0xff]
  %v2589 = vld [vmem:[%s1818 + $0x1a] sm:$0xff]
  %v2590 = vld [vmem:[%s1818 + $0x22] sm:$0xff]
  %v2591 = vld [vmem:[%s1818 + $0x32] sm:$0xff]
  %v2592 = vld [vmem:[%s1818 + $0x3a] sm:$0xff]
  %v2593 = vld [vmem:[%s1818 + $0x4a] sm:$0xff]
  %v2594 = vld [vmem:[%s1818 + $0x52] sm:$0xff]
  %v2595 = vld [vmem:[%s1818 + $0x62] sm:$0xff]
  %v2596 = vld [vmem:[%s1818 + $0x6a] sm:$0xff]
  %v2597 = vld [vmem:[%s1818 + $0x7a] sm:$0xff]
  %v2598 = vld [vmem:[%s1818 + $0x82] sm:$0xff]
  %v2599 = vld [vmem:[%s1818 + $0x92] sm:$0xff]
  %v2600 = vld [vmem:[%s1818 + $0x9a] sm:$0xff]
  %v2601 = vld [vmem:[%s1818 + $0xaa] sm:$0xff]
  %v2602 = vld [vmem:[%s1818 + $0xb2] sm:$0xff]
  %v2603 = vld [vmem:[%s1818 + $0xc2] sm:$0xff]
  %v2604 = vld [vmem:[%s1818 + $0xca] sm:$0xff]
  %v2605 = vld [vmem:[%s1818 + $0xda] sm:$0xff]
  %v2606 = vld [vmem:[%s1818 + $0xe2] sm:$0xff]
  %v2607 = vld [vmem:[%s1818 + $0xf2] sm:$0xff]
  %v2608 = vld [vmem:[%s1818 + $0xfa] sm:$0xff]
  %v2609 = vld [vmem:[%s1818 + $0x10a] sm:$0xff]
  %v2610 = vld [vmem:[%s1818 + $0x112] sm:$0xff]
  %v2611 = vld [vmem:[%s1818 + $0x122] sm:$0xff]
  %v2612 = vld [vmem:[%s1818 + $0x12a] sm:$0xff]
  %v2613 = vld [vmem:[%s1818 + $0x13a] sm:$0xff]
  %v2614 = vld [vmem:[%s1818 + $0x142] sm:$0xff]
  %v2615 = vld [vmem:[%s1818 + $0x152] sm:$0xff]
  %v2616 = vld [vmem:[%s1818 + $0x15a] sm:$0xff]
  %v2617 = vld [vmem:[%s1818 + $0x16a] sm:$0xff]
  %v2618 = vld [vmem:[%s1818 + $0x172] sm:$0xff]
  %v2619 = vld [vmem:[%s1818 + $0x1b2] sm:$0xff]
  %v2620 = vld [vmem:[%s1818 + $0x1ba] sm:$0xff]
  %v2621 = vld [vmem:[%s1818 + $0x1ca] sm:$0xff]
  %v2622 = vld [vmem:[%s1818 + $0x1d2] sm:$0xff]
  %v2623 = vld [vmem:[%s1818 + $0x1e2] sm:$0xff]
  %v2624 = vld [vmem:[%s1818 + $0x1ea] sm:$0xff]
  %v2625 = vld [vmem:[%s1818 + $0x1fa] sm:$0xff]
  %v2626 = vld [vmem:[%s1818 + $0x202] sm:$0xff]
  %v2627 = vld [vmem:[%s1818 + $0x212] sm:$0xff]
  %v2628 = vld [vmem:[%s1818 + $0x21a] sm:$0xff]
  %v2629 = vld [vmem:[%s1818 + $0x22a] sm:$0xff]
  %v2630 = vld [vmem:[%s1818 + $0x232] sm:$0xff]
  %v2631 = vld [vmem:[%s1818 + $0x242] sm:$0xff]
  %v2632 = vld [vmem:[%s1818 + $0x24a] sm:$0xff]
  %v2633 = vld [vmem:[%s1818 + $0x25a] sm:$0xff]
  %v2634 = vld [vmem:[%s1818 + $0x262] sm:$0xff]
  %v2635 = vld [vmem:[%s1818 + $0x272] sm:$0xff]
  %v2636 = vld [vmem:[%s1818 + $0x27a] sm:$0xff]
  %v2637 = vld [vmem:[%s1818 + $0x28a] sm:$0xff]
  %v2638 = vld [vmem:[%s1818 + $0x292] sm:$0xff]
  %v2639 = vld [vmem:[%s1818 + $0x2a2] sm:$0xff]
  %v2640 = vld [vmem:[%s1818 + $0x2aa] sm:$0xff]
  %v2641 = vld [vmem:[%s1818 + $0x2ba] sm:$0xff]
  %v2642 = vld [vmem:[%s1818 + $0x2c2] sm:$0xff]
  %v2643 = vld [vmem:[%s1818 + $0x2d2] sm:$0xff]
  %v2644 = vld [vmem:[%s1818 + $0x2da] sm:$0xff]
  %v2645 = vld [vmem:[%s1818 + $0x2ea] sm:$0xff]
  %v2646 = vld [vmem:[%s1818 + $0x2f2] sm:$0xff]
  %v2647 = vld [vmem:[%s1818 + $0x302] sm:$0xff]
  %v2648 = vld [vmem:[%s1818 + $0x30a] sm:$0xff]
  %v2649 = vld [vmem:[%s1818 + $0x31a] sm:$0xff]
  %v2650 = vld [vmem:[%s1818 + $0x322] sm:$0xff]
  %2651 = vst.msk [vmem:[#allocation2 + $0x10] sm:$0xff] %vm85, %v2587
  %2652 = vst.msk [vmem:[#allocation2 + $0x28] sm:$0xff] %vm85, %v2588
  %2653 = vst.msk [vmem:[#allocation2 + $0x40] sm:$0xff] %vm85, %v2589
  %2654 = vst.msk [vmem:[#allocation2 + $0x58] sm:$0xff] %vm85, %v2590
  %2655 = vst.msk [vmem:[#allocation2 + $0x70] sm:$0xff] %vm85, %v2591
  %2656 = vst.msk [vmem:[#allocation2 + $0x88] sm:$0xff] %vm85, %v2592
  %2657 = vst.msk [vmem:[#allocation2 + $0xa0] sm:$0xff] %vm85, %v2593
  %2658 = vst.msk [vmem:[#allocation2 + $0xb8] sm:$0xff] %vm85, %v2594
  %2659 = vst.msk [vmem:[#allocation2 + $0xd0] sm:$0xff] %vm85, %v2595
  %2660 = vst.msk [vmem:[#allocation2 + $0xe8] sm:$0xff] %vm85, %v2596
  %2661 = vst.msk [vmem:[#allocation2 + $0x100] sm:$0xff] %vm85, %v2597
  %2662 = vst.msk [vmem:[#allocation2 + $0x118] sm:$0xff] %vm85, %v2598
  %2663 = vst.msk [vmem:[#allocation2 + $0x130] sm:$0xff] %vm85, %v2599
  %2664 = vst.msk [vmem:[#allocation2 + $0x148] sm:$0xff] %vm85, %v2600
  %2665 = vst.msk [vmem:[#allocation2 + $0x160] sm:$0xff] %vm85, %v2601
  %2666 = vst.msk [vmem:[#allocation2 + $0x178] sm:$0xff] %vm85, %v2602
  %2667 = vst.msk [vmem:[#allocation2 + $0x190] sm:$0xff] %vm85, %v2603
  %2668 = vst.msk [vmem:[#allocation2 + $0x1a8] sm:$0xff] %vm85, %v2604
  %2669 = vst.msk [vmem:[#allocation2 + $0x1c0] sm:$0xff] %vm85, %v2605
  %2670 = vst.msk [vmem:[#allocation2 + $0x1d8] sm:$0xff] %vm85, %v2606
  %2671 = vst.msk [vmem:[#allocation2 + $0x1f0] sm:$0xff] %vm85, %v2607
  %2672 = vst.msk [vmem:[#allocation2 + $0x208] sm:$0xff] %vm85, %v2608
  %2673 = vst.msk [vmem:[#allocation2 + $0x220] sm:$0xff] %vm85, %v2609
  %2674 = vst.msk [vmem:[#allocation2 + $0x238] sm:$0xff] %vm85, %v2610
  %2675 = vst.msk [vmem:[#allocation2 + $0x250] sm:$0xff] %vm85, %v2611
  %2676 = vst.msk [vmem:[#allocation2 + $0x268] sm:$0xff] %vm85, %v2612
  %2677 = vst.msk [vmem:[#allocation2 + $0x280] sm:$0xff] %vm85, %v2613
  %2678 = vst.msk [vmem:[#allocation2 + $0x298] sm:$0xff] %vm85, %v2614
  %2679 = vst.msk [vmem:[#allocation2 + $0x2b0] sm:$0xff] %vm85, %v2615
  %2680 = vst.msk [vmem:[#allocation2 + $0x2c8] sm:$0xff] %vm85, %v2616
  %2681 = vst.msk [vmem:[#allocation2 + $0x2e0] sm:$0xff] %vm85, %v2617
  %2682 = vst.msk [vmem:[#allocation2 + $0x2f8] sm:$0xff] %vm85, %v2618
  %2683 = vst.msk [vmem:[#allocation2 + $0x310] sm:$0xff] %vm85, %v2619
  %2684 = vst.msk [vmem:[#allocation2 + $0x328] sm:$0xff] %vm85, %v2620
  %2685 = vst.msk [vmem:[#allocation2 + $0x340] sm:$0xff] %vm85, %v2621
  %2686 = vst.msk [vmem:[#allocation2 + $0x358] sm:$0xff] %vm85, %v2622
  %2687 = vst.msk [vmem:[#allocation2 + $0x370] sm:$0xff] %vm85, %v2623
  %2688 = vst.msk [vmem:[#allocation2 + $0x388] sm:$0xff] %vm85, %v2624
  %2689 = vst.msk [vmem:[#allocation2 + $0x3a0] sm:$0xff] %vm85, %v2625
  %2690 = vst.msk [vmem:[#allocation2 + $0x3b8] sm:$0xff] %vm85, %v2626
  %2691 = vst.msk [vmem:[#allocation2 + $0x3d0] sm:$0xff] %vm85, %v2627
  %2692 = vst.msk [vmem:[#allocation2 + $0x3e8] sm:$0xff] %vm85, %v2628
  %2693 = vst.msk [vmem:[#allocation2 + $0x400] sm:$0xff] %vm85, %v2629
  %2694 = vst.msk [vmem:[#allocation2 + $0x418] sm:$0xff] %vm85, %v2630
  %2695 = vst.msk [vmem:[#allocation2 + $0x430] sm:$0xff] %vm85, %v2631
  %2696 = vst.msk [vmem:[#allocation2 + $0x448] sm:$0xff] %vm85, %v2632
  %2697 = vst.msk [vmem:[#allocation2 + $0x460] sm:$0xff] %vm85, %v2633
  %2698 = vst.msk [vmem:[#allocation2 + $0x478] sm:$0xff] %vm85, %v2634
  %2699 = vst.msk [vmem:[#allocation2 + $0x490] sm:$0xff] %vm85, %v2635
  %2700 = vst.msk [vmem:[#allocation2 + $0x4a8] sm:$0xff] %vm85, %v2636
  %2701 = vst.msk [vmem:[#allocation2 + $0x4c0] sm:$0xff] %vm85, %v2637
  %2702 = vst.msk [vmem:[#allocation2 + $0x4d8] sm:$0xff] %vm85, %v2638
  %2703 = vst.msk [vmem:[#allocation2 + $0x4f0] sm:$0xff] %vm85, %v2639
  %2704 = vst.msk [vmem:[#allocation2 + $0x508] sm:$0xff] %vm85, %v2640
  %2705 = vst.msk [vmem:[#allocation2 + $0x520] sm:$0xff] %vm85, %v2641
  %2706 = vst.msk [vmem:[#allocation2 + $0x538] sm:$0xff] %vm85, %v2642
  %2707 = vst.msk [vmem:[#allocation2 + $0x550] sm:$0xff] %vm85, %v2643
  %2708 = vst.msk [vmem:[#allocation2 + $0x568] sm:$0xff] %vm85, %v2644
  %2709 = vst.msk [vmem:[#allocation2 + $0x580] sm:$0xff] %vm85, %v2645
  %2710 = vst.msk [vmem:[#allocation2 + $0x598] sm:$0xff] %vm85, %v2646
  %2711 = vst.msk [vmem:[#allocation2 + $0x5b0] sm:$0xff] %vm85, %v2647
  %2712 = vst.msk [vmem:[#allocation2 + $0x5c8] sm:$0xff] %vm85, %v2648
  %2713 = vst.msk [vmem:[#allocation2 + $0x5e0] sm:$0xff] %vm85, %v2649
  %2714 = vst.msk [vmem:[#allocation2 + $0x5f8] sm:$0xff] %vm85, %v2650
  %v2715 = vld [vmem:[#allocation2] sm:$0xff]
  %v2716 = vld [vmem:[#allocation2 + $0x8] sm:$0xff]
  %v2717 = vld [vmem:[#allocation2 + $0x10] sm:$0xff]
  %v2718 = vld [vmem:[#allocation2 + $0x18] sm:$0xff]
  %v2719 = vld [vmem:[#allocation2 + $0x20] sm:$0xff]
  %v2720 = vld [vmem:[#allocation2 + $0x28] sm:$0xff]
  %v2721 = vld [vmem:[#allocation2 + $0x30] sm:$0xff]
  %v2722 = vld [vmem:[#allocation2 + $0x38] sm:$0xff]
  %v2723 = vld [vmem:[#allocation2 + $0x40] sm:$0xff]
  %v2724 = vld [vmem:[#allocation2 + $0x48] sm:$0xff]
  %v2725 = vld [vmem:[#allocation2 + $0x50] sm:$0xff]
  %v2726 = vld [vmem:[#allocation2 + $0x58] sm:$0xff]
  %v2727 = vld [vmem:[#allocation2 + $0x60] sm:$0xff]
  %v2728 = vld [vmem:[#allocation2 + $0x68] sm:$0xff]
  %v2729 = vld [vmem:[#allocation2 + $0x70] sm:$0xff]
  %v2730 = vld [vmem:[#allocation2 + $0x78] sm:$0xff]
  %v2731 = vld [vmem:[#allocation2 + $0x80] sm:$0xff]
  %v2732 = vld [vmem:[#allocation2 + $0x88] sm:$0xff]
  %v2733 = vld [vmem:[#allocation2 + $0x90] sm:$0xff]
  %v2734 = vld [vmem:[#allocation2 + $0x98] sm:$0xff]
  %v2735 = vld [vmem:[#allocation2 + $0xa0] sm:$0xff]
  %v2736 = vld [vmem:[#allocation2 + $0xa8] sm:$0xff]
  %v2737 = vld [vmem:[#allocation2 + $0xb0] sm:$0xff]
  %v2738 = vld [vmem:[#allocation2 + $0xb8] sm:$0xff]
  %v2739 = vld [vmem:[#allocation2 + $0xc0] sm:$0xff]
  %v2740 = vld [vmem:[#allocation2 + $0xc8] sm:$0xff]
  %v2741 = vld [vmem:[#allocation2 + $0xd0] sm:$0xff]
  %v2742 = vld [vmem:[#allocation2 + $0xd8] sm:$0xff]
  %v2743 = vld [vmem:[#allocation2 + $0xe0] sm:$0xff]
  %v2744 = vld [vmem:[#allocation2 + $0xe8] sm:$0xff]
  %v2745 = vld [vmem:[#allocation2 + $0xf0] sm:$0xff]
  %v2746 = vld [vmem:[#allocation2 + $0xf8] sm:$0xff]
  %v2747 = vld [vmem:[#allocation2 + $0x100] sm:$0xff]
  %v2748 = vld [vmem:[#allocation2 + $0x108] sm:$0xff]
  %v2749 = vld [vmem:[#allocation2 + $0x110] sm:$0xff]
  %v2750 = vld [vmem:[#allocation2 + $0x118] sm:$0xff]
  %v2751 = vld [vmem:[#allocation2 + $0x120] sm:$0xff]
  %v2752 = vld [vmem:[#allocation2 + $0x128] sm:$0xff]
  %v2753 = vld [vmem:[#allocation2 + $0x130] sm:$0xff]
  %v2754 = vld [vmem:[#allocation2 + $0x138] sm:$0xff]
  %v2755 = vld [vmem:[#allocation2 + $0x140] sm:$0xff]
  %v2756 = vld [vmem:[#allocation2 + $0x148] sm:$0xff]
  %v2757 = vld [vmem:[#allocation2 + $0x150] sm:$0xff]
  %v2758 = vld [vmem:[#allocation2 + $0x158] sm:$0xff]
  %v2759 = vld [vmem:[#allocation2 + $0x160] sm:$0xff]
  %v2760 = vld [vmem:[#allocation2 + $0x168] sm:$0xff]
  %v2761 = vld [vmem:[#allocation2 + $0x170] sm:$0xff]
  %v2762 = vld [vmem:[#allocation2 + $0x178] sm:$0xff]
  %v2763 = vld [vmem:[#allocation2 + $0x180] sm:$0xff]
  %v2764 = vld [vmem:[#allocation2 + $0x188] sm:$0xff]
  %v2765 = vld [vmem:[#allocation2 + $0x190] sm:$0xff]
  %v2766 = vld [vmem:[#allocation2 + $0x198] sm:$0xff]
  %v2767 = vld [vmem:[#allocation2 + $0x1a0] sm:$0xff]
  %v2768 = vld [vmem:[#allocation2 + $0x1a8] sm:$0xff]
  %v2769 = vld [vmem:[#allocation2 + $0x1b0] sm:$0xff]
  %v2770 = vld [vmem:[#allocation2 + $0x1b8] sm:$0xff]
  %v2771 = vld [vmem:[#allocation2 + $0x1c0] sm:$0xff]
  %v2772 = vld [vmem:[#allocation2 + $0x1c8] sm:$0xff]
  %v2773 = vld [vmem:[#allocation2 + $0x1d0] sm:$0xff]
  %v2774 = vld [vmem:[#allocation2 + $0x1d8] sm:$0xff]
  %v2775 = vld [vmem:[#allocation2 + $0x1e0] sm:$0xff]
  %v2776 = vld [vmem:[#allocation2 + $0x1e8] sm:$0xff]
  %v2777 = vld [vmem:[#allocation2 + $0x1f0] sm:$0xff]
  %v2778 = vld [vmem:[#allocation2 + $0x1f8] sm:$0xff]
  %v2779 = vld [vmem:[#allocation2 + $0x200] sm:$0xff]
  %v2780 = vld [vmem:[#allocation2 + $0x208] sm:$0xff]
  %v2781 = vld [vmem:[#allocation2 + $0x210] sm:$0xff]
  %v2782 = vld [vmem:[#allocation2 + $0x218] sm:$0xff]
  %v2783 = vld [vmem:[#allocation2 + $0x220] sm:$0xff]
  %v2784 = vld [vmem:[#allocation2 + $0x228] sm:$0xff]
  %v2785 = vld [vmem:[#allocation2 + $0x230] sm:$0xff]
  %v2786 = vld [vmem:[#allocation2 + $0x238] sm:$0xff]
  %v2787 = vld [vmem:[#allocation2 + $0x240] sm:$0xff]
  %v2788 = vld [vmem:[#allocation2 + $0x248] sm:$0xff]
  %v2789 = vld [vmem:[#allocation2 + $0x250] sm:$0xff]
  %v2790 = vld [vmem:[#allocation2 + $0x258] sm:$0xff]
  %v2791 = vld [vmem:[#allocation2 + $0x260] sm:$0xff]
  %v2792 = vld [vmem:[#allocation2 + $0x268] sm:$0xff]
  %v2793 = vld [vmem:[#allocation2 + $0x270] sm:$0xff]
  %v2794 = vld [vmem:[#allocation2 + $0x278] sm:$0xff]
  %v2795 = vld [vmem:[#allocation2 + $0x280] sm:$0xff]
  %v2796 = vld [vmem:[#allocation2 + $0x288] sm:$0xff]
  %v2797 = vld [vmem:[#allocation2 + $0x290] sm:$0xff]
  %v2798 = vld [vmem:[#allocation2 + $0x298] sm:$0xff]
  %v2799 = vld [vmem:[#allocation2 + $0x2a0] sm:$0xff]
  %v2800 = vld [vmem:[#allocation2 + $0x2a8] sm:$0xff]
  %v2801 = vld [vmem:[#allocation2 + $0x2b0] sm:$0xff]
  %v2802 = vld [vmem:[#allocation2 + $0x2b8] sm:$0xff]
  %v2803 = vld [vmem:[#allocation2 + $0x2c0] sm:$0xff]
  %v2804 = vld [vmem:[#allocation2 + $0x2c8] sm:$0xff]
  %v2805 = vld [vmem:[#allocation2 + $0x2d0] sm:$0xff]
  %v2806 = vld [vmem:[#allocation2 + $0x2d8] sm:$0xff]
  %v2807 = vld [vmem:[#allocation2 + $0x2e0] sm:$0xff]
  %v2808 = vld [vmem:[#allocation2 + $0x2e8] sm:$0xff]
  %v2809 = vld [vmem:[#allocation2 + $0x2f0] sm:$0xff]
  %v2810 = vld [vmem:[#allocation2 + $0x2f8] sm:$0xff]
  %v2811 = vld [vmem:[#allocation2 + $0x300] sm:$0xff]
  %v2812 = vld [vmem:[#allocation2 + $0x308] sm:$0xff]
  %v2813 = vld [vmem:[#allocation2 + $0x310] sm:$0xff]
  %v2814 = vld [vmem:[#allocation2 + $0x318] sm:$0xff]
  %v2815 = vld [vmem:[#allocation2 + $0x320] sm:$0xff]
  %v2816 = vld [vmem:[#allocation2 + $0x328] sm:$0xff]
  %v2817 = vld [vmem:[#allocation2 + $0x330] sm:$0xff]
  %v2818 = vld [vmem:[#allocation2 + $0x338] sm:$0xff]
  %v2819 = vld [vmem:[#allocation2 + $0x340] sm:$0xff]
  %v2820 = vld [vmem:[#allocation2 + $0x348] sm:$0xff]
  %v2821 = vld [vmem:[#allocation2 + $0x350] sm:$0xff]
  %v2822 = vld [vmem:[#allocation2 + $0x358] sm:$0xff]
  %v2823 = vld [vmem:[#allocation2 + $0x360] sm:$0xff]
  %v2824 = vld [vmem:[#allocation2 + $0x368] sm:$0xff]
  %v2825 = vld [vmem:[#allocation2 + $0x370] sm:$0xff]
  %v2826 = vld [vmem:[#allocation2 + $0x378] sm:$0xff]
  %v2827 = vld [vmem:[#allocation2 + $0x380] sm:$0xff]
  %v2828 = vld [vmem:[#allocation2 + $0x388] sm:$0xff]
  %v2829 = vld [vmem:[#allocation2 + $0x390] sm:$0xff]
  %v2830 = vld [vmem:[#allocation2 + $0x398] sm:$0xff]
  %v2831 = vld [vmem:[#allocation2 + $0x3a0] sm:$0xff]
  %v2832 = vld [vmem:[#allocation2 + $0x3a8] sm:$0xff]
  %v2833 = vld [vmem:[#allocation2 + $0x3b0] sm:$0xff]
  %v2834 = vld [vmem:[#allocation2 + $0x3b8] sm:$0xff]
  %v2835 = vld [vmem:[#allocation2 + $0x3c0] sm:$0xff]
  %v2836 = vld [vmem:[#allocation2 + $0x3c8] sm:$0xff]
  %v2837 = vld [vmem:[#allocation2 + $0x3d0] sm:$0xff]
  %v2838 = vld [vmem:[#allocation2 + $0x3d8] sm:$0xff]
  %v2839 = vld [vmem:[#allocation2 + $0x3e0] sm:$0xff]
  %v2840 = vld [vmem:[#allocation2 + $0x3e8] sm:$0xff]
  %v2841 = vld [vmem:[#allocation2 + $0x3f0] sm:$0xff]
  %v2842 = vld [vmem:[#allocation2 + $0x3f8] sm:$0xff]
  %v2843 = vld [vmem:[#allocation2 + $0x400] sm:$0xff]
  %v2844 = vld [vmem:[#allocation2 + $0x408] sm:$0xff]
  %v2845 = vld [vmem:[#allocation2 + $0x410] sm:$0xff]
  %v2846 = vld [vmem:[#allocation2 + $0x418] sm:$0xff]
  %v2847 = vld [vmem:[#allocation2 + $0x420] sm:$0xff]
  %v2848 = vld [vmem:[#allocation2 + $0x428] sm:$0xff]
  %v2849 = vld [vmem:[#allocation2 + $0x430] sm:$0xff]
  %v2850 = vld [vmem:[#allocation2 + $0x438] sm:$0xff]
  %v2851 = vld [vmem:[#allocation2 + $0x440] sm:$0xff]
  %v2852 = vld [vmem:[#allocation2 + $0x448] sm:$0xff]
  %v2853 = vld [vmem:[#allocation2 + $0x450] sm:$0xff]
  %v2854 = vld [vmem:[#allocation2 + $0x458] sm:$0xff]
  %v2855 = vld [vmem:[#allocation2 + $0x460] sm:$0xff]
  %v2856 = vld [vmem:[#allocation2 + $0x468] sm:$0xff]
  %v2857 = vld [vmem:[#allocation2 + $0x470] sm:$0xff]
  %v2858 = vld [vmem:[#allocation2 + $0x478] sm:$0xff]
  %v2859 = vld [vmem:[#allocation2 + $0x480] sm:$0xff]
  %v2860 = vld [vmem:[#allocation2 + $0x488] sm:$0xff]
  %v2861 = vld [vmem:[#allocation2 + $0x490] sm:$0xff]
  %v2862 = vld [vmem:[#allocation2 + $0x498] sm:$0xff]
  %v2863 = vld [vmem:[#allocation2 + $0x4a0] sm:$0xff]
  %v2864 = vld [vmem:[#allocation2 + $0x4a8] sm:$0xff]
  %v2865 = vld [vmem:[#allocation2 + $0x4b0] sm:$0xff]
  %v2866 = vld [vmem:[#allocation2 + $0x4b8] sm:$0xff]
  %v2867 = vld [vmem:[#allocation2 + $0x4c0] sm:$0xff]
  %v2868 = vld [vmem:[#allocation2 + $0x4c8] sm:$0xff]
  %v2869 = vld [vmem:[#allocation2 + $0x4d0] sm:$0xff]
  %v2870 = vld [vmem:[#allocation2 + $0x4d8] sm:$0xff]
  %v2871 = vld [vmem:[#allocation2 + $0x4e0] sm:$0xff]
  %v2872 = vld [vmem:[#allocation2 + $0x4e8] sm:$0xff]
  %v2873 = vld [vmem:[#allocation2 + $0x4f0] sm:$0xff]
  %v2874 = vld [vmem:[#allocation2 + $0x4f8] sm:$0xff]
  %v2875 = vld [vmem:[#allocation2 + $0x500] sm:$0xff]
  %v2876 = vld [vmem:[#allocation2 + $0x508] sm:$0xff]
  %v2877 = vld [vmem:[#allocation2 + $0x510] sm:$0xff]
  %v2878 = vld [vmem:[#allocation2 + $0x518] sm:$0xff]
  %v2879 = vld [vmem:[#allocation2 + $0x520] sm:$0xff]
  %v2880 = vld [vmem:[#allocation2 + $0x528] sm:$0xff]
  %v2881 = vld [vmem:[#allocation2 + $0x530] sm:$0xff]
  %v2882 = vld [vmem:[#allocation2 + $0x538] sm:$0xff]
  %v2883 = vld [vmem:[#allocation2 + $0x540] sm:$0xff]
  %v2884 = vld [vmem:[#allocation2 + $0x548] sm:$0xff]
  %v2885 = vld [vmem:[#allocation2 + $0x550] sm:$0xff]
  %v2886 = vld [vmem:[#allocation2 + $0x558] sm:$0xff]
  %v2887 = vld [vmem:[#allocation2 + $0x560] sm:$0xff]
  %v2888 = vld [vmem:[#allocation2 + $0x568] sm:$0xff]
  %v2889 = vld [vmem:[#allocation2 + $0x570] sm:$0xff]
  %v2890 = vld [vmem:[#allocation2 + $0x578] sm:$0xff]
  %v2891 = vld [vmem:[#allocation2 + $0x580] sm:$0xff]
  %v2892 = vld [vmem:[#allocation2 + $0x588] sm:$0xff]
  %v2893 = vld [vmem:[#allocation2 + $0x590] sm:$0xff]
  %v2894 = vld [vmem:[#allocation2 + $0x598] sm:$0xff]
  %v2895 = vld [vmem:[#allocation2 + $0x5a0] sm:$0xff]
  %v2896 = vld [vmem:[#allocation2 + $0x5a8] sm:$0xff]
  %v2897 = vld [vmem:[#allocation2 + $0x5b0] sm:$0xff]
  %v2898 = vld [vmem:[#allocation2 + $0x5b8] sm:$0xff]
  %v2899 = vld [vmem:[#allocation2 + $0x5c0] sm:$0xff]
  %v2900 = vld [vmem:[#allocation2 + $0x5c8] sm:$0xff]
  %v2901 = vld [vmem:[#allocation2 + $0x5d0] sm:$0xff]
  %v2902 = vld [vmem:[#allocation2 + $0x5d8] sm:$0xff]
  %v2903 = vld [vmem:[#allocation2 + $0x5e0] sm:$0xff]
  %v2904 = vld [vmem:[#allocation2 + $0x5e8] sm:$0xff]
  %v2905 = vld [vmem:[#allocation2 + $0x5f0] sm:$0xff]
  %v2906 = vld [vmem:[#allocation2 + $0x5f8] sm:$0xff]
  %v2907 = vld [vmem:[%s1] sm:$0xff]
  %v2908 = vld [vmem:[%s1 + $0x8] sm:$0xff]
  %v2909 = vld [vmem:[%s1 + $0x10] sm:$0xff]
  %v2910 = vld [vmem:[%s1 + $0x18] sm:$0xff]
  %v2911 = vld [vmem:[%s1 + $0x20] sm:$0xff]
  %v2912 = vld [vmem:[%s1 + $0x28] sm:$0xff]
  %v2913 = vld [vmem:[%s1 + $0x30] sm:$0xff]
  %v2914 = vld [vmem:[%s1 + $0x38] sm:$0xff]
  %v2915 = vld [vmem:[%s1 + $0x40] sm:$0xff]
  %v2916 = vld [vmem:[%s1 + $0x48] sm:$0xff]
  %v2917 = vld [vmem:[%s1 + $0x50] sm:$0xff]
  %v2918 = vld [vmem:[%s1 + $0x58] sm:$0xff]
  %v2919 = vld [vmem:[%s1 + $0x60] sm:$0xff]
  %v2920 = vld [vmem:[%s1 + $0x68] sm:$0xff]
  %v2921 = vld [vmem:[%s1 + $0x70] sm:$0xff]
  %v2922 = vld [vmem:[%s1 + $0x78] sm:$0xff]
  %v2923 = vld [vmem:[%s1 + $0x80] sm:$0xff]
  %v2924 = vld [vmem:[%s1 + $0x88] sm:$0xff]
  %v2925 = vld [vmem:[%s1 + $0x90] sm:$0xff]
  %v2926 = vld [vmem:[%s1 + $0x98] sm:$0xff]
  %v2927 = vld [vmem:[%s1 + $0xa0] sm:$0xff]
  %v2928 = vld [vmem:[%s1 + $0xa8] sm:$0xff]
  %v2929 = vld [vmem:[%s1 + $0xb0] sm:$0xff]
  %v2930 = vld [vmem:[%s1 + $0xb8] sm:$0xff]
  %v2931 = vld [vmem:[%s1 + $0xc0] sm:$0xff]
  %v2932 = vld [vmem:[%s1 + $0xc8] sm:$0xff]
  %v2933 = vld [vmem:[%s1 + $0xd0] sm:$0xff]
  %v2934 = vld [vmem:[%s1 + $0xd8] sm:$0xff]
  %v2935 = vld [vmem:[%s1 + $0xe0] sm:$0xff]
  %v2936 = vld [vmem:[%s1 + $0xe8] sm:$0xff]
  %v2937 = vld [vmem:[%s1 + $0xf0] sm:$0xff]
  %v2938 = vld [vmem:[%s1 + $0xf8] sm:$0xff]
  %v2939 = vld [vmem:[%s1 + $0x100] sm:$0xff]
  %v2940 = vld [vmem:[%s1 + $0x108] sm:$0xff]
  %v2941 = vld [vmem:[%s1 + $0x110] sm:$0xff]
  %v2942 = vld [vmem:[%s1 + $0x118] sm:$0xff]
  %v2944 = vsel %vm85, %v2717, 0
  %v2947 = vsel %vm85, %v2720, 0
  %v2950 = vsel %vm85, %v2723, 0
  %v2953 = vsel %vm85, %v2726, 0
  %v2956 = vsel %vm85, %v2729, 0
  %v2959 = vsel %vm85, %v2732, 0
  %v2962 = vsel %vm85, %v2735, 0
  %v2965 = vsel %vm85, %v2738, 0
  %v2968 = vsel %vm85, %v2741, 0
  %v2971 = vsel %vm85, %v2744, 0
  %v2974 = vsel %vm85, %v2747, 0
  %v2977 = vsel %vm85, %v2750, 0
  %v2980 = vsel %vm85, %v2753, 0
  %v2983 = vsel %vm85, %v2756, 0
  %v2986 = vsel %vm85, %v2759, 0
  %v2989 = vsel %vm85, %v2762, 0
  %v2992 = vsel %vm85, %v2765, 0
  %v2995 = vsel %vm85, %v2768, 0
  %v2998 = vsel %vm85, %v2771, 0
  %v3001 = vsel %vm85, %v2774, 0
  %v3004 = vsel %vm85, %v2777, 0
  %v3007 = vsel %vm85, %v2780, 0
  %v3010 = vsel %vm85, %v2783, 0
  %v3013 = vsel %vm85, %v2786, 0
  %v3016 = vsel %vm85, %v2789, 0
  %v3019 = vsel %vm85, %v2792, 0
  %v3022 = vsel %vm85, %v2795, 0
  %v3025 = vsel %vm85, %v2798, 0
  %v3028 = vsel %vm85, %v2801, 0
  %v3031 = vsel %vm85, %v2804, 0
  %v3034 = vsel %vm85, %v2807, 0
  %v3037 = vsel %vm85, %v2810, 0
  %v3040 = vsel %vm85, %v2813, 0
  %v3043 = vsel %vm85, %v2816, 0
  %v3046 = vsel %vm85, %v2819, 0
  %v3049 = vsel %vm85, %v2822, 0
  %v3052 = vsel %vm85, %v2825, 0
  %v3055 = vsel %vm85, %v2828, 0
  %v3058 = vsel %vm85, %v2831, 0
  %v3061 = vsel %vm85, %v2834, 0
  %v3064 = vsel %vm85, %v2837, 0
  %v3067 = vsel %vm85, %v2840, 0
  %v3070 = vsel %vm85, %v2843, 0
  %v3073 = vsel %vm85, %v2846, 0
  %v3076 = vsel %vm85, %v2849, 0
  %v3079 = vsel %vm85, %v2852, 0
  %v3082 = vsel %vm85, %v2855, 0
  %v3085 = vsel %vm85, %v2858, 0
  %v3088 = vsel %vm85, %v2861, 0
  %v3091 = vsel %vm85, %v2864, 0
  %v3094 = vsel %vm85, %v2867, 0
  %v3097 = vsel %vm85, %v2870, 0
  %v3100 = vsel %vm85, %v2873, 0
  %v3103 = vsel %vm85, %v2876, 0
  %v3106 = vsel %vm85, %v2879, 0
  %v3109 = vsel %vm85, %v2882, 0
  %v3112 = vsel %vm85, %v2885, 0
  %v3115 = vsel %vm85, %v2888, 0
  %v3118 = vsel %vm85, %v2891, 0
  %v3121 = vsel %vm85, %v2894, 0
  %v3124 = vsel %vm85, %v2897, 0
  %v3127 = vsel %vm85, %v2900, 0
  %v3130 = vsel %vm85, %v2903, 0
  %v3133 = vsel %vm85, %v2906, 0
  %3135 = vmatprep.subr.mxu0 0.0
  %3136 = vmatpush1.msra.mxu0 %v2922
  %3137 = vmatprep.subr.mxu0 0.0
  %3138 = vmatpush1.msra.mxu0 %v2921
  %3139 = vmatprep.subr.mxu0 0.0
  %3140 = vmatpush1.msra.mxu0 %v2920
  %3141 = vmatprep.subr.mxu0 0.0
  %3142 = vmatpush1.msra.mxu0 %v2919
  %3143 = vmatprep.subr.mxu0 0.0
  %3144 = vmatpush1.msra.mxu0 %v2918
  %3145 = vmatprep.subr.mxu0 0.0
  %3146 = vmatpush1.msra.mxu0 %v2917
  %3147 = vmatprep.subr.mxu0 0.0
  %3148 = vmatpush1.msra.mxu0 %v2916
  %3149 = vmatprep.subr.mxu0 0.0
  %3150 = vmatpush1.msra.mxu0 %v2915
  %3151 = vmatprep.subr.mxu0 0.0
  %3152 = vmatpush1.msra.mxu0 %v2914
  %3153 = vmatprep.subr.mxu0 0.0
  %3154 = vmatpush1.msra.mxu0 %v2913
  %3155 = vmatprep.subr.mxu0 0.0
  %3156 = vmatpush1.msra.mxu0 %v2912
  %3157 = vmatprep.subr.mxu0 0.0
  %3158 = vmatpush1.msra.mxu0 %v2911
  %3159 = vmatprep.subr.mxu0 0.0
  %3160 = vmatpush1.msra.mxu0 %v2910
  %3161 = vmatprep.subr.mxu0 0.0
  %3162 = vmatpush1.msra.mxu0 %v2909
  %3163 = vmatprep.subr.mxu0 0.0
  %3164 = vmatpush1.msra.mxu0 %v2908
  %3165 = vmatprep.subr.mxu0 0.0
  %3166 = vmatpush1.msra.mxu0 %v2907
  %3167 = vmatprep.subr.mxu0 0.0
  %3168 = vmatpush2.msra.mxu0 %v2938
  %3169 = vmatprep.subr.mxu0 0.0
  %3170 = vmatpush2.msra.mxu0 %v2937
  %3171 = vmatprep.subr.mxu0 0.0
  %3172 = vmatpush2.msra.mxu0 %v2936
  %3173 = vmatprep.subr.mxu0 0.0
  %3174 = vmatpush2.msra.mxu0 %v2935
  %3175 = vmatprep.subr.mxu0 0.0
  %3176 = vmatpush2.msra.mxu0 %v2934
  %3177 = vmatprep.subr.mxu0 0.0
  %3178 = vmatpush2.msra.mxu0 %v2933
  %3179 = vmatprep.subr.mxu0 0.0
  %3180 = vmatpush2.msra.mxu0 %v2932
  %3181 = vmatprep.subr.mxu0 0.0
  %3182 = vmatpush2.msra.mxu0 %v2931
  %3183 = vmatprep.subr.mxu0 0.0
  %3184 = vmatpush2.msra.mxu0 %v2930
  %3185 = vmatprep.subr.mxu0 0.0
  %3186 = vmatpush2.msra.mxu0 %v2929
  %3187 = vmatprep.subr.mxu0 0.0
  %3188 = vmatpush2.msra.mxu0 %v2928
  %3189 = vmatprep.subr.mxu0 0.0
  %3190 = vmatpush2.msra.mxu0 %v2927
  %3191 = vmatprep.subr.mxu0 0.0
  %3192 = vmatpush2.msra.mxu0 %v2926
  %3193 = vmatprep.subr.mxu0 0.0
  %3194 = vmatpush2.msra.mxu0 %v2925
  %3195 = vmatprep.subr.mxu0 0.0
  %3196 = vmatpush2.msra.mxu0 %v2924
  %3197 = vmatprep.subr.mxu0 0.0
  %3198 = vmatpush2.msra.mxu0 %v2923
  %3199 = vmatprep.mubr.f32.mxu0 %v2716
  %3200 = vmatmul.mubr.f32.gmra.mxu0 %v2715
  %v3201 = vpop.f32.mrf.mxu0
  %v3202 = vadd.f32 0.0, %v3201
  %v3203 = vpop.f32.mrf.mxu0
  %3204 = vmatprep.mubr.f32.mxu0 %v2719
  %3205 = vmatmul.mubr.f32.gmra.mxu0 %v2718
  %v3206 = vpop.f32.mrf.mxu0
  %v3207 = vadd.f32 0.0, %v3206
  %v3208 = vpop.f32.mrf.mxu0
  %3209 = vmatprep.mubr.f32.mxu0 %v2722
  %3210 = vmatmul.mubr.f32.gmra.mxu0 %v2721
  %v3211 = vpop.f32.mrf.mxu0
  %v3212 = vadd.f32 0.0, %v3211
  %v3213 = vpop.f32.mrf.mxu0
  %3214 = vmatprep.mubr.f32.mxu0 %v2725
  %3215 = vmatmul.mubr.f32.gmra.mxu0 %v2724
  %v3216 = vpop.f32.mrf.mxu0
  %v3217 = vadd.f32 0.0, %v3216
  %v3218 = vpop.f32.mrf.mxu0
  %3219 = vmatprep.mubr.f32.mxu0 %v2728
  %3220 = vmatmul.mubr.f32.gmra.mxu0 %v2727
  %v3221 = vpop.f32.mrf.mxu0
  %v3222 = vadd.f32 0.0, %v3221
  %v3223 = vpop.f32.mrf.mxu0
  %3224 = vmatprep.mubr.f32.mxu0 %v2731
  %3225 = vmatmul.mubr.f32.gmra.mxu0 %v2730
  %v3226 = vpop.f32.mrf.mxu0
  %v3227 = vadd.f32 0.0, %v3226
  %v3228 = vpop.f32.mrf.mxu0
  %3229 = vmatprep.mubr.f32.mxu0 %v2734
  %3230 = vmatmul.mubr.f32.gmra.mxu0 %v2733
  %v3231 = vpop.f32.mrf.mxu0
  %v3232 = vadd.f32 0.0, %v3231
  %v3233 = vpop.f32.mrf.mxu0
  %3234 = vmatprep.mubr.f32.mxu0 %v2737
  %3235 = vmatmul.mubr.f32.gmra.mxu0 %v2736
  %v3236 = vpop.f32.mrf.mxu0
  %v3237 = vadd.f32 0.0, %v3236
  %v3238 = vpop.f32.mrf.mxu0
  %3239 = vmatprep.mubr.f32.mxu0 %v2740
  %3240 = vmatmul.mubr.f32.gmra.mxu0 %v2739
  %v3241 = vpop.f32.mrf.mxu0
  %v3242 = vadd.f32 0.0, %v3241
  %v3243 = vpop.f32.mrf.mxu0
  %3244 = vmatprep.mubr.f32.mxu0 %v2743
  %3245 = vmatmul.mubr.f32.gmra.mxu0 %v2742
  %v3246 = vpop.f32.mrf.mxu0
  %v3247 = vadd.f32 0.0, %v3246
  %v3248 = vpop.f32.mrf.mxu0
  %3249 = vmatprep.mubr.f32.mxu0 %v2746
  %3250 = vmatmul.mubr.f32.gmra.mxu0 %v2745
  %v3251 = vpop.f32.mrf.mxu0
  %v3252 = vadd.f32 0.0, %v3251
  %v3253 = vpop.f32.mrf.mxu0
  %3254 = vmatprep.mubr.f32.mxu0 %v2749
  %3255 = vmatmul.mubr.f32.gmra.mxu0 %v2748
  %v3256 = vpop.f32.mrf.mxu0
  %v3257 = vadd.f32 0.0, %v3256
  %v3258 = vpop.f32.mrf.mxu0
  %3259 = vmatprep.mubr.f32.mxu0 %v2752
  %3260 = vmatmul.mubr.f32.gmra.mxu0 %v2751
  %v3261 = vpop.f32.mrf.mxu0
  %v3262 = vadd.f32 0.0, %v3261
  %v3263 = vpop.f32.mrf.mxu0
  %3264 = vmatprep.mubr.f32.mxu0 %v2755
  %3265 = vmatmul.mubr.f32.gmra.mxu0 %v2754
  %v3266 = vpop.f32.mrf.mxu0
  %v3267 = vadd.f32 0.0, %v3266
  %v3268 = vpop.f32.mrf.mxu0
  %3269 = vmatprep.mubr.f32.mxu0 %v2758
  %3270 = vmatmul.mubr.f32.gmra.mxu0 %v2757
  %v3271 = vpop.f32.mrf.mxu0
  %v3272 = vadd.f32 0.0, %v3271
  %v3273 = vpop.f32.mrf.mxu0
  %3274 = vmatprep.mubr.f32.mxu0 %v2761
  %3275 = vmatmul.mubr.f32.gmra.mxu0 %v2760
  %v3276 = vpop.f32.mrf.mxu0
  %v3277 = vadd.f32 0.0, %v3276
  %v3278 = vpop.f32.mrf.mxu0
  %3279 = vmatprep.mubr.f32.mxu0 %v2764
  %3280 = vmatmul.mubr.f32.gmra.mxu0 %v2763
  %v3281 = vpop.f32.mrf.mxu0
  %v3282 = vadd.f32 0.0, %v3281
  %v3283 = vpop.f32.mrf.mxu0
  %3284 = vmatprep.mubr.f32.mxu0 %v2767
  %3285 = vmatmul.mubr.f32.gmra.mxu0 %v2766
  %v3286 = vpop.f32.mrf.mxu0
  %v3287 = vadd.f32 0.0, %v3286
  %v3288 = vpop.f32.mrf.mxu0
  %3289 = vmatprep.mubr.f32.mxu0 %v2770
  %3290 = vmatmul.mubr.f32.gmra.mxu0 %v2769
  %v3291 = vpop.f32.mrf.mxu0
  %v3292 = vadd.f32 0.0, %v3291
  %v3293 = vpop.f32.mrf.mxu0
  %3294 = vmatprep.mubr.f32.mxu0 %v2773
  %3295 = vmatmul.mubr.f32.gmra.mxu0 %v2772
  %v3296 = vpop.f32.mrf.mxu0
  %v3297 = vadd.f32 0.0, %v3296
  %v3298 = vpop.f32.mrf.mxu0
  %3299 = vmatprep.mubr.f32.mxu0 %v2776
  %3300 = vmatmul.mubr.f32.gmra.mxu0 %v2775
  %v3301 = vpop.f32.mrf.mxu0
  %v3302 = vadd.f32 0.0, %v3301
  %v3303 = vpop.f32.mrf.mxu0
  %3304 = vmatprep.mubr.f32.mxu0 %v2779
  %3305 = vmatmul.mubr.f32.gmra.mxu0 %v2778
  %v3306 = vpop.f32.mrf.mxu0
  %v3307 = vadd.f32 0.0, %v3306
  %v3308 = vpop.f32.mrf.mxu0
  %3309 = vmatprep.mubr.f32.mxu0 %v2782
  %3310 = vmatmul.mubr.f32.gmra.mxu0 %v2781
  %v3311 = vpop.f32.mrf.mxu0
  %v3312 = vadd.f32 0.0, %v3311
  %v3313 = vpop.f32.mrf.mxu0
  %3314 = vmatprep.mubr.f32.mxu0 %v2785
  %3315 = vmatmul.mubr.f32.gmra.mxu0 %v2784
  %v3316 = vpop.f32.mrf.mxu0
  %v3317 = vadd.f32 0.0, %v3316
  %v3318 = vpop.f32.mrf.mxu0
  %3319 = vmatprep.mubr.f32.mxu0 %v2788
  %3320 = vmatmul.mubr.f32.gmra.mxu0 %v2787
  %v3321 = vpop.f32.mrf.mxu0
  %v3322 = vadd.f32 0.0, %v3321
  %v3323 = vpop.f32.mrf.mxu0
  %3324 = vmatprep.mubr.f32.mxu0 %v2791
  %3325 = vmatmul.mubr.f32.gmra.mxu0 %v2790
  %v3326 = vpop.f32.mrf.mxu0
  %v3327 = vadd.f32 0.0, %v3326
  %v3328 = vpop.f32.mrf.mxu0
  %3329 = vmatprep.mubr.f32.mxu0 %v2794
  %3330 = vmatmul.mubr.f32.gmra.mxu0 %v2793
  %v3331 = vpop.f32.mrf.mxu0
  %v3332 = vadd.f32 0.0, %v3331
  %v3333 = vpop.f32.mrf.mxu0
  %3334 = vmatprep.mubr.f32.mxu0 %v2797
  %3335 = vmatmul.mubr.f32.gmra.mxu0 %v2796
  %v3336 = vpop.f32.mrf.mxu0
  %v3337 = vadd.f32 0.0, %v3336
  %v3338 = vpop.f32.mrf.mxu0
  %3339 = vmatprep.mubr.f32.mxu0 %v2800
  %3340 = vmatmul.mubr.f32.gmra.mxu0 %v2799
  %v3341 = vpop.f32.mrf.mxu0
  %v3342 = vadd.f32 0.0, %v3341
  %v3343 = vpop.f32.mrf.mxu0
  %3344 = vmatprep.mubr.f32.mxu0 %v2803
  %3345 = vmatmul.mubr.f32.gmra.mxu0 %v2802
  %v3346 = vpop.f32.mrf.mxu0
  %v3347 = vadd.f32 0.0, %v3346
  %v3348 = vpop.f32.mrf.mxu0
  %3349 = vmatprep.mubr.f32.mxu0 %v2806
  %3350 = vmatmul.mubr.f32.gmra.mxu0 %v2805
  %v3351 = vpop.f32.mrf.mxu0
  %v3352 = vadd.f32 0.0, %v3351
  %v3353 = vpop.f32.mrf.mxu0
  %3354 = vmatprep.mubr.f32.mxu0 %v2809
  %3355 = vmatmul.mubr.f32.gmra.mxu0 %v2808
  %v3356 = vpop.f32.mrf.mxu0
  %v3357 = vadd.f32 0.0, %v3356
  %v3358 = vpop.f32.mrf.mxu0
  %3359 = vmatprep.mubr.f32.mxu0 %v2812
  %3360 = vmatmul.mubr.f32.gmra.mxu0 %v2811
  %v3361 = vpop.f32.mrf.mxu0
  %v3362 = vadd.f32 0.0, %v3361
  %v3363 = vpop.f32.mrf.mxu0
  %3364 = vmatprep.mubr.f32.mxu0 %v2815
  %3365 = vmatmul.mubr.f32.gmra.mxu0 %v2814
  %v3366 = vpop.f32.mrf.mxu0
  %v3367 = vadd.f32 0.0, %v3366
  %v3368 = vpop.f32.mrf.mxu0
  %3369 = vmatprep.mubr.f32.mxu0 %v2818
  %3370 = vmatmul.mubr.f32.gmra.mxu0 %v2817
  %v3371 = vpop.f32.mrf.mxu0
  %v3372 = vadd.f32 0.0, %v3371
  %v3373 = vpop.f32.mrf.mxu0
  %3374 = vmatprep.mubr.f32.mxu0 %v2821
  %3375 = vmatmul.mubr.f32.gmra.mxu0 %v2820
  %v3376 = vpop.f32.mrf.mxu0
  %v3377 = vadd.f32 0.0, %v3376
  %v3378 = vpop.f32.mrf.mxu0
  %3379 = vmatprep.mubr.f32.mxu0 %v2824
  %3380 = vmatmul.mubr.f32.gmra.mxu0 %v2823
  %v3381 = vpop.f32.mrf.mxu0
  %v3382 = vadd.f32 0.0, %v3381
  %v3383 = vpop.f32.mrf.mxu0
  %3384 = vmatprep.mubr.f32.mxu0 %v2827
  %3385 = vmatmul.mubr.f32.gmra.mxu0 %v2826
  %v3386 = vpop.f32.mrf.mxu0
  %v3387 = vadd.f32 0.0, %v3386
  %v3388 = vpop.f32.mrf.mxu0
  %3389 = vmatprep.mubr.f32.mxu0 %v2830
  %3390 = vmatmul.mubr.f32.gmra.mxu0 %v2829
  %v3391 = vpop.f32.mrf.mxu0
  %v3392 = vadd.f32 0.0, %v3391
  %v3393 = vpop.f32.mrf.mxu0
  %3394 = vmatprep.mubr.f32.mxu0 %v2833
  %3395 = vmatmul.mubr.f32.gmra.mxu0 %v2832
  %v3396 = vpop.f32.mrf.mxu0
  %v3397 = vadd.f32 0.0, %v3396
  %v3398 = vpop.f32.mrf.mxu0
  %3399 = vmatprep.mubr.f32.mxu0 %v2836
  %3400 = vmatmul.mubr.f32.gmra.mxu0 %v2835
  %v3401 = vpop.f32.mrf.mxu0
  %v3402 = vadd.f32 0.0, %v3401
  %v3403 = vpop.f32.mrf.mxu0
  %3404 = vmatprep.mubr.f32.mxu0 %v2839
  %3405 = vmatmul.mubr.f32.gmra.mxu0 %v2838
  %v3406 = vpop.f32.mrf.mxu0
  %v3407 = vadd.f32 0.0, %v3406
  %v3408 = vpop.f32.mrf.mxu0
  %3409 = vmatprep.mubr.f32.mxu0 %v2842
  %3410 = vmatmul.mubr.f32.gmra.mxu0 %v2841
  %v3411 = vpop.f32.mrf.mxu0
  %v3412 = vadd.f32 0.0, %v3411
  %v3413 = vpop.f32.mrf.mxu0
  %3414 = vmatprep.mubr.f32.mxu0 %v2845
  %3415 = vmatmul.mubr.f32.gmra.mxu0 %v2844
  %v3416 = vpop.f32.mrf.mxu0
  %v3417 = vadd.f32 0.0, %v3416
  %v3418 = vpop.f32.mrf.mxu0
  %3419 = vmatprep.mubr.f32.mxu0 %v2848
  %3420 = vmatmul.mubr.f32.gmra.mxu0 %v2847
  %v3421 = vpop.f32.mrf.mxu0
  %v3422 = vadd.f32 0.0, %v3421
  %v3423 = vpop.f32.mrf.mxu0
  %3424 = vmatprep.mubr.f32.mxu0 %v2851
  %3425 = vmatmul.mubr.f32.gmra.mxu0 %v2850
  %v3426 = vpop.f32.mrf.mxu0
  %v3427 = vadd.f32 0.0, %v3426
  %v3428 = vpop.f32.mrf.mxu0
  %3429 = vmatprep.mubr.f32.mxu0 %v2854
  %3430 = vmatmul.mubr.f32.gmra.mxu0 %v2853
  %v3431 = vpop.f32.mrf.mxu0
  %v3432 = vadd.f32 0.0, %v3431
  %v3433 = vpop.f32.mrf.mxu0
  %3434 = vmatprep.mubr.f32.mxu0 %v2857
  %3435 = vmatmul.mubr.f32.gmra.mxu0 %v2856
  %v3436 = vpop.f32.mrf.mxu0
  %v3437 = vadd.f32 0.0, %v3436
  %v3438 = vpop.f32.mrf.mxu0
  %3439 = vmatprep.mubr.f32.mxu0 %v2860
  %3440 = vmatmul.mubr.f32.gmra.mxu0 %v2859
  %v3441 = vpop.f32.mrf.mxu0
  %v3442 = vadd.f32 0.0, %v3441
  %v3443 = vpop.f32.mrf.mxu0
  %3444 = vmatprep.mubr.f32.mxu0 %v2863
  %3445 = vmatmul.mubr.f32.gmra.mxu0 %v2862
  %v3446 = vpop.f32.mrf.mxu0
  %v3447 = vadd.f32 0.0, %v3446
  %v3448 = vpop.f32.mrf.mxu0
  %3449 = vmatprep.mubr.f32.mxu0 %v2866
  %3450 = vmatmul.mubr.f32.gmra.mxu0 %v2865
  %v3451 = vpop.f32.mrf.mxu0
  %v3452 = vadd.f32 0.0, %v3451
  %v3453 = vpop.f32.mrf.mxu0
  %3454 = vmatprep.mubr.f32.mxu0 %v2869
  %3455 = vmatmul.mubr.f32.gmra.mxu0 %v2868
  %v3456 = vpop.f32.mrf.mxu0
  %v3457 = vadd.f32 0.0, %v3456
  %v3458 = vpop.f32.mrf.mxu0
  %3459 = vmatprep.mubr.f32.mxu0 %v2872
  %3460 = vmatmul.mubr.f32.gmra.mxu0 %v2871
  %v3461 = vpop.f32.mrf.mxu0
  %v3462 = vadd.f32 0.0, %v3461
  %v3463 = vpop.f32.mrf.mxu0
  %3464 = vmatprep.mubr.f32.mxu0 %v2875
  %3465 = vmatmul.mubr.f32.gmra.mxu0 %v2874
  %v3466 = vpop.f32.mrf.mxu0
  %v3467 = vadd.f32 0.0, %v3466
  %v3468 = vpop.f32.mrf.mxu0
  %3469 = vmatprep.mubr.f32.mxu0 %v2878
  %3470 = vmatmul.mubr.f32.gmra.mxu0 %v2877
  %v3471 = vpop.f32.mrf.mxu0
  %v3472 = vadd.f32 0.0, %v3471
  %v3473 = vpop.f32.mrf.mxu0
  %3474 = vmatprep.mubr.f32.mxu0 %v2881
  %3475 = vmatmul.mubr.f32.gmra.mxu0 %v2880
  %v3476 = vpop.f32.mrf.mxu0
  %v3477 = vadd.f32 0.0, %v3476
  %v3478 = vpop.f32.mrf.mxu0
  %3479 = vmatprep.mubr.f32.mxu0 %v2884
  %3480 = vmatmul.mubr.f32.gmra.mxu0 %v2883
  %v3481 = vpop.f32.mrf.mxu0
  %v3482 = vadd.f32 0.0, %v3481
  %v3483 = vpop.f32.mrf.mxu0
  %3484 = vmatprep.mubr.f32.mxu0 %v2887
  %3485 = vmatmul.mubr.f32.gmra.mxu0 %v2886
  %v3486 = vpop.f32.mrf.mxu0
  %v3487 = vadd.f32 0.0, %v3486
  %v3488 = vpop.f32.mrf.mxu0
  %3489 = vmatprep.mubr.f32.mxu0 %v2890
  %3490 = vmatmul.mubr.f32.gmra.mxu0 %v2889
  %v3491 = vpop.f32.mrf.mxu0
  %v3492 = vadd.f32 0.0, %v3491
  %v3493 = vpop.f32.mrf.mxu0
  %3494 = vmatprep.mubr.f32.mxu0 %v2893
  %3495 = vmatmul.mubr.f32.gmra.mxu0 %v2892
  %v3496 = vpop.f32.mrf.mxu0
  %v3497 = vadd.f32 0.0, %v3496
  %v3498 = vpop.f32.mrf.mxu0
  %3499 = vmatprep.mubr.f32.mxu0 %v2896
  %3500 = vmatmul.mubr.f32.gmra.mxu0 %v2895
  %v3501 = vpop.f32.mrf.mxu0
  %v3502 = vadd.f32 0.0, %v3501
  %v3503 = vpop.f32.mrf.mxu0
  %3504 = vmatprep.mubr.f32.mxu0 %v2899
  %3505 = vmatmul.mubr.f32.gmra.mxu0 %v2898
  %v3506 = vpop.f32.mrf.mxu0
  %v3507 = vadd.f32 0.0, %v3506
  %v3508 = vpop.f32.mrf.mxu0
  %3509 = vmatprep.mubr.f32.mxu0 %v2902
  %3510 = vmatmul.mubr.f32.gmra.mxu0 %v2901
  %v3511 = vpop.f32.mrf.mxu0
  %v3512 = vadd.f32 0.0, %v3511
  %v3513 = vpop.f32.mrf.mxu0
  %3514 = vmatprep.mubr.f32.mxu0 %v2905
  %3515 = vmatmul.mubr.f32.gmra.mxu0 %v2904
  %v3516 = vpop.f32.mrf.mxu0
  %v3517 = vadd.f32 0.0, %v3516
  %v3518 = vpop.f32.mrf.mxu0
  %3519 = vdwg.mxu0
  %3520 = vmatprep.subr.mxu0 0.0
  %3521 = vmatpush1.msra.mxu0 0.0
  %3522 = vmatprep.subr.mxu0 0.0
  %3523 = vmatpush1.msra.mxu0 0.0
  %3524 = vmatprep.subr.mxu0 0.0
  %3525 = vmatpush1.msra.mxu0 0.0
  %3526 = vmatprep.subr.mxu0 0.0
  %3527 = vmatpush1.msra.mxu0 0.0
  %3528 = vmatprep.subr.mxu0 0.0
  %3529 = vmatpush1.msra.mxu0 0.0
  %3530 = vmatprep.subr.mxu0 0.0
  %3531 = vmatpush1.msra.mxu0 0.0
  %3532 = vmatprep.subr.mxu0 0.0
  %3533 = vmatpush1.msra.mxu0 0.0
  %3534 = vmatprep.subr.mxu0 0.0
  %3535 = vmatpush1.msra.mxu0 0.0
  %3536 = vmatprep.subr.mxu0 0.0
  %3537 = vmatpush1.msra.mxu0 0.0
  %3538 = vmatprep.subr.mxu0 0.0
  %3539 = vmatpush1.msra.mxu0 0.0
  %3540 = vmatprep.subr.mxu0 0.0
  %3541 = vmatpush1.msra.mxu0 0.0
  %3542 = vmatprep.subr.mxu0 0.0
  %3543 = vmatpush1.msra.mxu0 0.0
  %3544 = vmatprep.subr.mxu0 0.0
  %3545 = vmatpush1.msra.mxu0 %v2942
  %3546 = vmatprep.subr.mxu0 0.0
  %3547 = vmatpush1.msra.mxu0 %v2941
  %3548 = vmatprep.subr.mxu0 0.0
  %3549 = vmatpush1.msra.mxu0 %v2940
  %3550 = vmatprep.subr.mxu0 0.0
  %3551 = vmatpush1.msra.mxu0 %v2939
  %3552 = vmatprep.subr.mxu0 0.0
  %3553 = vmatpush2.msra.mxu0 0.0
  %3554 = vmatprep.subr.mxu0 0.0
  %3555 = vmatpush2.msra.mxu0 0.0
  %3556 = vmatprep.subr.mxu0 0.0
  %3557 = vmatpush2.msra.mxu0 0.0
  %3558 = vmatprep.subr.mxu0 0.0
  %3559 = vmatpush2.msra.mxu0 0.0
  %3560 = vmatprep.subr.mxu0 0.0
  %3561 = vmatpush2.msra.mxu0 0.0
  %3562 = vmatprep.subr.mxu0 0.0
  %3563 = vmatpush2.msra.mxu0 0.0
  %3564 = vmatprep.subr.mxu0 0.0
  %3565 = vmatpush2.msra.mxu0 0.0
  %3566 = vmatprep.subr.mxu0 0.0
  %3567 = vmatpush2.msra.mxu0 0.0
  %3568 = vmatprep.subr.mxu0 0.0
  %3569 = vmatpush2.msra.mxu0 0.0
  %3570 = vmatprep.subr.mxu0 0.0
  %3571 = vmatpush2.msra.mxu0 0.0
  %3572 = vmatprep.subr.mxu0 0.0
  %3573 = vmatpush2.msra.mxu0 0.0
  %3574 = vmatprep.subr.mxu0 0.0
  %3575 = vmatpush2.msra.mxu0 0.0
  %3576 = vmatprep.subr.mxu0 0.0
  %3577 = vmatpush2.msra.mxu0 0.0
  %3578 = vmatprep.subr.mxu0 0.0
  %3579 = vmatpush2.msra.mxu0 0.0
  %3580 = vmatprep.subr.mxu0 0.0
  %3581 = vmatpush2.msra.mxu0 0.0
  %3582 = vmatprep.subr.mxu0 0.0
  %3583 = vmatpush2.msra.mxu0 0.0
  %3584 = vmatprep.mubr.f32.mxu0 0.0
  %3585 = vmatmul.mubr.f32.gmra.mxu0 %v2944
  %v3586 = vpop.f32.mrf.mxu0
  %v3587 = vadd.f32 %v3202, %v3586
  %v3588 = vpop.f32.mrf.mxu0
  %3589 = vmatprep.mubr.f32.mxu0 0.0
  %3590 = vmatmul.mubr.f32.gmra.mxu0 %v2947
  %v3591 = vpop.f32.mrf.mxu0
  %v3592 = vadd.f32 %v3207, %v3591
  %v3593 = vpop.f32.mrf.mxu0
  %3594 = vmatprep.mubr.f32.mxu0 0.0
  %3595 = vmatmul.mubr.f32.gmra.mxu0 %v2950
  %v3596 = vpop.f32.mrf.mxu0
  %v3597 = vadd.f32 %v3212, %v3596
  %v3598 = vpop.f32.mrf.mxu0
  %3599 = vmatprep.mubr.f32.mxu0 0.0
  %3600 = vmatmul.mubr.f32.gmra.mxu0 %v2953
  %v3601 = vpop.f32.mrf.mxu0
  %v3602 = vadd.f32 %v3217, %v3601
  %v3603 = vpop.f32.mrf.mxu0
  %3604 = vmatprep.mubr.f32.mxu0 0.0
  %3605 = vmatmul.mubr.f32.gmra.mxu0 %v2956
  %v3606 = vpop.f32.mrf.mxu0
  %v3607 = vadd.f32 %v3222, %v3606
  %v3608 = vpop.f32.mrf.mxu0
  %3609 = vmatprep.mubr.f32.mxu0 0.0
  %3610 = vmatmul.mubr.f32.gmra.mxu0 %v2959
  %v3611 = vpop.f32.mrf.mxu0
  %v3612 = vadd.f32 %v3227, %v3611
  %v3613 = vpop.f32.mrf.mxu0
  %3614 = vmatprep.mubr.f32.mxu0 0.0
  %3615 = vmatmul.mubr.f32.gmra.mxu0 %v2962
  %v3616 = vpop.f32.mrf.mxu0
  %v3617 = vadd.f32 %v3232, %v3616
  %v3618 = vpop.f32.mrf.mxu0
  %3619 = vmatprep.mubr.f32.mxu0 0.0
  %3620 = vmatmul.mubr.f32.gmra.mxu0 %v2965
  %v3621 = vpop.f32.mrf.mxu0
  %v3622 = vadd.f32 %v3237, %v3621
  %v3623 = vpop.f32.mrf.mxu0
  %3624 = vmatprep.mubr.f32.mxu0 0.0
  %3625 = vmatmul.mubr.f32.gmra.mxu0 %v2968
  %v3626 = vpop.f32.mrf.mxu0
  %v3627 = vadd.f32 %v3242, %v3626
  %v3628 = vpop.f32.mrf.mxu0
  %3629 = vmatprep.mubr.f32.mxu0 0.0
  %3630 = vmatmul.mubr.f32.gmra.mxu0 %v2971
  %v3631 = vpop.f32.mrf.mxu0
  %v3632 = vadd.f32 %v3247, %v3631
  %v3633 = vpop.f32.mrf.mxu0
  %3634 = vmatprep.mubr.f32.mxu0 0.0
  %3635 = vmatmul.mubr.f32.gmra.mxu0 %v2974
  %v3636 = vpop.f32.mrf.mxu0
  %v3637 = vadd.f32 %v3252, %v3636
  %v3638 = vpop.f32.mrf.mxu0
  %3639 = vmatprep.mubr.f32.mxu0 0.0
  %3640 = vmatmul.mubr.f32.gmra.mxu0 %v2977
  %v3641 = vpop.f32.mrf.mxu0
  %v3642 = vadd.f32 %v3257, %v3641
  %v3643 = vpop.f32.mrf.mxu0
  %3644 = vmatprep.mubr.f32.mxu0 0.0
  %3645 = vmatmul.mubr.f32.gmra.mxu0 %v2980
  %v3646 = vpop.f32.mrf.mxu0
  %v3647 = vadd.f32 %v3262, %v3646
  %v3648 = vpop.f32.mrf.mxu0
  %3649 = vmatprep.mubr.f32.mxu0 0.0
  %3650 = vmatmul.mubr.f32.gmra.mxu0 %v2983
  %v3651 = vpop.f32.mrf.mxu0
  %v3652 = vadd.f32 %v3267, %v3651
  %v3653 = vpop.f32.mrf.mxu0
  %3654 = vmatprep.mubr.f32.mxu0 0.0
  %3655 = vmatmul.mubr.f32.gmra.mxu0 %v2986
  %v3656 = vpop.f32.mrf.mxu0
  %v3657 = vadd.f32 %v3272, %v3656
  %v3658 = vpop.f32.mrf.mxu0
  %3659 = vmatprep.mubr.f32.mxu0 0.0
  %3660 = vmatmul.mubr.f32.gmra.mxu0 %v2989
  %v3661 = vpop.f32.mrf.mxu0
  %v3662 = vadd.f32 %v3277, %v3661
  %v3663 = vpop.f32.mrf.mxu0
  %3664 = vmatprep.mubr.f32.mxu0 0.0
  %3665 = vmatmul.mubr.f32.gmra.mxu0 %v2992
  %v3666 = vpop.f32.mrf.mxu0
  %v3667 = vadd.f32 %v3282, %v3666
  %v3668 = vpop.f32.mrf.mxu0
  %3669 = vmatprep.mubr.f32.mxu0 0.0
  %3670 = vmatmul.mubr.f32.gmra.mxu0 %v2995
  %v3671 = vpop.f32.mrf.mxu0
  %v3672 = vadd.f32 %v3287, %v3671
  %v3673 = vpop.f32.mrf.mxu0
  %3674 = vmatprep.mubr.f32.mxu0 0.0
  %3675 = vmatmul.mubr.f32.gmra.mxu0 %v2998
  %v3676 = vpop.f32.mrf.mxu0
  %v3677 = vadd.f32 %v3292, %v3676
  %v3678 = vpop.f32.mrf.mxu0
  %3679 = vmatprep.mubr.f32.mxu0 0.0
  %3680 = vmatmul.mubr.f32.gmra.mxu0 %v3001
  %v3681 = vpop.f32.mrf.mxu0
  %v3682 = vadd.f32 %v3297, %v3681
  %v3683 = vpop.f32.mrf.mxu0
  %3684 = vmatprep.mubr.f32.mxu0 0.0
  %3685 = vmatmul.mubr.f32.gmra.mxu0 %v3004
  %v3686 = vpop.f32.mrf.mxu0
  %v3687 = vadd.f32 %v3302, %v3686
  %v3688 = vpop.f32.mrf.mxu0
  %3689 = vmatprep.mubr.f32.mxu0 0.0
  %3690 = vmatmul.mubr.f32.gmra.mxu0 %v3007
  %v3691 = vpop.f32.mrf.mxu0
  %v3692 = vadd.f32 %v3307, %v3691
  %v3693 = vpop.f32.mrf.mxu0
  %3694 = vmatprep.mubr.f32.mxu0 0.0
  %3695 = vmatmul.mubr.f32.gmra.mxu0 %v3010
  %v3696 = vpop.f32.mrf.mxu0
  %v3697 = vadd.f32 %v3312, %v3696
  %v3698 = vpop.f32.mrf.mxu0
  %3699 = vmatprep.mubr.f32.mxu0 0.0
  %3700 = vmatmul.mubr.f32.gmra.mxu0 %v3013
  %v3701 = vpop.f32.mrf.mxu0
  %v3702 = vadd.f32 %v3317, %v3701
  %v3703 = vpop.f32.mrf.mxu0
  %3704 = vmatprep.mubr.f32.mxu0 0.0
  %3705 = vmatmul.mubr.f32.gmra.mxu0 %v3016
  %v3706 = vpop.f32.mrf.mxu0
  %v3707 = vadd.f32 %v3322, %v3706
  %v3708 = vpop.f32.mrf.mxu0
  %3709 = vmatprep.mubr.f32.mxu0 0.0
  %3710 = vmatmul.mubr.f32.gmra.mxu0 %v3019
  %v3711 = vpop.f32.mrf.mxu0
  %v3712 = vadd.f32 %v3327, %v3711
  %v3713 = vpop.f32.mrf.mxu0
  %3714 = vmatprep.mubr.f32.mxu0 0.0
  %3715 = vmatmul.mubr.f32.gmra.mxu0 %v3022
  %v3716 = vpop.f32.mrf.mxu0
  %v3717 = vadd.f32 %v3332, %v3716
  %v3718 = vpop.f32.mrf.mxu0
  %3719 = vmatprep.mubr.f32.mxu0 0.0
  %3720 = vmatmul.mubr.f32.gmra.mxu0 %v3025
  %v3721 = vpop.f32.mrf.mxu0
  %v3722 = vadd.f32 %v3337, %v3721
  %v3723 = vpop.f32.mrf.mxu0
  %3724 = vmatprep.mubr.f32.mxu0 0.0
  %3725 = vmatmul.mubr.f32.gmra.mxu0 %v3028
  %v3726 = vpop.f32.mrf.mxu0
  %v3727 = vadd.f32 %v3342, %v3726
  %v3728 = vpop.f32.mrf.mxu0
  %3729 = vmatprep.mubr.f32.mxu0 0.0
  %3730 = vmatmul.mubr.f32.gmra.mxu0 %v3031
  %v3731 = vpop.f32.mrf.mxu0
  %v3732 = vadd.f32 %v3347, %v3731
  %v3733 = vpop.f32.mrf.mxu0
  %3734 = vmatprep.mubr.f32.mxu0 0.0
  %3735 = vmatmul.mubr.f32.gmra.mxu0 %v3034
  %v3736 = vpop.f32.mrf.mxu0
  %v3737 = vadd.f32 %v3352, %v3736
  %v3738 = vpop.f32.mrf.mxu0
  %3739 = vmatprep.mubr.f32.mxu0 0.0
  %3740 = vmatmul.mubr.f32.gmra.mxu0 %v3037
  %v3741 = vpop.f32.mrf.mxu0
  %v3742 = vadd.f32 %v3357, %v3741
  %v3743 = vpop.f32.mrf.mxu0
  %3744 = vmatprep.mubr.f32.mxu0 0.0
  %3745 = vmatmul.mubr.f32.gmra.mxu0 %v3040
  %v3746 = vpop.f32.mrf.mxu0
  %v3747 = vadd.f32 %v3362, %v3746
  %v3748 = vpop.f32.mrf.mxu0
  %3749 = vmatprep.mubr.f32.mxu0 0.0
  %3750 = vmatmul.mubr.f32.gmra.mxu0 %v3043
  %v3751 = vpop.f32.mrf.mxu0
  %v3752 = vadd.f32 %v3367, %v3751
  %v3753 = vpop.f32.mrf.mxu0
  %3754 = vmatprep.mubr.f32.mxu0 0.0
  %3755 = vmatmul.mubr.f32.gmra.mxu0 %v3046
  %v3756 = vpop.f32.mrf.mxu0
  %v3757 = vadd.f32 %v3372, %v3756
  %v3758 = vpop.f32.mrf.mxu0
  %3759 = vmatprep.mubr.f32.mxu0 0.0
  %3760 = vmatmul.mubr.f32.gmra.mxu0 %v3049
  %v3761 = vpop.f32.mrf.mxu0
  %v3762 = vadd.f32 %v3377, %v3761
  %v3763 = vpop.f32.mrf.mxu0
  %3764 = vmatprep.mubr.f32.mxu0 0.0
  %3765 = vmatmul.mubr.f32.gmra.mxu0 %v3052
  %v3766 = vpop.f32.mrf.mxu0
  %v3767 = vadd.f32 %v3382, %v3766
  %v3768 = vpop.f32.mrf.mxu0
  %3769 = vmatprep.mubr.f32.mxu0 0.0
  %3770 = vmatmul.mubr.f32.gmra.mxu0 %v3055
  %v3771 = vpop.f32.mrf.mxu0
  %v3772 = vadd.f32 %v3387, %v3771
  %v3773 = vpop.f32.mrf.mxu0
  %3774 = vmatprep.mubr.f32.mxu0 0.0
  %3775 = vmatmul.mubr.f32.gmra.mxu0 %v3058
  %v3776 = vpop.f32.mrf.mxu0
  %v3777 = vadd.f32 %v3392, %v3776
  %v3778 = vpop.f32.mrf.mxu0
  %3779 = vmatprep.mubr.f32.mxu0 0.0
  %3780 = vmatmul.mubr.f32.gmra.mxu0 %v3061
  %v3781 = vpop.f32.mrf.mxu0
  %v3782 = vadd.f32 %v3397, %v3781
  %v3783 = vpop.f32.mrf.mxu0
  %3784 = vmatprep.mubr.f32.mxu0 0.0
  %3785 = vmatmul.mubr.f32.gmra.mxu0 %v3064
  %v3786 = vpop.f32.mrf.mxu0
  %v3787 = vadd.f32 %v3402, %v3786
  %v3788 = vpop.f32.mrf.mxu0
  %3789 = vmatprep.mubr.f32.mxu0 0.0
  %3790 = vmatmul.mubr.f32.gmra.mxu0 %v3067
  %v3791 = vpop.f32.mrf.mxu0
  %v3792 = vadd.f32 %v3407, %v3791
  %v3793 = vpop.f32.mrf.mxu0
  %3794 = vmatprep.mubr.f32.mxu0 0.0
  %3795 = vmatmul.mubr.f32.gmra.mxu0 %v3070
  %v3796 = vpop.f32.mrf.mxu0
  %v3797 = vadd.f32 %v3412, %v3796
  %v3798 = vpop.f32.mrf.mxu0
  %3799 = vmatprep.mubr.f32.mxu0 0.0
  %3800 = vmatmul.mubr.f32.gmra.mxu0 %v3073
  %v3801 = vpop.f32.mrf.mxu0
  %v3802 = vadd.f32 %v3417, %v3801
  %v3803 = vpop.f32.mrf.mxu0
  %3804 = vmatprep.mubr.f32.mxu0 0.0
  %3805 = vmatmul.mubr.f32.gmra.mxu0 %v3076
  %v3806 = vpop.f32.mrf.mxu0
  %v3807 = vadd.f32 %v3422, %v3806
  %v3808 = vpop.f32.mrf.mxu0
  %3809 = vmatprep.mubr.f32.mxu0 0.0
  %3810 = vmatmul.mubr.f32.gmra.mxu0 %v3079
  %v3811 = vpop.f32.mrf.mxu0
  %v3812 = vadd.f32 %v3427, %v3811
  %v3813 = vpop.f32.mrf.mxu0
  %3814 = vmatprep.mubr.f32.mxu0 0.0
  %3815 = vmatmul.mubr.f32.gmra.mxu0 %v3082
  %v3816 = vpop.f32.mrf.mxu0
  %v3817 = vadd.f32 %v3432, %v3816
  %v3818 = vpop.f32.mrf.mxu0
  %3819 = vmatprep.mubr.f32.mxu0 0.0
  %3820 = vmatmul.mubr.f32.gmra.mxu0 %v3085
  %v3821 = vpop.f32.mrf.mxu0
  %v3822 = vadd.f32 %v3437, %v3821
  %v3823 = vpop.f32.mrf.mxu0
  %3824 = vmatprep.mubr.f32.mxu0 0.0
  %3825 = vmatmul.mubr.f32.gmra.mxu0 %v3088
  %v3826 = vpop.f32.mrf.mxu0
  %v3827 = vadd.f32 %v3442, %v3826
  %v3828 = vpop.f32.mrf.mxu0
  %3829 = vmatprep.mubr.f32.mxu0 0.0
  %3830 = vmatmul.mubr.f32.gmra.mxu0 %v3091
  %v3831 = vpop.f32.mrf.mxu0
  %v3832 = vadd.f32 %v3447, %v3831
  %v3833 = vpop.f32.mrf.mxu0
  %3834 = vmatprep.mubr.f32.mxu0 0.0
  %3835 = vmatmul.mubr.f32.gmra.mxu0 %v3094
  %v3836 = vpop.f32.mrf.mxu0
  %v3837 = vadd.f32 %v3452, %v3836
  %v3838 = vpop.f32.mrf.mxu0
  %3839 = vmatprep.mubr.f32.mxu0 0.0
  %3840 = vmatmul.mubr.f32.gmra.mxu0 %v3097
  %v3841 = vpop.f32.mrf.mxu0
  %v3842 = vadd.f32 %v3457, %v3841
  %v3843 = vpop.f32.mrf.mxu0
  %3844 = vmatprep.mubr.f32.mxu0 0.0
  %3845 = vmatmul.mubr.f32.gmra.mxu0 %v3100
  %v3846 = vpop.f32.mrf.mxu0
  %v3847 = vadd.f32 %v3462, %v3846
  %v3848 = vpop.f32.mrf.mxu0
  %3849 = vmatprep.mubr.f32.mxu0 0.0
  %3850 = vmatmul.mubr.f32.gmra.mxu0 %v3103
  %v3851 = vpop.f32.mrf.mxu0
  %v3852 = vadd.f32 %v3467, %v3851
  %v3853 = vpop.f32.mrf.mxu0
  %3854 = vmatprep.mubr.f32.mxu0 0.0
  %3855 = vmatmul.mubr.f32.gmra.mxu0 %v3106
  %v3856 = vpop.f32.mrf.mxu0
  %v3857 = vadd.f32 %v3472, %v3856
  %v3858 = vpop.f32.mrf.mxu0
  %3859 = vmatprep.mubr.f32.mxu0 0.0
  %3860 = vmatmul.mubr.f32.gmra.mxu0 %v3109
  %v3861 = vpop.f32.mrf.mxu0
  %v3862 = vadd.f32 %v3477, %v3861
  %v3863 = vpop.f32.mrf.mxu0
  %3864 = vmatprep.mubr.f32.mxu0 0.0
  %3865 = vmatmul.mubr.f32.gmra.mxu0 %v3112
  %v3866 = vpop.f32.mrf.mxu0
  %v3867 = vadd.f32 %v3482, %v3866
  %v3868 = vpop.f32.mrf.mxu0
  %3869 = vmatprep.mubr.f32.mxu0 0.0
  %3870 = vmatmul.mubr.f32.gmra.mxu0 %v3115
  %v3871 = vpop.f32.mrf.mxu0
  %v3872 = vadd.f32 %v3487, %v3871
  %v3873 = vpop.f32.mrf.mxu0
  %3874 = vmatprep.mubr.f32.mxu0 0.0
  %3875 = vmatmul.mubr.f32.gmra.mxu0 %v3118
  %v3876 = vpop.f32.mrf.mxu0
  %v3877 = vadd.f32 %v3492, %v3876
  %v3878 = vpop.f32.mrf.mxu0
  %3879 = vmatprep.mubr.f32.mxu0 0.0
  %3880 = vmatmul.mubr.f32.gmra.mxu0 %v3121
  %v3881 = vpop.f32.mrf.mxu0
  %v3882 = vadd.f32 %v3497, %v3881
  %v3883 = vpop.f32.mrf.mxu0
  %3884 = vmatprep.mubr.f32.mxu0 0.0
  %3885 = vmatmul.mubr.f32.gmra.mxu0 %v3124
  %v3886 = vpop.f32.mrf.mxu0
  %v3887 = vadd.f32 %v3502, %v3886
  %v3888 = vpop.f32.mrf.mxu0
  %3889 = vmatprep.mubr.f32.mxu0 0.0
  %3890 = vmatmul.mubr.f32.gmra.mxu0 %v3127
  %v3891 = vpop.f32.mrf.mxu0
  %v3892 = vadd.f32 %v3507, %v3891
  %v3893 = vpop.f32.mrf.mxu0
  %3894 = vmatprep.mubr.f32.mxu0 0.0
  %3895 = vmatmul.mubr.f32.gmra.mxu0 %v3130
  %v3896 = vpop.f32.mrf.mxu0
  %v3897 = vadd.f32 %v3512, %v3896
  %v3898 = vpop.f32.mrf.mxu0
  %3899 = vmatprep.mubr.f32.mxu0 0.0
  %3900 = vmatmul.mubr.f32.gmra.mxu0 %v3133
  %v3901 = vpop.f32.mrf.mxu0
  %v3902 = vadd.f32 %v3517, %v3901
  %v3903 = vpop.f32.mrf.mxu0
  %3904 = vdwg.mxu0
  %v3905 = vsel %vm85, %v3587, 0.0
  %v3906 = vsel %vm85, %v3592, 0.0
  %v3907 = vadd.f32 %v3905, %v3906
  %v3908 = vsel %vm85, %v3597, 0.0
  %v3909 = vadd.f32 %v3907, %v3908
  %v3910 = vsel %vm85, %v3602, 0.0
  %v3911 = vadd.f32 %v3909, %v3910
  %v3912 = vsel %vm85, %v3607, 0.0
  %v3913 = vadd.f32 %v3911, %v3912
  %v3914 = vsel %vm85, %v3612, 0.0
  %v3915 = vadd.f32 %v3913, %v3914
  %v3916 = vsel %vm85, %v3617, 0.0
  %v3917 = vadd.f32 %v3915, %v3916
  %v3918 = vsel %vm85, %v3622, 0.0
  %v3919 = vadd.f32 %v3917, %v3918
  %v3920 = vsel %vm85, %v3627, 0.0
  %v3921 = vadd.f32 %v3919, %v3920
  %v3922 = vsel %vm85, %v3632, 0.0
  %v3923 = vadd.f32 %v3921, %v3922
  %v3924 = vsel %vm85, %v3637, 0.0
  %v3925 = vadd.f32 %v3923, %v3924
  %v3926 = vsel %vm85, %v3642, 0.0
  %v3927 = vadd.f32 %v3925, %v3926
  %v3928 = vsel %vm85, %v3647, 0.0
  %v3929 = vadd.f32 %v3927, %v3928
  %v3930 = vsel %vm85, %v3652, 0.0
  %v3931 = vadd.f32 %v3929, %v3930
  %v3932 = vsel %vm85, %v3657, 0.0
  %v3933 = vadd.f32 %v3931, %v3932
  %v3934 = vsel %vm85, %v3662, 0.0
  %v3935 = vadd.f32 %v3933, %v3934
  %v3936 = vsel %vm85, %v3667, 0.0
  %v3937 = vadd.f32 %v3935, %v3936
  %v3938 = vsel %vm85, %v3672, 0.0
  %v3939 = vadd.f32 %v3937, %v3938
  %v3940 = vsel %vm85, %v3677, 0.0
  %v3941 = vadd.f32 %v3939, %v3940
  %v3942 = vsel %vm85, %v3682, 0.0
  %v3943 = vadd.f32 %v3941, %v3942
  %v3944 = vsel %vm85, %v3687, 0.0
  %v3945 = vadd.f32 %v3943, %v3944
  %v3946 = vsel %vm85, %v3692, 0.0
  %v3947 = vadd.f32 %v3945, %v3946
  %v3948 = vsel %vm85, %v3697, 0.0
  %v3949 = vadd.f32 %v3947, %v3948
  %v3950 = vsel %vm85, %v3702, 0.0
  %v3951 = vadd.f32 %v3949, %v3950
  %v3952 = vsel %vm85, %v3707, 0.0
  %v3953 = vadd.f32 %v3951, %v3952
  %v3954 = vsel %vm85, %v3712, 0.0
  %v3955 = vadd.f32 %v3953, %v3954
  %v3956 = vsel %vm85, %v3717, 0.0
  %v3957 = vadd.f32 %v3955, %v3956
  %v3958 = vsel %vm85, %v3722, 0.0
  %v3959 = vadd.f32 %v3957, %v3958
  %v3960 = vsel %vm85, %v3727, 0.0
  %v3961 = vadd.f32 %v3959, %v3960
  %v3962 = vsel %vm85, %v3732, 0.0
  %v3963 = vadd.f32 %v3961, %v3962
  %v3964 = vsel %vm85, %v3737, 0.0
  %v3965 = vadd.f32 %v3963, %v3964
  %v3966 = vsel %vm85, %v3742, 0.0
  %v3967 = vadd.f32 %v3965, %v3966
  %v3968 = vsel %vm85, %v3747, 0.0
  %v3969 = vadd.f32 %v3967, %v3968
  %v3970 = vsel %vm85, %v3752, 0.0
  %v3971 = vadd.f32 %v3969, %v3970
  %v3972 = vsel %vm85, %v3757, 0.0
  %v3973 = vadd.f32 %v3971, %v3972
  %v3974 = vsel %vm85, %v3762, 0.0
  %v3975 = vadd.f32 %v3973, %v3974
  %v3976 = vsel %vm85, %v3767, 0.0
  %v3977 = vadd.f32 %v3975, %v3976
  %v3978 = vsel %vm85, %v3772, 0.0
  %v3979 = vadd.f32 %v3977, %v3978
  %v3980 = vsel %vm85, %v3777, 0.0
  %v3981 = vadd.f32 %v3979, %v3980
  %v3982 = vsel %vm85, %v3782, 0.0
  %v3983 = vadd.f32 %v3981, %v3982
  %v3984 = vsel %vm85, %v3787, 0.0
  %v3985 = vadd.f32 %v3983, %v3984
  %v3986 = vsel %vm85, %v3792, 0.0
  %v3987 = vadd.f32 %v3985, %v3986
  %v3988 = vsel %vm85, %v3797, 0.0
  %v3989 = vadd.f32 %v3987, %v3988
  %v3990 = vsel %vm85, %v3802, 0.0
  %v3991 = vadd.f32 %v3989, %v3990
  %v3992 = vsel %vm85, %v3807, 0.0
  %v3993 = vadd.f32 %v3991, %v3992
  %v3994 = vsel %vm85, %v3812, 0.0
  %v3995 = vadd.f32 %v3993, %v3994
  %v3996 = vsel %vm85, %v3817, 0.0
  %v3997 = vadd.f32 %v3995, %v3996
  %v3998 = vsel %vm85, %v3822, 0.0
  %v3999 = vadd.f32 %v3997, %v3998
  %v4000 = vsel %vm85, %v3827, 0.0
  %v4001 = vadd.f32 %v3999, %v4000
  %v4002 = vsel %vm85, %v3832, 0.0
  %v4003 = vadd.f32 %v4001, %v4002
  %v4004 = vsel %vm85, %v3837, 0.0
  %v4005 = vadd.f32 %v4003, %v4004
  %v4006 = vsel %vm85, %v3842, 0.0
  %v4007 = vadd.f32 %v4005, %v4006
  %v4008 = vsel %vm85, %v3847, 0.0
  %v4009 = vadd.f32 %v4007, %v4008
  %v4010 = vsel %vm85, %v3852, 0.0
  %v4011 = vadd.f32 %v4009, %v4010
  %v4012 = vsel %vm85, %v3857, 0.0
  %v4013 = vadd.f32 %v4011, %v4012
  %v4014 = vsel %vm85, %v3862, 0.0
  %v4015 = vadd.f32 %v4013, %v4014
  %v4016 = vsel %vm85, %v3867, 0.0
  %v4017 = vadd.f32 %v4015, %v4016
  %v4018 = vsel %vm85, %v3872, 0.0
  %v4019 = vadd.f32 %v4017, %v4018
  %v4020 = vsel %vm85, %v3877, 0.0
  %v4021 = vadd.f32 %v4019, %v4020
  %v4022 = vsel %vm85, %v3882, 0.0
  %v4023 = vadd.f32 %v4021, %v4022
  %v4024 = vsel %vm85, %v3887, 0.0
  %v4025 = vadd.f32 %v4023, %v4024
  %v4026 = vsel %vm85, %v3892, 0.0
  %v4027 = vadd.f32 %v4025, %v4026
  %v4028 = vsel %vm85, %v3897, 0.0
  %v4029 = vadd.f32 %v4027, %v4028
  %v4030 = vsel %vm85, %v3902, 0.0
  %v4031 = vadd.f32 %v4029, %v4030
  %v4032 = vrot.slane %v4031, 4
  %v4033 = vadd.f32 %v4031, %v4032
  %v4034 = vrot.slane %v4033, 2
  %v4035 = vadd.f32 %v4033, %v4034
  %v4036 = vrot.slane %v4035, 1
  %v4037 = vadd.f32 %v4035, %v4036
  %v4038 = vmul.f32 %v3587, %v3587
  %v4039 = vmul.f32 %v3592, %v3592
  %v4040 = vmul.f32 %v3597, %v3597
  %v4041 = vmul.f32 %v3602, %v3602
  %v4042 = vmul.f32 %v3607, %v3607
  %v4043 = vmul.f32 %v3612, %v3612
  %v4044 = vmul.f32 %v3617, %v3617
  %v4045 = vmul.f32 %v3622, %v3622
  %v4046 = vmul.f32 %v3627, %v3627
  %v4047 = vmul.f32 %v3632, %v3632
  %v4048 = vmul.f32 %v3637, %v3637
  %v4049 = vmul.f32 %v3642, %v3642
  %v4050 = vmul.f32 %v3647, %v3647
  %v4051 = vmul.f32 %v3652, %v3652
  %v4052 = vmul.f32 %v3657, %v3657
  %v4053 = vmul.f32 %v3662, %v3662
  %v4054 = vmul.f32 %v3667, %v3667
  %v4055 = vmul.f32 %v3672, %v3672
  %v4056 = vmul.f32 %v3677, %v3677
  %v4057 = vmul.f32 %v3682, %v3682
  %v4058 = vmul.f32 %v3687, %v3687
  %v4059 = vmul.f32 %v3692, %v3692
  %v4060 = vmul.f32 %v3697, %v3697
  %v4061 = vmul.f32 %v3702, %v3702
  %v4062 = vmul.f32 %v3707, %v3707
  %v4063 = vmul.f32 %v3712, %v3712
  %v4064 = vmul.f32 %v3717, %v3717
  %v4065 = vmul.f32 %v3722, %v3722
  %v4066 = vmul.f32 %v3727, %v3727
  %v4067 = vmul.f32 %v3732, %v3732
  %v4068 = vmul.f32 %v3737, %v3737
  %v4069 = vmul.f32 %v3742, %v3742
  %v4070 = vmul.f32 %v3747, %v3747
  %v4071 = vmul.f32 %v3752, %v3752
  %v4072 = vmul.f32 %v3757, %v3757
  %v4073 = vmul.f32 %v3762, %v3762
  %v4074 = vmul.f32 %v3767, %v3767
  %v4075 = vmul.f32 %v3772, %v3772
  %v4076 = vmul.f32 %v3777, %v3777
  %v4077 = vmul.f32 %v3782, %v3782
  %v4078 = vmul.f32 %v3787, %v3787
  %v4079 = vmul.f32 %v3792, %v3792
  %v4080 = vmul.f32 %v3797, %v3797
  %v4081 = vmul.f32 %v3802, %v3802
  %v4082 = vmul.f32 %v3807, %v3807
  %v4083 = vmul.f32 %v3812, %v3812
  %v4084 = vmul.f32 %v3817, %v3817
  %v4085 = vmul.f32 %v3822, %v3822
  %v4086 = vmul.f32 %v3827, %v3827
  %v4087 = vmul.f32 %v3832, %v3832
  %v4088 = vmul.f32 %v3837, %v3837
  %v4089 = vmul.f32 %v3842, %v3842
  %v4090 = vmul.f32 %v3847, %v3847
  %v4091 = vmul.f32 %v3852, %v3852
  %v4092 = vmul.f32 %v3857, %v3857
  %v4093 = vmul.f32 %v3862, %v3862
  %v4094 = vmul.f32 %v3867, %v3867
  %v4095 = vmul.f32 %v3872, %v3872
  %v4096 = vmul.f32 %v3877, %v3877
  %v4097 = vmul.f32 %v3882, %v3882
  %v4098 = vmul.f32 %v3887, %v3887
  %v4099 = vmul.f32 %v3892, %v3892
  %v4100 = vmul.f32 %v3897, %v3897
  %v4101 = vmul.f32 %v3902, %v3902
  %v4102 = vsel %vm85, %v4038, 0.0
  %v4103 = vsel %vm85, %v4039, 0.0
  %v4104 = vadd.f32 %v4102, %v4103
  %v4105 = vsel %vm85, %v4040, 0.0
  %v4106 = vadd.f32 %v4104, %v4105
  %v4107 = vsel %vm85, %v4041, 0.0
  %v4108 = vadd.f32 %v4106, %v4107
  %v4109 = vsel %vm85, %v4042, 0.0
  %v4110 = vadd.f32 %v4108, %v4109
  %v4111 = vsel %vm85, %v4043, 0.0
  %v4112 = vadd.f32 %v4110, %v4111
  %v4113 = vsel %vm85, %v4044, 0.0
  %v4114 = vadd.f32 %v4112, %v4113
  %v4115 = vsel %vm85, %v4045, 0.0
  %v4116 = vadd.f32 %v4114, %v4115
  %v4117 = vsel %vm85, %v4046, 0.0
  %v4118 = vadd.f32 %v4116, %v4117
  %v4119 = vsel %vm85, %v4047, 0.0
  %v4120 = vadd.f32 %v4118, %v4119
  %v4121 = vsel %vm85, %v4048, 0.0
  %v4122 = vadd.f32 %v4120, %v4121
  %v4123 = vsel %vm85, %v4049, 0.0
  %v4124 = vadd.f32 %v4122, %v4123
  %v4125 = vsel %vm85, %v4050, 0.0
  %v4126 = vadd.f32 %v4124, %v4125
  %v4127 = vsel %vm85, %v4051, 0.0
  %v4128 = vadd.f32 %v4126, %v4127
  %v4129 = vsel %vm85, %v4052, 0.0
  %v4130 = vadd.f32 %v4128, %v4129
  %v4131 = vsel %vm85, %v4053, 0.0
  %v4132 = vadd.f32 %v4130, %v4131
  %v4133 = vsel %vm85, %v4054, 0.0
  %v4134 = vadd.f32 %v4132, %v4133
  %v4135 = vsel %vm85, %v4055, 0.0
  %v4136 = vadd.f32 %v4134, %v4135
  %v4137 = vsel %vm85, %v4056, 0.0
  %v4138 = vadd.f32 %v4136, %v4137
  %v4139 = vsel %vm85, %v4057, 0.0
  %v4140 = vadd.f32 %v4138, %v4139
  %v4141 = vsel %vm85, %v4058, 0.0
  %v4142 = vadd.f32 %v4140, %v4141
  %v4143 = vsel %vm85, %v4059, 0.0
  %v4144 = vadd.f32 %v4142, %v4143
  %v4145 = vsel %vm85, %v4060, 0.0
  %v4146 = vadd.f32 %v4144, %v4145
  %v4147 = vsel %vm85, %v4061, 0.0
  %v4148 = vadd.f32 %v4146, %v4147
  %v4149 = vsel %vm85, %v4062, 0.0
  %v4150 = vadd.f32 %v4148, %v4149
  %v4151 = vsel %vm85, %v4063, 0.0
  %v4152 = vadd.f32 %v4150, %v4151
  %v4153 = vsel %vm85, %v4064, 0.0
  %v4154 = vadd.f32 %v4152, %v4153
  %v4155 = vsel %vm85, %v4065, 0.0
  %v4156 = vadd.f32 %v4154, %v4155
  %v4157 = vsel %vm85, %v4066, 0.0
  %v4158 = vadd.f32 %v4156, %v4157
  %v4159 = vsel %vm85, %v4067, 0.0
  %v4160 = vadd.f32 %v4158, %v4159
  %v4161 = vsel %vm85, %v4068, 0.0
  %v4162 = vadd.f32 %v4160, %v4161
  %v4163 = vsel %vm85, %v4069, 0.0
  %v4164 = vadd.f32 %v4162, %v4163
  %v4165 = vsel %vm85, %v4070, 0.0
  %v4166 = vadd.f32 %v4164, %v4165
  %v4167 = vsel %vm85, %v4071, 0.0
  %v4168 = vadd.f32 %v4166, %v4167
  %v4169 = vsel %vm85, %v4072, 0.0
  %v4170 = vadd.f32 %v4168, %v4169
  %v4171 = vsel %vm85, %v4073, 0.0
  %v4172 = vadd.f32 %v4170, %v4171
  %v4173 = vsel %vm85, %v4074, 0.0
  %v4174 = vadd.f32 %v4172, %v4173
  %v4175 = vsel %vm85, %v4075, 0.0
  %v4176 = vadd.f32 %v4174, %v4175
  %v4177 = vsel %vm85, %v4076, 0.0
  %v4178 = vadd.f32 %v4176, %v4177
  %v4179 = vsel %vm85, %v4077, 0.0
  %v4180 = vadd.f32 %v4178, %v4179
  %v4181 = vsel %vm85, %v4078, 0.0
  %v4182 = vadd.f32 %v4180, %v4181
  %v4183 = vsel %vm85, %v4079, 0.0
  %v4184 = vadd.f32 %v4182, %v4183
  %v4185 = vsel %vm85, %v4080, 0.0
  %v4186 = vadd.f32 %v4184, %v4185
  %v4187 = vsel %vm85, %v4081, 0.0
  %v4188 = vadd.f32 %v4186, %v4187
  %v4189 = vsel %vm85, %v4082, 0.0
  %v4190 = vadd.f32 %v4188, %v4189
  %v4191 = vsel %vm85, %v4083, 0.0
  %v4192 = vadd.f32 %v4190, %v4191
  %v4193 = vsel %vm85, %v4084, 0.0
  %v4194 = vadd.f32 %v4192, %v4193
  %v4195 = vsel %vm85, %v4085, 0.0
  %v4196 = vadd.f32 %v4194, %v4195
  %v4197 = vsel %vm85, %v4086, 0.0
  %v4198 = vadd.f32 %v4196, %v4197
  %v4199 = vsel %vm85, %v4087, 0.0
  %v4200 = vadd.f32 %v4198, %v4199
  %v4201 = vsel %vm85, %v4088, 0.0
  %v4202 = vadd.f32 %v4200, %v4201
  %v4203 = vsel %vm85, %v4089, 0.0
  %v4204 = vadd.f32 %v4202, %v4203
  %v4205 = vsel %vm85, %v4090, 0.0
  %v4206 = vadd.f32 %v4204, %v4205
  %v4207 = vsel %vm85, %v4091, 0.0
  %v4208 = vadd.f32 %v4206, %v4207
  %v4209 = vsel %vm85, %v4092, 0.0
  %v4210 = vadd.f32 %v4208, %v4209
  %v4211 = vsel %vm85, %v4093, 0.0
  %v4212 = vadd.f32 %v4210, %v4211
  %v4213 = vsel %vm85, %v4094, 0.0
  %v4214 = vadd.f32 %v4212, %v4213
  %v4215 = vsel %vm85, %v4095, 0.0
  %v4216 = vadd.f32 %v4214, %v4215
  %v4217 = vsel %vm85, %v4096, 0.0
  %v4218 = vadd.f32 %v4216, %v4217
  %v4219 = vsel %vm85, %v4097, 0.0
  %v4220 = vadd.f32 %v4218, %v4219
  %v4221 = vsel %vm85, %v4098, 0.0
  %v4222 = vadd.f32 %v4220, %v4221
  %v4223 = vsel %vm85, %v4099, 0.0
  %v4224 = vadd.f32 %v4222, %v4223
  %v4225 = vsel %vm85, %v4100, 0.0
  %v4226 = vadd.f32 %v4224, %v4225
  %v4227 = vsel %vm85, %v4101, 0.0
  %v4228 = vadd.f32 %v4226, %v4227
  %v4229 = vrot.slane %v4228, 4
  %v4230 = vadd.f32 %v4228, %v4229
  %v4231 = vrot.slane %v4230, 2
  %v4232 = vadd.f32 %v4230, %v4231
  %v4233 = vrot.slane %v4232, 1
  %v4234 = vadd.f32 %v4232, %v4233
  %v4235 = vmul.f32 %v4037, 0.001953125
  %v4236 = vmul.f32 %v4234, 0.001953125
  %v4237 = vmul.f32 %v4235, %v4235
  %v4238 = vsub.f32 %v4236, %v4237
  %v4239 = vadd.f32 %v4238, 1e-05
  %v4240 = vrsqrt.pop %v4239
  %v4241 = vmul.f32 %v4240, %v17
  %v4242 = vmul.f32 %v4235, %v4241
  %v4243 = vsub.f32 %v18, %v4242
  %v4244 = vlaneseq
  %v4245 = vshrl.u32 %v4244, 7
  %v4246 = vsub.s32 0, %v4245
  %v4247 = vrot.slane %v4241, %v4246
  %v4248 = vmul.f32 %v3587, %v4247
  %v4249 = vmul.f32 %v3592, %v4247
  %v4250 = vmul.f32 %v3597, %v4247
  %v4251 = vmul.f32 %v3602, %v4247
  %v4252 = vmul.f32 %v3607, %v4247
  %v4253 = vmul.f32 %v3612, %v4247
  %v4254 = vmul.f32 %v3617, %v4247
  %v4255 = vmul.f32 %v3622, %v4247
  %v4256 = vmul.f32 %v3627, %v4247
  %v4257 = vmul.f32 %v3632, %v4247
  %v4258 = vmul.f32 %v3637, %v4247
  %v4259 = vmul.f32 %v3642, %v4247
  %v4260 = vmul.f32 %v3647, %v4247
  %v4261 = vmul.f32 %v3652, %v4247
  %v4262 = vmul.f32 %v3657, %v4247
  %v4263 = vmul.f32 %v3662, %v4247
  %v4264 = vmul.f32 %v3667, %v4247
  %v4265 = vmul.f32 %v3672, %v4247
  %v4266 = vmul.f32 %v3677, %v4247
  %v4267 = vmul.f32 %v3682, %v4247
  %v4268 = vmul.f32 %v3687, %v4247
  %v4269 = vmul.f32 %v3692, %v4247
  %v4270 = vmul.f32 %v3697, %v4247
  %v4271 = vmul.f32 %v3702, %v4247
  %v4272 = vmul.f32 %v3707, %v4247
  %v4273 = vmul.f32 %v3712, %v4247
  %v4274 = vmul.f32 %v3717, %v4247
  %v4275 = vmul.f32 %v3722, %v4247
  %v4276 = vmul.f32 %v3727, %v4247
  %v4277 = vmul.f32 %v3732, %v4247
  %v4278 = vmul.f32 %v3737, %v4247
  %v4279 = vmul.f32 %v3742, %v4247
  %v4280 = vmul.f32 %v3747, %v4247
  %v4281 = vmul.f32 %v3752, %v4247
  %v4282 = vmul.f32 %v3757, %v4247
  %v4283 = vmul.f32 %v3762, %v4247
  %v4284 = vmul.f32 %v3767, %v4247
  %v4285 = vmul.f32 %v3772, %v4247
  %v4286 = vmul.f32 %v3777, %v4247
  %v4287 = vmul.f32 %v3782, %v4247
  %v4288 = vmul.f32 %v3787, %v4247
  %v4289 = vmul.f32 %v3792, %v4247
  %v4290 = vmul.f32 %v3797, %v4247
  %v4291 = vmul.f32 %v3802, %v4247
  %v4292 = vmul.f32 %v3807, %v4247
  %v4293 = vmul.f32 %v3812, %v4247
  %v4294 = vmul.f32 %v3817, %v4247
  %v4295 = vmul.f32 %v3822, %v4247
  %v4296 = vmul.f32 %v3827, %v4247
  %v4297 = vmul.f32 %v3832, %v4247
  %v4298 = vmul.f32 %v3837, %v4247
  %v4299 = vmul.f32 %v3842, %v4247
  %v4300 = vmul.f32 %v3847, %v4247
  %v4301 = vmul.f32 %v3852, %v4247
  %v4302 = vmul.f32 %v3857, %v4247
  %v4303 = vmul.f32 %v3862, %v4247
  %v4304 = vmul.f32 %v3867, %v4247
  %v4305 = vmul.f32 %v3872, %v4247
  %v4306 = vmul.f32 %v3877, %v4247
  %v4307 = vmul.f32 %v3882, %v4247
  %v4308 = vmul.f32 %v3887, %v4247
  %v4309 = vmul.f32 %v3892, %v4247
  %v4310 = vmul.f32 %v3897, %v4247
  %v4311 = vmul.f32 %v3902, %v4247
  %v4312 = vlaneseq
  %v4313 = vshrl.u32 %v4312, 7
  %v4314 = vsub.s32 0, %v4313
  %v4315 = vrot.slane %v4243, %v4314
  %v4316 = vadd.f32 %v4248, %v4315
  %v4317 = vadd.f32 %v4249, %v4315
  %v4318 = vadd.f32 %v4250, %v4315
  %v4319 = vadd.f32 %v4251, %v4315
  %v4320 = vadd.f32 %v4252, %v4315
  %v4321 = vadd.f32 %v4253, %v4315
  %v4322 = vadd.f32 %v4254, %v4315
  %v4323 = vadd.f32 %v4255, %v4315
  %v4324 = vadd.f32 %v4256, %v4315
  %v4325 = vadd.f32 %v4257, %v4315
  %v4326 = vadd.f32 %v4258, %v4315
  %v4327 = vadd.f32 %v4259, %v4315
  %v4328 = vadd.f32 %v4260, %v4315
  %v4329 = vadd.f32 %v4261, %v4315
  %v4330 = vadd.f32 %v4262, %v4315
  %v4331 = vadd.f32 %v4263, %v4315
  %v4332 = vadd.f32 %v4264, %v4315
  %v4333 = vadd.f32 %v4265, %v4315
  %v4334 = vadd.f32 %v4266, %v4315
  %v4335 = vadd.f32 %v4267, %v4315
  %v4336 = vadd.f32 %v4268, %v4315
  %v4337 = vadd.f32 %v4269, %v4315
  %v4338 = vadd.f32 %v4270, %v4315
  %v4339 = vadd.f32 %v4271, %v4315
  %v4340 = vadd.f32 %v4272, %v4315
  %v4341 = vadd.f32 %v4273, %v4315
  %v4342 = vadd.f32 %v4274, %v4315
  %v4343 = vadd.f32 %v4275, %v4315
  %v4344 = vadd.f32 %v4276, %v4315
  %v4345 = vadd.f32 %v4277, %v4315
  %v4346 = vadd.f32 %v4278, %v4315
  %v4347 = vadd.f32 %v4279, %v4315
  %v4348 = vadd.f32 %v4280, %v4315
  %v4349 = vadd.f32 %v4281, %v4315
  %v4350 = vadd.f32 %v4282, %v4315
  %v4351 = vadd.f32 %v4283, %v4315
  %v4352 = vadd.f32 %v4284, %v4315
  %v4353 = vadd.f32 %v4285, %v4315
  %v4354 = vadd.f32 %v4286, %v4315
  %v4355 = vadd.f32 %v4287, %v4315
  %v4356 = vadd.f32 %v4288, %v4315
  %v4357 = vadd.f32 %v4289, %v4315
  %v4358 = vadd.f32 %v4290, %v4315
  %v4359 = vadd.f32 %v4291, %v4315
  %v4360 = vadd.f32 %v4292, %v4315
  %v4361 = vadd.f32 %v4293, %v4315
  %v4362 = vadd.f32 %v4294, %v4315
  %v4363 = vadd.f32 %v4295, %v4315
  %v4364 = vadd.f32 %v4296, %v4315
  %v4365 = vadd.f32 %v4297, %v4315
  %v4366 = vadd.f32 %v4298, %v4315
  %v4367 = vadd.f32 %v4299, %v4315
  %v4368 = vadd.f32 %v4300, %v4315
  %v4369 = vadd.f32 %v4301, %v4315
  %v4370 = vadd.f32 %v4302, %v4315
  %v4371 = vadd.f32 %v4303, %v4315
  %v4372 = vadd.f32 %v4304, %v4315
  %v4373 = vadd.f32 %v4305, %v4315
  %v4374 = vadd.f32 %v4306, %v4315
  %v4375 = vadd.f32 %v4307, %v4315
  %v4376 = vadd.f32 %v4308, %v4315
  %v4377 = vadd.f32 %v4309, %v4315
  %v4378 = vadd.f32 %v4310, %v4315
  %v4379 = vadd.f32 %v4311, %v4315
  %v4380 = vmax.f32 %v4316, 0.0
  %v4381 = vmax.f32 %v4317, 0.0
  %v4382 = vmax.f32 %v4318, 0.0
  %v4383 = vmax.f32 %v4319, 0.0
  %v4384 = vmax.f32 %v4320, 0.0
  %v4385 = vmax.f32 %v4321, 0.0
  %v4386 = vmax.f32 %v4322, 0.0
  %v4387 = vmax.f32 %v4323, 0.0
  %v4388 = vmax.f32 %v4324, 0.0
  %v4389 = vmax.f32 %v4325, 0.0
  %v4390 = vmax.f32 %v4326, 0.0
  %v4391 = vmax.f32 %v4327, 0.0
  %v4392 = vmax.f32 %v4328, 0.0
  %v4393 = vmax.f32 %v4329, 0.0
  %v4394 = vmax.f32 %v4330, 0.0
  %v4395 = vmax.f32 %v4331, 0.0
  %v4396 = vmax.f32 %v4332, 0.0
  %v4397 = vmax.f32 %v4333, 0.0
  %v4398 = vmax.f32 %v4334, 0.0
  %v4399 = vmax.f32 %v4335, 0.0
  %v4400 = vmax.f32 %v4336, 0.0
  %v4401 = vmax.f32 %v4337, 0.0
  %v4402 = vmax.f32 %v4338, 0.0
  %v4403 = vmax.f32 %v4339, 0.0
  %v4404 = vmax.f32 %v4340, 0.0
  %v4405 = vmax.f32 %v4341, 0.0
  %v4406 = vmax.f32 %v4342, 0.0
  %v4407 = vmax.f32 %v4343, 0.0
  %v4408 = vmax.f32 %v4344, 0.0
  %v4409 = vmax.f32 %v4345, 0.0
  %v4410 = vmax.f32 %v4346, 0.0
  %v4411 = vmax.f32 %v4347, 0.0
  %v4412 = vmax.f32 %v4348, 0.0
  %v4413 = vmax.f32 %v4349, 0.0
  %v4414 = vmax.f32 %v4350, 0.0
  %v4415 = vmax.f32 %v4351, 0.0
  %v4416 = vmax.f32 %v4352, 0.0
  %v4417 = vmax.f32 %v4353, 0.0
  %v4418 = vmax.f32 %v4354, 0.0
  %v4419 = vmax.f32 %v4355, 0.0
  %v4420 = vmax.f32 %v4356, 0.0
  %v4421 = vmax.f32 %v4357, 0.0
  %v4422 = vmax.f32 %v4358, 0.0
  %v4423 = vmax.f32 %v4359, 0.0
  %v4424 = vmax.f32 %v4360, 0.0
  %v4425 = vmax.f32 %v4361, 0.0
  %v4426 = vmax.f32 %v4362, 0.0
  %v4427 = vmax.f32 %v4363, 0.0
  %v4428 = vmax.f32 %v4364, 0.0
  %v4429 = vmax.f32 %v4365, 0.0
  %v4430 = vmax.f32 %v4366, 0.0
  %v4431 = vmax.f32 %v4367, 0.0
  %v4432 = vmax.f32 %v4368, 0.0
  %v4433 = vmax.f32 %v4369, 0.0
  %v4434 = vmax.f32 %v4370, 0.0
  %v4435 = vmax.f32 %v4371, 0.0
  %v4436 = vmax.f32 %v4372, 0.0
  %v4437 = vmax.f32 %v4373, 0.0
  %v4438 = vmax.f32 %v4374, 0.0
  %v4439 = vmax.f32 %v4375, 0.0
  %v4440 = vmax.f32 %v4376, 0.0
  %v4441 = vmax.f32 %v4377, 0.0
  %v4442 = vmax.f32 %v4378, 0.0
  %v4443 = vmax.f32 %v4379, 0.0
  %4444 = vst.msk [vmem:[#allocation3] sm:$0xff] %vm85, 0.0
  %4445 = vst.msk [vmem:[#allocation3 + $0x8] sm:$0xff] %vm85, 0.0
  %vm4446 = vcmask 254976
  %4447 = vst.msk [vmem:[#allocation3 + $0x10] sm:$0x3] %vm4446, 0.0
  %4448 = vst.msk [vmem:[#allocation3 + $0x1b0] sm:$0xff] %vm85, 0.0
  %4449 = vst.msk [vmem:[#allocation3 + $0x1b8] sm:$0xff] %vm85, 0.0
  %4450 = vst.msk [vmem:[#allocation3 + $0x1c0] sm:$0x3] %vm4446, 0.0
  %s4451 = scalar_lea.vmem [#allocation3], 408
  %4452 = vst.msk [vmem:[%s4451] sm:$0xff] %vm85, 0.0
  %4453 = vst.msk [vmem:[%s4451 + $0x8] sm:$0xff] %vm85, 0.0
  %4454 = vst.msk [vmem:[%s4451 + $0x10] sm:$0x3] %vm4446, 0.0
  %4455 = vst.msk [vmem:[%s4451 + $0x1b0] sm:$0xff] %vm85, 0.0
  %4456 = vst.msk [vmem:[%s4451 + $0x1b8] sm:$0xff] %vm85, 0.0
  %4457 = vst.msk [vmem:[%s4451 + $0x1c0] sm:$0x3] %vm4446, 0.0
  %vm4458 = vcmask 253952
  %4459 = vst.msk [vmem:[#allocation3] sm:$0x1] %vm4458, 0.0
  %4460 = vst.msk [vmem:[#allocation3 + $0x18] sm:$0x1] %vm4458, 0.0
  %4461 = vst.msk [vmem:[#allocation3 + $0x30] sm:$0x1] %vm4458, 0.0
  %4462 = vst.msk [vmem:[#allocation3 + $0x48] sm:$0x1] %vm4458, 0.0
  %4463 = vst.msk [vmem:[#allocation3 + $0x60] sm:$0x1] %vm4458, 0.0
  %4464 = vst.msk [vmem:[#allocation3 + $0x78] sm:$0x1] %vm4458, 0.0
  %4465 = vst.msk [vmem:[#allocation3 + $0x90] sm:$0x1] %vm4458, 0.0
  %4466 = vst.msk [vmem:[#allocation3 + $0xa8] sm:$0x1] %vm4458, 0.0
  %4467 = vst.msk [vmem:[#allocation3 + $0xc0] sm:$0x1] %vm4458, 0.0
  %4468 = vst.msk [vmem:[#allocation3 + $0xd8] sm:$0x1] %vm4458, 0.0
  %4469 = vst.msk [vmem:[#allocation3 + $0xf0] sm:$0x1] %vm4458, 0.0
  %4470 = vst.msk [vmem:[#allocation3 + $0x108] sm:$0x1] %vm4458, 0.0
  %4471 = vst.msk [vmem:[#allocation3 + $0x120] sm:$0x1] %vm4458, 0.0
  %4472 = vst.msk [vmem:[#allocation3 + $0x138] sm:$0x1] %vm4458, 0.0
  %4473 = vst.msk [vmem:[#allocation3 + $0x150] sm:$0x1] %vm4458, 0.0
  %4474 = vst.msk [vmem:[#allocation3 + $0x168] sm:$0x1] %vm4458, 0.0
  %4475 = vst.msk [vmem:[#allocation3 + $0x180] sm:$0x1] %vm4458, 0.0
  %4476 = vst.msk [vmem:[#allocation3 + $0x198] sm:$0x1] %vm4458, 0.0
  %4477 = vst.msk [vmem:[#allocation3 + $0x1b0] sm:$0x1] %vm4458, 0.0
  %4478 = vst.msk [vmem:[#allocation3 + $0x1c8] sm:$0x1] %vm4458, 0.0
  %4479 = vst.msk [vmem:[#allocation3 + $0x1e0] sm:$0x1] %vm4458, 0.0
  %4480 = vst.msk [vmem:[#allocation3 + $0x1f8] sm:$0x1] %vm4458, 0.0
  %4481 = vst.msk [vmem:[#allocation3 + $0x210] sm:$0x1] %vm4458, 0.0
  %4482 = vst.msk [vmem:[#allocation3 + $0x228] sm:$0x1] %vm4458, 0.0
  %4483 = vst.msk [vmem:[#allocation3 + $0x240] sm:$0x1] %vm4458, 0.0
  %4484 = vst.msk [vmem:[#allocation3 + $0x258] sm:$0x1] %vm4458, 0.0
  %4485 = vst.msk [vmem:[#allocation3 + $0x270] sm:$0x1] %vm4458, 0.0
  %4486 = vst.msk [vmem:[#allocation3 + $0x288] sm:$0x1] %vm4458, 0.0
  %4487 = vst.msk [vmem:[#allocation3 + $0x2a0] sm:$0x1] %vm4458, 0.0
  %4488 = vst.msk [vmem:[#allocation3 + $0x2b8] sm:$0x1] %vm4458, 0.0
  %4489 = vst.msk [vmem:[#allocation3 + $0x2d0] sm:$0x1] %vm4458, 0.0
  %4490 = vst.msk [vmem:[#allocation3 + $0x2e8] sm:$0x1] %vm4458, 0.0
  %4491 = vst.msk [vmem:[#allocation3 + $0x300] sm:$0x1] %vm4458, 0.0
  %4492 = vst.msk [vmem:[#allocation3 + $0x318] sm:$0x1] %vm4458, 0.0
  %4493 = vst.msk [vmem:[#allocation3 + $0x330] sm:$0x1] %vm4458, 0.0
  %4494 = vst.msk [vmem:[#allocation3 + $0x348] sm:$0x1] %vm4458, 0.0
  %4495 = vst.msk [vmem:[#allocation3 + $0x11] sm:$0x1] %vm4458, 0.0
  %4496 = vst.msk [vmem:[#allocation3 + $0x29] sm:$0x1] %vm4458, 0.0
  %4497 = vst.msk [vmem:[#allocation3 + $0x41] sm:$0x1] %vm4458, 0.0
  %4498 = vst.msk [vmem:[#allocation3 + $0x59] sm:$0x1] %vm4458, 0.0
  %4499 = vst.msk [vmem:[#allocation3 + $0x71] sm:$0x1] %vm4458, 0.0
  %4500 = vst.msk [vmem:[#allocation3 + $0x89] sm:$0x1] %vm4458, 0.0
  %4501 = vst.msk [vmem:[#allocation3 + $0xa1] sm:$0x1] %vm4458, 0.0
  %4502 = vst.msk [vmem:[#allocation3 + $0xb9] sm:$0x1] %vm4458, 0.0
  %4503 = vst.msk [vmem:[#allocation3 + $0xd1] sm:$0x1] %vm4458, 0.0
  %4504 = vst.msk [vmem:[#allocation3 + $0xe9] sm:$0x1] %vm4458, 0.0
  %4505 = vst.msk [vmem:[#allocation3 + $0x101] sm:$0x1] %vm4458, 0.0
  %4506 = vst.msk [vmem:[#allocation3 + $0x119] sm:$0x1] %vm4458, 0.0
  %4507 = vst.msk [vmem:[#allocation3 + $0x131] sm:$0x1] %vm4458, 0.0
  %4508 = vst.msk [vmem:[#allocation3 + $0x149] sm:$0x1] %vm4458, 0.0
  %4509 = vst.msk [vmem:[#allocation3 + $0x161] sm:$0x1] %vm4458, 0.0
  %4510 = vst.msk [vmem:[#allocation3 + $0x179] sm:$0x1] %vm4458, 0.0
  %4511 = vst.msk [vmem:[#allocation3 + $0x191] sm:$0x1] %vm4458, 0.0
  %4512 = vst.msk [vmem:[#allocation3 + $0x1a9] sm:$0x1] %vm4458, 0.0
  %4513 = vst.msk [vmem:[#allocation3 + $0x1c1] sm:$0x1] %vm4458, 0.0
  %4514 = vst.msk [vmem:[#allocation3 + $0x1d9] sm:$0x1] %vm4458, 0.0
  %4515 = vst.msk [vmem:[#allocation3 + $0x1f1] sm:$0x1] %vm4458, 0.0
  %4516 = vst.msk [vmem:[#allocation3 + $0x209] sm:$0x1] %vm4458, 0.0
  %4517 = vst.msk [vmem:[#allocation3 + $0x221] sm:$0x1] %vm4458, 0.0
  %4518 = vst.msk [vmem:[#allocation3 + $0x239] sm:$0x1] %vm4458, 0.0
  %4519 = vst.msk [vmem:[#allocation3 + $0x251] sm:$0x1] %vm4458, 0.0
  %4520 = vst.msk [vmem:[#allocation3 + $0x269] sm:$0x1] %vm4458, 0.0
  %4521 = vst.msk [vmem:[#allocation3 + $0x281] sm:$0x1] %vm4458, 0.0
  %4522 = vst.msk [vmem:[#allocation3 + $0x299] sm:$0x1] %vm4458, 0.0
  %4523 = vst.msk [vmem:[#allocation3 + $0x2b1] sm:$0x1] %vm4458, 0.0
  %4524 = vst.msk [vmem:[#allocation3 + $0x2c9] sm:$0x1] %vm4458, 0.0
  %4525 = vst.msk [vmem:[#allocation3 + $0x2e1] sm:$0x1] %vm4458, 0.0
  %4526 = vst.msk [vmem:[#allocation3 + $0x2f9] sm:$0x1] %vm4458, 0.0
  %4527 = vst.msk [vmem:[#allocation3 + $0x311] sm:$0x1] %vm4458, 0.0
  %4528 = vst.msk [vmem:[#allocation3 + $0x329] sm:$0x1] %vm4458, 0.0
  %4529 = vst.msk [vmem:[#allocation3 + $0x341] sm:$0x1] %vm4458, 0.0
  %4530 = vst.msk [vmem:[#allocation3 + $0x359] sm:$0x1] %vm4458, 0.0
  %s4531 = scalar_lea.vmem [#allocation3], 24
  %4532 = vst.msk [vmem:[%s4531 + $0x1] sm:$0xff] %vm85, %v4380
  %4533 = vst.msk [vmem:[%s4531 + $0x9] sm:$0xff] %vm85, %v4381
  %4534 = vst.msk [vmem:[%s4531 + $0x19] sm:$0xff] %vm85, %v4382
  %4535 = vst.msk [vmem:[%s4531 + $0x21] sm:$0xff] %vm85, %v4383
  %4536 = vst.msk [vmem:[%s4531 + $0x31] sm:$0xff] %vm85, %v4384
  %4537 = vst.msk [vmem:[%s4531 + $0x39] sm:$0xff] %vm85, %v4385
  %4538 = vst.msk [vmem:[%s4531 + $0x49] sm:$0xff] %vm85, %v4386
  %4539 = vst.msk [vmem:[%s4531 + $0x51] sm:$0xff] %vm85, %v4387
  %4540 = vst.msk [vmem:[%s4531 + $0x61] sm:$0xff] %vm85, %v4388
  %4541 = vst.msk [vmem:[%s4531 + $0x69] sm:$0xff] %vm85, %v4389
  %4542 = vst.msk [vmem:[%s4531 + $0x79] sm:$0xff] %vm85, %v4390
  %4543 = vst.msk [vmem:[%s4531 + $0x81] sm:$0xff] %vm85, %v4391
  %4544 = vst.msk [vmem:[%s4531 + $0x91] sm:$0xff] %vm85, %v4392
  %4545 = vst.msk [vmem:[%s4531 + $0x99] sm:$0xff] %vm85, %v4393
  %4546 = vst.msk [vmem:[%s4531 + $0xa9] sm:$0xff] %vm85, %v4394
  %4547 = vst.msk [vmem:[%s4531 + $0xb1] sm:$0xff] %vm85, %v4395
  %4548 = vst.msk [vmem:[%s4531 + $0xc1] sm:$0xff] %vm85, %v4396
  %4549 = vst.msk [vmem:[%s4531 + $0xc9] sm:$0xff] %vm85, %v4397
  %4550 = vst.msk [vmem:[%s4531 + $0xd9] sm:$0xff] %vm85, %v4398
  %4551 = vst.msk [vmem:[%s4531 + $0xe1] sm:$0xff] %vm85, %v4399
  %4552 = vst.msk [vmem:[%s4531 + $0xf1] sm:$0xff] %vm85, %v4400
  %4553 = vst.msk [vmem:[%s4531 + $0xf9] sm:$0xff] %vm85, %v4401
  %4554 = vst.msk [vmem:[%s4531 + $0x109] sm:$0xff] %vm85, %v4402
  %4555 = vst.msk [vmem:[%s4531 + $0x111] sm:$0xff] %vm85, %v4403
  %4556 = vst.msk [vmem:[%s4531 + $0x121] sm:$0xff] %vm85, %v4404
  %4557 = vst.msk [vmem:[%s4531 + $0x129] sm:$0xff] %vm85, %v4405
  %4558 = vst.msk [vmem:[%s4531 + $0x139] sm:$0xff] %vm85, %v4406
  %4559 = vst.msk [vmem:[%s4531 + $0x141] sm:$0xff] %vm85, %v4407
  %4560 = vst.msk [vmem:[%s4531 + $0x151] sm:$0xff] %vm85, %v4408
  %4561 = vst.msk [vmem:[%s4531 + $0x159] sm:$0xff] %vm85, %v4409
  %4562 = vst.msk [vmem:[%s4531 + $0x169] sm:$0xff] %vm85, %v4410
  %4563 = vst.msk [vmem:[%s4531 + $0x171] sm:$0xff] %vm85, %v4411
  %4564 = vst.msk [vmem:[%s4531 + $0x1b1] sm:$0xff] %vm85, %v4412
  %4565 = vst.msk [vmem:[%s4531 + $0x1b9] sm:$0xff] %vm85, %v4413
  %4566 = vst.msk [vmem:[%s4531 + $0x1c9] sm:$0xff] %vm85, %v4414
  %4567 = vst.msk [vmem:[%s4531 + $0x1d1] sm:$0xff] %vm85, %v4415
  %4568 = vst.msk [vmem:[%s4531 + $0x1e1] sm:$0xff] %vm85, %v4416
  %4569 = vst.msk [vmem:[%s4531 + $0x1e9] sm:$0xff] %vm85, %v4417
  %4570 = vst.msk [vmem:[%s4531 + $0x1f9] sm:$0xff] %vm85, %v4418
  %4571 = vst.msk [vmem:[%s4531 + $0x201] sm:$0xff] %vm85, %v4419
  %4572 = vst.msk [vmem:[%s4531 + $0x211] sm:$0xff] %vm85, %v4420
  %4573 = vst.msk [vmem:[%s4531 + $0x219] sm:$0xff] %vm85, %v4421
  %4574 = vst.msk [vmem:[%s4531 + $0x229] sm:$0xff] %vm85, %v4422
  %4575 = vst.msk [vmem:[%s4531 + $0x231] sm:$0xff] %vm85, %v4423
  %4576 = vst.msk [vmem:[%s4531 + $0x241] sm:$0xff] %vm85, %v4424
  %4577 = vst.msk [vmem:[%s4531 + $0x249] sm:$0xff] %vm85, %v4425
  %4578 = vst.msk [vmem:[%s4531 + $0x259] sm:$0xff] %vm85, %v4426
  %4579 = vst.msk [vmem:[%s4531 + $0x261] sm:$0xff] %vm85, %v4427
  %4580 = vst.msk [vmem:[%s4531 + $0x271] sm:$0xff] %vm85, %v4428
  %4581 = vst.msk [vmem:[%s4531 + $0x279] sm:$0xff] %vm85, %v4429
  %4582 = vst.msk [vmem:[%s4531 + $0x289] sm:$0xff] %vm85, %v4430
  %4583 = vst.msk [vmem:[%s4531 + $0x291] sm:$0xff] %vm85, %v4431
  %4584 = vst.msk [vmem:[%s4531 + $0x2a1] sm:$0xff] %vm85, %v4432
  %4585 = vst.msk [vmem:[%s4531 + $0x2a9] sm:$0xff] %vm85, %v4433
  %4586 = vst.msk [vmem:[%s4531 + $0x2b9] sm:$0xff] %vm85, %v4434
  %4587 = vst.msk [vmem:[%s4531 + $0x2c1] sm:$0xff] %vm85, %v4435
  %4588 = vst.msk [vmem:[%s4531 + $0x2d1] sm:$0xff] %vm85, %v4436
  %4589 = vst.msk [vmem:[%s4531 + $0x2d9] sm:$0xff] %vm85, %v4437
  %4590 = vst.msk [vmem:[%s4531 + $0x2e9] sm:$0xff] %vm85, %v4438
  %4591 = vst.msk [vmem:[%s4531 + $0x2f1] sm:$0xff] %vm85, %v4439
  %4592 = vst.msk [vmem:[%s4531 + $0x301] sm:$0xff] %vm85, %v4440
  %4593 = vst.msk [vmem:[%s4531 + $0x309] sm:$0xff] %vm85, %v4441
  %4594 = vst.msk [vmem:[%s4531 + $0x319] sm:$0xff] %vm85, %v4442
  %4595 = vst.msk [vmem:[%s4531 + $0x321] sm:$0xff] %vm85, %v4443
  %v4596 = vld [vmem:[#allocation3] sm:$0xff]
  %v4597 = vld [vmem:[#allocation3 + $0x8] sm:$0xff]
  %v4598 = vld [vmem:[#allocation3 + $0x18] sm:$0xff]
  %v4599 = vld [vmem:[#allocation3 + $0x20] sm:$0xff]
  %v4600 = vld [vmem:[#allocation3 + $0x30] sm:$0xff]
  %v4601 = vld [vmem:[#allocation3 + $0x38] sm:$0xff]
  %v4602 = vld [vmem:[#allocation3 + $0x48] sm:$0xff]
  %v4603 = vld [vmem:[#allocation3 + $0x50] sm:$0xff]
  %v4604 = vld [vmem:[#allocation3 + $0x60] sm:$0xff]
  %v4605 = vld [vmem:[#allocation3 + $0x68] sm:$0xff]
  %v4606 = vld [vmem:[#allocation3 + $0x78] sm:$0xff]
  %v4607 = vld [vmem:[#allocation3 + $0x80] sm:$0xff]
  %v4608 = vld [vmem:[#allocation3 + $0x90] sm:$0xff]
  %v4609 = vld [vmem:[#allocation3 + $0x98] sm:$0xff]
  %v4610 = vld [vmem:[#allocation3 + $0xa8] sm:$0xff]
  %v4611 = vld [vmem:[#allocation3 + $0xb0] sm:$0xff]
  %v4612 = vld [vmem:[#allocation3 + $0xc0] sm:$0xff]
  %v4613 = vld [vmem:[#allocation3 + $0xc8] sm:$0xff]
  %v4614 = vld [vmem:[#allocation3 + $0xd8] sm:$0xff]
  %v4615 = vld [vmem:[#allocation3 + $0xe0] sm:$0xff]
  %v4616 = vld [vmem:[#allocation3 + $0xf0] sm:$0xff]
  %v4617 = vld [vmem:[#allocation3 + $0xf8] sm:$0xff]
  %v4618 = vld [vmem:[#allocation3 + $0x108] sm:$0xff]
  %v4619 = vld [vmem:[#allocation3 + $0x110] sm:$0xff]
  %v4620 = vld [vmem:[#allocation3 + $0x120] sm:$0xff]
  %v4621 = vld [vmem:[#allocation3 + $0x128] sm:$0xff]
  %v4622 = vld [vmem:[#allocation3 + $0x138] sm:$0xff]
  %v4623 = vld [vmem:[#allocation3 + $0x140] sm:$0xff]
  %v4624 = vld [vmem:[#allocation3 + $0x150] sm:$0xff]
  %v4625 = vld [vmem:[#allocation3 + $0x158] sm:$0xff]
  %v4626 = vld [vmem:[#allocation3 + $0x168] sm:$0xff]
  %v4627 = vld [vmem:[#allocation3 + $0x170] sm:$0xff]
  %v4628 = vld [vmem:[#allocation3 + $0x1b0] sm:$0xff]
  %v4629 = vld [vmem:[#allocation3 + $0x1b8] sm:$0xff]
  %v4630 = vld [vmem:[#allocation3 + $0x1c8] sm:$0xff]
  %v4631 = vld [vmem:[#allocation3 + $0x1d0] sm:$0xff]
  %v4632 = vld [vmem:[#allocation3 + $0x1e0] sm:$0xff]
  %v4633 = vld [vmem:[#allocation3 + $0x1e8] sm:$0xff]
  %v4634 = vld [vmem:[#allocation3 + $0x1f8] sm:$0xff]
  %v4635 = vld [vmem:[#allocation3 + $0x200] sm:$0xff]
  %v4636 = vld [vmem:[#allocation3 + $0x210] sm:$0xff]
  %v4637 = vld [vmem:[#allocation3 + $0x218] sm:$0xff]
  %v4638 = vld [vmem:[#allocation3 + $0x228] sm:$0xff]
  %v4639 = vld [vmem:[#allocation3 + $0x230] sm:$0xff]
  %v4640 = vld [vmem:[#allocation3 + $0x240] sm:$0xff]
  %v4641 = vld [vmem:[#allocation3 + $0x248] sm:$0xff]
  %v4642 = vld [vmem:[#allocation3 + $0x258] sm:$0xff]
  %v4643 = vld [vmem:[#allocation3 + $0x260] sm:$0xff]
  %v4644 = vld [vmem:[#allocation3 + $0x270] sm:$0xff]
  %v4645 = vld [vmem:[#allocation3 + $0x278] sm:$0xff]
  %v4646 = vld [vmem:[#allocation3 + $0x288] sm:$0xff]
  %v4647 = vld [vmem:[#allocation3 + $0x290] sm:$0xff]
  %v4648 = vld [vmem:[#allocation3 + $0x2a0] sm:$0xff]
  %v4649 = vld [vmem:[#allocation3 + $0x2a8] sm:$0xff]
  %v4650 = vld [vmem:[#allocation3 + $0x2b8] sm:$0xff]
  %v4651 = vld [vmem:[#allocation3 + $0x2c0] sm:$0xff]
  %v4652 = vld [vmem:[#allocation3 + $0x2d0] sm:$0xff]
  %v4653 = vld [vmem:[#allocation3 + $0x2d8] sm:$0xff]
  %v4654 = vld [vmem:[#allocation3 + $0x2e8] sm:$0xff]
  %v4655 = vld [vmem:[#allocation3 + $0x2f0] sm:$0xff]
  %v4656 = vld [vmem:[#allocation3 + $0x300] sm:$0xff]
  %v4657 = vld [vmem:[#allocation3 + $0x308] sm:$0xff]
  %v4658 = vld [vmem:[#allocation3 + $0x318] sm:$0xff]
  %v4659 = vld [vmem:[#allocation3 + $0x320] sm:$0xff]
  %4660 = vst.msk [vmem:[#allocation2] sm:$0xff] %vm85, %v4596
  %4661 = vst.msk [vmem:[#allocation2 + $0x18] sm:$0xff] %vm85, %v4597
  %4662 = vst.msk [vmem:[#allocation2 + $0x30] sm:$0xff] %vm85, %v4598
  %4663 = vst.msk [vmem:[#allocation2 + $0x48] sm:$0xff] %vm85, %v4599
  %4664 = vst.msk [vmem:[#allocation2 + $0x60] sm:$0xff] %vm85, %v4600
  %4665 = vst.msk [vmem:[#allocation2 + $0x78] sm:$0xff] %vm85, %v4601
  %4666 = vst.msk [vmem:[#allocation2 + $0x90] sm:$0xff] %vm85, %v4602
  %4667 = vst.msk [vmem:[#allocation2 + $0xa8] sm:$0xff] %vm85, %v4603
  %4668 = vst.msk [vmem:[#allocation2 + $0xc0] sm:$0xff] %vm85, %v4604
  %4669 = vst.msk [vmem:[#allocation2 + $0xd8] sm:$0xff] %vm85, %v4605
  %4670 = vst.msk [vmem:[#allocation2 + $0xf0] sm:$0xff] %vm85, %v4606
  %4671 = vst.msk [vmem:[#allocation2 + $0x108] sm:$0xff] %vm85, %v4607
  %4672 = vst.msk [vmem:[#allocation2 + $0x120] sm:$0xff] %vm85, %v4608
  %4673 = vst.msk [vmem:[#allocation2 + $0x138] sm:$0xff] %vm85, %v4609
  %4674 = vst.msk [vmem:[#allocation2 + $0x150] sm:$0xff] %vm85, %v4610
  %4675 = vst.msk [vmem:[#allocation2 + $0x168] sm:$0xff] %vm85, %v4611
  %4676 = vst.msk [vmem:[#allocation2 + $0x180] sm:$0xff] %vm85, %v4612
  %4677 = vst.msk [vmem:[#allocation2 + $0x198] sm:$0xff] %vm85, %v4613
  %4678 = vst.msk [vmem:[#allocation2 + $0x1b0] sm:$0xff] %vm85, %v4614
  %4679 = vst.msk [vmem:[#allocation2 + $0x1c8] sm:$0xff] %vm85, %v4615
  %4680 = vst.msk [vmem:[#allocation2 + $0x1e0] sm:$0xff] %vm85, %v4616
  %4681 = vst.msk [vmem:[#allocation2 + $0x1f8] sm:$0xff] %vm85, %v4617
  %4682 = vst.msk [vmem:[#allocation2 + $0x210] sm:$0xff] %vm85, %v4618
  %4683 = vst.msk [vmem:[#allocation2 + $0x228] sm:$0xff] %vm85, %v4619
  %4684 = vst.msk [vmem:[#allocation2 + $0x240] sm:$0xff] %vm85, %v4620
  %4685 = vst.msk [vmem:[#allocation2 + $0x258] sm:$0xff] %vm85, %v4621
  %4686 = vst.msk [vmem:[#allocation2 + $0x270] sm:$0xff] %vm85, %v4622
  %4687 = vst.msk [vmem:[#allocation2 + $0x288] sm:$0xff] %vm85, %v4623
  %4688 = vst.msk [vmem:[#allocation2 + $0x2a0] sm:$0xff] %vm85, %v4624
  %4689 = vst.msk [vmem:[#allocation2 + $0x2b8] sm:$0xff] %vm85, %v4625
  %4690 = vst.msk [vmem:[#allocation2 + $0x2d0] sm:$0xff] %vm85, %v4626
  %4691 = vst.msk [vmem:[#allocation2 + $0x2e8] sm:$0xff] %vm85, %v4627
  %4692 = vst.msk [vmem:[#allocation2 + $0x300] sm:$0xff] %vm85, %v4628
  %4693 = vst.msk [vmem:[#allocation2 + $0x318] sm:$0xff] %vm85, %v4629
  %4694 = vst.msk [vmem:[#allocation2 + $0x330] sm:$0xff] %vm85, %v4630
  %4695 = vst.msk [vmem:[#allocation2 + $0x348] sm:$0xff] %vm85, %v4631
  %4696 = vst.msk [vmem:[#allocation2 + $0x360] sm:$0xff] %vm85, %v4632
  %4697 = vst.msk [vmem:[#allocation2 + $0x378] sm:$0xff] %vm85, %v4633
  %4698 = vst.msk [vmem:[#allocation2 + $0x390] sm:$0xff] %vm85, %v4634
  %4699 = vst.msk [vmem:[#allocation2 + $0x3a8] sm:$0xff] %vm85, %v4635
  %4700 = vst.msk [vmem:[#allocation2 + $0x3c0] sm:$0xff] %vm85, %v4636
  %4701 = vst.msk [vmem:[#allocation2 + $0x3d8] sm:$0xff] %vm85, %v4637
  %4702 = vst.msk [vmem:[#allocation2 + $0x3f0] sm:$0xff] %vm85, %v4638
  %4703 = vst.msk [vmem:[#allocation2 + $0x408] sm:$0xff] %vm85, %v4639
  %4704 = vst.msk [vmem:[#allocation2 + $0x420] sm:$0xff] %vm85, %v4640
  %4705 = vst.msk [vmem:[#allocation2 + $0x438] sm:$0xff] %vm85, %v4641
  %4706 = vst.msk [vmem:[#allocation2 + $0x450] sm:$0xff] %vm85, %v4642
  %4707 = vst.msk [vmem:[#allocation2 + $0x468] sm:$0xff] %vm85, %v4643
  %4708 = vst.msk [vmem:[#allocation2 + $0x480] sm:$0xff] %vm85, %v4644
  %4709 = vst.msk [vmem:[#allocation2 + $0x498] sm:$0xff] %vm85, %v4645
  %4710 = vst.msk [vmem:[#allocation2 + $0x4b0] sm:$0xff] %vm85, %v4646
  %4711 = vst.msk [vmem:[#allocation2 + $0x4c8] sm:$0xff] %vm85, %v4647
  %4712 = vst.msk [vmem:[#allocation2 + $0x4e0] sm:$0xff] %vm85, %v4648
  %4713 = vst.msk [vmem:[#allocation2 + $0x4f8] sm:$0xff] %vm85, %v4649
  %4714 = vst.msk [vmem:[#allocation2 + $0x510] sm:$0xff] %vm85, %v4650
  %4715 = vst.msk [vmem:[#allocation2 + $0x528] sm:$0xff] %vm85, %v4651
  %4716 = vst.msk [vmem:[#allocation2 + $0x540] sm:$0xff] %vm85, %v4652
  %4717 = vst.msk [vmem:[#allocation2 + $0x558] sm:$0xff] %vm85, %v4653
  %4718 = vst.msk [vmem:[#allocation2 + $0x570] sm:$0xff] %vm85, %v4654
  %4719 = vst.msk [vmem:[#allocation2 + $0x588] sm:$0xff] %vm85, %v4655
  %4720 = vst.msk [vmem:[#allocation2 + $0x5a0] sm:$0xff] %vm85, %v4656
  %4721 = vst.msk [vmem:[#allocation2 + $0x5b8] sm:$0xff] %vm85, %v4657
  %4722 = vst.msk [vmem:[#allocation2 + $0x5d0] sm:$0xff] %vm85, %v4658
  %4723 = vst.msk [vmem:[#allocation2 + $0x5e8] sm:$0xff] %vm85, %v4659
  %v4724 = vld [vmem:[#allocation3 + $0x1] sm:$0xff]
  %v4725 = vld [vmem:[#allocation3 + $0x9] sm:$0xff]
  %v4726 = vld [vmem:[#allocation3 + $0x19] sm:$0xff]
  %v4727 = vld [vmem:[#allocation3 + $0x21] sm:$0xff]
  %v4728 = vld [vmem:[#allocation3 + $0x31] sm:$0xff]
  %v4729 = vld [vmem:[#allocation3 + $0x39] sm:$0xff]
  %v4730 = vld [vmem:[#allocation3 + $0x49] sm:$0xff]
  %v4731 = vld [vmem:[#allocation3 + $0x51] sm:$0xff]
  %v4732 = vld [vmem:[#allocation3 + $0x61] sm:$0xff]
  %v4733 = vld [vmem:[#allocation3 + $0x69] sm:$0xff]
  %v4734 = vld [vmem:[#allocation3 + $0x79] sm:$0xff]
  %v4735 = vld [vmem:[#allocation3 + $0x81] sm:$0xff]
  %v4736 = vld [vmem:[#allocation3 + $0x91] sm:$0xff]
  %v4737 = vld [vmem:[#allocation3 + $0x99] sm:$0xff]
  %v4738 = vld [vmem:[#allocation3 + $0xa9] sm:$0xff]
  %v4739 = vld [vmem:[#allocation3 + $0xb1] sm:$0xff]
  %v4740 = vld [vmem:[#allocation3 + $0xc1] sm:$0xff]
  %v4741 = vld [vmem:[#allocation3 + $0xc9] sm:$0xff]
  %v4742 = vld [vmem:[#allocation3 + $0xd9] sm:$0xff]
  %v4743 = vld [vmem:[#allocation3 + $0xe1] sm:$0xff]
  %v4744 = vld [vmem:[#allocation3 + $0xf1] sm:$0xff]
  %v4745 = vld [vmem:[#allocation3 + $0xf9] sm:$0xff]
  %v4746 = vld [vmem:[#allocation3 + $0x109] sm:$0xff]
  %v4747 = vld [vmem:[#allocation3 + $0x111] sm:$0xff]
  %v4748 = vld [vmem:[#allocation3 + $0x121] sm:$0xff]
  %v4749 = vld [vmem:[#allocation3 + $0x129] sm:$0xff]
  %v4750 = vld [vmem:[#allocation3 + $0x139] sm:$0xff]
  %v4751 = vld [vmem:[#allocation3 + $0x141] sm:$0xff]
  %v4752 = vld [vmem:[#allocation3 + $0x151] sm:$0xff]
  %v4753 = vld [vmem:[#allocation3 + $0x159] sm:$0xff]
  %v4754 = vld [vmem:[#allocation3 + $0x169] sm:$0xff]
  %v4755 = vld [vmem:[#allocation3 + $0x171] sm:$0xff]
  %v4756 = vld [vmem:[#allocation3 + $0x1b1] sm:$0xff]
  %v4757 = vld [vmem:[#allocation3 + $0x1b9] sm:$0xff]
  %v4758 = vld [vmem:[#allocation3 + $0x1c9] sm:$0xff]
  %v4759 = vld [vmem:[#allocation3 + $0x1d1] sm:$0xff]
  %v4760 = vld [vmem:[#allocation3 + $0x1e1] sm:$0xff]
  %v4761 = vld [vmem:[#allocation3 + $0x1e9] sm:$0xff]
  %v4762 = vld [vmem:[#allocation3 + $0x1f9] sm:$0xff]
  %v4763 = vld [vmem:[#allocation3 + $0x201] sm:$0xff]
  %v4764 = vld [vmem:[#allocation3 + $0x211] sm:$0xff]
  %v4765 = vld [vmem:[#allocation3 + $0x219] sm:$0xff]
  %v4766 = vld [vmem:[#allocation3 + $0x229] sm:$0xff]
  %v4767 = vld [vmem:[#allocation3 + $0x231] sm:$0xff]
  %v4768 = vld [vmem:[#allocation3 + $0x241] sm:$0xff]
  %v4769 = vld [vmem:[#allocation3 + $0x249] sm:$0xff]
  %v4770 = vld [vmem:[#allocation3 + $0x259] sm:$0xff]
  %v4771 = vld [vmem:[#allocation3 + $0x261] sm:$0xff]
  %v4772 = vld [vmem:[#allocation3 + $0x271] sm:$0xff]
  %v4773 = vld [vmem:[#allocation3 + $0x279] sm:$0xff]
  %v4774 = vld [vmem:[#allocation3 + $0x289] sm:$0xff]
  %v4775 = vld [vmem:[#allocation3 + $0x291] sm:$0xff]
  %v4776 = vld [vmem:[#allocation3 + $0x2a1] sm:$0xff]
  %v4777 = vld [vmem:[#allocation3 + $0x2a9] sm:$0xff]
  %v4778 = vld [vmem:[#allocation3 + $0x2b9] sm:$0xff]
  %v4779 = vld [vmem:[#allocation3 + $0x2c1] sm:$0xff]
  %v4780 = vld [vmem:[#allocation3 + $0x2d1] sm:$0xff]
  %v4781 = vld [vmem:[#allocation3 + $0x2d9] sm:$0xff]
  %v4782 = vld [vmem:[#allocation3 + $0x2e9] sm:$0xff]
  %v4783 = vld [vmem:[#allocation3 + $0x2f1] sm:$0xff]
  %v4784 = vld [vmem:[#allocation3 + $0x301] sm:$0xff]
  %v4785 = vld [vmem:[#allocation3 + $0x309] sm:$0xff]
  %v4786 = vld [vmem:[#allocation3 + $0x319] sm:$0xff]
  %v4787 = vld [vmem:[#allocation3 + $0x321] sm:$0xff]
  %4852 = vrot.lane.b32.xlu0 %v4724, 32
  %v4853 = vpop.permute.xlu0 %4852
  %4854 = vrot.lane.b32.xlu0 %v4725, 32
  %v4855 = vpop.permute.xlu0 %4854
  %4856 = vrot.lane.b32.xlu0 %v4726, 32
  %v4857 = vpop.permute.xlu0 %4856
  %4858 = vrot.lane.b32.xlu0 %v4727, 32
  %v4859 = vpop.permute.xlu0 %4858
  %4860 = vrot.lane.b32.xlu0 %v4728, 32
  %v4861 = vpop.permute.xlu0 %4860
  %4862 = vrot.lane.b32.xlu0 %v4729, 32
  %v4863 = vpop.permute.xlu0 %4862
  %4864 = vrot.lane.b32.xlu0 %v4730, 32
  %v4865 = vpop.permute.xlu0 %4864
  %4866 = vrot.lane.b32.xlu0 %v4731, 32
  %v4867 = vpop.permute.xlu0 %4866
  %4868 = vrot.lane.b32.xlu0 %v4732, 32
  %v4869 = vpop.permute.xlu0 %4868
  %4870 = vrot.lane.b32.xlu0 %v4733, 32
  %v4871 = vpop.permute.xlu0 %4870
  %4872 = vrot.lane.b32.xlu0 %v4734, 32
  %v4873 = vpop.permute.xlu0 %4872
  %4874 = vrot.lane.b32.xlu0 %v4735, 32
  %v4875 = vpop.permute.xlu0 %4874
  %4876 = vrot.lane.b32.xlu0 %v4736, 32
  %v4877 = vpop.permute.xlu0 %4876
  %4878 = vrot.lane.b32.xlu0 %v4737, 32
  %v4879 = vpop.permute.xlu0 %4878
  %4880 = vrot.lane.b32.xlu0 %v4738, 32
  %v4881 = vpop.permute.xlu0 %4880
  %4882 = vrot.lane.b32.xlu0 %v4739, 32
  %v4883 = vpop.permute.xlu0 %4882
  %4884 = vrot.lane.b32.xlu0 %v4740, 32
  %v4885 = vpop.permute.xlu0 %4884
  %4886 = vrot.lane.b32.xlu0 %v4741, 32
  %v4887 = vpop.permute.xlu0 %4886
  %4888 = vrot.lane.b32.xlu0 %v4742, 32
  %v4889 = vpop.permute.xlu0 %4888
  %4890 = vrot.lane.b32.xlu0 %v4743, 32
  %v4891 = vpop.permute.xlu0 %4890
  %4892 = vrot.lane.b32.xlu0 %v4744, 32
  %v4893 = vpop.permute.xlu0 %4892
  %4894 = vrot.lane.b32.xlu0 %v4745, 32
  %v4895 = vpop.permute.xlu0 %4894
  %4896 = vrot.lane.b32.xlu0 %v4746, 32
  %v4897 = vpop.permute.xlu0 %4896
  %4898 = vrot.lane.b32.xlu0 %v4747, 32
  %v4899 = vpop.permute.xlu0 %4898
  %4900 = vrot.lane.b32.xlu0 %v4748, 32
  %v4901 = vpop.permute.xlu0 %4900
  %4902 = vrot.lane.b32.xlu0 %v4749, 32
  %v4903 = vpop.permute.xlu0 %4902
  %4904 = vrot.lane.b32.xlu0 %v4750, 32
  %v4905 = vpop.permute.xlu0 %4904
  %4906 = vrot.lane.b32.xlu0 %v4751, 32
  %v4907 = vpop.permute.xlu0 %4906
  %4908 = vrot.lane.b32.xlu0 %v4752, 32
  %v4909 = vpop.permute.xlu0 %4908
  %4910 = vrot.lane.b32.xlu0 %v4753, 32
  %v4911 = vpop.permute.xlu0 %4910
  %4912 = vrot.lane.b32.xlu0 %v4754, 32
  %v4913 = vpop.permute.xlu0 %4912
  %4914 = vrot.lane.b32.xlu0 %v4755, 32
  %v4915 = vpop.permute.xlu0 %4914
  %4916 = vrot.lane.b32.xlu0 %v4756, 32
  %v4917 = vpop.permute.xlu0 %4916
  %4918 = vrot.lane.b32.xlu0 %v4757, 32
  %v4919 = vpop.permute.xlu0 %4918
  %4920 = vrot.lane.b32.xlu0 %v4758, 32
  %v4921 = vpop.permute.xlu0 %4920
  %4922 = vrot.lane.b32.xlu0 %v4759, 32
  %v4923 = vpop.permute.xlu0 %4922
  %4924 = vrot.lane.b32.xlu0 %v4760, 32
  %v4925 = vpop.permute.xlu0 %4924
  %4926 = vrot.lane.b32.xlu0 %v4761, 32
  %v4927 = vpop.permute.xlu0 %4926
  %4928 = vrot.lane.b32.xlu0 %v4762, 32
  %v4929 = vpop.permute.xlu0 %4928
  %4930 = vrot.lane.b32.xlu0 %v4763, 32
  %v4931 = vpop.permute.xlu0 %4930
  %4932 = vrot.lane.b32.xlu0 %v4764, 32
  %v4933 = vpop.permute.xlu0 %4932
  %4934 = vrot.lane.b32.xlu0 %v4765, 32
  %v4935 = vpop.permute.xlu0 %4934
  %4936 = vrot.lane.b32.xlu0 %v4766, 32
  %v4937 = vpop.permute.xlu0 %4936
  %4938 = vrot.lane.b32.xlu0 %v4767, 32
  %v4939 = vpop.permute.xlu0 %4938
  %4940 = vrot.lane.b32.xlu0 %v4768, 32
  %v4941 = vpop.permute.xlu0 %4940
  %4942 = vrot.lane.b32.xlu0 %v4769, 32
  %v4943 = vpop.permute.xlu0 %4942
  %4944 = vrot.lane.b32.xlu0 %v4770, 32
  %v4945 = vpop.permute.xlu0 %4944
  %4946 = vrot.lane.b32.xlu0 %v4771, 32
  %v4947 = vpop.permute.xlu0 %4946
  %4948 = vrot.lane.b32.xlu0 %v4772, 32
  %v4949 = vpop.permute.xlu0 %4948
  %4950 = vrot.lane.b32.xlu0 %v4773, 32
  %v4951 = vpop.permute.xlu0 %4950
  %4952 = vrot.lane.b32.xlu0 %v4774, 32
  %v4953 = vpop.permute.xlu0 %4952
  %4954 = vrot.lane.b32.xlu0 %v4775, 32
  %v4955 = vpop.permute.xlu0 %4954
  %4956 = vrot.lane.b32.xlu0 %v4776, 32
  %v4957 = vpop.permute.xlu0 %4956
  %4958 = vrot.lane.b32.xlu0 %v4777, 32
  %v4959 = vpop.permute.xlu0 %4958
  %4960 = vrot.lane.b32.xlu0 %v4778, 32
  %v4961 = vpop.permute.xlu0 %4960
  %4962 = vrot.lane.b32.xlu0 %v4779, 32
  %v4963 = vpop.permute.xlu0 %4962
  %4964 = vrot.lane.b32.xlu0 %v4780, 32
  %v4965 = vpop.permute.xlu0 %4964
  %4966 = vrot.lane.b32.xlu0 %v4781, 32
  %v4967 = vpop.permute.xlu0 %4966
  %4968 = vrot.lane.b32.xlu0 %v4782, 32
  %v4969 = vpop.permute.xlu0 %4968
  %4970 = vrot.lane.b32.xlu0 %v4783, 32
  %v4971 = vpop.permute.xlu0 %4970
  %4972 = vrot.lane.b32.xlu0 %v4784, 32
  %v4973 = vpop.permute.xlu0 %4972
  %4974 = vrot.lane.b32.xlu0 %v4785, 32
  %v4975 = vpop.permute.xlu0 %4974
  %4976 = vrot.lane.b32.xlu0 %v4786, 32
  %v4977 = vpop.permute.xlu0 %4976
  %4978 = vrot.lane.b32.xlu0 %v4787, 32
  %v4979 = vpop.permute.xlu0 %4978
  %5044 = vst.msk [vmem:[#allocation2] sm:$0xff] %vm470, %v4853
  %5045 = vst.msk [vmem:[#allocation2 + $0x18] sm:$0xff] %vm470, %v4855
  %5046 = vst.msk [vmem:[#allocation2 + $0x30] sm:$0xff] %vm470, %v4857
  %5047 = vst.msk [vmem:[#allocation2 + $0x48] sm:$0xff] %vm470, %v4859
  %5048 = vst.msk [vmem:[#allocation2 + $0x60] sm:$0xff] %vm470, %v4861
  %5049 = vst.msk [vmem:[#allocation2 + $0x78] sm:$0xff] %vm470, %v4863
  %5050 = vst.msk [vmem:[#allocation2 + $0x90] sm:$0xff] %vm470, %v4865
  %5051 = vst.msk [vmem:[#allocation2 + $0xa8] sm:$0xff] %vm470, %v4867
  %5052 = vst.msk [vmem:[#allocation2 + $0xc0] sm:$0xff] %vm470, %v4869
  %5053 = vst.msk [vmem:[#allocation2 + $0xd8] sm:$0xff] %vm470, %v4871
  %5054 = vst.msk [vmem:[#allocation2 + $0xf0] sm:$0xff] %vm470, %v4873
  %5055 = vst.msk [vmem:[#allocation2 + $0x108] sm:$0xff] %vm470, %v4875
  %5056 = vst.msk [vmem:[#allocation2 + $0x120] sm:$0xff] %vm470, %v4877
  %5057 = vst.msk [vmem:[#allocation2 + $0x138] sm:$0xff] %vm470, %v4879
  %5058 = vst.msk [vmem:[#allocation2 + $0x150] sm:$0xff] %vm470, %v4881
  %5059 = vst.msk [vmem:[#allocation2 + $0x168] sm:$0xff] %vm470, %v4883
  %5060 = vst.msk [vmem:[#allocation2 + $0x180] sm:$0xff] %vm470, %v4885
  %5061 = vst.msk [vmem:[#allocation2 + $0x198] sm:$0xff] %vm470, %v4887
  %5062 = vst.msk [vmem:[#allocation2 + $0x1b0] sm:$0xff] %vm470, %v4889
  %5063 = vst.msk [vmem:[#allocation2 + $0x1c8] sm:$0xff] %vm470, %v4891
  %5064 = vst.msk [vmem:[#allocation2 + $0x1e0] sm:$0xff] %vm470, %v4893
  %5065 = vst.msk [vmem:[#allocation2 + $0x1f8] sm:$0xff] %vm470, %v4895
  %5066 = vst.msk [vmem:[#allocation2 + $0x210] sm:$0xff] %vm470, %v4897
  %5067 = vst.msk [vmem:[#allocation2 + $0x228] sm:$0xff] %vm470, %v4899
  %5068 = vst.msk [vmem:[#allocation2 + $0x240] sm:$0xff] %vm470, %v4901
  %5069 = vst.msk [vmem:[#allocation2 + $0x258] sm:$0xff] %vm470, %v4903
  %5070 = vst.msk [vmem:[#allocation2 + $0x270] sm:$0xff] %vm470, %v4905
  %5071 = vst.msk [vmem:[#allocation2 + $0x288] sm:$0xff] %vm470, %v4907
  %5072 = vst.msk [vmem:[#allocation2 + $0x2a0] sm:$0xff] %vm470, %v4909
  %5073 = vst.msk [vmem:[#allocation2 + $0x2b8] sm:$0xff] %vm470, %v4911
  %5074 = vst.msk [vmem:[#allocation2 + $0x2d0] sm:$0xff] %vm470, %v4913
  %5075 = vst.msk [vmem:[#allocation2 + $0x2e8] sm:$0xff] %vm470, %v4915
  %5076 = vst.msk [vmem:[#allocation2 + $0x300] sm:$0xff] %vm470, %v4917
  %5077 = vst.msk [vmem:[#allocation2 + $0x318] sm:$0xff] %vm470, %v4919
  %5078 = vst.msk [vmem:[#allocation2 + $0x330] sm:$0xff] %vm470, %v4921
  %5079 = vst.msk [vmem:[#allocation2 + $0x348] sm:$0xff] %vm470, %v4923
  %5080 = vst.msk [vmem:[#allocation2 + $0x360] sm:$0xff] %vm470, %v4925
  %5081 = vst.msk [vmem:[#allocation2 + $0x378] sm:$0xff] %vm470, %v4927
  %5082 = vst.msk [vmem:[#allocation2 + $0x390] sm:$0xff] %vm470, %v4929
  %5083 = vst.msk [vmem:[#allocation2 + $0x3a8] sm:$0xff] %vm470, %v4931
  %5084 = vst.msk [vmem:[#allocation2 + $0x3c0] sm:$0xff] %vm470, %v4933
  %5085 = vst.msk [vmem:[#allocation2 + $0x3d8] sm:$0xff] %vm470, %v4935
  %5086 = vst.msk [vmem:[#allocation2 + $0x3f0] sm:$0xff] %vm470, %v4937
  %5087 = vst.msk [vmem:[#allocation2 + $0x408] sm:$0xff] %vm470, %v4939
  %5088 = vst.msk [vmem:[#allocation2 + $0x420] sm:$0xff] %vm470, %v4941
  %5089 = vst.msk [vmem:[#allocation2 + $0x438] sm:$0xff] %vm470, %v4943
  %5090 = vst.msk [vmem:[#allocation2 + $0x450] sm:$0xff] %vm470, %v4945
  %5091 = vst.msk [vmem:[#allocation2 + $0x468] sm:$0xff] %vm470, %v4947
  %5092 = vst.msk [vmem:[#allocation2 + $0x480] sm:$0xff] %vm470, %v4949
  %5093 = vst.msk [vmem:[#allocation2 + $0x498] sm:$0xff] %vm470, %v4951
  %5094 = vst.msk [vmem:[#allocation2 + $0x4b0] sm:$0xff] %vm470, %v4953
  %5095 = vst.msk [vmem:[#allocation2 + $0x4c8] sm:$0xff] %vm470, %v4955
  %5096 = vst.msk [vmem:[#allocation2 + $0x4e0] sm:$0xff] %vm470, %v4957
  %5097 = vst.msk [vmem:[#allocation2 + $0x4f8] sm:$0xff] %vm470, %v4959
  %5098 = vst.msk [vmem:[#allocation2 + $0x510] sm:$0xff] %vm470, %v4961
  %5099 = vst.msk [vmem:[#allocation2 + $0x528] sm:$0xff] %vm470, %v4963
  %5100 = vst.msk [vmem:[#allocation2 + $0x540] sm:$0xff] %vm470, %v4965
  %5101 = vst.msk [vmem:[#allocation2 + $0x558] sm:$0xff] %vm470, %v4967
  %5102 = vst.msk [vmem:[#allocation2 + $0x570] sm:$0xff] %vm470, %v4969
  %5103 = vst.msk [vmem:[#allocation2 + $0x588] sm:$0xff] %vm470, %v4971
  %5104 = vst.msk [vmem:[#allocation2 + $0x5a0] sm:$0xff] %vm470, %v4973
  %5105 = vst.msk [vmem:[#allocation2 + $0x5b8] sm:$0xff] %vm470, %v4975
  %5106 = vst.msk [vmem:[#allocation2 + $0x5d0] sm:$0xff] %vm470, %v4977
  %5107 = vst.msk [vmem:[#allocation2 + $0x5e8] sm:$0xff] %vm470, %v4979
  %v5108 = vld [vmem:[#allocation3 + $0x2] sm:$0xff]
  %v5109 = vld [vmem:[#allocation3 + $0xa] sm:$0xff]
  %v5110 = vld [vmem:[#allocation3 + $0x1a] sm:$0xff]
  %v5111 = vld [vmem:[#allocation3 + $0x22] sm:$0xff]
  %v5112 = vld [vmem:[#allocation3 + $0x32] sm:$0xff]
  %v5113 = vld [vmem:[#allocation3 + $0x3a] sm:$0xff]
  %v5114 = vld [vmem:[#allocation3 + $0x4a] sm:$0xff]
  %v5115 = vld [vmem:[#allocation3 + $0x52] sm:$0xff]
  %v5116 = vld [vmem:[#allocation3 + $0x62] sm:$0xff]
  %v5117 = vld [vmem:[#allocation3 + $0x6a] sm:$0xff]
  %v5118 = vld [vmem:[#allocation3 + $0x7a] sm:$0xff]
  %v5119 = vld [vmem:[#allocation3 + $0x82] sm:$0xff]
  %v5120 = vld [vmem:[#allocation3 + $0x92] sm:$0xff]
  %v5121 = vld [vmem:[#allocation3 + $0x9a] sm:$0xff]
  %v5122 = vld [vmem:[#allocation3 + $0xaa] sm:$0xff]
  %v5123 = vld [vmem:[#allocation3 + $0xb2] sm:$0xff]
  %v5124 = vld [vmem:[#allocation3 + $0xc2] sm:$0xff]
  %v5125 = vld [vmem:[#allocation3 + $0xca] sm:$0xff]
  %v5126 = vld [vmem:[#allocation3 + $0xda] sm:$0xff]
  %v5127 = vld [vmem:[#allocation3 + $0xe2] sm:$0xff]
  %v5128 = vld [vmem:[#allocation3 + $0xf2] sm:$0xff]
  %v5129 = vld [vmem:[#allocation3 + $0xfa] sm:$0xff]
  %v5130 = vld [vmem:[#allocation3 + $0x10a] sm:$0xff]
  %v5131 = vld [vmem:[#allocation3 + $0x112] sm:$0xff]
  %v5132 = vld [vmem:[#allocation3 + $0x122] sm:$0xff]
  %v5133 = vld [vmem:[#allocation3 + $0x12a] sm:$0xff]
  %v5134 = vld [vmem:[#allocation3 + $0x13a] sm:$0xff]
  %v5135 = vld [vmem:[#allocation3 + $0x142] sm:$0xff]
  %v5136 = vld [vmem:[#allocation3 + $0x152] sm:$0xff]
  %v5137 = vld [vmem:[#allocation3 + $0x15a] sm:$0xff]
  %v5138 = vld [vmem:[#allocation3 + $0x16a] sm:$0xff]
  %v5139 = vld [vmem:[#allocation3 + $0x172] sm:$0xff]
  %v5140 = vld [vmem:[#allocation3 + $0x1b2] sm:$0xff]
  %v5141 = vld [vmem:[#allocation3 + $0x1ba] sm:$0xff]
  %v5142 = vld [vmem:[#allocation3 + $0x1ca] sm:$0xff]
  %v5143 = vld [vmem:[#allocation3 + $0x1d2] sm:$0xff]
  %v5144 = vld [vmem:[#allocation3 + $0x1e2] sm:$0xff]
  %v5145 = vld [vmem:[#allocation3 + $0x1ea] sm:$0xff]
  %v5146 = vld [vmem:[#allocation3 + $0x1fa] sm:$0xff]
  %v5147 = vld [vmem:[#allocation3 + $0x202] sm:$0xff]
  %v5148 = vld [vmem:[#allocation3 + $0x212] sm:$0xff]
  %v5149 = vld [vmem:[#allocation3 + $0x21a] sm:$0xff]
  %v5150 = vld [vmem:[#allocation3 + $0x22a] sm:$0xff]
  %v5151 = vld [vmem:[#allocation3 + $0x232] sm:$0xff]
  %v5152 = vld [vmem:[#allocation3 + $0x242] sm:$0xff]
  %v5153 = vld [vmem:[#allocation3 + $0x24a] sm:$0xff]
  %v5154 = vld [vmem:[#allocation3 + $0x25a] sm:$0xff]
  %v5155 = vld [vmem:[#allocation3 + $0x262] sm:$0xff]
  %v5156 = vld [vmem:[#allocation3 + $0x272] sm:$0xff]
  %v5157 = vld [vmem:[#allocation3 + $0x27a] sm:$0xff]
  %v5158 = vld [vmem:[#allocation3 + $0x28a] sm:$0xff]
  %v5159 = vld [vmem:[#allocation3 + $0x292] sm:$0xff]
  %v5160 = vld [vmem:[#allocation3 + $0x2a2] sm:$0xff]
  %v5161 = vld [vmem:[#allocation3 + $0x2aa] sm:$0xff]
  %v5162 = vld [vmem:[#allocation3 + $0x2ba] sm:$0xff]
  %v5163 = vld [vmem:[#allocation3 + $0x2c2] sm:$0xff]
  %v5164 = vld [vmem:[#allocation3 + $0x2d2] sm:$0xff]
  %v5165 = vld [vmem:[#allocation3 + $0x2da] sm:$0xff]
  %v5166 = vld [vmem:[#allocation3 + $0x2ea] sm:$0xff]
  %v5167 = vld [vmem:[#allocation3 + $0x2f2] sm:$0xff]
  %v5168 = vld [vmem:[#allocation3 + $0x302] sm:$0xff]
  %v5169 = vld [vmem:[#allocation3 + $0x30a] sm:$0xff]
  %v5170 = vld [vmem:[#allocation3 + $0x31a] sm:$0xff]
  %v5171 = vld [vmem:[#allocation3 + $0x322] sm:$0xff]
  %5236 = vrot.lane.b32.xlu0 %v5108, 64
  %v5237 = vpop.permute.xlu0 %5236
  %5238 = vrot.lane.b32.xlu0 %v5109, 64
  %v5239 = vpop.permute.xlu0 %5238
  %5240 = vrot.lane.b32.xlu0 %v5110, 64
  %v5241 = vpop.permute.xlu0 %5240
  %5242 = vrot.lane.b32.xlu0 %v5111, 64
  %v5243 = vpop.permute.xlu0 %5242
  %5244 = vrot.lane.b32.xlu0 %v5112, 64
  %v5245 = vpop.permute.xlu0 %5244
  %5246 = vrot.lane.b32.xlu0 %v5113, 64
  %v5247 = vpop.permute.xlu0 %5246
  %5248 = vrot.lane.b32.xlu0 %v5114, 64
  %v5249 = vpop.permute.xlu0 %5248
  %5250 = vrot.lane.b32.xlu0 %v5115, 64
  %v5251 = vpop.permute.xlu0 %5250
  %5252 = vrot.lane.b32.xlu0 %v5116, 64
  %v5253 = vpop.permute.xlu0 %5252
  %5254 = vrot.lane.b32.xlu0 %v5117, 64
  %v5255 = vpop.permute.xlu0 %5254
  %5256 = vrot.lane.b32.xlu0 %v5118, 64
  %v5257 = vpop.permute.xlu0 %5256
  %5258 = vrot.lane.b32.xlu0 %v5119, 64
  %v5259 = vpop.permute.xlu0 %5258
  %5260 = vrot.lane.b32.xlu0 %v5120, 64
  %v5261 = vpop.permute.xlu0 %5260
  %5262 = vrot.lane.b32.xlu0 %v5121, 64
  %v5263 = vpop.permute.xlu0 %5262
  %5264 = vrot.lane.b32.xlu0 %v5122, 64
  %v5265 = vpop.permute.xlu0 %5264
  %5266 = vrot.lane.b32.xlu0 %v5123, 64
  %v5267 = vpop.permute.xlu0 %5266
  %5268 = vrot.lane.b32.xlu0 %v5124, 64
  %v5269 = vpop.permute.xlu0 %5268
  %5270 = vrot.lane.b32.xlu0 %v5125, 64
  %v5271 = vpop.permute.xlu0 %5270
  %5272 = vrot.lane.b32.xlu0 %v5126, 64
  %v5273 = vpop.permute.xlu0 %5272
  %5274 = vrot.lane.b32.xlu0 %v5127, 64
  %v5275 = vpop.permute.xlu0 %5274
  %5276 = vrot.lane.b32.xlu0 %v5128, 64
  %v5277 = vpop.permute.xlu0 %5276
  %5278 = vrot.lane.b32.xlu0 %v5129, 64
  %v5279 = vpop.permute.xlu0 %5278
  %5280 = vrot.lane.b32.xlu0 %v5130, 64
  %v5281 = vpop.permute.xlu0 %5280
  %5282 = vrot.lane.b32.xlu0 %v5131, 64
  %v5283 = vpop.permute.xlu0 %5282
  %5284 = vrot.lane.b32.xlu0 %v5132, 64
  %v5285 = vpop.permute.xlu0 %5284
  %5286 = vrot.lane.b32.xlu0 %v5133, 64
  %v5287 = vpop.permute.xlu0 %5286
  %5288 = vrot.lane.b32.xlu0 %v5134, 64
  %v5289 = vpop.permute.xlu0 %5288
  %5290 = vrot.lane.b32.xlu0 %v5135, 64
  %v5291 = vpop.permute.xlu0 %5290
  %5292 = vrot.lane.b32.xlu0 %v5136, 64
  %v5293 = vpop.permute.xlu0 %5292
  %5294 = vrot.lane.b32.xlu0 %v5137, 64
  %v5295 = vpop.permute.xlu0 %5294
  %5296 = vrot.lane.b32.xlu0 %v5138, 64
  %v5297 = vpop.permute.xlu0 %5296
  %5298 = vrot.lane.b32.xlu0 %v5139, 64
  %v5299 = vpop.permute.xlu0 %5298
  %5300 = vrot.lane.b32.xlu0 %v5140, 64
  %v5301 = vpop.permute.xlu0 %5300
  %5302 = vrot.lane.b32.xlu0 %v5141, 64
  %v5303 = vpop.permute.xlu0 %5302
  %5304 = vrot.lane.b32.xlu0 %v5142, 64
  %v5305 = vpop.permute.xlu0 %5304
  %5306 = vrot.lane.b32.xlu0 %v5143, 64
  %v5307 = vpop.permute.xlu0 %5306
  %5308 = vrot.lane.b32.xlu0 %v5144, 64
  %v5309 = vpop.permute.xlu0 %5308
  %5310 = vrot.lane.b32.xlu0 %v5145, 64
  %v5311 = vpop.permute.xlu0 %5310
  %5312 = vrot.lane.b32.xlu0 %v5146, 64
  %v5313 = vpop.permute.xlu0 %5312
  %5314 = vrot.lane.b32.xlu0 %v5147, 64
  %v5315 = vpop.permute.xlu0 %5314
  %5316 = vrot.lane.b32.xlu0 %v5148, 64
  %v5317 = vpop.permute.xlu0 %5316
  %5318 = vrot.lane.b32.xlu0 %v5149, 64
  %v5319 = vpop.permute.xlu0 %5318
  %5320 = vrot.lane.b32.xlu0 %v5150, 64
  %v5321 = vpop.permute.xlu0 %5320
  %5322 = vrot.lane.b32.xlu0 %v5151, 64
  %v5323 = vpop.permute.xlu0 %5322
  %5324 = vrot.lane.b32.xlu0 %v5152, 64
  %v5325 = vpop.permute.xlu0 %5324
  %5326 = vrot.lane.b32.xlu0 %v5153, 64
  %v5327 = vpop.permute.xlu0 %5326
  %5328 = vrot.lane.b32.xlu0 %v5154, 64
  %v5329 = vpop.permute.xlu0 %5328
  %5330 = vrot.lane.b32.xlu0 %v5155, 64
  %v5331 = vpop.permute.xlu0 %5330
  %5332 = vrot.lane.b32.xlu0 %v5156, 64
  %v5333 = vpop.permute.xlu0 %5332
  %5334 = vrot.lane.b32.xlu0 %v5157, 64
  %v5335 = vpop.permute.xlu0 %5334
  %5336 = vrot.lane.b32.xlu0 %v5158, 64
  %v5337 = vpop.permute.xlu0 %5336
  %5338 = vrot.lane.b32.xlu0 %v5159, 64
  %v5339 = vpop.permute.xlu0 %5338
  %5340 = vrot.lane.b32.xlu0 %v5160, 64
  %v5341 = vpop.permute.xlu0 %5340
  %5342 = vrot.lane.b32.xlu0 %v5161, 64
  %v5343 = vpop.permute.xlu0 %5342
  %5344 = vrot.lane.b32.xlu0 %v5162, 64
  %v5345 = vpop.permute.xlu0 %5344
  %5346 = vrot.lane.b32.xlu0 %v5163, 64
  %v5347 = vpop.permute.xlu0 %5346
  %5348 = vrot.lane.b32.xlu0 %v5164, 64
  %v5349 = vpop.permute.xlu0 %5348
  %5350 = vrot.lane.b32.xlu0 %v5165, 64
  %v5351 = vpop.permute.xlu0 %5350
  %5352 = vrot.lane.b32.xlu0 %v5166, 64
  %v5353 = vpop.permute.xlu0 %5352
  %5354 = vrot.lane.b32.xlu0 %v5167, 64
  %v5355 = vpop.permute.xlu0 %5354
  %5356 = vrot.lane.b32.xlu0 %v5168, 64
  %v5357 = vpop.permute.xlu0 %5356
  %5358 = vrot.lane.b32.xlu0 %v5169, 64
  %v5359 = vpop.permute.xlu0 %5358
  %5360 = vrot.lane.b32.xlu0 %v5170, 64
  %v5361 = vpop.permute.xlu0 %5360
  %5362 = vrot.lane.b32.xlu0 %v5171, 64
  %v5363 = vpop.permute.xlu0 %5362
  %5428 = vst.msk [vmem:[#allocation2] sm:$0xff] %vm855, %v5237
  %5429 = vst.msk [vmem:[#allocation2 + $0x18] sm:$0xff] %vm855, %v5239
  %5430 = vst.msk [vmem:[#allocation2 + $0x30] sm:$0xff] %vm855, %v5241
  %5431 = vst.msk [vmem:[#allocation2 + $0x48] sm:$0xff] %vm855, %v5243
  %5432 = vst.msk [vmem:[#allocation2 + $0x60] sm:$0xff] %vm855, %v5245
  %5433 = vst.msk [vmem:[#allocation2 + $0x78] sm:$0xff] %vm855, %v5247
  %5434 = vst.msk [vmem:[#allocation2 + $0x90] sm:$0xff] %vm855, %v5249
  %5435 = vst.msk [vmem:[#allocation2 + $0xa8] sm:$0xff] %vm855, %v5251
  %5436 = vst.msk [vmem:[#allocation2 + $0xc0] sm:$0xff] %vm855, %v5253
  %5437 = vst.msk [vmem:[#allocation2 + $0xd8] sm:$0xff] %vm855, %v5255
  %5438 = vst.msk [vmem:[#allocation2 + $0xf0] sm:$0xff] %vm855, %v5257
  %5439 = vst.msk [vmem:[#allocation2 + $0x108] sm:$0xff] %vm855, %v5259
  %5440 = vst.msk [vmem:[#allocation2 + $0x120] sm:$0xff] %vm855, %v5261
  %5441 = vst.msk [vmem:[#allocation2 + $0x138] sm:$0xff] %vm855, %v5263
  %5442 = vst.msk [vmem:[#allocation2 + $0x150] sm:$0xff] %vm855, %v5265
  %5443 = vst.msk [vmem:[#allocation2 + $0x168] sm:$0xff] %vm855, %v5267
  %5444 = vst.msk [vmem:[#allocation2 + $0x180] sm:$0xff] %vm855, %v5269
  %5445 = vst.msk [vmem:[#allocation2 + $0x198] sm:$0xff] %vm855, %v5271
  %5446 = vst.msk [vmem:[#allocation2 + $0x1b0] sm:$0xff] %vm855, %v5273
  %5447 = vst.msk [vmem:[#allocation2 + $0x1c8] sm:$0xff] %vm855, %v5275
  %5448 = vst.msk [vmem:[#allocation2 + $0x1e0] sm:$0xff] %vm855, %v5277
  %5449 = vst.msk [vmem:[#allocation2 + $0x1f8] sm:$0xff] %vm855, %v5279
  %5450 = vst.msk [vmem:[#allocation2 + $0x210] sm:$0xff] %vm855, %v5281
  %5451 = vst.msk [vmem:[#allocation2 + $0x228] sm:$0xff] %vm855, %v5283
  %5452 = vst.msk [vmem:[#allocation2 + $0x240] sm:$0xff] %vm855, %v5285
  %5453 = vst.msk [vmem:[#allocation2 + $0x258] sm:$0xff] %vm855, %v5287
  %5454 = vst.msk [vmem:[#allocation2 + $0x270] sm:$0xff] %vm855, %v5289
  %5455 = vst.msk [vmem:[#allocation2 + $0x288] sm:$0xff] %vm855, %v5291
  %5456 = vst.msk [vmem:[#allocation2 + $0x2a0] sm:$0xff] %vm855, %v5293
  %5457 = vst.msk [vmem:[#allocation2 + $0x2b8] sm:$0xff] %vm855, %v5295
  %5458 = vst.msk [vmem:[#allocation2 + $0x2d0] sm:$0xff] %vm855, %v5297
  %5459 = vst.msk [vmem:[#allocation2 + $0x2e8] sm:$0xff] %vm855, %v5299
  %5460 = vst.msk [vmem:[#allocation2 + $0x300] sm:$0xff] %vm855, %v5301
  %5461 = vst.msk [vmem:[#allocation2 + $0x318] sm:$0xff] %vm855, %v5303
  %5462 = vst.msk [vmem:[#allocation2 + $0x330] sm:$0xff] %vm855, %v5305
  %5463 = vst.msk [vmem:[#allocation2 + $0x348] sm:$0xff] %vm855, %v5307
  %5464 = vst.msk [vmem:[#allocation2 + $0x360] sm:$0xff] %vm855, %v5309
  %5465 = vst.msk [vmem:[#allocation2 + $0x378] sm:$0xff] %vm855, %v5311
  %5466 = vst.msk [vmem:[#allocation2 + $0x390] sm:$0xff] %vm855, %v5313
  %5467 = vst.msk [vmem:[#allocation2 + $0x3a8] sm:$0xff] %vm855, %v5315
  %5468 = vst.msk [vmem:[#allocation2 + $0x3c0] sm:$0xff] %vm855, %v5317
  %5469 = vst.msk [vmem:[#allocation2 + $0x3d8] sm:$0xff] %vm855, %v5319
  %5470 = vst.msk [vmem:[#allocation2 + $0x3f0] sm:$0xff] %vm855, %v5321
  %5471 = vst.msk [vmem:[#allocation2 + $0x408] sm:$0xff] %vm855, %v5323
  %5472 = vst.msk [vmem:[#allocation2 + $0x420] sm:$0xff] %vm855, %v5325
  %5473 = vst.msk [vmem:[#allocation2 + $0x438] sm:$0xff] %vm855, %v5327
  %5474 = vst.msk [vmem:[#allocation2 + $0x450] sm:$0xff] %vm855, %v5329
  %5475 = vst.msk [vmem:[#allocation2 + $0x468] sm:$0xff] %vm855, %v5331
  %5476 = vst.msk [vmem:[#allocation2 + $0x480] sm:$0xff] %vm855, %v5333
  %5477 = vst.msk [vmem:[#allocation2 + $0x498] sm:$0xff] %vm855, %v5335
  %5478 = vst.msk [vmem:[#allocation2 + $0x4b0] sm:$0xff] %vm855, %v5337
  %5479 = vst.msk [vmem:[#allocation2 + $0x4c8] sm:$0xff] %vm855, %v5339
  %5480 = vst.msk [vmem:[#allocation2 + $0x4e0] sm:$0xff] %vm855, %v5341
  %5481 = vst.msk [vmem:[#allocation2 + $0x4f8] sm:$0xff] %vm855, %v5343
  %5482 = vst.msk [vmem:[#allocation2 + $0x510] sm:$0xff] %vm855, %v5345
  %5483 = vst.msk [vmem:[#allocation2 + $0x528] sm:$0xff] %vm855, %v5347
  %5484 = vst.msk [vmem:[#allocation2 + $0x540] sm:$0xff] %vm855, %v5349
  %5485 = vst.msk [vmem:[#allocation2 + $0x558] sm:$0xff] %vm855, %v5351
  %5486 = vst.msk [vmem:[#allocation2 + $0x570] sm:$0xff] %vm855, %v5353
  %5487 = vst.msk [vmem:[#allocation2 + $0x588] sm:$0xff] %vm855, %v5355
  %5488 = vst.msk [vmem:[#allocation2 + $0x5a0] sm:$0xff] %vm855, %v5357
  %5489 = vst.msk [vmem:[#allocation2 + $0x5b8] sm:$0xff] %vm855, %v5359
  %5490 = vst.msk [vmem:[#allocation2 + $0x5d0] sm:$0xff] %vm855, %v5361
  %5491 = vst.msk [vmem:[#allocation2 + $0x5e8] sm:$0xff] %vm855, %v5363
  %v5492 = vld [vmem:[%s4531] sm:$0xff]
  %v5493 = vld [vmem:[%s4531 + $0x8] sm:$0xff]
  %v5494 = vld [vmem:[%s4531 + $0x18] sm:$0xff]
  %v5495 = vld [vmem:[%s4531 + $0x20] sm:$0xff]
  %v5496 = vld [vmem:[%s4531 + $0x30] sm:$0xff]
  %v5497 = vld [vmem:[%s4531 + $0x38] sm:$0xff]
  %v5498 = vld [vmem:[%s4531 + $0x48] sm:$0xff]
  %v5499 = vld [vmem:[%s4531 + $0x50] sm:$0xff]
  %v5500 = vld [vmem:[%s4531 + $0x60] sm:$0xff]
  %v5501 = vld [vmem:[%s4531 + $0x68] sm:$0xff]
  %v5502 = vld [vmem:[%s4531 + $0x78] sm:$0xff]
  %v5503 = vld [vmem:[%s4531 + $0x80] sm:$0xff]
  %v5504 = vld [vmem:[%s4531 + $0x90] sm:$0xff]
  %v5505 = vld [vmem:[%s4531 + $0x98] sm:$0xff]
  %v5506 = vld [vmem:[%s4531 + $0xa8] sm:$0xff]
  %v5507 = vld [vmem:[%s4531 + $0xb0] sm:$0xff]
  %v5508 = vld [vmem:[%s4531 + $0xc0] sm:$0xff]
  %v5509 = vld [vmem:[%s4531 + $0xc8] sm:$0xff]
  %v5510 = vld [vmem:[%s4531 + $0xd8] sm:$0xff]
  %v5511 = vld [vmem:[%s4531 + $0xe0] sm:$0xff]
  %v5512 = vld [vmem:[%s4531 + $0xf0] sm:$0xff]
  %v5513 = vld [vmem:[%s4531 + $0xf8] sm:$0xff]
  %v5514 = vld [vmem:[%s4531 + $0x108] sm:$0xff]
  %v5515 = vld [vmem:[%s4531 + $0x110] sm:$0xff]
  %v5516 = vld [vmem:[%s4531 + $0x120] sm:$0xff]
  %v5517 = vld [vmem:[%s4531 + $0x128] sm:$0xff]
  %v5518 = vld [vmem:[%s4531 + $0x138] sm:$0xff]
  %v5519 = vld [vmem:[%s4531 + $0x140] sm:$0xff]
  %v5520 = vld [vmem:[%s4531 + $0x150] sm:$0xff]
  %v5521 = vld [vmem:[%s4531 + $0x158] sm:$0xff]
  %v5522 = vld [vmem:[%s4531 + $0x168] sm:$0xff]
  %v5523 = vld [vmem:[%s4531 + $0x170] sm:$0xff]
  %v5524 = vld [vmem:[%s4531 + $0x1b0] sm:$0xff]
  %v5525 = vld [vmem:[%s4531 + $0x1b8] sm:$0xff]
  %v5526 = vld [vmem:[%s4531 + $0x1c8] sm:$0xff]
  %v5527 = vld [vmem:[%s4531 + $0x1d0] sm:$0xff]
  %v5528 = vld [vmem:[%s4531 + $0x1e0] sm:$0xff]
  %v5529 = vld [vmem:[%s4531 + $0x1e8] sm:$0xff]
  %v5530 = vld [vmem:[%s4531 + $0x1f8] sm:$0xff]
  %v5531 = vld [vmem:[%s4531 + $0x200] sm:$0xff]
  %v5532 = vld [vmem:[%s4531 + $0x210] sm:$0xff]
  %v5533 = vld [vmem:[%s4531 + $0x218] sm:$0xff]
  %v5534 = vld [vmem:[%s4531 + $0x228] sm:$0xff]
  %v5535 = vld [vmem:[%s4531 + $0x230] sm:$0xff]
  %v5536 = vld [vmem:[%s4531 + $0x240] sm:$0xff]
  %v5537 = vld [vmem:[%s4531 + $0x248] sm:$0xff]
  %v5538 = vld [vmem:[%s4531 + $0x258] sm:$0xff]
  %v5539 = vld [vmem:[%s4531 + $0x260] sm:$0xff]
  %v5540 = vld [vmem:[%s4531 + $0x270] sm:$0xff]
  %v5541 = vld [vmem:[%s4531 + $0x278] sm:$0xff]
  %v5542 = vld [vmem:[%s4531 + $0x288] sm:$0xff]
  %v5543 = vld [vmem:[%s4531 + $0x290] sm:$0xff]
  %v5544 = vld [vmem:[%s4531 + $0x2a0] sm:$0xff]
  %v5545 = vld [vmem:[%s4531 + $0x2a8] sm:$0xff]
  %v5546 = vld [vmem:[%s4531 + $0x2b8] sm:$0xff]
  %v5547 = vld [vmem:[%s4531 + $0x2c0] sm:$0xff]
  %v5548 = vld [vmem:[%s4531 + $0x2d0] sm:$0xff]
  %v5549 = vld [vmem:[%s4531 + $0x2d8] sm:$0xff]
  %v5550 = vld [vmem:[%s4531 + $0x2e8] sm:$0xff]
  %v5551 = vld [vmem:[%s4531 + $0x2f0] sm:$0xff]
  %v5552 = vld [vmem:[%s4531 + $0x300] sm:$0xff]
  %v5553 = vld [vmem:[%s4531 + $0x308] sm:$0xff]
  %v5554 = vld [vmem:[%s4531 + $0x318] sm:$0xff]
  %v5555 = vld [vmem:[%s4531 + $0x320] sm:$0xff]
  %5620 = vrot.lane.b32.xlu0 %v5492, 96
  %v5621 = vpop.permute.xlu0 %5620
  %5622 = vrot.lane.b32.xlu0 %v5493, 96
  %v5623 = vpop.permute.xlu0 %5622
  %5624 = vrot.lane.b32.xlu0 %v5494, 96
  %v5625 = vpop.permute.xlu0 %5624
  %5626 = vrot.lane.b32.xlu0 %v5495, 96
  %v5627 = vpop.permute.xlu0 %5626
  %5628 = vrot.lane.b32.xlu0 %v5496, 96
  %v5629 = vpop.permute.xlu0 %5628
  %5630 = vrot.lane.b32.xlu0 %v5497, 96
  %v5631 = vpop.permute.xlu0 %5630
  %5632 = vrot.lane.b32.xlu0 %v5498, 96
  %v5633 = vpop.permute.xlu0 %5632
  %5634 = vrot.lane.b32.xlu0 %v5499, 96
  %v5635 = vpop.permute.xlu0 %5634
  %5636 = vrot.lane.b32.xlu0 %v5500, 96
  %v5637 = vpop.permute.xlu0 %5636
  %5638 = vrot.lane.b32.xlu0 %v5501, 96
  %v5639 = vpop.permute.xlu0 %5638
  %5640 = vrot.lane.b32.xlu0 %v5502, 96
  %v5641 = vpop.permute.xlu0 %5640
  %5642 = vrot.lane.b32.xlu0 %v5503, 96
  %v5643 = vpop.permute.xlu0 %5642
  %5644 = vrot.lane.b32.xlu0 %v5504, 96
  %v5645 = vpop.permute.xlu0 %5644
  %5646 = vrot.lane.b32.xlu0 %v5505, 96
  %v5647 = vpop.permute.xlu0 %5646
  %5648 = vrot.lane.b32.xlu0 %v5506, 96
  %v5649 = vpop.permute.xlu0 %5648
  %5650 = vrot.lane.b32.xlu0 %v5507, 96
  %v5651 = vpop.permute.xlu0 %5650
  %5652 = vrot.lane.b32.xlu0 %v5508, 96
  %v5653 = vpop.permute.xlu0 %5652
  %5654 = vrot.lane.b32.xlu0 %v5509, 96
  %v5655 = vpop.permute.xlu0 %5654
  %5656 = vrot.lane.b32.xlu0 %v5510, 96
  %v5657 = vpop.permute.xlu0 %5656
  %5658 = vrot.lane.b32.xlu0 %v5511, 96
  %v5659 = vpop.permute.xlu0 %5658
  %5660 = vrot.lane.b32.xlu0 %v5512, 96
  %v5661 = vpop.permute.xlu0 %5660
  %5662 = vrot.lane.b32.xlu0 %v5513, 96
  %v5663 = vpop.permute.xlu0 %5662
  %5664 = vrot.lane.b32.xlu0 %v5514, 96
  %v5665 = vpop.permute.xlu0 %5664
  %5666 = vrot.lane.b32.xlu0 %v5515, 96
  %v5667 = vpop.permute.xlu0 %5666
  %5668 = vrot.lane.b32.xlu0 %v5516, 96
  %v5669 = vpop.permute.xlu0 %5668
  %5670 = vrot.lane.b32.xlu0 %v5517, 96
  %v5671 = vpop.permute.xlu0 %5670
  %5672 = vrot.lane.b32.xlu0 %v5518, 96
  %v5673 = vpop.permute.xlu0 %5672
  %5674 = vrot.lane.b32.xlu0 %v5519, 96
  %v5675 = vpop.permute.xlu0 %5674
  %5676 = vrot.lane.b32.xlu0 %v5520, 96
  %v5677 = vpop.permute.xlu0 %5676
  %5678 = vrot.lane.b32.xlu0 %v5521, 96
  %v5679 = vpop.permute.xlu0 %5678
  %5680 = vrot.lane.b32.xlu0 %v5522, 96
  %v5681 = vpop.permute.xlu0 %5680
  %5682 = vrot.lane.b32.xlu0 %v5523, 96
  %v5683 = vpop.permute.xlu0 %5682
  %5684 = vrot.lane.b32.xlu0 %v5524, 96
  %v5685 = vpop.permute.xlu0 %5684
  %5686 = vrot.lane.b32.xlu0 %v5525, 96
  %v5687 = vpop.permute.xlu0 %5686
  %5688 = vrot.lane.b32.xlu0 %v5526, 96
  %v5689 = vpop.permute.xlu0 %5688
  %5690 = vrot.lane.b32.xlu0 %v5527, 96
  %v5691 = vpop.permute.xlu0 %5690
  %5692 = vrot.lane.b32.xlu0 %v5528, 96
  %v5693 = vpop.permute.xlu0 %5692
  %5694 = vrot.lane.b32.xlu0 %v5529, 96
  %v5695 = vpop.permute.xlu0 %5694
  %5696 = vrot.lane.b32.xlu0 %v5530, 96
  %v5697 = vpop.permute.xlu0 %5696
  %5698 = vrot.lane.b32.xlu0 %v5531, 96
  %v5699 = vpop.permute.xlu0 %5698
  %5700 = vrot.lane.b32.xlu0 %v5532, 96
  %v5701 = vpop.permute.xlu0 %5700
  %5702 = vrot.lane.b32.xlu0 %v5533, 96
  %v5703 = vpop.permute.xlu0 %5702
  %5704 = vrot.lane.b32.xlu0 %v5534, 96
  %v5705 = vpop.permute.xlu0 %5704
  %5706 = vrot.lane.b32.xlu0 %v5535, 96
  %v5707 = vpop.permute.xlu0 %5706
  %5708 = vrot.lane.b32.xlu0 %v5536, 96
  %v5709 = vpop.permute.xlu0 %5708
  %5710 = vrot.lane.b32.xlu0 %v5537, 96
  %v5711 = vpop.permute.xlu0 %5710
  %5712 = vrot.lane.b32.xlu0 %v5538, 96
  %v5713 = vpop.permute.xlu0 %5712
  %5714 = vrot.lane.b32.xlu0 %v5539, 96
  %v5715 = vpop.permute.xlu0 %5714
  %5716 = vrot.lane.b32.xlu0 %v5540, 96
  %v5717 = vpop.permute.xlu0 %5716
  %5718 = vrot.lane.b32.xlu0 %v5541, 96
  %v5719 = vpop.permute.xlu0 %5718
  %5720 = vrot.lane.b32.xlu0 %v5542, 96
  %v5721 = vpop.permute.xlu0 %5720
  %5722 = vrot.lane.b32.xlu0 %v5543, 96
  %v5723 = vpop.permute.xlu0 %5722
  %5724 = vrot.lane.b32.xlu0 %v5544, 96
  %v5725 = vpop.permute.xlu0 %5724
  %5726 = vrot.lane.b32.xlu0 %v5545, 96
  %v5727 = vpop.permute.xlu0 %5726
  %5728 = vrot.lane.b32.xlu0 %v5546, 96
  %v5729 = vpop.permute.xlu0 %5728
  %5730 = vrot.lane.b32.xlu0 %v5547, 96
  %v5731 = vpop.permute.xlu0 %5730
  %5732 = vrot.lane.b32.xlu0 %v5548, 96
  %v5733 = vpop.permute.xlu0 %5732
  %5734 = vrot.lane.b32.xlu0 %v5549, 96
  %v5735 = vpop.permute.xlu0 %5734
  %5736 = vrot.lane.b32.xlu0 %v5550, 96
  %v5737 = vpop.permute.xlu0 %5736
  %5738 = vrot.lane.b32.xlu0 %v5551, 96
  %v5739 = vpop.permute.xlu0 %5738
  %5740 = vrot.lane.b32.xlu0 %v5552, 96
  %v5741 = vpop.permute.xlu0 %5740
  %5742 = vrot.lane.b32.xlu0 %v5553, 96
  %v5743 = vpop.permute.xlu0 %5742
  %5744 = vrot.lane.b32.xlu0 %v5554, 96
  %v5745 = vpop.permute.xlu0 %5744
  %5746 = vrot.lane.b32.xlu0 %v5555, 96
  %v5747 = vpop.permute.xlu0 %5746
  %5812 = vst.msk [vmem:[#allocation2] sm:$0xff] %vm1241, %v5621
  %5813 = vst.msk [vmem:[#allocation2 + $0x18] sm:$0xff] %vm1241, %v5623
  %5814 = vst.msk [vmem:[#allocation2 + $0x30] sm:$0xff] %vm1241, %v5625
  %5815 = vst.msk [vmem:[#allocation2 + $0x48] sm:$0xff] %vm1241, %v5627
  %5816 = vst.msk [vmem:[#allocation2 + $0x60] sm:$0xff] %vm1241, %v5629
  %5817 = vst.msk [vmem:[#allocation2 + $0x78] sm:$0xff] %vm1241, %v5631
  %5818 = vst.msk [vmem:[#allocation2 + $0x90] sm:$0xff] %vm1241, %v5633
  %5819 = vst.msk [vmem:[#allocation2 + $0xa8] sm:$0xff] %vm1241, %v5635
  %5820 = vst.msk [vmem:[#allocation2 + $0xc0] sm:$0xff] %vm1241, %v5637
  %5821 = vst.msk [vmem:[#allocation2 + $0xd8] sm:$0xff] %vm1241, %v5639
  %5822 = vst.msk [vmem:[#allocation2 + $0xf0] sm:$0xff] %vm1241, %v5641
  %5823 = vst.msk [vmem:[#allocation2 + $0x108] sm:$0xff] %vm1241, %v5643
  %5824 = vst.msk [vmem:[#allocation2 + $0x120] sm:$0xff] %vm1241, %v5645
  %5825 = vst.msk [vmem:[#allocation2 + $0x138] sm:$0xff] %vm1241, %v5647
  %5826 = vst.msk [vmem:[#allocation2 + $0x150] sm:$0xff] %vm1241, %v5649
  %5827 = vst.msk [vmem:[#allocation2 + $0x168] sm:$0xff] %vm1241, %v5651
  %5828 = vst.msk [vmem:[#allocation2 + $0x180] sm:$0xff] %vm1241, %v5653
  %5829 = vst.msk [vmem:[#allocation2 + $0x198] sm:$0xff] %vm1241, %v5655
  %5830 = vst.msk [vmem:[#allocation2 + $0x1b0] sm:$0xff] %vm1241, %v5657
  %5831 = vst.msk [vmem:[#allocation2 + $0x1c8] sm:$0xff] %vm1241, %v5659
  %5832 = vst.msk [vmem:[#allocation2 + $0x1e0] sm:$0xff] %vm1241, %v5661
  %5833 = vst.msk [vmem:[#allocation2 + $0x1f8] sm:$0xff] %vm1241, %v5663
  %5834 = vst.msk [vmem:[#allocation2 + $0x210] sm:$0xff] %vm1241, %v5665
  %5835 = vst.msk [vmem:[#allocation2 + $0x228] sm:$0xff] %vm1241, %v5667
  %5836 = vst.msk [vmem:[#allocation2 + $0x240] sm:$0xff] %vm1241, %v5669
  %5837 = vst.msk [vmem:[#allocation2 + $0x258] sm:$0xff] %vm1241, %v5671
  %5838 = vst.msk [vmem:[#allocation2 + $0x270] sm:$0xff] %vm1241, %v5673
  %5839 = vst.msk [vmem:[#allocation2 + $0x288] sm:$0xff] %vm1241, %v5675
  %5840 = vst.msk [vmem:[#allocation2 + $0x2a0] sm:$0xff] %vm1241, %v5677
  %5841 = vst.msk [vmem:[#allocation2 + $0x2b8] sm:$0xff] %vm1241, %v5679
  %5842 = vst.msk [vmem:[#allocation2 + $0x2d0] sm:$0xff] %vm1241, %v5681
  %5843 = vst.msk [vmem:[#allocation2 + $0x2e8] sm:$0xff] %vm1241, %v5683
  %5844 = vst.msk [vmem:[#allocation2 + $0x300] sm:$0xff] %vm1241, %v5685
  %5845 = vst.msk [vmem:[#allocation2 + $0x318] sm:$0xff] %vm1241, %v5687
  %5846 = vst.msk [vmem:[#allocation2 + $0x330] sm:$0xff] %vm1241, %v5689
  %5847 = vst.msk [vmem:[#allocation2 + $0x348] sm:$0xff] %vm1241, %v5691
  %5848 = vst.msk [vmem:[#allocation2 + $0x360] sm:$0xff] %vm1241, %v5693
  %5849 = vst.msk [vmem:[#allocation2 + $0x378] sm:$0xff] %vm1241, %v5695
  %5850 = vst.msk [vmem:[#allocation2 + $0x390] sm:$0xff] %vm1241, %v5697
  %5851 = vst.msk [vmem:[#allocation2 + $0x3a8] sm:$0xff] %vm1241, %v5699
  %5852 = vst.msk [vmem:[#allocation2 + $0x3c0] sm:$0xff] %vm1241, %v5701
  %5853 = vst.msk [vmem:[#allocation2 + $0x3d8] sm:$0xff] %vm1241, %v5703
  %5854 = vst.msk [vmem:[#allocation2 + $0x3f0] sm:$0xff] %vm1241, %v5705
  %5855 = vst.msk [vmem:[#allocation2 + $0x408] sm:$0xff] %vm1241, %v5707
  %5856 = vst.msk [vmem:[#allocation2 + $0x420] sm:$0xff] %vm1241, %v5709
  %5857 = vst.msk [vmem:[#allocation2 + $0x438] sm:$0xff] %vm1241, %v5711
  %5858 = vst.msk [vmem:[#allocation2 + $0x450] sm:$0xff] %vm1241, %v5713
  %5859 = vst.msk [vmem:[#allocation2 + $0x468] sm:$0xff] %vm1241, %v5715
  %5860 = vst.msk [vmem:[#allocation2 + $0x480] sm:$0xff] %vm1241, %v5717
  %5861 = vst.msk [vmem:[#allocation2 + $0x498] sm:$0xff] %vm1241, %v5719
  %5862 = vst.msk [vmem:[#allocation2 + $0x4b0] sm:$0xff] %vm1241, %v5721
  %5863 = vst.msk [vmem:[#allocation2 + $0x4c8] sm:$0xff] %vm1241, %v5723
  %5864 = vst.msk [vmem:[#allocation2 + $0x4e0] sm:$0xff] %vm1241, %v5725
  %5865 = vst.msk [vmem:[#allocation2 + $0x4f8] sm:$0xff] %vm1241, %v5727
  %5866 = vst.msk [vmem:[#allocation2 + $0x510] sm:$0xff] %vm1241, %v5729
  %5867 = vst.msk [vmem:[#allocation2 + $0x528] sm:$0xff] %vm1241, %v5731
  %5868 = vst.msk [vmem:[#allocation2 + $0x540] sm:$0xff] %vm1241, %v5733
  %5869 = vst.msk [vmem:[#allocation2 + $0x558] sm:$0xff] %vm1241, %v5735
  %5870 = vst.msk [vmem:[#allocation2 + $0x570] sm:$0xff] %vm1241, %v5737
  %5871 = vst.msk [vmem:[#allocation2 + $0x588] sm:$0xff] %vm1241, %v5739
  %5872 = vst.msk [vmem:[#allocation2 + $0x5a0] sm:$0xff] %vm1241, %v5741
  %5873 = vst.msk [vmem:[#allocation2 + $0x5b8] sm:$0xff] %vm1241, %v5743
  %5874 = vst.msk [vmem:[#allocation2 + $0x5d0] sm:$0xff] %vm1241, %v5745
  %5875 = vst.msk [vmem:[#allocation2 + $0x5e8] sm:$0xff] %vm1241, %v5747
  %v5876 = vld [vmem:[%s4531 + $0x1] sm:$0xff]
  %v5877 = vld [vmem:[%s4531 + $0x9] sm:$0xff]
  %v5878 = vld [vmem:[%s4531 + $0x19] sm:$0xff]
  %v5879 = vld [vmem:[%s4531 + $0x21] sm:$0xff]
  %v5880 = vld [vmem:[%s4531 + $0x31] sm:$0xff]
  %v5881 = vld [vmem:[%s4531 + $0x39] sm:$0xff]
  %v5882 = vld [vmem:[%s4531 + $0x49] sm:$0xff]
  %v5883 = vld [vmem:[%s4531 + $0x51] sm:$0xff]
  %v5884 = vld [vmem:[%s4531 + $0x61] sm:$0xff]
  %v5885 = vld [vmem:[%s4531 + $0x69] sm:$0xff]
  %v5886 = vld [vmem:[%s4531 + $0x79] sm:$0xff]
  %v5887 = vld [vmem:[%s4531 + $0x81] sm:$0xff]
  %v5888 = vld [vmem:[%s4531 + $0x91] sm:$0xff]
  %v5889 = vld [vmem:[%s4531 + $0x99] sm:$0xff]
  %v5890 = vld [vmem:[%s4531 + $0xa9] sm:$0xff]
  %v5891 = vld [vmem:[%s4531 + $0xb1] sm:$0xff]
  %v5892 = vld [vmem:[%s4531 + $0xc1] sm:$0xff]
  %v5893 = vld [vmem:[%s4531 + $0xc9] sm:$0xff]
  %v5894 = vld [vmem:[%s4531 + $0xd9] sm:$0xff]
  %v5895 = vld [vmem:[%s4531 + $0xe1] sm:$0xff]
  %v5896 = vld [vmem:[%s4531 + $0xf1] sm:$0xff]
  %v5897 = vld [vmem:[%s4531 + $0xf9] sm:$0xff]
  %v5898 = vld [vmem:[%s4531 + $0x109] sm:$0xff]
  %v5899 = vld [vmem:[%s4531 + $0x111] sm:$0xff]
  %v5900 = vld [vmem:[%s4531 + $0x121] sm:$0xff]
  %v5901 = vld [vmem:[%s4531 + $0x129] sm:$0xff]
  %v5902 = vld [vmem:[%s4531 + $0x139] sm:$0xff]
  %v5903 = vld [vmem:[%s4531 + $0x141] sm:$0xff]
  %v5904 = vld [vmem:[%s4531 + $0x151] sm:$0xff]
  %v5905 = vld [vmem:[%s4531 + $0x159] sm:$0xff]
  %v5906 = vld [vmem:[%s4531 + $0x169] sm:$0xff]
  %v5907 = vld [vmem:[%s4531 + $0x171] sm:$0xff]
  %v5908 = vld [vmem:[%s4531 + $0x1b1] sm:$0xff]
  %v5909 = vld [vmem:[%s4531 + $0x1b9] sm:$0xff]
  %v5910 = vld [vmem:[%s4531 + $0x1c9] sm:$0xff]
  %v5911 = vld [vmem:[%s4531 + $0x1d1] sm:$0xff]
  %v5912 = vld [vmem:[%s4531 + $0x1e1] sm:$0xff]
  %v5913 = vld [vmem:[%s4531 + $0x1e9] sm:$0xff]
  %v5914 = vld [vmem:[%s4531 + $0x1f9] sm:$0xff]
  %v5915 = vld [vmem:[%s4531 + $0x201] sm:$0xff]
  %v5916 = vld [vmem:[%s4531 + $0x211] sm:$0xff]
  %v5917 = vld [vmem:[%s4531 + $0x219] sm:$0xff]
  %v5918 = vld [vmem:[%s4531 + $0x229] sm:$0xff]
  %v5919 = vld [vmem:[%s4531 + $0x231] sm:$0xff]
  %v5920 = vld [vmem:[%s4531 + $0x241] sm:$0xff]
  %v5921 = vld [vmem:[%s4531 + $0x249] sm:$0xff]
  %v5922 = vld [vmem:[%s4531 + $0x259] sm:$0xff]
  %v5923 = vld [vmem:[%s4531 + $0x261] sm:$0xff]
  %v5924 = vld [vmem:[%s4531 + $0x271] sm:$0xff]
  %v5925 = vld [vmem:[%s4531 + $0x279] sm:$0xff]
  %v5926 = vld [vmem:[%s4531 + $0x289] sm:$0xff]
  %v5927 = vld [vmem:[%s4531 + $0x291] sm:$0xff]
  %v5928 = vld [vmem:[%s4531 + $0x2a1] sm:$0xff]
  %v5929 = vld [vmem:[%s4531 + $0x2a9] sm:$0xff]
  %v5930 = vld [vmem:[%s4531 + $0x2b9] sm:$0xff]
  %v5931 = vld [vmem:[%s4531 + $0x2c1] sm:$0xff]
  %v5932 = vld [vmem:[%s4531 + $0x2d1] sm:$0xff]
  %v5933 = vld [vmem:[%s4531 + $0x2d9] sm:$0xff]
  %v5934 = vld [vmem:[%s4531 + $0x2e9] sm:$0xff]
  %v5935 = vld [vmem:[%s4531 + $0x2f1] sm:$0xff]
  %v5936 = vld [vmem:[%s4531 + $0x301] sm:$0xff]
  %v5937 = vld [vmem:[%s4531 + $0x309] sm:$0xff]
  %v5938 = vld [vmem:[%s4531 + $0x319] sm:$0xff]
  %v5939 = vld [vmem:[%s4531 + $0x321] sm:$0xff]
  %5940 = vst.msk [vmem:[#allocation2 + $0x8] sm:$0xff] %vm85, %v5876
  %5941 = vst.msk [vmem:[#allocation2 + $0x20] sm:$0xff] %vm85, %v5877
  %5942 = vst.msk [vmem:[#allocation2 + $0x38] sm:$0xff] %vm85, %v5878
  %5943 = vst.msk [vmem:[#allocation2 + $0x50] sm:$0xff] %vm85, %v5879
  %5944 = vst.msk [vmem:[#allocation2 + $0x68] sm:$0xff] %vm85, %v5880
  %5945 = vst.msk [vmem:[#allocation2 + $0x80] sm:$0xff] %vm85, %v5881
  %5946 = vst.msk [vmem:[#allocation2 + $0x98] sm:$0xff] %vm85, %v5882
  %5947 = vst.msk [vmem:[#allocation2 + $0xb0] sm:$0xff] %vm85, %v5883
  %5948 = vst.msk [vmem:[#allocation2 + $0xc8] sm:$0xff] %vm85, %v5884
  %5949 = vst.msk [vmem:[#allocation2 + $0xe0] sm:$0xff] %vm85, %v5885
  %5950 = vst.msk [vmem:[#allocation2 + $0xf8] sm:$0xff] %vm85, %v5886
  %5951 = vst.msk [vmem:[#allocation2 + $0x110] sm:$0xff] %vm85, %v5887
  %5952 = vst.msk [vmem:[#allocation2 + $0x128] sm:$0xff] %vm85, %v5888
  %5953 = vst.msk [vmem:[#allocation2 + $0x140] sm:$0xff] %vm85, %v5889
  %5954 = vst.msk [vmem:[#allocation2 + $0x158] sm:$0xff] %vm85, %v5890
  %5955 = vst.msk [vmem:[#allocation2 + $0x170] sm:$0xff] %vm85, %v5891
  %5956 = vst.msk [vmem:[#allocation2 + $0x188] sm:$0xff] %vm85, %v5892
  %5957 = vst.msk [vmem:[#allocation2 + $0x1a0] sm:$0xff] %vm85, %v5893
  %5958 = vst.msk [vmem:[#allocation2 + $0x1b8] sm:$0xff] %vm85, %v5894
  %5959 = vst.msk [vmem:[#allocation2 + $0x1d0] sm:$0xff] %vm85, %v5895
  %5960 = vst.msk [vmem:[#allocation2 + $0x1e8] sm:$0xff] %vm85, %v5896
  %5961 = vst.msk [vmem:[#allocation2 + $0x200] sm:$0xff] %vm85, %v5897
  %5962 = vst.msk [vmem:[#allocation2 + $0x218] sm:$0xff] %vm85, %v5898
  %5963 = vst.msk [vmem:[#allocation2 + $0x230] sm:$0xff] %vm85, %v5899
  %5964 = vst.msk [vmem:[#allocation2 + $0x248] sm:$0xff] %vm85, %v5900
  %5965 = vst.msk [vmem:[#allocation2 + $0x260] sm:$0xff] %vm85, %v5901
  %5966 = vst.msk [vmem:[#allocation2 + $0x278] sm:$0xff] %vm85, %v5902
  %5967 = vst.msk [vmem:[#allocation2 + $0x290] sm:$0xff] %vm85, %v5903
  %5968 = vst.msk [vmem:[#allocation2 + $0x2a8] sm:$0xff] %vm85, %v5904
  %5969 = vst.msk [vmem:[#allocation2 + $0x2c0] sm:$0xff] %vm85, %v5905
  %5970 = vst.msk [vmem:[#allocation2 + $0x2d8] sm:$0xff] %vm85, %v5906
  %5971 = vst.msk [vmem:[#allocation2 + $0x2f0] sm:$0xff] %vm85, %v5907
  %5972 = vst.msk [vmem:[#allocation2 + $0x308] sm:$0xff] %vm85, %v5908
  %5973 = vst.msk [vmem:[#allocation2 + $0x320] sm:$0xff] %vm85, %v5909
  %5974 = vst.msk [vmem:[#allocation2 + $0x338] sm:$0xff] %vm85, %v5910
  %5975 = vst.msk [vmem:[#allocation2 + $0x350] sm:$0xff] %vm85, %v5911
  %5976 = vst.msk [vmem:[#allocation2 + $0x368] sm:$0xff] %vm85, %v5912
  %5977 = vst.msk [vmem:[#allocation2 + $0x380] sm:$0xff] %vm85, %v5913
  %5978 = vst.msk [vmem:[#allocation2 + $0x398] sm:$0xff] %vm85, %v5914
  %5979 = vst.msk [vmem:[#allocation2 + $0x3b0] sm:$0xff] %vm85, %v5915
  %5980 = vst.msk [vmem:[#allocation2 + $0x3c8] sm:$0xff] %vm85, %v5916
  %5981 = vst.msk [vmem:[#allocation2 + $0x3e0] sm:$0xff] %vm85, %v5917
  %5982 = vst.msk [vmem:[#allocation2 + $0x3f8] sm:$0xff] %vm85, %v5918
  %5983 = vst.msk [vmem:[#allocation2 + $0x410] sm:$0xff] %vm85, %v5919
  %5984 = vst.msk [vmem:[#allocation2 + $0x428] sm:$0xff] %vm85, %v5920
  %5985 = vst.msk [vmem:[#allocation2 + $0x440] sm:$0xff] %vm85, %v5921
  %5986 = vst.msk [vmem:[#allocation2 + $0x458] sm:$0xff] %vm85, %v5922
  %5987 = vst.msk [vmem:[#allocation2 + $0x470] sm:$0xff] %vm85, %v5923
  %5988 = vst.msk [vmem:[#allocation2 + $0x488] sm:$0xff] %vm85, %v5924
  %5989 = vst.msk [vmem:[#allocation2 + $0x4a0] sm:$0xff] %vm85, %v5925
  %5990 = vst.msk [vmem:[#allocation2 + $0x4b8] sm:$0xff] %vm85, %v5926
  %5991 = vst.msk [vmem:[#allocation2 + $0x4d0] sm:$0xff] %vm85, %v5927
  %5992 = vst.msk [vmem:[#allocation2 + $0x4e8] sm:$0xff] %vm85, %v5928
  %5993 = vst.msk [vmem:[#allocation2 + $0x500] sm:$0xff] %vm85, %v5929
  %5994 = vst.msk [vmem:[#allocation2 + $0x518] sm:$0xff] %vm85, %v5930
  %5995 = vst.msk [vmem:[#allocation2 + $0x530] sm:$0xff] %vm85, %v5931
  %5996 = vst.msk [vmem:[#allocation2 + $0x548] sm:$0xff] %vm85, %v5932
  %5997 = vst.msk [vmem:[#allocation2 + $0x560] sm:$0xff] %vm85, %v5933
  %5998 = vst.msk [vmem:[#allocation2 + $0x578] sm:$0xff] %vm85, %v5934
  %5999 = vst.msk [vmem:[#allocation2 + $0x590] sm:$0xff] %vm85, %v5935
  %6000 = vst.msk [vmem:[#allocation2 + $0x5a8] sm:$0xff] %vm85, %v5936
  %6001 = vst.msk [vmem:[#allocation2 + $0x5c0] sm:$0xff] %vm85, %v5937
  %6002 = vst.msk [vmem:[#allocation2 + $0x5d8] sm:$0xff] %vm85, %v5938
  %6003 = vst.msk [vmem:[#allocation2 + $0x5f0] sm:$0xff] %vm85, %v5939
  %v6004 = vld [vmem:[%s4531 + $0x2] sm:$0xff]
  %v6005 = vld [vmem:[%s4531 + $0xa] sm:$0xff]
  %v6006 = vld [vmem:[%s4531 + $0x1a] sm:$0xff]
  %v6007 = vld [vmem:[%s4531 + $0x22] sm:$0xff]
  %v6008 = vld [vmem:[%s4531 + $0x32] sm:$0xff]
  %v6009 = vld [vmem:[%s4531 + $0x3a] sm:$0xff]
  %v6010 = vld [vmem:[%s4531 + $0x4a] sm:$0xff]
  %v6011 = vld [vmem:[%s4531 + $0x52] sm:$0xff]
  %v6012 = vld [vmem:[%s4531 + $0x62] sm:$0xff]
  %v6013 = vld [vmem:[%s4531 + $0x6a] sm:$0xff]
  %v6014 = vld [vmem:[%s4531 + $0x7a] sm:$0xff]
  %v6015 = vld [vmem:[%s4531 + $0x82] sm:$0xff]
  %v6016 = vld [vmem:[%s4531 + $0x92] sm:$0xff]
  %v6017 = vld [vmem:[%s4531 + $0x9a] sm:$0xff]
  %v6018 = vld [vmem:[%s4531 + $0xaa] sm:$0xff]
  %v6019 = vld [vmem:[%s4531 + $0xb2] sm:$0xff]
  %v6020 = vld [vmem:[%s4531 + $0xc2] sm:$0xff]
  %v6021 = vld [vmem:[%s4531 + $0xca] sm:$0xff]
  %v6022 = vld [vmem:[%s4531 + $0xda] sm:$0xff]
  %v6023 = vld [vmem:[%s4531 + $0xe2] sm:$0xff]
  %v6024 = vld [vmem:[%s4531 + $0xf2] sm:$0xff]
  %v6025 = vld [vmem:[%s4531 + $0xfa] sm:$0xff]
  %v6026 = vld [vmem:[%s4531 + $0x10a] sm:$0xff]
  %v6027 = vld [vmem:[%s4531 + $0x112] sm:$0xff]
  %v6028 = vld [vmem:[%s4531 + $0x122] sm:$0xff]
  %v6029 = vld [vmem:[%s4531 + $0x12a] sm:$0xff]
  %v6030 = vld [vmem:[%s4531 + $0x13a] sm:$0xff]
  %v6031 = vld [vmem:[%s4531 + $0x142] sm:$0xff]
  %v6032 = vld [vmem:[%s4531 + $0x152] sm:$0xff]
  %v6033 = vld [vmem:[%s4531 + $0x15a] sm:$0xff]
  %v6034 = vld [vmem:[%s4531 + $0x16a] sm:$0xff]
  %v6035 = vld [vmem:[%s4531 + $0x172] sm:$0xff]
  %v6036 = vld [vmem:[%s4531 + $0x1b2] sm:$0xff]
  %v6037 = vld [vmem:[%s4531 + $0x1ba] sm:$0xff]
  %v6038 = vld [vmem:[%s4531 + $0x1ca] sm:$0xff]
  %v6039 = vld [vmem:[%s4531 + $0x1d2] sm:$0xff]
  %v6040 = vld [vmem:[%s4531 + $0x1e2] sm:$0xff]
  %v6041 = vld [vmem:[%s4531 + $0x1ea] sm:$0xff]
  %v6042 = vld [vmem:[%s4531 + $0x1fa] sm:$0xff]
  %v6043 = vld [vmem:[%s4531 + $0x202] sm:$0xff]
  %v6044 = vld [vmem:[%s4531 + $0x212] sm:$0xff]
  %v6045 = vld [vmem:[%s4531 + $0x21a] sm:$0xff]
  %v6046 = vld [vmem:[%s4531 + $0x22a] sm:$0xff]
  %v6047 = vld [vmem:[%s4531 + $0x232] sm:$0xff]
  %v6048 = vld [vmem:[%s4531 + $0x242] sm:$0xff]
  %v6049 = vld [vmem:[%s4531 + $0x24a] sm:$0xff]
  %v6050 = vld [vmem:[%s4531 + $0x25a] sm:$0xff]
  %v6051 = vld [vmem:[%s4531 + $0x262] sm:$0xff]
  %v6052 = vld [vmem:[%s4531 + $0x272] sm:$0xff]
  %v6053 = vld [vmem:[%s4531 + $0x27a] sm:$0xff]
  %v6054 = vld [vmem:[%s4531 + $0x28a] sm:$0xff]
  %v6055 = vld [vmem:[%s4531 + $0x292] sm:$0xff]
  %v6056 = vld [vmem:[%s4531 + $0x2a2] sm:$0xff]
  %v6057 = vld [vmem:[%s4531 + $0x2aa] sm:$0xff]
  %v6058 = vld [vmem:[%s4531 + $0x2ba] sm:$0xff]
  %v6059 = vld [vmem:[%s4531 + $0x2c2] sm:$0xff]
  %v6060 = vld [vmem:[%s4531 + $0x2d2] sm:$0xff]
  %v6061 = vld [vmem:[%s4531 + $0x2da] sm:$0xff]
  %v6062 = vld [vmem:[%s4531 + $0x2ea] sm:$0xff]
  %v6063 = vld [vmem:[%s4531 + $0x2f2] sm:$0xff]
  %v6064 = vld [vmem:[%s4531 + $0x302] sm:$0xff]
  %v6065 = vld [vmem:[%s4531 + $0x30a] sm:$0xff]
  %v6066 = vld [vmem:[%s4531 + $0x31a] sm:$0xff]
  %v6067 = vld [vmem:[%s4531 + $0x322] sm:$0xff]
  %6132 = vrot.lane.b32.xlu0 %v6004, 32
  %v6133 = vpop.permute.xlu0 %6132
  %6134 = vrot.lane.b32.xlu0 %v6005, 32
  %v6135 = vpop.permute.xlu0 %6134
  %6136 = vrot.lane.b32.xlu0 %v6006, 32
  %v6137 = vpop.permute.xlu0 %6136
  %6138 = vrot.lane.b32.xlu0 %v6007, 32
  %v6139 = vpop.permute.xlu0 %6138
  %6140 = vrot.lane.b32.xlu0 %v6008, 32
  %v6141 = vpop.permute.xlu0 %6140
  %6142 = vrot.lane.b32.xlu0 %v6009, 32
  %v6143 = vpop.permute.xlu0 %6142
  %6144 = vrot.lane.b32.xlu0 %v6010, 32
  %v6145 = vpop.permute.xlu0 %6144
  %6146 = vrot.lane.b32.xlu0 %v6011, 32
  %v6147 = vpop.permute.xlu0 %6146
  %6148 = vrot.lane.b32.xlu0 %v6012, 32
  %v6149 = vpop.permute.xlu0 %6148
  %6150 = vrot.lane.b32.xlu0 %v6013, 32
  %v6151 = vpop.permute.xlu0 %6150
  %6152 = vrot.lane.b32.xlu0 %v6014, 32
  %v6153 = vpop.permute.xlu0 %6152
  %6154 = vrot.lane.b32.xlu0 %v6015, 32
  %v6155 = vpop.permute.xlu0 %6154
  %6156 = vrot.lane.b32.xlu0 %v6016, 32
  %v6157 = vpop.permute.xlu0 %6156
  %6158 = vrot.lane.b32.xlu0 %v6017, 32
  %v6159 = vpop.permute.xlu0 %6158
  %6160 = vrot.lane.b32.xlu0 %v6018, 32
  %v6161 = vpop.permute.xlu0 %6160
  %6162 = vrot.lane.b32.xlu0 %v6019, 32
  %v6163 = vpop.permute.xlu0 %6162
  %6164 = vrot.lane.b32.xlu0 %v6020, 32
  %v6165 = vpop.permute.xlu0 %6164
  %6166 = vrot.lane.b32.xlu0 %v6021, 32
  %v6167 = vpop.permute.xlu0 %6166
  %6168 = vrot.lane.b32.xlu0 %v6022, 32
  %v6169 = vpop.permute.xlu0 %6168
  %6170 = vrot.lane.b32.xlu0 %v6023, 32
  %v6171 = vpop.permute.xlu0 %6170
  %6172 = vrot.lane.b32.xlu0 %v6024, 32
  %v6173 = vpop.permute.xlu0 %6172
  %6174 = vrot.lane.b32.xlu0 %v6025, 32
  %v6175 = vpop.permute.xlu0 %6174
  %6176 = vrot.lane.b32.xlu0 %v6026, 32
  %v6177 = vpop.permute.xlu0 %6176
  %6178 = vrot.lane.b32.xlu0 %v6027, 32
  %v6179 = vpop.permute.xlu0 %6178
  %6180 = vrot.lane.b32.xlu0 %v6028, 32
  %v6181 = vpop.permute.xlu0 %6180
  %6182 = vrot.lane.b32.xlu0 %v6029, 32
  %v6183 = vpop.permute.xlu0 %6182
  %6184 = vrot.lane.b32.xlu0 %v6030, 32
  %v6185 = vpop.permute.xlu0 %6184
  %6186 = vrot.lane.b32.xlu0 %v6031, 32
  %v6187 = vpop.permute.xlu0 %6186
  %6188 = vrot.lane.b32.xlu0 %v6032, 32
  %v6189 = vpop.permute.xlu0 %6188
  %6190 = vrot.lane.b32.xlu0 %v6033, 32
  %v6191 = vpop.permute.xlu0 %6190
  %6192 = vrot.lane.b32.xlu0 %v6034, 32
  %v6193 = vpop.permute.xlu0 %6192
  %6194 = vrot.lane.b32.xlu0 %v6035, 32
  %v6195 = vpop.permute.xlu0 %6194
  %6196 = vrot.lane.b32.xlu0 %v6036, 32
  %v6197 = vpop.permute.xlu0 %6196
  %6198 = vrot.lane.b32.xlu0 %v6037, 32
  %v6199 = vpop.permute.xlu0 %6198
  %6200 = vrot.lane.b32.xlu0 %v6038, 32
  %v6201 = vpop.permute.xlu0 %6200
  %6202 = vrot.lane.b32.xlu0 %v6039, 32
  %v6203 = vpop.permute.xlu0 %6202
  %6204 = vrot.lane.b32.xlu0 %v6040, 32
  %v6205 = vpop.permute.xlu0 %6204
  %6206 = vrot.lane.b32.xlu0 %v6041, 32
  %v6207 = vpop.permute.xlu0 %6206
  %6208 = vrot.lane.b32.xlu0 %v6042, 32
  %v6209 = vpop.permute.xlu0 %6208
  %6210 = vrot.lane.b32.xlu0 %v6043, 32
  %v6211 = vpop.permute.xlu0 %6210
  %6212 = vrot.lane.b32.xlu0 %v6044, 32
  %v6213 = vpop.permute.xlu0 %6212
  %6214 = vrot.lane.b32.xlu0 %v6045, 32
  %v6215 = vpop.permute.xlu0 %6214
  %6216 = vrot.lane.b32.xlu0 %v6046, 32
  %v6217 = vpop.permute.xlu0 %6216
  %6218 = vrot.lane.b32.xlu0 %v6047, 32
  %v6219 = vpop.permute.xlu0 %6218
  %6220 = vrot.lane.b32.xlu0 %v6048, 32
  %v6221 = vpop.permute.xlu0 %6220
  %6222 = vrot.lane.b32.xlu0 %v6049, 32
  %v6223 = vpop.permute.xlu0 %6222
  %6224 = vrot.lane.b32.xlu0 %v6050, 32
  %v6225 = vpop.permute.xlu0 %6224
  %6226 = vrot.lane.b32.xlu0 %v6051, 32
  %v6227 = vpop.permute.xlu0 %6226
  %6228 = vrot.lane.b32.xlu0 %v6052, 32
  %v6229 = vpop.permute.xlu0 %6228
  %6230 = vrot.lane.b32.xlu0 %v6053, 32
  %v6231 = vpop.permute.xlu0 %6230
  %6232 = vrot.lane.b32.xlu0 %v6054, 32
  %v6233 = vpop.permute.xlu0 %6232
  %6234 = vrot.lane.b32.xlu0 %v6055, 32
  %v6235 = vpop.permute.xlu0 %6234
  %6236 = vrot.lane.b32.xlu0 %v6056, 32
  %v6237 = vpop.permute.xlu0 %6236
  %6238 = vrot.lane.b32.xlu0 %v6057, 32
  %v6239 = vpop.permute.xlu0 %6238
  %6240 = vrot.lane.b32.xlu0 %v6058, 32
  %v6241 = vpop.permute.xlu0 %6240
  %6242 = vrot.lane.b32.xlu0 %v6059, 32
  %v6243 = vpop.permute.xlu0 %6242
  %6244 = vrot.lane.b32.xlu0 %v6060, 32
  %v6245 = vpop.permute.xlu0 %6244
  %6246 = vrot.lane.b32.xlu0 %v6061, 32
  %v6247 = vpop.permute.xlu0 %6246
  %6248 = vrot.lane.b32.xlu0 %v6062, 32
  %v6249 = vpop.permute.xlu0 %6248
  %6250 = vrot.lane.b32.xlu0 %v6063, 32
  %v6251 = vpop.permute.xlu0 %6250
  %6252 = vrot.lane.b32.xlu0 %v6064, 32
  %v6253 = vpop.permute.xlu0 %6252
  %6254 = vrot.lane.b32.xlu0 %v6065, 32
  %v6255 = vpop.permute.xlu0 %6254
  %6256 = vrot.lane.b32.xlu0 %v6066, 32
  %v6257 = vpop.permute.xlu0 %6256
  %6258 = vrot.lane.b32.xlu0 %v6067, 32
  %v6259 = vpop.permute.xlu0 %6258
  %6324 = vst.msk [vmem:[#allocation2 + $0x8] sm:$0xff] %vm470, %v6133
  %6325 = vst.msk [vmem:[#allocation2 + $0x20] sm:$0xff] %vm470, %v6135
  %6326 = vst.msk [vmem:[#allocation2 + $0x38] sm:$0xff] %vm470, %v6137
  %6327 = vst.msk [vmem:[#allocation2 + $0x50] sm:$0xff] %vm470, %v6139
  %6328 = vst.msk [vmem:[#allocation2 + $0x68] sm:$0xff] %vm470, %v6141
  %6329 = vst.msk [vmem:[#allocation2 + $0x80] sm:$0xff] %vm470, %v6143
  %6330 = vst.msk [vmem:[#allocation2 + $0x98] sm:$0xff] %vm470, %v6145
  %6331 = vst.msk [vmem:[#allocation2 + $0xb0] sm:$0xff] %vm470, %v6147
  %6332 = vst.msk [vmem:[#allocation2 + $0xc8] sm:$0xff] %vm470, %v6149
  %6333 = vst.msk [vmem:[#allocation2 + $0xe0] sm:$0xff] %vm470, %v6151
  %6334 = vst.msk [vmem:[#allocation2 + $0xf8] sm:$0xff] %vm470, %v6153
  %6335 = vst.msk [vmem:[#allocation2 + $0x110] sm:$0xff] %vm470, %v6155
  %6336 = vst.msk [vmem:[#allocation2 + $0x128] sm:$0xff] %vm470, %v6157
  %6337 = vst.msk [vmem:[#allocation2 + $0x140] sm:$0xff] %vm470, %v6159
  %6338 = vst.msk [vmem:[#allocation2 + $0x158] sm:$0xff] %vm470, %v6161
  %6339 = vst.msk [vmem:[#allocation2 + $0x170] sm:$0xff] %vm470, %v6163
  %6340 = vst.msk [vmem:[#allocation2 + $0x188] sm:$0xff] %vm470, %v6165
  %6341 = vst.msk [vmem:[#allocation2 + $0x1a0] sm:$0xff] %vm470, %v6167
  %6342 = vst.msk [vmem:[#allocation2 + $0x1b8] sm:$0xff] %vm470, %v6169
  %6343 = vst.msk [vmem:[#allocation2 + $0x1d0] sm:$0xff] %vm470, %v6171
  %6344 = vst.msk [vmem:[#allocation2 + $0x1e8] sm:$0xff] %vm470, %v6173
  %6345 = vst.msk [vmem:[#allocation2 + $0x200] sm:$0xff] %vm470, %v6175
  %6346 = vst.msk [vmem:[#allocation2 + $0x218] sm:$0xff] %vm470, %v6177
  %6347 = vst.msk [vmem:[#allocation2 + $0x230] sm:$0xff] %vm470, %v6179
  %6348 = vst.msk [vmem:[#allocation2 + $0x248] sm:$0xff] %vm470, %v6181
  %6349 = vst.msk [vmem:[#allocation2 + $0x260] sm:$0xff] %vm470, %v6183
  %6350 = vst.msk [vmem:[#allocation2 + $0x278] sm:$0xff] %vm470, %v6185
  %6351 = vst.msk [vmem:[#allocation2 + $0x290] sm:$0xff] %vm470, %v6187
  %6352 = vst.msk [vmem:[#allocation2 + $0x2a8] sm:$0xff] %vm470, %v6189
  %6353 = vst.msk [vmem:[#allocation2 + $0x2c0] sm:$0xff] %vm470, %v6191
  %6354 = vst.msk [vmem:[#allocation2 + $0x2d8] sm:$0xff] %vm470, %v6193
  %6355 = vst.msk [vmem:[#allocation2 + $0x2f0] sm:$0xff] %vm470, %v6195
  %6356 = vst.msk [vmem:[#allocation2 + $0x308] sm:$0xff] %vm470, %v6197
  %6357 = vst.msk [vmem:[#allocation2 + $0x320] sm:$0xff] %vm470, %v6199
  %6358 = vst.msk [vmem:[#allocation2 + $0x338] sm:$0xff] %vm470, %v6201
  %6359 = vst.msk [vmem:[#allocation2 + $0x350] sm:$0xff] %vm470, %v6203
  %6360 = vst.msk [vmem:[#allocation2 + $0x368] sm:$0xff] %vm470, %v6205
  %6361 = vst.msk [vmem:[#allocation2 + $0x380] sm:$0xff] %vm470, %v6207
  %6362 = vst.msk [vmem:[#allocation2 + $0x398] sm:$0xff] %vm470, %v6209
  %6363 = vst.msk [vmem:[#allocation2 + $0x3b0] sm:$0xff] %vm470, %v6211
  %6364 = vst.msk [vmem:[#allocation2 + $0x3c8] sm:$0xff] %vm470, %v6213
  %6365 = vst.msk [vmem:[#allocation2 + $0x3e0] sm:$0xff] %vm470, %v6215
  %6366 = vst.msk [vmem:[#allocation2 + $0x3f8] sm:$0xff] %vm470, %v6217
  %6367 = vst.msk [vmem:[#allocation2 + $0x410] sm:$0xff] %vm470, %v6219
  %6368 = vst.msk [vmem:[#allocation2 + $0x428] sm:$0xff] %vm470, %v6221
  %6369 = vst.msk [vmem:[#allocation2 + $0x440] sm:$0xff] %vm470, %v6223
  %6370 = vst.msk [vmem:[#allocation2 + $0x458] sm:$0xff] %vm470, %v6225
  %6371 = vst.msk [vmem:[#allocation2 + $0x470] sm:$0xff] %vm470, %v6227
  %6372 = vst.msk [vmem:[#allocation2 + $0x488] sm:$0xff] %vm470, %v6229
  %6373 = vst.msk [vmem:[#allocation2 + $0x4a0] sm:$0xff] %vm470, %v6231
  %6374 = vst.msk [vmem:[#allocation2 + $0x4b8] sm:$0xff] %vm470, %v6233
  %6375 = vst.msk [vmem:[#allocation2 + $0x4d0] sm:$0xff] %vm470, %v6235
  %6376 = vst.msk [vmem:[#allocation2 + $0x4e8] sm:$0xff] %vm470, %v6237
  %6377 = vst.msk [vmem:[#allocation2 + $0x500] sm:$0xff] %vm470, %v6239
  %6378 = vst.msk [vmem:[#allocation2 + $0x518] sm:$0xff] %vm470, %v6241
  %6379 = vst.msk [vmem:[#allocation2 + $0x530] sm:$0xff] %vm470, %v6243
  %6380 = vst.msk [vmem:[#allocation2 + $0x548] sm:$0xff] %vm470, %v6245
  %6381 = vst.msk [vmem:[#allocation2 + $0x560] sm:$0xff] %vm470, %v6247
  %6382 = vst.msk [vmem:[#allocation2 + $0x578] sm:$0xff] %vm470, %v6249
  %6383 = vst.msk [vmem:[#allocation2 + $0x590] sm:$0xff] %vm470, %v6251
  %6384 = vst.msk [vmem:[#allocation2 + $0x5a8] sm:$0xff] %vm470, %v6253
  %6385 = vst.msk [vmem:[#allocation2 + $0x5c0] sm:$0xff] %vm470, %v6255
  %6386 = vst.msk [vmem:[#allocation2 + $0x5d8] sm:$0xff] %vm470, %v6257
  %6387 = vst.msk [vmem:[#allocation2 + $0x5f0] sm:$0xff] %vm470, %v6259
  %s6388 = scalar_lea.vmem [#allocation3], 48
  %v6389 = vld [vmem:[%s6388] sm:$0xff]
  %v6390 = vld [vmem:[%s6388 + $0x8] sm:$0xff]
  %v6391 = vld [vmem:[%s6388 + $0x18] sm:$0xff]
  %v6392 = vld [vmem:[%s6388 + $0x20] sm:$0xff]
  %v6393 = vld [vmem:[%s6388 + $0x30] sm:$0xff]
  %v6394 = vld [vmem:[%s6388 + $0x38] sm:$0xff]
  %v6395 = vld [vmem:[%s6388 + $0x48] sm:$0xff]
  %v6396 = vld [vmem:[%s6388 + $0x50] sm:$0xff]
  %v6397 = vld [vmem:[%s6388 + $0x60] sm:$0xff]
  %v6398 = vld [vmem:[%s6388 + $0x68] sm:$0xff]
  %v6399 = vld [vmem:[%s6388 + $0x78] sm:$0xff]
  %v6400 = vld [vmem:[%s6388 + $0x80] sm:$0xff]
  %v6401 = vld [vmem:[%s6388 + $0x90] sm:$0xff]
  %v6402 = vld [vmem:[%s6388 + $0x98] sm:$0xff]
  %v6403 = vld [vmem:[%s6388 + $0xa8] sm:$0xff]
  %v6404 = vld [vmem:[%s6388 + $0xb0] sm:$0xff]
  %v6405 = vld [vmem:[%s6388 + $0xc0] sm:$0xff]
  %v6406 = vld [vmem:[%s6388 + $0xc8] sm:$0xff]
  %v6407 = vld [vmem:[%s6388 + $0xd8] sm:$0xff]
  %v6408 = vld [vmem:[%s6388 + $0xe0] sm:$0xff]
  %v6409 = vld [vmem:[%s6388 + $0xf0] sm:$0xff]
  %v6410 = vld [vmem:[%s6388 + $0xf8] sm:$0xff]
  %v6411 = vld [vmem:[%s6388 + $0x108] sm:$0xff]
  %v6412 = vld [vmem:[%s6388 + $0x110] sm:$0xff]
  %v6413 = vld [vmem:[%s6388 + $0x120] sm:$0xff]
  %v6414 = vld [vmem:[%s6388 + $0x128] sm:$0xff]
  %v6415 = vld [vmem:[%s6388 + $0x138] sm:$0xff]
  %v6416 = vld [vmem:[%s6388 + $0x140] sm:$0xff]
  %v6417 = vld [vmem:[%s6388 + $0x150] sm:$0xff]
  %v6418 = vld [vmem:[%s6388 + $0x158] sm:$0xff]
  %v6419 = vld [vmem:[%s6388 + $0x168] sm:$0xff]
  %v6420 = vld [vmem:[%s6388 + $0x170] sm:$0xff]
  %v6421 = vld [vmem:[%s6388 + $0x1b0] sm:$0xff]
  %v6422 = vld [vmem:[%s6388 + $0x1b8] sm:$0xff]
  %v6423 = vld [vmem:[%s6388 + $0x1c8] sm:$0xff]
  %v6424 = vld [vmem:[%s6388 + $0x1d0] sm:$0xff]
  %v6425 = vld [vmem:[%s6388 + $0x1e0] sm:$0xff]
  %v6426 = vld [vmem:[%s6388 + $0x1e8] sm:$0xff]
  %v6427 = vld [vmem:[%s6388 + $0x1f8] sm:$0xff]
  %v6428 = vld [vmem:[%s6388 + $0x200] sm:$0xff]
  %v6429 = vld [vmem:[%s6388 + $0x210] sm:$0xff]
  %v6430 = vld [vmem:[%s6388 + $0x218] sm:$0xff]
  %v6431 = vld [vmem:[%s6388 + $0x228] sm:$0xff]
  %v6432 = vld [vmem:[%s6388 + $0x230] sm:$0xff]
  %v6433 = vld [vmem:[%s6388 + $0x240] sm:$0xff]
  %v6434 = vld [vmem:[%s6388 + $0x248] sm:$0xff]
  %v6435 = vld [vmem:[%s6388 + $0x258] sm:$0xff]
  %v6436 = vld [vmem:[%s6388 + $0x260] sm:$0xff]
  %v6437 = vld [vmem:[%s6388 + $0x270] sm:$0xff]
  %v6438 = vld [vmem:[%s6388 + $0x278] sm:$0xff]
  %v6439 = vld [vmem:[%s6388 + $0x288] sm:$0xff]
  %v6440 = vld [vmem:[%s6388 + $0x290] sm:$0xff]
  %v6441 = vld [vmem:[%s6388 + $0x2a0] sm:$0xff]
  %v6442 = vld [vmem:[%s6388 + $0x2a8] sm:$0xff]
  %v6443 = vld [vmem:[%s6388 + $0x2b8] sm:$0xff]
  %v6444 = vld [vmem:[%s6388 + $0x2c0] sm:$0xff]
  %v6445 = vld [vmem:[%s6388 + $0x2d0] sm:$0xff]
  %v6446 = vld [vmem:[%s6388 + $0x2d8] sm:$0xff]
  %v6447 = vld [vmem:[%s6388 + $0x2e8] sm:$0xff]
  %v6448 = vld [vmem:[%s6388 + $0x2f0] sm:$0xff]
  %v6449 = vld [vmem:[%s6388 + $0x300] sm:$0xff]
  %v6450 = vld [vmem:[%s6388 + $0x308] sm:$0xff]
  %v6451 = vld [vmem:[%s6388 + $0x318] sm:$0xff]
  %v6452 = vld [vmem:[%s6388 + $0x320] sm:$0xff]
  %6517 = vrot.lane.b32.xlu0 %v6389, 64
  %v6518 = vpop.permute.xlu0 %6517
  %6519 = vrot.lane.b32.xlu0 %v6390, 64
  %v6520 = vpop.permute.xlu0 %6519
  %6521 = vrot.lane.b32.xlu0 %v6391, 64
  %v6522 = vpop.permute.xlu0 %6521
  %6523 = vrot.lane.b32.xlu0 %v6392, 64
  %v6524 = vpop.permute.xlu0 %6523
  %6525 = vrot.lane.b32.xlu0 %v6393, 64
  %v6526 = vpop.permute.xlu0 %6525
  %6527 = vrot.lane.b32.xlu0 %v6394, 64
  %v6528 = vpop.permute.xlu0 %6527
  %6529 = vrot.lane.b32.xlu0 %v6395, 64
  %v6530 = vpop.permute.xlu0 %6529
  %6531 = vrot.lane.b32.xlu0 %v6396, 64
  %v6532 = vpop.permute.xlu0 %6531
  %6533 = vrot.lane.b32.xlu0 %v6397, 64
  %v6534 = vpop.permute.xlu0 %6533
  %6535 = vrot.lane.b32.xlu0 %v6398, 64
  %v6536 = vpop.permute.xlu0 %6535
  %6537 = vrot.lane.b32.xlu0 %v6399, 64
  %v6538 = vpop.permute.xlu0 %6537
  %6539 = vrot.lane.b32.xlu0 %v6400, 64
  %v6540 = vpop.permute.xlu0 %6539
  %6541 = vrot.lane.b32.xlu0 %v6401, 64
  %v6542 = vpop.permute.xlu0 %6541
  %6543 = vrot.lane.b32.xlu0 %v6402, 64
  %v6544 = vpop.permute.xlu0 %6543
  %6545 = vrot.lane.b32.xlu0 %v6403, 64
  %v6546 = vpop.permute.xlu0 %6545
  %6547 = vrot.lane.b32.xlu0 %v6404, 64
  %v6548 = vpop.permute.xlu0 %6547
  %6549 = vrot.lane.b32.xlu0 %v6405, 64
  %v6550 = vpop.permute.xlu0 %6549
  %6551 = vrot.lane.b32.xlu0 %v6406, 64
  %v6552 = vpop.permute.xlu0 %6551
  %6553 = vrot.lane.b32.xlu0 %v6407, 64
  %v6554 = vpop.permute.xlu0 %6553
  %6555 = vrot.lane.b32.xlu0 %v6408, 64
  %v6556 = vpop.permute.xlu0 %6555
  %6557 = vrot.lane.b32.xlu0 %v6409, 64
  %v6558 = vpop.permute.xlu0 %6557
  %6559 = vrot.lane.b32.xlu0 %v6410, 64
  %v6560 = vpop.permute.xlu0 %6559
  %6561 = vrot.lane.b32.xlu0 %v6411, 64
  %v6562 = vpop.permute.xlu0 %6561
  %6563 = vrot.lane.b32.xlu0 %v6412, 64
  %v6564 = vpop.permute.xlu0 %6563
  %6565 = vrot.lane.b32.xlu0 %v6413, 64
  %v6566 = vpop.permute.xlu0 %6565
  %6567 = vrot.lane.b32.xlu0 %v6414, 64
  %v6568 = vpop.permute.xlu0 %6567
  %6569 = vrot.lane.b32.xlu0 %v6415, 64
  %v6570 = vpop.permute.xlu0 %6569
  %6571 = vrot.lane.b32.xlu0 %v6416, 64
  %v6572 = vpop.permute.xlu0 %6571
  %6573 = vrot.lane.b32.xlu0 %v6417, 64
  %v6574 = vpop.permute.xlu0 %6573
  %6575 = vrot.lane.b32.xlu0 %v6418, 64
  %v6576 = vpop.permute.xlu0 %6575
  %6577 = vrot.lane.b32.xlu0 %v6419, 64
  %v6578 = vpop.permute.xlu0 %6577
  %6579 = vrot.lane.b32.xlu0 %v6420, 64
  %v6580 = vpop.permute.xlu0 %6579
  %6581 = vrot.lane.b32.xlu0 %v6421, 64
  %v6582 = vpop.permute.xlu0 %6581
  %6583 = vrot.lane.b32.xlu0 %v6422, 64
  %v6584 = vpop.permute.xlu0 %6583
  %6585 = vrot.lane.b32.xlu0 %v6423, 64
  %v6586 = vpop.permute.xlu0 %6585
  %6587 = vrot.lane.b32.xlu0 %v6424, 64
  %v6588 = vpop.permute.xlu0 %6587
  %6589 = vrot.lane.b32.xlu0 %v6425, 64
  %v6590 = vpop.permute.xlu0 %6589
  %6591 = vrot.lane.b32.xlu0 %v6426, 64
  %v6592 = vpop.permute.xlu0 %6591
  %6593 = vrot.lane.b32.xlu0 %v6427, 64
  %v6594 = vpop.permute.xlu0 %6593
  %6595 = vrot.lane.b32.xlu0 %v6428, 64
  %v6596 = vpop.permute.xlu0 %6595
  %6597 = vrot.lane.b32.xlu0 %v6429, 64
  %v6598 = vpop.permute.xlu0 %6597
  %6599 = vrot.lane.b32.xlu0 %v6430, 64
  %v6600 = vpop.permute.xlu0 %6599
  %6601 = vrot.lane.b32.xlu0 %v6431, 64
  %v6602 = vpop.permute.xlu0 %6601
  %6603 = vrot.lane.b32.xlu0 %v6432, 64
  %v6604 = vpop.permute.xlu0 %6603
  %6605 = vrot.lane.b32.xlu0 %v6433, 64
  %v6606 = vpop.permute.xlu0 %6605
  %6607 = vrot.lane.b32.xlu0 %v6434, 64
  %v6608 = vpop.permute.xlu0 %6607
  %6609 = vrot.lane.b32.xlu0 %v6435, 64
  %v6610 = vpop.permute.xlu0 %6609
  %6611 = vrot.lane.b32.xlu0 %v6436, 64
  %v6612 = vpop.permute.xlu0 %6611
  %6613 = vrot.lane.b32.xlu0 %v6437, 64
  %v6614 = vpop.permute.xlu0 %6613
  %6615 = vrot.lane.b32.xlu0 %v6438, 64
  %v6616 = vpop.permute.xlu0 %6615
  %6617 = vrot.lane.b32.xlu0 %v6439, 64
  %v6618 = vpop.permute.xlu0 %6617
  %6619 = vrot.lane.b32.xlu0 %v6440, 64
  %v6620 = vpop.permute.xlu0 %6619
  %6621 = vrot.lane.b32.xlu0 %v6441, 64
  %v6622 = vpop.permute.xlu0 %6621
  %6623 = vrot.lane.b32.xlu0 %v6442, 64
  %v6624 = vpop.permute.xlu0 %6623
  %6625 = vrot.lane.b32.xlu0 %v6443, 64
  %v6626 = vpop.permute.xlu0 %6625
  %6627 = vrot.lane.b32.xlu0 %v6444, 64
  %v6628 = vpop.permute.xlu0 %6627
  %6629 = vrot.lane.b32.xlu0 %v6445, 64
  %v6630 = vpop.permute.xlu0 %6629
  %6631 = vrot.lane.b32.xlu0 %v6446, 64
  %v6632 = vpop.permute.xlu0 %6631
  %6633 = vrot.lane.b32.xlu0 %v6447, 64
  %v6634 = vpop.permute.xlu0 %6633
  %6635 = vrot.lane.b32.xlu0 %v6448, 64
  %v6636 = vpop.permute.xlu0 %6635
  %6637 = vrot.lane.b32.xlu0 %v6449, 64
  %v6638 = vpop.permute.xlu0 %6637
  %6639 = vrot.lane.b32.xlu0 %v6450, 64
  %v6640 = vpop.permute.xlu0 %6639
  %6641 = vrot.lane.b32.xlu0 %v6451, 64
  %v6642 = vpop.permute.xlu0 %6641
  %6643 = vrot.lane.b32.xlu0 %v6452, 64
  %v6644 = vpop.permute.xlu0 %6643
  %6709 = vst.msk [vmem:[#allocation2 + $0x8] sm:$0xff] %vm855, %v6518
  %6710 = vst.msk [vmem:[#allocation2 + $0x20] sm:$0xff] %vm855, %v6520
  %6711 = vst.msk [vmem:[#allocation2 + $0x38] sm:$0xff] %vm855, %v6522
  %6712 = vst.msk [vmem:[#allocation2 + $0x50] sm:$0xff] %vm855, %v6524
  %6713 = vst.msk [vmem:[#allocation2 + $0x68] sm:$0xff] %vm855, %v6526
  %6714 = vst.msk [vmem:[#allocation2 + $0x80] sm:$0xff] %vm855, %v6528
  %6715 = vst.msk [vmem:[#allocation2 + $0x98] sm:$0xff] %vm855, %v6530
  %6716 = vst.msk [vmem:[#allocation2 + $0xb0] sm:$0xff] %vm855, %v6532
  %6717 = vst.msk [vmem:[#allocation2 + $0xc8] sm:$0xff] %vm855, %v6534
  %6718 = vst.msk [vmem:[#allocation2 + $0xe0] sm:$0xff] %vm855, %v6536
  %6719 = vst.msk [vmem:[#allocation2 + $0xf8] sm:$0xff] %vm855, %v6538
  %6720 = vst.msk [vmem:[#allocation2 + $0x110] sm:$0xff] %vm855, %v6540
  %6721 = vst.msk [vmem:[#allocation2 + $0x128] sm:$0xff] %vm855, %v6542
  %6722 = vst.msk [vmem:[#allocation2 + $0x140] sm:$0xff] %vm855, %v6544
  %6723 = vst.msk [vmem:[#allocation2 + $0x158] sm:$0xff] %vm855, %v6546
  %6724 = vst.msk [vmem:[#allocation2 + $0x170] sm:$0xff] %vm855, %v6548
  %6725 = vst.msk [vmem:[#allocation2 + $0x188] sm:$0xff] %vm855, %v6550
  %6726 = vst.msk [vmem:[#allocation2 + $0x1a0] sm:$0xff] %vm855, %v6552
  %6727 = vst.msk [vmem:[#allocation2 + $0x1b8] sm:$0xff] %vm855, %v6554
  %6728 = vst.msk [vmem:[#allocation2 + $0x1d0] sm:$0xff] %vm855, %v6556
  %6729 = vst.msk [vmem:[#allocation2 + $0x1e8] sm:$0xff] %vm855, %v6558
  %6730 = vst.msk [vmem:[#allocation2 + $0x200] sm:$0xff] %vm855, %v6560
  %6731 = vst.msk [vmem:[#allocation2 + $0x218] sm:$0xff] %vm855, %v6562
  %6732 = vst.msk [vmem:[#allocation2 + $0x230] sm:$0xff] %vm855, %v6564
  %6733 = vst.msk [vmem:[#allocation2 + $0x248] sm:$0xff] %vm855, %v6566
  %6734 = vst.msk [vmem:[#allocation2 + $0x260] sm:$0xff] %vm855, %v6568
  %6735 = vst.msk [vmem:[#allocation2 + $0x278] sm:$0xff] %vm855, %v6570
  %6736 = vst.msk [vmem:[#allocation2 + $0x290] sm:$0xff] %vm855, %v6572
  %6737 = vst.msk [vmem:[#allocation2 + $0x2a8] sm:$0xff] %vm855, %v6574
  %6738 = vst.msk [vmem:[#allocation2 + $0x2c0] sm:$0xff] %vm855, %v6576
  %6739 = vst.msk [vmem:[#allocation2 + $0x2d8] sm:$0xff] %vm855, %v6578
  %6740 = vst.msk [vmem:[#allocation2 + $0x2f0] sm:$0xff] %vm855, %v6580
  %6741 = vst.msk [vmem:[#allocation2 + $0x308] sm:$0xff] %vm855, %v6582
  %6742 = vst.msk [vmem:[#allocation2 + $0x320] sm:$0xff] %vm855, %v6584
  %6743 = vst.msk [vmem:[#allocation2 + $0x338] sm:$0xff] %vm855, %v6586
  %6744 = vst.msk [vmem:[#allocation2 + $0x350] sm:$0xff] %vm855, %v6588
  %6745 = vst.msk [vmem:[#allocation2 + $0x368] sm:$0xff] %vm855, %v6590
  %6746 = vst.msk [vmem:[#allocation2 + $0x380] sm:$0xff] %vm855, %v6592
  %6747 = vst.msk [vmem:[#allocation2 + $0x398] sm:$0xff] %vm855, %v6594
  %6748 = vst.msk [vmem:[#allocation2 + $0x3b0] sm:$0xff] %vm855, %v6596
  %6749 = vst.msk [vmem:[#allocation2 + $0x3c8] sm:$0xff] %vm855, %v6598
  %6750 = vst.msk [vmem:[#allocation2 + $0x3e0] sm:$0xff] %vm855, %v6600
  %6751 = vst.msk [vmem:[#allocation2 + $0x3f8] sm:$0xff] %vm855, %v6602
  %6752 = vst.msk [vmem:[#allocation2 + $0x410] sm:$0xff] %vm855, %v6604
  %6753 = vst.msk [vmem:[#allocation2 + $0x428] sm:$0xff] %vm855, %v6606
  %6754 = vst.msk [vmem:[#allocation2 + $0x440] sm:$0xff] %vm855, %v6608
  %6755 = vst.msk [vmem:[#allocation2 + $0x458] sm:$0xff] %vm855, %v6610
  %6756 = vst.msk [vmem:[#allocation2 + $0x470] sm:$0xff] %vm855, %v6612
  %6757 = vst.msk [vmem:[#allocation2 + $0x488] sm:$0xff] %vm855, %v6614
  %6758 = vst.msk [vmem:[#allocation2 + $0x4a0] sm:$0xff] %vm855, %v6616
  %6759 = vst.msk [vmem:[#allocation2 + $0x4b8] sm:$0xff] %vm855, %v6618
  %6760 = vst.msk [vmem:[#allocation2 + $0x4d0] sm:$0xff] %vm855, %v6620
  %6761 = vst.msk [vmem:[#allocation2 + $0x4e8] sm:$0xff] %vm855, %v6622
  %6762 = vst.msk [vmem:[#allocation2 + $0x500] sm:$0xff] %vm855, %v6624
  %6763 = vst.msk [vmem:[#allocation2 + $0x518] sm:$0xff] %vm855, %v6626
  %6764 = vst.msk [vmem:[#allocation2 + $0x530] sm:$0xff] %vm855, %v6628
  %6765 = vst.msk [vmem:[#allocation2 + $0x548] sm:$0xff] %vm855, %v6630
  %6766 = vst.msk [vmem:[#allocation2 + $0x560] sm:$0xff] %vm855, %v6632
  %6767 = vst.msk [vmem:[#allocation2 + $0x578] sm:$0xff] %vm855, %v6634
  %6768 = vst.msk [vmem:[#allocation2 + $0x590] sm:$0xff] %vm855, %v6636
  %6769 = vst.msk [vmem:[#allocation2 + $0x5a8] sm:$0xff] %vm855, %v6638
  %6770 = vst.msk [vmem:[#allocation2 + $0x5c0] sm:$0xff] %vm855, %v6640
  %6771 = vst.msk [vmem:[#allocation2 + $0x5d8] sm:$0xff] %vm855, %v6642
  %6772 = vst.msk [vmem:[#allocation2 + $0x5f0] sm:$0xff] %vm855, %v6644
  %v6773 = vld [vmem:[%s6388 + $0x1] sm:$0xff]
  %v6774 = vld [vmem:[%s6388 + $0x9] sm:$0xff]
  %v6775 = vld [vmem:[%s6388 + $0x19] sm:$0xff]
  %v6776 = vld [vmem:[%s6388 + $0x21] sm:$0xff]
  %v6777 = vld [vmem:[%s6388 + $0x31] sm:$0xff]
  %v6778 = vld [vmem:[%s6388 + $0x39] sm:$0xff]
  %v6779 = vld [vmem:[%s6388 + $0x49] sm:$0xff]
  %v6780 = vld [vmem:[%s6388 + $0x51] sm:$0xff]
  %v6781 = vld [vmem:[%s6388 + $0x61] sm:$0xff]
  %v6782 = vld [vmem:[%s6388 + $0x69] sm:$0xff]
  %v6783 = vld [vmem:[%s6388 + $0x79] sm:$0xff]
  %v6784 = vld [vmem:[%s6388 + $0x81] sm:$0xff]
  %v6785 = vld [vmem:[%s6388 + $0x91] sm:$0xff]
  %v6786 = vld [vmem:[%s6388 + $0x99] sm:$0xff]
  %v6787 = vld [vmem:[%s6388 + $0xa9] sm:$0xff]
  %v6788 = vld [vmem:[%s6388 + $0xb1] sm:$0xff]
  %v6789 = vld [vmem:[%s6388 + $0xc1] sm:$0xff]
  %v6790 = vld [vmem:[%s6388 + $0xc9] sm:$0xff]
  %v6791 = vld [vmem:[%s6388 + $0xd9] sm:$0xff]
  %v6792 = vld [vmem:[%s6388 + $0xe1] sm:$0xff]
  %v6793 = vld [vmem:[%s6388 + $0xf1] sm:$0xff]
  %v6794 = vld [vmem:[%s6388 + $0xf9] sm:$0xff]
  %v6795 = vld [vmem:[%s6388 + $0x109] sm:$0xff]
  %v6796 = vld [vmem:[%s6388 + $0x111] sm:$0xff]
  %v6797 = vld [vmem:[%s6388 + $0x121] sm:$0xff]
  %v6798 = vld [vmem:[%s6388 + $0x129] sm:$0xff]
  %v6799 = vld [vmem:[%s6388 + $0x139] sm:$0xff]
  %v6800 = vld [vmem:[%s6388 + $0x141] sm:$0xff]
  %v6801 = vld [vmem:[%s6388 + $0x151] sm:$0xff]
  %v6802 = vld [vmem:[%s6388 + $0x159] sm:$0xff]
  %v6803 = vld [vmem:[%s6388 + $0x169] sm:$0xff]
  %v6804 = vld [vmem:[%s6388 + $0x171] sm:$0xff]
  %v6805 = vld [vmem:[%s6388 + $0x1b1] sm:$0xff]
  %v6806 = vld [vmem:[%s6388 + $0x1b9] sm:$0xff]
  %v6807 = vld [vmem:[%s6388 + $0x1c9] sm:$0xff]
  %v6808 = vld [vmem:[%s6388 + $0x1d1] sm:$0xff]
  %v6809 = vld [vmem:[%s6388 + $0x1e1] sm:$0xff]
  %v6810 = vld [vmem:[%s6388 + $0x1e9] sm:$0xff]
  %v6811 = vld [vmem:[%s6388 + $0x1f9] sm:$0xff]
  %v6812 = vld [vmem:[%s6388 + $0x201] sm:$0xff]
  %v6813 = vld [vmem:[%s6388 + $0x211] sm:$0xff]
  %v6814 = vld [vmem:[%s6388 + $0x219] sm:$0xff]
  %v6815 = vld [vmem:[%s6388 + $0x229] sm:$0xff]
  %v6816 = vld [vmem:[%s6388 + $0x231] sm:$0xff]
  %v6817 = vld [vmem:[%s6388 + $0x241] sm:$0xff]
  %v6818 = vld [vmem:[%s6388 + $0x249] sm:$0xff]
  %v6819 = vld [vmem:[%s6388 + $0x259] sm:$0xff]
  %v6820 = vld [vmem:[%s6388 + $0x261] sm:$0xff]
  %v6821 = vld [vmem:[%s6388 + $0x271] sm:$0xff]
  %v6822 = vld [vmem:[%s6388 + $0x279] sm:$0xff]
  %v6823 = vld [vmem:[%s6388 + $0x289] sm:$0xff]
  %v6824 = vld [vmem:[%s6388 + $0x291] sm:$0xff]
  %v6825 = vld [vmem:[%s6388 + $0x2a1] sm:$0xff]
  %v6826 = vld [vmem:[%s6388 + $0x2a9] sm:$0xff]
  %v6827 = vld [vmem:[%s6388 + $0x2b9] sm:$0xff]
  %v6828 = vld [vmem:[%s6388 + $0x2c1] sm:$0xff]
  %v6829 = vld [vmem:[%s6388 + $0x2d1] sm:$0xff]
  %v6830 = vld [vmem:[%s6388 + $0x2d9] sm:$0xff]
  %v6831 = vld [vmem:[%s6388 + $0x2e9] sm:$0xff]
  %v6832 = vld [vmem:[%s6388 + $0x2f1] sm:$0xff]
  %v6833 = vld [vmem:[%s6388 + $0x301] sm:$0xff]
  %v6834 = vld [vmem:[%s6388 + $0x309] sm:$0xff]
  %v6835 = vld [vmem:[%s6388 + $0x319] sm:$0xff]
  %v6836 = vld [vmem:[%s6388 + $0x321] sm:$0xff]
  %6901 = vrot.lane.b32.xlu0 %v6773, 96
  %v6902 = vpop.permute.xlu0 %6901
  %6903 = vrot.lane.b32.xlu0 %v6774, 96
  %v6904 = vpop.permute.xlu0 %6903
  %6905 = vrot.lane.b32.xlu0 %v6775, 96
  %v6906 = vpop.permute.xlu0 %6905
  %6907 = vrot.lane.b32.xlu0 %v6776, 96
  %v6908 = vpop.permute.xlu0 %6907
  %6909 = vrot.lane.b32.xlu0 %v6777, 96
  %v6910 = vpop.permute.xlu0 %6909
  %6911 = vrot.lane.b32.xlu0 %v6778, 96
  %v6912 = vpop.permute.xlu0 %6911
  %6913 = vrot.lane.b32.xlu0 %v6779, 96
  %v6914 = vpop.permute.xlu0 %6913
  %6915 = vrot.lane.b32.xlu0 %v6780, 96
  %v6916 = vpop.permute.xlu0 %6915
  %6917 = vrot.lane.b32.xlu0 %v6781, 96
  %v6918 = vpop.permute.xlu0 %6917
  %6919 = vrot.lane.b32.xlu0 %v6782, 96
  %v6920 = vpop.permute.xlu0 %6919
  %6921 = vrot.lane.b32.xlu0 %v6783, 96
  %v6922 = vpop.permute.xlu0 %6921
  %6923 = vrot.lane.b32.xlu0 %v6784, 96
  %v6924 = vpop.permute.xlu0 %6923
  %6925 = vrot.lane.b32.xlu0 %v6785, 96
  %v6926 = vpop.permute.xlu0 %6925
  %6927 = vrot.lane.b32.xlu0 %v6786, 96
  %v6928 = vpop.permute.xlu0 %6927
  %6929 = vrot.lane.b32.xlu0 %v6787, 96
  %v6930 = vpop.permute.xlu0 %6929
  %6931 = vrot.lane.b32.xlu0 %v6788, 96
  %v6932 = vpop.permute.xlu0 %6931
  %6933 = vrot.lane.b32.xlu0 %v6789, 96
  %v6934 = vpop.permute.xlu0 %6933
  %6935 = vrot.lane.b32.xlu0 %v6790, 96
  %v6936 = vpop.permute.xlu0 %6935
  %6937 = vrot.lane.b32.xlu0 %v6791, 96
  %v6938 = vpop.permute.xlu0 %6937
  %6939 = vrot.lane.b32.xlu0 %v6792, 96
  %v6940 = vpop.permute.xlu0 %6939
  %6941 = vrot.lane.b32.xlu0 %v6793, 96
  %v6942 = vpop.permute.xlu0 %6941
  %6943 = vrot.lane.b32.xlu0 %v6794, 96
  %v6944 = vpop.permute.xlu0 %6943
  %6945 = vrot.lane.b32.xlu0 %v6795, 96
  %v6946 = vpop.permute.xlu0 %6945
  %6947 = vrot.lane.b32.xlu0 %v6796, 96
  %v6948 = vpop.permute.xlu0 %6947
  %6949 = vrot.lane.b32.xlu0 %v6797, 96
  %v6950 = vpop.permute.xlu0 %6949
  %6951 = vrot.lane.b32.xlu0 %v6798, 96
  %v6952 = vpop.permute.xlu0 %6951
  %6953 = vrot.lane.b32.xlu0 %v6799, 96
  %v6954 = vpop.permute.xlu0 %6953
  %6955 = vrot.lane.b32.xlu0 %v6800, 96
  %v6956 = vpop.permute.xlu0 %6955
  %6957 = vrot.lane.b32.xlu0 %v6801, 96
  %v6958 = vpop.permute.xlu0 %6957
  %6959 = vrot.lane.b32.xlu0 %v6802, 96
  %v6960 = vpop.permute.xlu0 %6959
  %6961 = vrot.lane.b32.xlu0 %v6803, 96
  %v6962 = vpop.permute.xlu0 %6961
  %6963 = vrot.lane.b32.xlu0 %v6804, 96
  %v6964 = vpop.permute.xlu0 %6963
  %6965 = vrot.lane.b32.xlu0 %v6805, 96
  %v6966 = vpop.permute.xlu0 %6965
  %6967 = vrot.lane.b32.xlu0 %v6806, 96
  %v6968 = vpop.permute.xlu0 %6967
  %6969 = vrot.lane.b32.xlu0 %v6807, 96
  %v6970 = vpop.permute.xlu0 %6969
  %6971 = vrot.lane.b32.xlu0 %v6808, 96
  %v6972 = vpop.permute.xlu0 %6971
  %6973 = vrot.lane.b32.xlu0 %v6809, 96
  %v6974 = vpop.permute.xlu0 %6973
  %6975 = vrot.lane.b32.xlu0 %v6810, 96
  %v6976 = vpop.permute.xlu0 %6975
  %6977 = vrot.lane.b32.xlu0 %v6811, 96
  %v6978 = vpop.permute.xlu0 %6977
  %6979 = vrot.lane.b32.xlu0 %v6812, 96
  %v6980 = vpop.permute.xlu0 %6979
  %6981 = vrot.lane.b32.xlu0 %v6813, 96
  %v6982 = vpop.permute.xlu0 %6981
  %6983 = vrot.lane.b32.xlu0 %v6814, 96
  %v6984 = vpop.permute.xlu0 %6983
  %6985 = vrot.lane.b32.xlu0 %v6815, 96
  %v6986 = vpop.permute.xlu0 %6985
  %6987 = vrot.lane.b32.xlu0 %v6816, 96
  %v6988 = vpop.permute.xlu0 %6987
  %6989 = vrot.lane.b32.xlu0 %v6817, 96
  %v6990 = vpop.permute.xlu0 %6989
  %6991 = vrot.lane.b32.xlu0 %v6818, 96
  %v6992 = vpop.permute.xlu0 %6991
  %6993 = vrot.lane.b32.xlu0 %v6819, 96
  %v6994 = vpop.permute.xlu0 %6993
  %6995 = vrot.lane.b32.xlu0 %v6820, 96
  %v6996 = vpop.permute.xlu0 %6995
  %6997 = vrot.lane.b32.xlu0 %v6821, 96
  %v6998 = vpop.permute.xlu0 %6997
  %6999 = vrot.lane.b32.xlu0 %v6822, 96
  %v7000 = vpop.permute.xlu0 %6999
  %7001 = vrot.lane.b32.xlu0 %v6823, 96
  %v7002 = vpop.permute.xlu0 %7001
  %7003 = vrot.lane.b32.xlu0 %v6824, 96
  %v7004 = vpop.permute.xlu0 %7003
  %7005 = vrot.lane.b32.xlu0 %v6825, 96
  %v7006 = vpop.permute.xlu0 %7005
  %7007 = vrot.lane.b32.xlu0 %v6826, 96
  %v7008 = vpop.permute.xlu0 %7007
  %7009 = vrot.lane.b32.xlu0 %v6827, 96
  %v7010 = vpop.permute.xlu0 %7009
  %7011 = vrot.lane.b32.xlu0 %v6828, 96
  %v7012 = vpop.permute.xlu0 %7011
  %7013 = vrot.lane.b32.xlu0 %v6829, 96
  %v7014 = vpop.permute.xlu0 %7013
  %7015 = vrot.lane.b32.xlu0 %v6830, 96
  %v7016 = vpop.permute.xlu0 %7015
  %7017 = vrot.lane.b32.xlu0 %v6831, 96
  %v7018 = vpop.permute.xlu0 %7017
  %7019 = vrot.lane.b32.xlu0 %v6832, 96
  %v7020 = vpop.permute.xlu0 %7019
  %7021 = vrot.lane.b32.xlu0 %v6833, 96
  %v7022 = vpop.permute.xlu0 %7021
  %7023 = vrot.lane.b32.xlu0 %v6834, 96
  %v7024 = vpop.permute.xlu0 %7023
  %7025 = vrot.lane.b32.xlu0 %v6835, 96
  %v7026 = vpop.permute.xlu0 %7025
  %7027 = vrot.lane.b32.xlu0 %v6836, 96
  %v7028 = vpop.permute.xlu0 %7027
  %7093 = vst.msk [vmem:[#allocation2 + $0x8] sm:$0xff] %vm1241, %v6902
  %7094 = vst.msk [vmem:[#allocation2 + $0x20] sm:$0xff] %vm1241, %v6904
  %7095 = vst.msk [vmem:[#allocation2 + $0x38] sm:$0xff] %vm1241, %v6906
  %7096 = vst.msk [vmem:[#allocation2 + $0x50] sm:$0xff] %vm1241, %v6908
  %7097 = vst.msk [vmem:[#allocation2 + $0x68] sm:$0xff] %vm1241, %v6910
  %7098 = vst.msk [vmem:[#allocation2 + $0x80] sm:$0xff] %vm1241, %v6912
  %7099 = vst.msk [vmem:[#allocation2 + $0x98] sm:$0xff] %vm1241, %v6914
  %7100 = vst.msk [vmem:[#allocation2 + $0xb0] sm:$0xff] %vm1241, %v6916
  %7101 = vst.msk [vmem:[#allocation2 + $0xc8] sm:$0xff] %vm1241, %v6918
  %7102 = vst.msk [vmem:[#allocation2 + $0xe0] sm:$0xff] %vm1241, %v6920
  %7103 = vst.msk [vmem:[#allocation2 + $0xf8] sm:$0xff] %vm1241, %v6922
  %7104 = vst.msk [vmem:[#allocation2 + $0x110] sm:$0xff] %vm1241, %v6924
  %7105 = vst.msk [vmem:[#allocation2 + $0x128] sm:$0xff] %vm1241, %v6926
  %7106 = vst.msk [vmem:[#allocation2 + $0x140] sm:$0xff] %vm1241, %v6928
  %7107 = vst.msk [vmem:[#allocation2 + $0x158] sm:$0xff] %vm1241, %v6930
  %7108 = vst.msk [vmem:[#allocation2 + $0x170] sm:$0xff] %vm1241, %v6932
  %7109 = vst.msk [vmem:[#allocation2 + $0x188] sm:$0xff] %vm1241, %v6934
  %7110 = vst.msk [vmem:[#allocation2 + $0x1a0] sm:$0xff] %vm1241, %v6936
  %7111 = vst.msk [vmem:[#allocation2 + $0x1b8] sm:$0xff] %vm1241, %v6938
  %7112 = vst.msk [vmem:[#allocation2 + $0x1d0] sm:$0xff] %vm1241, %v6940
  %7113 = vst.msk [vmem:[#allocation2 + $0x1e8] sm:$0xff] %vm1241, %v6942
  %7114 = vst.msk [vmem:[#allocation2 + $0x200] sm:$0xff] %vm1241, %v6944
  %7115 = vst.msk [vmem:[#allocation2 + $0x218] sm:$0xff] %vm1241, %v6946
  %7116 = vst.msk [vmem:[#allocation2 + $0x230] sm:$0xff] %vm1241, %v6948
  %7117 = vst.msk [vmem:[#allocation2 + $0x248] sm:$0xff] %vm1241, %v6950
  %7118 = vst.msk [vmem:[#allocation2 + $0x260] sm:$0xff] %vm1241, %v6952
  %7119 = vst.msk [vmem:[#allocation2 + $0x278] sm:$0xff] %vm1241, %v6954
  %7120 = vst.msk [vmem:[#allocation2 + $0x290] sm:$0xff] %vm1241, %v6956
  %7121 = vst.msk [vmem:[#allocation2 + $0x2a8] sm:$0xff] %vm1241, %v6958
  %7122 = vst.msk [vmem:[#allocation2 + $0x2c0] sm:$0xff] %vm1241, %v6960
  %7123 = vst.msk [vmem:[#allocation2 + $0x2d8] sm:$0xff] %vm1241, %v6962
  %7124 = vst.msk [vmem:[#allocation2 + $0x2f0] sm:$0xff] %vm1241, %v6964
  %7125 = vst.msk [vmem:[#allocation2 + $0x308] sm:$0xff] %vm1241, %v6966
  %7126 = vst.msk [vmem:[#allocation2 + $0x320] sm:$0xff] %vm1241, %v6968
  %7127 = vst.msk [vmem:[#allocation2 + $0x338] sm:$0xff] %vm1241, %v6970
  %7128 = vst.msk [vmem:[#allocation2 + $0x350] sm:$0xff] %vm1241, %v6972
  %7129 = vst.msk [vmem:[#allocation2 + $0x368] sm:$0xff] %vm1241, %v6974
  %7130 = vst.msk [vmem:[#allocation2 + $0x380] sm:$0xff] %vm1241, %v6976
  %7131 = vst.msk [vmem:[#allocation2 + $0x398] sm:$0xff] %vm1241, %v6978
  %7132 = vst.msk [vmem:[#allocation2 + $0x3b0] sm:$0xff] %vm1241, %v6980
  %7133 = vst.msk [vmem:[#allocation2 + $0x3c8] sm:$0xff] %vm1241, %v6982
  %7134 = vst.msk [vmem:[#allocation2 + $0x3e0] sm:$0xff] %vm1241, %v6984
  %7135 = vst.msk [vmem:[#allocation2 + $0x3f8] sm:$0xff] %vm1241, %v6986
  %7136 = vst.msk [vmem:[#allocation2 + $0x410] sm:$0xff] %vm1241, %v6988
  %7137 = vst.msk [vmem:[#allocation2 + $0x428] sm:$0xff] %vm1241, %v6990
  %7138 = vst.msk [vmem:[#allocation2 + $0x440] sm:$0xff] %vm1241, %v6992
  %7139 = vst.msk [vmem:[#allocation2 + $0x458] sm:$0xff] %vm1241, %v6994
  %7140 = vst.msk [vmem:[#allocation2 + $0x470] sm:$0xff] %vm1241, %v6996
  %7141 = vst.msk [vmem:[#allocation2 + $0x488] sm:$0xff] %vm1241, %v6998
  %7142 = vst.msk [vmem:[#allocation2 + $0x4a0] sm:$0xff] %vm1241, %v7000
  %7143 = vst.msk [vmem:[#allocation2 + $0x4b8] sm:$0xff] %vm1241, %v7002
  %7144 = vst.msk [vmem:[#allocation2 + $0x4d0] sm:$0xff] %vm1241, %v7004
  %7145 = vst.msk [vmem:[#allocation2 + $0x4e8] sm:$0xff] %vm1241, %v7006
  %7146 = vst.msk [vmem:[#allocation2 + $0x500] sm:$0xff] %vm1241, %v7008
  %7147 = vst.msk [vmem:[#allocation2 + $0x518] sm:$0xff] %vm1241, %v7010
  %7148 = vst.msk [vmem:[#allocation2 + $0x530] sm:$0xff] %vm1241, %v7012
  %7149 = vst.msk [vmem:[#allocation2 + $0x548] sm:$0xff] %vm1241, %v7014
  %7150 = vst.msk [vmem:[#allocation2 + $0x560] sm:$0xff] %vm1241, %v7016
  %7151 = vst.msk [vmem:[#allocation2 + $0x578] sm:$0xff] %vm1241, %v7018
  %7152 = vst.msk [vmem:[#allocation2 + $0x590] sm:$0xff] %vm1241, %v7020
  %7153 = vst.msk [vmem:[#allocation2 + $0x5a8] sm:$0xff] %vm1241, %v7022
  %7154 = vst.msk [vmem:[#allocation2 + $0x5c0] sm:$0xff] %vm1241, %v7024
  %7155 = vst.msk [vmem:[#allocation2 + $0x5d8] sm:$0xff] %vm1241, %v7026
  %7156 = vst.msk [vmem:[#allocation2 + $0x5f0] sm:$0xff] %vm1241, %v7028
  %v7157 = vld [vmem:[%s6388 + $0x2] sm:$0xff]
  %v7158 = vld [vmem:[%s6388 + $0xa] sm:$0xff]
  %v7159 = vld [vmem:[%s6388 + $0x1a] sm:$0xff]
  %v7160 = vld [vmem:[%s6388 + $0x22] sm:$0xff]
  %v7161 = vld [vmem:[%s6388 + $0x32] sm:$0xff]
  %v7162 = vld [vmem:[%s6388 + $0x3a] sm:$0xff]
  %v7163 = vld [vmem:[%s6388 + $0x4a] sm:$0xff]
  %v7164 = vld [vmem:[%s6388 + $0x52] sm:$0xff]
  %v7165 = vld [vmem:[%s6388 + $0x62] sm:$0xff]
  %v7166 = vld [vmem:[%s6388 + $0x6a] sm:$0xff]
  %v7167 = vld [vmem:[%s6388 + $0x7a] sm:$0xff]
  %v7168 = vld [vmem:[%s6388 + $0x82] sm:$0xff]
  %v7169 = vld [vmem:[%s6388 + $0x92] sm:$0xff]
  %v7170 = vld [vmem:[%s6388 + $0x9a] sm:$0xff]
  %v7171 = vld [vmem:[%s6388 + $0xaa] sm:$0xff]
  %v7172 = vld [vmem:[%s6388 + $0xb2] sm:$0xff]
  %v7173 = vld [vmem:[%s6388 + $0xc2] sm:$0xff]
  %v7174 = vld [vmem:[%s6388 + $0xca] sm:$0xff]
  %v7175 = vld [vmem:[%s6388 + $0xda] sm:$0xff]
  %v7176 = vld [vmem:[%s6388 + $0xe2] sm:$0xff]
  %v7177 = vld [vmem:[%s6388 + $0xf2] sm:$0xff]
  %v7178 = vld [vmem:[%s6388 + $0xfa] sm:$0xff]
  %v7179 = vld [vmem:[%s6388 + $0x10a] sm:$0xff]
  %v7180 = vld [vmem:[%s6388 + $0x112] sm:$0xff]
  %v7181 = vld [vmem:[%s6388 + $0x122] sm:$0xff]
  %v7182 = vld [vmem:[%s6388 + $0x12a] sm:$0xff]
  %v7183 = vld [vmem:[%s6388 + $0x13a] sm:$0xff]
  %v7184 = vld [vmem:[%s6388 + $0x142] sm:$0xff]
  %v7185 = vld [vmem:[%s6388 + $0x152] sm:$0xff]
  %v7186 = vld [vmem:[%s6388 + $0x15a] sm:$0xff]
  %v7187 = vld [vmem:[%s6388 + $0x16a] sm:$0xff]
  %v7188 = vld [vmem:[%s6388 + $0x172] sm:$0xff]
  %v7189 = vld [vmem:[%s6388 + $0x1b2] sm:$0xff]
  %v7190 = vld [vmem:[%s6388 + $0x1ba] sm:$0xff]
  %v7191 = vld [vmem:[%s6388 + $0x1ca] sm:$0xff]
  %v7192 = vld [vmem:[%s6388 + $0x1d2] sm:$0xff]
  %v7193 = vld [vmem:[%s6388 + $0x1e2] sm:$0xff]
  %v7194 = vld [vmem:[%s6388 + $0x1ea] sm:$0xff]
  %v7195 = vld [vmem:[%s6388 + $0x1fa] sm:$0xff]
  %v7196 = vld [vmem:[%s6388 + $0x202] sm:$0xff]
  %v7197 = vld [vmem:[%s6388 + $0x212] sm:$0xff]
  %v7198 = vld [vmem:[%s6388 + $0x21a] sm:$0xff]
  %v7199 = vld [vmem:[%s6388 + $0x22a] sm:$0xff]
  %v7200 = vld [vmem:[%s6388 + $0x232] sm:$0xff]
  %v7201 = vld [vmem:[%s6388 + $0x242] sm:$0xff]
  %v7202 = vld [vmem:[%s6388 + $0x24a] sm:$0xff]
  %v7203 = vld [vmem:[%s6388 + $0x25a] sm:$0xff]
  %v7204 = vld [vmem:[%s6388 + $0x262] sm:$0xff]
  %v7205 = vld [vmem:[%s6388 + $0x272] sm:$0xff]
  %v7206 = vld [vmem:[%s6388 + $0x27a] sm:$0xff]
  %v7207 = vld [vmem:[%s6388 + $0x28a] sm:$0xff]
  %v7208 = vld [vmem:[%s6388 + $0x292] sm:$0xff]
  %v7209 = vld [vmem:[%s6388 + $0x2a2] sm:$0xff]
  %v7210 = vld [vmem:[%s6388 + $0x2aa] sm:$0xff]
  %v7211 = vld [vmem:[%s6388 + $0x2ba] sm:$0xff]
  %v7212 = vld [vmem:[%s6388 + $0x2c2] sm:$0xff]
  %v7213 = vld [vmem:[%s6388 + $0x2d2] sm:$0xff]
  %v7214 = vld [vmem:[%s6388 + $0x2da] sm:$0xff]
  %v7215 = vld [vmem:[%s6388 + $0x2ea] sm:$0xff]
  %v7216 = vld [vmem:[%s6388 + $0x2f2] sm:$0xff]
  %v7217 = vld [vmem:[%s6388 + $0x302] sm:$0xff]
  %v7218 = vld [vmem:[%s6388 + $0x30a] sm:$0xff]
  %v7219 = vld [vmem:[%s6388 + $0x31a] sm:$0xff]
  %v7220 = vld [vmem:[%s6388 + $0x322] sm:$0xff]
  %7221 = vst.msk [vmem:[#allocation2 + $0x10] sm:$0xff] %vm85, %v7157
  %7222 = vst.msk [vmem:[#allocation2 + $0x28] sm:$0xff] %vm85, %v7158
  %7223 = vst.msk [vmem:[#allocation2 + $0x40] sm:$0xff] %vm85, %v7159
  %7224 = vst.msk [vmem:[#allocation2 + $0x58] sm:$0xff] %vm85, %v7160
  %7225 = vst.msk [vmem:[#allocation2 + $0x70] sm:$0xff] %vm85, %v7161
  %7226 = vst.msk [vmem:[#allocation2 + $0x88] sm:$0xff] %vm85, %v7162
  %7227 = vst.msk [vmem:[#allocation2 + $0xa0] sm:$0xff] %vm85, %v7163
  %7228 = vst.msk [vmem:[#allocation2 + $0xb8] sm:$0xff] %vm85, %v7164
  %7229 = vst.msk [vmem:[#allocation2 + $0xd0] sm:$0xff] %vm85, %v7165
  %7230 = vst.msk [vmem:[#allocation2 + $0xe8] sm:$0xff] %vm85, %v7166
  %7231 = vst.msk [vmem:[#allocation2 + $0x100] sm:$0xff] %vm85, %v7167
  %7232 = vst.msk [vmem:[#allocation2 + $0x118] sm:$0xff] %vm85, %v7168
  %7233 = vst.msk [vmem:[#allocation2 + $0x130] sm:$0xff] %vm85, %v7169
  %7234 = vst.msk [vmem:[#allocation2 + $0x148] sm:$0xff] %vm85, %v7170
  %7235 = vst.msk [vmem:[#allocation2 + $0x160] sm:$0xff] %vm85, %v7171
  %7236 = vst.msk [vmem:[#allocation2 + $0x178] sm:$0xff] %vm85, %v7172
  %7237 = vst.msk [vmem:[#allocation2 + $0x190] sm:$0xff] %vm85, %v7173
  %7238 = vst.msk [vmem:[#allocation2 + $0x1a8] sm:$0xff] %vm85, %v7174
  %7239 = vst.msk [vmem:[#allocation2 + $0x1c0] sm:$0xff] %vm85, %v7175
  %7240 = vst.msk [vmem:[#allocation2 + $0x1d8] sm:$0xff] %vm85, %v7176
  %7241 = vst.msk [vmem:[#allocation2 + $0x1f0] sm:$0xff] %vm85, %v7177
  %7242 = vst.msk [vmem:[#allocation2 + $0x208] sm:$0xff] %vm85, %v7178
  %7243 = vst.msk [vmem:[#allocation2 + $0x220] sm:$0xff] %vm85, %v7179
  %7244 = vst.msk [vmem:[#allocation2 + $0x238] sm:$0xff] %vm85, %v7180
  %7245 = vst.msk [vmem:[#allocation2 + $0x250] sm:$0xff] %vm85, %v7181
  %7246 = vst.msk [vmem:[#allocation2 + $0x268] sm:$0xff] %vm85, %v7182
  %7247 = vst.msk [vmem:[#allocation2 + $0x280] sm:$0xff] %vm85, %v7183
  %7248 = vst.msk [vmem:[#allocation2 + $0x298] sm:$0xff] %vm85, %v7184
  %7249 = vst.msk [vmem:[#allocation2 + $0x2b0] sm:$0xff] %vm85, %v7185
  %7250 = vst.msk [vmem:[#allocation2 + $0x2c8] sm:$0xff] %vm85, %v7186
  %7251 = vst.msk [vmem:[#allocation2 + $0x2e0] sm:$0xff] %vm85, %v7187
  %7252 = vst.msk [vmem:[#allocation2 + $0x2f8] sm:$0xff] %vm85, %v7188
  %7253 = vst.msk [vmem:[#allocation2 + $0x310] sm:$0xff] %vm85, %v7189
  %7254 = vst.msk [vmem:[#allocation2 + $0x328] sm:$0xff] %vm85, %v7190
  %7255 = vst.msk [vmem:[#allocation2 + $0x340] sm:$0xff] %vm85, %v7191
  %7256 = vst.msk [vmem:[#allocation2 + $0x358] sm:$0xff] %vm85, %v7192
  %7257 = vst.msk [vmem:[#allocation2 + $0x370] sm:$0xff] %vm85, %v7193
  %7258 = vst.msk [vmem:[#allocation2 + $0x388] sm:$0xff] %vm85, %v7194
  %7259 = vst.msk [vmem:[#allocation2 + $0x3a0] sm:$0xff] %vm85, %v7195
  %7260 = vst.msk [vmem:[#allocation2 + $0x3b8] sm:$0xff] %vm85, %v7196
  %7261 = vst.msk [vmem:[#allocation2 + $0x3d0] sm:$0xff] %vm85, %v7197
  %7262 = vst.msk [vmem:[#allocation2 + $0x3e8] sm:$0xff] %vm85, %v7198
  %7263 = vst.msk [vmem:[#allocation2 + $0x400] sm:$0xff] %vm85, %v7199
  %7264 = vst.msk [vmem:[#allocation2 + $0x418] sm:$0xff] %vm85, %v7200
  %7265 = vst.msk [vmem:[#allocation2 + $0x430] sm:$0xff] %vm85, %v7201
  %7266 = vst.msk [vmem:[#allocation2 + $0x448] sm:$0xff] %vm85, %v7202
  %7267 = vst.msk [vmem:[#allocation2 + $0x460] sm:$0xff] %vm85, %v7203
  %7268 = vst.msk [vmem:[#allocation2 + $0x478] sm:$0xff] %vm85, %v7204
  %7269 = vst.msk [vmem:[#allocation2 + $0x490] sm:$0xff] %vm85, %v7205
  %7270 = vst.msk [vmem:[#allocation2 + $0x4a8] sm:$0xff] %vm85, %v7206
  %7271 = vst.msk [vmem:[#allocation2 + $0x4c0] sm:$0xff] %vm85, %v7207
  %7272 = vst.msk [vmem:[#allocation2 + $0x4d8] sm:$0xff] %vm85, %v7208
  %7273 = vst.msk [vmem:[#allocation2 + $0x4f0] sm:$0xff] %vm85, %v7209
  %7274 = vst.msk [vmem:[#allocation2 + $0x508] sm:$0xff] %vm85, %v7210
  %7275 = vst.msk [vmem:[#allocation2 + $0x520] sm:$0xff] %vm85, %v7211
  %7276 = vst.msk [vmem:[#allocation2 + $0x538] sm:$0xff] %vm85, %v7212
  %7277 = vst.msk [vmem:[#allocation2 + $0x550] sm:$0xff] %vm85, %v7213
  %7278 = vst.msk [vmem:[#allocation2 + $0x568] sm:$0xff] %vm85, %v7214
  %7279 = vst.msk [vmem:[#allocation2 + $0x580] sm:$0xff] %vm85, %v7215
  %7280 = vst.msk [vmem:[#allocation2 + $0x598] sm:$0xff] %vm85, %v7216
  %7281 = vst.msk [vmem:[#allocation2 + $0x5b0] sm:$0xff] %vm85, %v7217
  %7282 = vst.msk [vmem:[#allocation2 + $0x5c8] sm:$0xff] %vm85, %v7218
  %7283 = vst.msk [vmem:[#allocation2 + $0x5e0] sm:$0xff] %vm85, %v7219
  %7284 = vst.msk [vmem:[#allocation2 + $0x5f8] sm:$0xff] %vm85, %v7220
  %v7285 = vld [vmem:[#allocation2] sm:$0xff]
  %v7286 = vld [vmem:[#allocation2 + $0x8] sm:$0xff]
  %v7287 = vld [vmem:[#allocation2 + $0x10] sm:$0xff]
  %v7288 = vld [vmem:[#allocation2 + $0x18] sm:$0xff]
  %v7289 = vld [vmem:[#allocation2 + $0x20] sm:$0xff]
  %v7290 = vld [vmem:[#allocation2 + $0x28] sm:$0xff]
  %v7291 = vld [vmem:[#allocation2 + $0x30] sm:$0xff]
  %v7292 = vld [vmem:[#allocation2 + $0x38] sm:$0xff]
  %v7293 = vld [vmem:[#allocation2 + $0x40] sm:$0xff]
  %v7294 = vld [vmem:[#allocation2 + $0x48] sm:$0xff]
  %v7295 = vld [vmem:[#allocation2 + $0x50] sm:$0xff]
  %v7296 = vld [vmem:[#allocation2 + $0x58] sm:$0xff]
  %v7297 = vld [vmem:[#allocation2 + $0x60] sm:$0xff]
  %v7298 = vld [vmem:[#allocation2 + $0x68] sm:$0xff]
  %v7299 = vld [vmem:[#allocation2 + $0x70] sm:$0xff]
  %v7300 = vld [vmem:[#allocation2 + $0x78] sm:$0xff]
  %v7301 = vld [vmem:[#allocation2 + $0x80] sm:$0xff]
  %v7302 = vld [vmem:[#allocation2 + $0x88] sm:$0xff]
  %v7303 = vld [vmem:[#allocation2 + $0x90] sm:$0xff]
  %v7304 = vld [vmem:[#allocation2 + $0x98] sm:$0xff]
  %v7305 = vld [vmem:[#allocation2 + $0xa0] sm:$0xff]
  %v7306 = vld [vmem:[#allocation2 + $0xa8] sm:$0xff]
  %v7307 = vld [vmem:[#allocation2 + $0xb0] sm:$0xff]
  %v7308 = vld [vmem:[#allocation2 + $0xb8] sm:$0xff]
  %v7309 = vld [vmem:[#allocation2 + $0xc0] sm:$0xff]
  %v7310 = vld [vmem:[#allocation2 + $0xc8] sm:$0xff]
  %v7311 = vld [vmem:[#allocation2 + $0xd0] sm:$0xff]
  %v7312 = vld [vmem:[#allocation2 + $0xd8] sm:$0xff]
  %v7313 = vld [vmem:[#allocation2 + $0xe0] sm:$0xff]
  %v7314 = vld [vmem:[#allocation2 + $0xe8] sm:$0xff]
  %v7315 = vld [vmem:[#allocation2 + $0xf0] sm:$0xff]
  %v7316 = vld [vmem:[#allocation2 + $0xf8] sm:$0xff]
  %v7317 = vld [vmem:[#allocation2 + $0x100] sm:$0xff]
  %v7318 = vld [vmem:[#allocation2 + $0x108] sm:$0xff]
  %v7319 = vld [vmem:[#allocation2 + $0x110] sm:$0xff]
  %v7320 = vld [vmem:[#allocation2 + $0x118] sm:$0xff]
  %v7321 = vld [vmem:[#allocation2 + $0x120] sm:$0xff]
  %v7322 = vld [vmem:[#allocation2 + $0x128] sm:$0xff]
  %v7323 = vld [vmem:[#allocation2 + $0x130] sm:$0xff]
  %v7324 = vld [vmem:[#allocation2 + $0x138] sm:$0xff]
  %v7325 = vld [vmem:[#allocation2 + $0x140] sm:$0xff]
  %v7326 = vld [vmem:[#allocation2 + $0x148] sm:$0xff]
  %v7327 = vld [vmem:[#allocation2 + $0x150] sm:$0xff]
  %v7328 = vld [vmem:[#allocation2 + $0x158] sm:$0xff]
  %v7329 = vld [vmem:[#allocation2 + $0x160] sm:$0xff]
  %v7330 = vld [vmem:[#allocation2 + $0x168] sm:$0xff]
  %v7331 = vld [vmem:[#allocation2 + $0x170] sm:$0xff]
  %v7332 = vld [vmem:[#allocation2 + $0x178] sm:$0xff]
  %v7333 = vld [vmem:[#allocation2 + $0x180] sm:$0xff]
  %v7334 = vld [vmem:[#allocation2 + $0x188] sm:$0xff]
  %v7335 = vld [vmem:[#allocation2 + $0x190] sm:$0xff]
  %v7336 = vld [vmem:[#allocation2 + $0x198] sm:$0xff]
  %v7337 = vld [vmem:[#allocation2 + $0x1a0] sm:$0xff]
  %v7338 = vld [vmem:[#allocation2 + $0x1a8] sm:$0xff]
  %v7339 = vld [vmem:[#allocation2 + $0x1b0] sm:$0xff]
  %v7340 = vld [vmem:[#allocation2 + $0x1b8] sm:$0xff]
  %v7341 = vld [vmem:[#allocation2 + $0x1c0] sm:$0xff]
  %v7342 = vld [vmem:[#allocation2 + $0x1c8] sm:$0xff]
  %v7343 = vld [vmem:[#allocation2 + $0x1d0] sm:$0xff]
  %v7344 = vld [vmem:[#allocation2 + $0x1d8] sm:$0xff]
  %v7345 = vld [vmem:[#allocation2 + $0x1e0] sm:$0xff]
  %v7346 = vld [vmem:[#allocation2 + $0x1e8] sm:$0xff]
  %v7347 = vld [vmem:[#allocation2 + $0x1f0] sm:$0xff]
  %v7348 = vld [vmem:[#allocation2 + $0x1f8] sm:$0xff]
  %v7349 = vld [vmem:[#allocation2 + $0x200] sm:$0xff]
  %v7350 = vld [vmem:[#allocation2 + $0x208] sm:$0xff]
  %v7351 = vld [vmem:[#allocation2 + $0x210] sm:$0xff]
  %v7352 = vld [vmem:[#allocation2 + $0x218] sm:$0xff]
  %v7353 = vld [vmem:[#allocation2 + $0x220] sm:$0xff]
  %v7354 = vld [vmem:[#allocation2 + $0x228] sm:$0xff]
  %v7355 = vld [vmem:[#allocation2 + $0x230] sm:$0xff]
  %v7356 = vld [vmem:[#allocation2 + $0x238] sm:$0xff]
  %v7357 = vld [vmem:[#allocation2 + $0x240] sm:$0xff]
  %v7358 = vld [vmem:[#allocation2 + $0x248] sm:$0xff]
  %v7359 = vld [vmem:[#allocation2 + $0x250] sm:$0xff]
  %v7360 = vld [vmem:[#allocation2 + $0x258] sm:$0xff]
  %v7361 = vld [vmem:[#allocation2 + $0x260] sm:$0xff]
  %v7362 = vld [vmem:[#allocation2 + $0x268] sm:$0xff]
  %v7363 = vld [vmem:[#allocation2 + $0x270] sm:$0xff]
  %v7364 = vld [vmem:[#allocation2 + $0x278] sm:$0xff]
  %v7365 = vld [vmem:[#allocation2 + $0x280] sm:$0xff]
  %v7366 = vld [vmem:[#allocation2 + $0x288] sm:$0xff]
  %v7367 = vld [vmem:[#allocation2 + $0x290] sm:$0xff]
  %v7368 = vld [vmem:[#allocation2 + $0x298] sm:$0xff]
  %v7369 = vld [vmem:[#allocation2 + $0x2a0] sm:$0xff]
  %v7370 = vld [vmem:[#allocation2 + $0x2a8] sm:$0xff]
  %v7371 = vld [vmem:[#allocation2 + $0x2b0] sm:$0xff]
  %v7372 = vld [vmem:[#allocation2 + $0x2b8] sm:$0xff]
  %v7373 = vld [vmem:[#allocation2 + $0x2c0] sm:$0xff]
  %v7374 = vld [vmem:[#allocation2 + $0x2c8] sm:$0xff]
  %v7375 = vld [vmem:[#allocation2 + $0x2d0] sm:$0xff]
  %v7376 = vld [vmem:[#allocation2 + $0x2d8] sm:$0xff]
  %v7377 = vld [vmem:[#allocation2 + $0x2e0] sm:$0xff]
  %v7378 = vld [vmem:[#allocation2 + $0x2e8] sm:$0xff]
  %v7379 = vld [vmem:[#allocation2 + $0x2f0] sm:$0xff]
  %v7380 = vld [vmem:[#allocation2 + $0x2f8] sm:$0xff]
  %v7381 = vld [vmem:[#allocation2 + $0x300] sm:$0xff]
  %v7382 = vld [vmem:[#allocation2 + $0x308] sm:$0xff]
  %v7383 = vld [vmem:[#allocation2 + $0x310] sm:$0xff]
  %v7384 = vld [vmem:[#allocation2 + $0x318] sm:$0xff]
  %v7385 = vld [vmem:[#allocation2 + $0x320] sm:$0xff]
  %v7386 = vld [vmem:[#allocation2 + $0x328] sm:$0xff]
  %v7387 = vld [vmem:[#allocation2 + $0x330] sm:$0xff]
  %v7388 = vld [vmem:[#allocation2 + $0x338] sm:$0xff]
  %v7389 = vld [vmem:[#allocation2 + $0x340] sm:$0xff]
  %v7390 = vld [vmem:[#allocation2 + $0x348] sm:$0xff]
  %v7391 = vld [vmem:[#allocation2 + $0x350] sm:$0xff]
  %v7392 = vld [vmem:[#allocation2 + $0x358] sm:$0xff]
  %v7393 = vld [vmem:[#allocation2 + $0x360] sm:$0xff]
  %v7394 = vld [vmem:[#allocation2 + $0x368] sm:$0xff]
  %v7395 = vld [vmem:[#allocation2 + $0x370] sm:$0xff]
  %v7396 = vld [vmem:[#allocation2 + $0x378] sm:$0xff]
  %v7397 = vld [vmem:[#allocation2 + $0x380] sm:$0xff]
  %v7398 = vld [vmem:[#allocation2 + $0x388] sm:$0xff]
  %v7399 = vld [vmem:[#allocation2 + $0x390] sm:$0xff]
  %v7400 = vld [vmem:[#allocation2 + $0x398] sm:$0xff]
  %v7401 = vld [vmem:[#allocation2 + $0x3a0] sm:$0xff]
  %v7402 = vld [vmem:[#allocation2 + $0x3a8] sm:$0xff]
  %v7403 = vld [vmem:[#allocation2 + $0x3b0] sm:$0xff]
  %v7404 = vld [vmem:[#allocation2 + $0x3b8] sm:$0xff]
  %v7405 = vld [vmem:[#allocation2 + $0x3c0] sm:$0xff]
  %v7406 = vld [vmem:[#allocation2 + $0x3c8] sm:$0xff]
  %v7407 = vld [vmem:[#allocation2 + $0x3d0] sm:$0xff]
  %v7408 = vld [vmem:[#allocation2 + $0x3d8] sm:$0xff]
  %v7409 = vld [vmem:[#allocation2 + $0x3e0] sm:$0xff]
  %v7410 = vld [vmem:[#allocation2 + $0x3e8] sm:$0xff]
  %v7411 = vld [vmem:[#allocation2 + $0x3f0] sm:$0xff]
  %v7412 = vld [vmem:[#allocation2 + $0x3f8] sm:$0xff]
  %v7413 = vld [vmem:[#allocation2 + $0x400] sm:$0xff]
  %v7414 = vld [vmem:[#allocation2 + $0x408] sm:$0xff]
  %v7415 = vld [vmem:[#allocation2 + $0x410] sm:$0xff]
  %v7416 = vld [vmem:[#allocation2 + $0x418] sm:$0xff]
  %v7417 = vld [vmem:[#allocation2 + $0x420] sm:$0xff]
  %v7418 = vld [vmem:[#allocation2 + $0x428] sm:$0xff]
  %v7419 = vld [vmem:[#allocation2 + $0x430] sm:$0xff]
  %v7420 = vld [vmem:[#allocation2 + $0x438] sm:$0xff]
  %v7421 = vld [vmem:[#allocation2 + $0x440] sm:$0xff]
  %v7422 = vld [vmem:[#allocation2 + $0x448] sm:$0xff]
  %v7423 = vld [vmem:[#allocation2 + $0x450] sm:$0xff]
  %v7424 = vld [vmem:[#allocation2 + $0x458] sm:$0xff]
  %v7425 = vld [vmem:[#allocation2 + $0x460] sm:$0xff]
  %v7426 = vld [vmem:[#allocation2 + $0x468] sm:$0xff]
  %v7427 = vld [vmem:[#allocation2 + $0x470] sm:$0xff]
  %v7428 = vld [vmem:[#allocation2 + $0x478] sm:$0xff]
  %v7429 = vld [vmem:[#allocation2 + $0x480] sm:$0xff]
  %v7430 = vld [vmem:[#allocation2 + $0x488] sm:$0xff]
  %v7431 = vld [vmem:[#allocation2 + $0x490] sm:$0xff]
  %v7432 = vld [vmem:[#allocation2 + $0x498] sm:$0xff]
  %v7433 = vld [vmem:[#allocation2 + $0x4a0] sm:$0xff]
  %v7434 = vld [vmem:[#allocation2 + $0x4a8] sm:$0xff]
  %v7435 = vld [vmem:[#allocation2 + $0x4b0] sm:$0xff]
  %v7436 = vld [vmem:[#allocation2 + $0x4b8] sm:$0xff]
  %v7437 = vld [vmem:[#allocation2 + $0x4c0] sm:$0xff]
  %v7438 = vld [vmem:[#allocation2 + $0x4c8] sm:$0xff]
  %v7439 = vld [vmem:[#allocation2 + $0x4d0] sm:$0xff]
  %v7440 = vld [vmem:[#allocation2 + $0x4d8] sm:$0xff]
  %v7441 = vld [vmem:[#allocation2 + $0x4e0] sm:$0xff]
  %v7442 = vld [vmem:[#allocation2 + $0x4e8] sm:$0xff]
  %v7443 = vld [vmem:[#allocation2 + $0x4f0] sm:$0xff]
  %v7444 = vld [vmem:[#allocation2 + $0x4f8] sm:$0xff]
  %v7445 = vld [vmem:[#allocation2 + $0x500] sm:$0xff]
  %v7446 = vld [vmem:[#allocation2 + $0x508] sm:$0xff]
  %v7447 = vld [vmem:[#allocation2 + $0x510] sm:$0xff]
  %v7448 = vld [vmem:[#allocation2 + $0x518] sm:$0xff]
  %v7449 = vld [vmem:[#allocation2 + $0x520] sm:$0xff]
  %v7450 = vld [vmem:[#allocation2 + $0x528] sm:$0xff]
  %v7451 = vld [vmem:[#allocation2 + $0x530] sm:$0xff]
  %v7452 = vld [vmem:[#allocation2 + $0x538] sm:$0xff]
  %v7453 = vld [vmem:[#allocation2 + $0x540] sm:$0xff]
  %v7454 = vld [vmem:[#allocation2 + $0x548] sm:$0xff]
  %v7455 = vld [vmem:[#allocation2 + $0x550] sm:$0xff]
  %v7456 = vld [vmem:[#allocation2 + $0x558] sm:$0xff]
  %v7457 = vld [vmem:[#allocation2 + $0x560] sm:$0xff]
  %v7458 = vld [vmem:[#allocation2 + $0x568] sm:$0xff]
  %v7459 = vld [vmem:[#allocation2 + $0x570] sm:$0xff]
  %v7460 = vld [vmem:[#allocation2 + $0x578] sm:$0xff]
  %v7461 = vld [vmem:[#allocation2 + $0x580] sm:$0xff]
  %v7462 = vld [vmem:[#allocation2 + $0x588] sm:$0xff]
  %v7463 = vld [vmem:[#allocation2 + $0x590] sm:$0xff]
  %v7464 = vld [vmem:[#allocation2 + $0x598] sm:$0xff]
  %v7465 = vld [vmem:[#allocation2 + $0x5a0] sm:$0xff]
  %v7466 = vld [vmem:[#allocation2 + $0x5a8] sm:$0xff]
  %v7467 = vld [vmem:[#allocation2 + $0x5b0] sm:$0xff]
  %v7468 = vld [vmem:[#allocation2 + $0x5b8] sm:$0xff]
  %v7469 = vld [vmem:[#allocation2 + $0x5c0] sm:$0xff]
  %v7470 = vld [vmem:[#allocation2 + $0x5c8] sm:$0xff]
  %v7471 = vld [vmem:[#allocation2 + $0x5d0] sm:$0xff]
  %v7472 = vld [vmem:[#allocation2 + $0x5d8] sm:$0xff]
  %v7473 = vld [vmem:[#allocation2 + $0x5e0] sm:$0xff]
  %v7474 = vld [vmem:[#allocation2 + $0x5e8] sm:$0xff]
  %v7475 = vld [vmem:[#allocation2 + $0x5f0] sm:$0xff]
  %v7476 = vld [vmem:[#allocation2 + $0x5f8] sm:$0xff]
  %v7477 = vld [vmem:[%s2] sm:$0xff]
  %v7478 = vld [vmem:[%s2 + $0x8] sm:$0xff]
  %v7479 = vld [vmem:[%s2 + $0x10] sm:$0xff]
  %v7480 = vld [vmem:[%s2 + $0x18] sm:$0xff]
  %v7481 = vld [vmem:[%s2 + $0x20] sm:$0xff]
  %v7482 = vld [vmem:[%s2 + $0x28] sm:$0xff]
  %v7483 = vld [vmem:[%s2 + $0x30] sm:$0xff]
  %v7484 = vld [vmem:[%s2 + $0x38] sm:$0xff]
  %v7485 = vld [vmem:[%s2 + $0x40] sm:$0xff]
  %v7486 = vld [vmem:[%s2 + $0x48] sm:$0xff]
  %v7487 = vld [vmem:[%s2 + $0x50] sm:$0xff]
  %v7488 = vld [vmem:[%s2 + $0x58] sm:$0xff]
  %v7489 = vld [vmem:[%s2 + $0x60] sm:$0xff]
  %v7490 = vld [vmem:[%s2 + $0x68] sm:$0xff]
  %v7491 = vld [vmem:[%s2 + $0x70] sm:$0xff]
  %v7492 = vld [vmem:[%s2 + $0x78] sm:$0xff]
  %v7493 = vld [vmem:[%s2 + $0x80] sm:$0xff]
  %v7494 = vld [vmem:[%s2 + $0x88] sm:$0xff]
  %v7495 = vld [vmem:[%s2 + $0x90] sm:$0xff]
  %v7496 = vld [vmem:[%s2 + $0x98] sm:$0xff]
  %v7497 = vld [vmem:[%s2 + $0xa0] sm:$0xff]
  %v7498 = vld [vmem:[%s2 + $0xa8] sm:$0xff]
  %v7499 = vld [vmem:[%s2 + $0xb0] sm:$0xff]
  %v7500 = vld [vmem:[%s2 + $0xb8] sm:$0xff]
  %v7501 = vld [vmem:[%s2 + $0xc0] sm:$0xff]
  %v7502 = vld [vmem:[%s2 + $0xc8] sm:$0xff]
  %v7503 = vld [vmem:[%s2 + $0xd0] sm:$0xff]
  %v7504 = vld [vmem:[%s2 + $0xd8] sm:$0xff]
  %v7505 = vld [vmem:[%s2 + $0xe0] sm:$0xff]
  %v7506 = vld [vmem:[%s2 + $0xe8] sm:$0xff]
  %v7507 = vld [vmem:[%s2 + $0xf0] sm:$0xff]
  %v7508 = vld [vmem:[%s2 + $0xf8] sm:$0xff]
  %v7509 = vld [vmem:[%s2 + $0x100] sm:$0xff]
  %v7510 = vld [vmem:[%s2 + $0x108] sm:$0xff]
  %v7511 = vld [vmem:[%s2 + $0x110] sm:$0xff]
  %v7512 = vld [vmem:[%s2 + $0x118] sm:$0xff]
  %v7514 = vsel %vm85, %v7287, 0
  %v7517 = vsel %vm85, %v7290, 0
  %v7520 = vsel %vm85, %v7293, 0
  %v7523 = vsel %vm85, %v7296, 0
  %v7526 = vsel %vm85, %v7299, 0
  %v7529 = vsel %vm85, %v7302, 0
  %v7532 = vsel %vm85, %v7305, 0
  %v7535 = vsel %vm85, %v7308, 0
  %v7538 = vsel %vm85, %v7311, 0
  %v7541 = vsel %vm85, %v7314, 0
  %v7544 = vsel %vm85, %v7317, 0
  %v7547 = vsel %vm85, %v7320, 0
  %v7550 = vsel %vm85, %v7323, 0
  %v7553 = vsel %vm85, %v7326, 0
  %v7556 = vsel %vm85, %v7329, 0
  %v7559 = vsel %vm85, %v7332, 0
  %v7562 = vsel %vm85, %v7335, 0
  %v7565 = vsel %vm85, %v7338, 0
  %v7568 = vsel %vm85, %v7341, 0
  %v7571 = vsel %vm85, %v7344, 0
  %v7574 = vsel %vm85, %v7347, 0
  %v7577 = vsel %vm85, %v7350, 0
  %v7580 = vsel %vm85, %v7353, 0
  %v7583 = vsel %vm85, %v7356, 0
  %v7586 = vsel %vm85, %v7359, 0
  %v7589 = vsel %vm85, %v7362, 0
  %v7592 = vsel %vm85, %v7365, 0
  %v7595 = vsel %vm85, %v7368, 0
  %v7598 = vsel %vm85, %v7371, 0
  %v7601 = vsel %vm85, %v7374, 0
  %v7604 = vsel %vm85, %v7377, 0
  %v7607 = vsel %vm85, %v7380, 0
  %v7610 = vsel %vm85, %v7383, 0
  %v7613 = vsel %vm85, %v7386, 0
  %v7616 = vsel %vm85, %v7389, 0
  %v7619 = vsel %vm85, %v7392, 0
  %v7622 = vsel %vm85, %v7395, 0
  %v7625 = vsel %vm85, %v7398, 0
  %v7628 = vsel %vm85, %v7401, 0
  %v7631 = vsel %vm85, %v7404, 0
  %v7634 = vsel %vm85, %v7407, 0
  %v7637 = vsel %vm85, %v7410, 0
  %v7640 = vsel %vm85, %v7413, 0
  %v7643 = vsel %vm85, %v7416, 0
  %v7646 = vsel %vm85, %v7419, 0
  %v7649 = vsel %vm85, %v7422, 0
  %v7652 = vsel %vm85, %v7425, 0
  %v7655 = vsel %vm85, %v7428, 0
  %v7658 = vsel %vm85, %v7431, 0
  %v7661 = vsel %vm85, %v7434, 0
  %v7664 = vsel %vm85, %v7437, 0
  %v7667 = vsel %vm85, %v7440, 0
  %v7670 = vsel %vm85, %v7443, 0
  %v7673 = vsel %vm85, %v7446, 0
  %v7676 = vsel %vm85, %v7449, 0
  %v7679 = vsel %vm85, %v7452, 0
  %v7682 = vsel %vm85, %v7455, 0
  %v7685 = vsel %vm85, %v7458, 0
  %v7688 = vsel %vm85, %v7461, 0
  %v7691 = vsel %vm85, %v7464, 0
  %v7694 = vsel %vm85, %v7467, 0
  %v7697 = vsel %vm85, %v7470, 0
  %v7700 = vsel %vm85, %v7473, 0
  %v7703 = vsel %vm85, %v7476, 0
  %7705 = vmatprep.subr.mxu0 0.0
  %7706 = vmatpush1.msra.mxu0 %v7492
  %7707 = vmatprep.subr.mxu0 0.0
  %7708 = vmatpush1.msra.mxu0 %v7491
  %7709 = vmatprep.subr.mxu0 0.0
  %7710 = vmatpush1.msra.mxu0 %v7490
  %7711 = vmatprep.subr.mxu0 0.0
  %7712 = vmatpush1.msra.mxu0 %v7489
  %7713 = vmatprep.subr.mxu0 0.0
  %7714 = vmatpush1.msra.mxu0 %v7488
  %7715 = vmatprep.subr.mxu0 0.0
  %7716 = vmatpush1.msra.mxu0 %v7487
  %7717 = vmatprep.subr.mxu0 0.0
  %7718 = vmatpush1.msra.mxu0 %v7486
  %7719 = vmatprep.subr.mxu0 0.0
  %7720 = vmatpush1.msra.mxu0 %v7485
  %7721 = vmatprep.subr.mxu0 0.0
  %7722 = vmatpush1.msra.mxu0 %v7484
  %7723 = vmatprep.subr.mxu0 0.0
  %7724 = vmatpush1.msra.mxu0 %v7483
  %7725 = vmatprep.subr.mxu0 0.0
  %7726 = vmatpush1.msra.mxu0 %v7482
  %7727 = vmatprep.subr.mxu0 0.0
  %7728 = vmatpush1.msra.mxu0 %v7481
  %7729 = vmatprep.subr.mxu0 0.0
  %7730 = vmatpush1.msra.mxu0 %v7480
  %7731 = vmatprep.subr.mxu0 0.0
  %7732 = vmatpush1.msra.mxu0 %v7479
  %7733 = vmatprep.subr.mxu0 0.0
  %7734 = vmatpush1.msra.mxu0 %v7478
  %7735 = vmatprep.subr.mxu0 0.0
  %7736 = vmatpush1.msra.mxu0 %v7477
  %7737 = vmatprep.subr.mxu0 0.0
  %7738 = vmatpush2.msra.mxu0 %v7508
  %7739 = vmatprep.subr.mxu0 0.0
  %7740 = vmatpush2.msra.mxu0 %v7507
  %7741 = vmatprep.subr.mxu0 0.0
  %7742 = vmatpush2.msra.mxu0 %v7506
  %7743 = vmatprep.subr.mxu0 0.0
  %7744 = vmatpush2.msra.mxu0 %v7505
  %7745 = vmatprep.subr.mxu0 0.0
  %7746 = vmatpush2.msra.mxu0 %v7504
  %7747 = vmatprep.subr.mxu0 0.0
  %7748 = vmatpush2.msra.mxu0 %v7503
  %7749 = vmatprep.subr.mxu0 0.0
  %7750 = vmatpush2.msra.mxu0 %v7502
  %7751 = vmatprep.subr.mxu0 0.0
  %7752 = vmatpush2.msra.mxu0 %v7501
  %7753 = vmatprep.subr.mxu0 0.0
  %7754 = vmatpush2.msra.mxu0 %v7500
  %7755 = vmatprep.subr.mxu0 0.0
  %7756 = vmatpush2.msra.mxu0 %v7499
  %7757 = vmatprep.subr.mxu0 0.0
  %7758 = vmatpush2.msra.mxu0 %v7498
  %7759 = vmatprep.subr.mxu0 0.0
  %7760 = vmatpush2.msra.mxu0 %v7497
  %7761 = vmatprep.subr.mxu0 0.0
  %7762 = vmatpush2.msra.mxu0 %v7496
  %7763 = vmatprep.subr.mxu0 0.0
  %7764 = vmatpush2.msra.mxu0 %v7495
  %7765 = vmatprep.subr.mxu0 0.0
  %7766 = vmatpush2.msra.mxu0 %v7494
  %7767 = vmatprep.subr.mxu0 0.0
  %7768 = vmatpush2.msra.mxu0 %v7493
  %7769 = vmatprep.mubr.f32.mxu0 %v7286
  %7770 = vmatmul.mubr.f32.gmra.mxu0 %v7285
  %v7771 = vpop.f32.mrf.mxu0
  %v7772 = vadd.f32 0.0, %v7771
  %v7773 = vpop.f32.mrf.mxu0
  %7774 = vmatprep.mubr.f32.mxu0 %v7289
  %7775 = vmatmul.mubr.f32.gmra.mxu0 %v7288
  %v7776 = vpop.f32.mrf.mxu0
  %v7777 = vadd.f32 0.0, %v7776
  %v7778 = vpop.f32.mrf.mxu0
  %7779 = vmatprep.mubr.f32.mxu0 %v7292
  %7780 = vmatmul.mubr.f32.gmra.mxu0 %v7291
  %v7781 = vpop.f32.mrf.mxu0
  %v7782 = vadd.f32 0.0, %v7781
  %v7783 = vpop.f32.mrf.mxu0
  %7784 = vmatprep.mubr.f32.mxu0 %v7295
  %7785 = vmatmul.mubr.f32.gmra.mxu0 %v7294
  %v7786 = vpop.f32.mrf.mxu0
  %v7787 = vadd.f32 0.0, %v7786
  %v7788 = vpop.f32.mrf.mxu0
  %7789 = vmatprep.mubr.f32.mxu0 %v7298
  %7790 = vmatmul.mubr.f32.gmra.mxu0 %v7297
  %v7791 = vpop.f32.mrf.mxu0
  %v7792 = vadd.f32 0.0, %v7791
  %v7793 = vpop.f32.mrf.mxu0
  %7794 = vmatprep.mubr.f32.mxu0 %v7301
  %7795 = vmatmul.mubr.f32.gmra.mxu0 %v7300
  %v7796 = vpop.f32.mrf.mxu0
  %v7797 = vadd.f32 0.0, %v7796
  %v7798 = vpop.f32.mrf.mxu0
  %7799 = vmatprep.mubr.f32.mxu0 %v7304
  %7800 = vmatmul.mubr.f32.gmra.mxu0 %v7303
  %v7801 = vpop.f32.mrf.mxu0
  %v7802 = vadd.f32 0.0, %v7801
  %v7803 = vpop.f32.mrf.mxu0
  %7804 = vmatprep.mubr.f32.mxu0 %v7307
  %7805 = vmatmul.mubr.f32.gmra.mxu0 %v7306
  %v7806 = vpop.f32.mrf.mxu0
  %v7807 = vadd.f32 0.0, %v7806
  %v7808 = vpop.f32.mrf.mxu0
  %7809 = vmatprep.mubr.f32.mxu0 %v7310
  %7810 = vmatmul.mubr.f32.gmra.mxu0 %v7309
  %v7811 = vpop.f32.mrf.mxu0
  %v7812 = vadd.f32 0.0, %v7811
  %v7813 = vpop.f32.mrf.mxu0
  %7814 = vmatprep.mubr.f32.mxu0 %v7313
  %7815 = vmatmul.mubr.f32.gmra.mxu0 %v7312
  %v7816 = vpop.f32.mrf.mxu0
  %v7817 = vadd.f32 0.0, %v7816
  %v7818 = vpop.f32.mrf.mxu0
  %7819 = vmatprep.mubr.f32.mxu0 %v7316
  %7820 = vmatmul.mubr.f32.gmra.mxu0 %v7315
  %v7821 = vpop.f32.mrf.mxu0
  %v7822 = vadd.f32 0.0, %v7821
  %v7823 = vpop.f32.mrf.mxu0
  %7824 = vmatprep.mubr.f32.mxu0 %v7319
  %7825 = vmatmul.mubr.f32.gmra.mxu0 %v7318
  %v7826 = vpop.f32.mrf.mxu0
  %v7827 = vadd.f32 0.0, %v7826
  %v7828 = vpop.f32.mrf.mxu0
  %7829 = vmatprep.mubr.f32.mxu0 %v7322
  %7830 = vmatmul.mubr.f32.gmra.mxu0 %v7321
  %v7831 = vpop.f32.mrf.mxu0
  %v7832 = vadd.f32 0.0, %v7831
  %v7833 = vpop.f32.mrf.mxu0
  %7834 = vmatprep.mubr.f32.mxu0 %v7325
  %7835 = vmatmul.mubr.f32.gmra.mxu0 %v7324
  %v7836 = vpop.f32.mrf.mxu0
  %v7837 = vadd.f32 0.0, %v7836
  %v7838 = vpop.f32.mrf.mxu0
  %7839 = vmatprep.mubr.f32.mxu0 %v7328
  %7840 = vmatmul.mubr.f32.gmra.mxu0 %v7327
  %v7841 = vpop.f32.mrf.mxu0
  %v7842 = vadd.f32 0.0, %v7841
  %v7843 = vpop.f32.mrf.mxu0
  %7844 = vmatprep.mubr.f32.mxu0 %v7331
  %7845 = vmatmul.mubr.f32.gmra.mxu0 %v7330
  %v7846 = vpop.f32.mrf.mxu0
  %v7847 = vadd.f32 0.0, %v7846
  %v7848 = vpop.f32.mrf.mxu0
  %7849 = vmatprep.mubr.f32.mxu0 %v7334
  %7850 = vmatmul.mubr.f32.gmra.mxu0 %v7333
  %v7851 = vpop.f32.mrf.mxu0
  %v7852 = vadd.f32 0.0, %v7851
  %v7853 = vpop.f32.mrf.mxu0
  %7854 = vmatprep.mubr.f32.mxu0 %v7337
  %7855 = vmatmul.mubr.f32.gmra.mxu0 %v7336
  %v7856 = vpop.f32.mrf.mxu0
  %v7857 = vadd.f32 0.0, %v7856
  %v7858 = vpop.f32.mrf.mxu0
  %7859 = vmatprep.mubr.f32.mxu0 %v7340
  %7860 = vmatmul.mubr.f32.gmra.mxu0 %v7339
  %v7861 = vpop.f32.mrf.mxu0
  %v7862 = vadd.f32 0.0, %v7861
  %v7863 = vpop.f32.mrf.mxu0
  %7864 = vmatprep.mubr.f32.mxu0 %v7343
  %7865 = vmatmul.mubr.f32.gmra.mxu0 %v7342
  %v7866 = vpop.f32.mrf.mxu0
  %v7867 = vadd.f32 0.0, %v7866
  %v7868 = vpop.f32.mrf.mxu0
  %7869 = vmatprep.mubr.f32.mxu0 %v7346
  %7870 = vmatmul.mubr.f32.gmra.mxu0 %v7345
  %v7871 = vpop.f32.mrf.mxu0
  %v7872 = vadd.f32 0.0, %v7871
  %v7873 = vpop.f32.mrf.mxu0
  %7874 = vmatprep.mubr.f32.mxu0 %v7349
  %7875 = vmatmul.mubr.f32.gmra.mxu0 %v7348
  %v7876 = vpop.f32.mrf.mxu0
  %v7877 = vadd.f32 0.0, %v7876
  %v7878 = vpop.f32.mrf.mxu0
  %7879 = vmatprep.mubr.f32.mxu0 %v7352
  %7880 = vmatmul.mubr.f32.gmra.mxu0 %v7351
  %v7881 = vpop.f32.mrf.mxu0
  %v7882 = vadd.f32 0.0, %v7881
  %v7883 = vpop.f32.mrf.mxu0
  %7884 = vmatprep.mubr.f32.mxu0 %v7355
  %7885 = vmatmul.mubr.f32.gmra.mxu0 %v7354
  %v7886 = vpop.f32.mrf.mxu0
  %v7887 = vadd.f32 0.0, %v7886
  %v7888 = vpop.f32.mrf.mxu0
  %7889 = vmatprep.mubr.f32.mxu0 %v7358
  %7890 = vmatmul.mubr.f32.gmra.mxu0 %v7357
  %v7891 = vpop.f32.mrf.mxu0
  %v7892 = vadd.f32 0.0, %v7891
  %v7893 = vpop.f32.mrf.mxu0
  %7894 = vmatprep.mubr.f32.mxu0 %v7361
  %7895 = vmatmul.mubr.f32.gmra.mxu0 %v7360
  %v7896 = vpop.f32.mrf.mxu0
  %v7897 = vadd.f32 0.0, %v7896
  %v7898 = vpop.f32.mrf.mxu0
  %7899 = vmatprep.mubr.f32.mxu0 %v7364
  %7900 = vmatmul.mubr.f32.gmra.mxu0 %v7363
  %v7901 = vpop.f32.mrf.mxu0
  %v7902 = vadd.f32 0.0, %v7901
  %v7903 = vpop.f32.mrf.mxu0
  %7904 = vmatprep.mubr.f32.mxu0 %v7367
  %7905 = vmatmul.mubr.f32.gmra.mxu0 %v7366
  %v7906 = vpop.f32.mrf.mxu0
  %v7907 = vadd.f32 0.0, %v7906
  %v7908 = vpop.f32.mrf.mxu0
  %7909 = vmatprep.mubr.f32.mxu0 %v7370
  %7910 = vmatmul.mubr.f32.gmra.mxu0 %v7369
  %v7911 = vpop.f32.mrf.mxu0
  %v7912 = vadd.f32 0.0, %v7911
  %v7913 = vpop.f32.mrf.mxu0
  %7914 = vmatprep.mubr.f32.mxu0 %v7373
  %7915 = vmatmul.mubr.f32.gmra.mxu0 %v7372
  %v7916 = vpop.f32.mrf.mxu0
  %v7917 = vadd.f32 0.0, %v7916
  %v7918 = vpop.f32.mrf.mxu0
  %7919 = vmatprep.mubr.f32.mxu0 %v7376
  %7920 = vmatmul.mubr.f32.gmra.mxu0 %v7375
  %v7921 = vpop.f32.mrf.mxu0
  %v7922 = vadd.f32 0.0, %v7921
  %v7923 = vpop.f32.mrf.mxu0
  %7924 = vmatprep.mubr.f32.mxu0 %v7379
  %7925 = vmatmul.mubr.f32.gmra.mxu0 %v7378
  %v7926 = vpop.f32.mrf.mxu0
  %v7927 = vadd.f32 0.0, %v7926
  %v7928 = vpop.f32.mrf.mxu0
  %7929 = vmatprep.mubr.f32.mxu0 %v7382
  %7930 = vmatmul.mubr.f32.gmra.mxu0 %v7381
  %v7931 = vpop.f32.mrf.mxu0
  %v7932 = vadd.f32 0.0, %v7931
  %v7933 = vpop.f32.mrf.mxu0
  %7934 = vmatprep.mubr.f32.mxu0 %v7385
  %7935 = vmatmul.mubr.f32.gmra.mxu0 %v7384
  %v7936 = vpop.f32.mrf.mxu0
  %v7937 = vadd.f32 0.0, %v7936
  %v7938 = vpop.f32.mrf.mxu0
  %7939 = vmatprep.mubr.f32.mxu0 %v7388
  %7940 = vmatmul.mubr.f32.gmra.mxu0 %v7387
  %v7941 = vpop.f32.mrf.mxu0
  %v7942 = vadd.f32 0.0, %v7941
  %v7943 = vpop.f32.mrf.mxu0
  %7944 = vmatprep.mubr.f32.mxu0 %v7391
  %7945 = vmatmul.mubr.f32.gmra.mxu0 %v7390
  %v7946 = vpop.f32.mrf.mxu0
  %v7947 = vadd.f32 0.0, %v7946
  %v7948 = vpop.f32.mrf.mxu0
  %7949 = vmatprep.mubr.f32.mxu0 %v7394
  %7950 = vmatmul.mubr.f32.gmra.mxu0 %v7393
  %v7951 = vpop.f32.mrf.mxu0
  %v7952 = vadd.f32 0.0, %v7951
  %v7953 = vpop.f32.mrf.mxu0
  %7954 = vmatprep.mubr.f32.mxu0 %v7397
  %7955 = vmatmul.mubr.f32.gmra.mxu0 %v7396
  %v7956 = vpop.f32.mrf.mxu0
  %v7957 = vadd.f32 0.0, %v7956
  %v7958 = vpop.f32.mrf.mxu0
  %7959 = vmatprep.mubr.f32.mxu0 %v7400
  %7960 = vmatmul.mubr.f32.gmra.mxu0 %v7399
  %v7961 = vpop.f32.mrf.mxu0
  %v7962 = vadd.f32 0.0, %v7961
  %v7963 = vpop.f32.mrf.mxu0
  %7964 = vmatprep.mubr.f32.mxu0 %v7403
  %7965 = vmatmul.mubr.f32.gmra.mxu0 %v7402
  %v7966 = vpop.f32.mrf.mxu0
  %v7967 = vadd.f32 0.0, %v7966
  %v7968 = vpop.f32.mrf.mxu0
  %7969 = vmatprep.mubr.f32.mxu0 %v7406
  %7970 = vmatmul.mubr.f32.gmra.mxu0 %v7405
  %v7971 = vpop.f32.mrf.mxu0
  %v7972 = vadd.f32 0.0, %v7971
  %v7973 = vpop.f32.mrf.mxu0
  %7974 = vmatprep.mubr.f32.mxu0 %v7409
  %7975 = vmatmul.mubr.f32.gmra.mxu0 %v7408
  %v7976 = vpop.f32.mrf.mxu0
  %v7977 = vadd.f32 0.0, %v7976
  %v7978 = vpop.f32.mrf.mxu0
  %7979 = vmatprep.mubr.f32.mxu0 %v7412
  %7980 = vmatmul.mubr.f32.gmra.mxu0 %v7411
  %v7981 = vpop.f32.mrf.mxu0
  %v7982 = vadd.f32 0.0, %v7981
  %v7983 = vpop.f32.mrf.mxu0
  %7984 = vmatprep.mubr.f32.mxu0 %v7415
  %7985 = vmatmul.mubr.f32.gmra.mxu0 %v7414
  %v7986 = vpop.f32.mrf.mxu0
  %v7987 = vadd.f32 0.0, %v7986
  %v7988 = vpop.f32.mrf.mxu0
  %7989 = vmatprep.mubr.f32.mxu0 %v7418
  %7990 = vmatmul.mubr.f32.gmra.mxu0 %v7417
  %v7991 = vpop.f32.mrf.mxu0
  %v7992 = vadd.f32 0.0, %v7991
  %v7993 = vpop.f32.mrf.mxu0
  %7994 = vmatprep.mubr.f32.mxu0 %v7421
  %7995 = vmatmul.mubr.f32.gmra.mxu0 %v7420
  %v7996 = vpop.f32.mrf.mxu0
  %v7997 = vadd.f32 0.0, %v7996
  %v7998 = vpop.f32.mrf.mxu0
  %7999 = vmatprep.mubr.f32.mxu0 %v7424
  %8000 = vmatmul.mubr.f32.gmra.mxu0 %v7423
  %v8001 = vpop.f32.mrf.mxu0
  %v8002 = vadd.f32 0.0, %v8001
  %v8003 = vpop.f32.mrf.mxu0
  %8004 = vmatprep.mubr.f32.mxu0 %v7427
  %8005 = vmatmul.mubr.f32.gmra.mxu0 %v7426
  %v8006 = vpop.f32.mrf.mxu0
  %v8007 = vadd.f32 0.0, %v8006
  %v8008 = vpop.f32.mrf.mxu0
  %8009 = vmatprep.mubr.f32.mxu0 %v7430
  %8010 = vmatmul.mubr.f32.gmra.mxu0 %v7429
  %v8011 = vpop.f32.mrf.mxu0
  %v8012 = vadd.f32 0.0, %v8011
  %v8013 = vpop.f32.mrf.mxu0
  %8014 = vmatprep.mubr.f32.mxu0 %v7433
  %8015 = vmatmul.mubr.f32.gmra.mxu0 %v7432
  %v8016 = vpop.f32.mrf.mxu0
  %v8017 = vadd.f32 0.0, %v8016
  %v8018 = vpop.f32.mrf.mxu0
  %8019 = vmatprep.mubr.f32.mxu0 %v7436
  %8020 = vmatmul.mubr.f32.gmra.mxu0 %v7435
  %v8021 = vpop.f32.mrf.mxu0
  %v8022 = vadd.f32 0.0, %v8021
  %v8023 = vpop.f32.mrf.mxu0
  %8024 = vmatprep.mubr.f32.mxu0 %v7439
  %8025 = vmatmul.mubr.f32.gmra.mxu0 %v7438
  %v8026 = vpop.f32.mrf.mxu0
  %v8027 = vadd.f32 0.0, %v8026
  %v8028 = vpop.f32.mrf.mxu0
  %8029 = vmatprep.mubr.f32.mxu0 %v7442
  %8030 = vmatmul.mubr.f32.gmra.mxu0 %v7441
  %v8031 = vpop.f32.mrf.mxu0
  %v8032 = vadd.f32 0.0, %v8031
  %v8033 = vpop.f32.mrf.mxu0
  %8034 = vmatprep.mubr.f32.mxu0 %v7445
  %8035 = vmatmul.mubr.f32.gmra.mxu0 %v7444
  %v8036 = vpop.f32.mrf.mxu0
  %v8037 = vadd.f32 0.0, %v8036
  %v8038 = vpop.f32.mrf.mxu0
  %8039 = vmatprep.mubr.f32.mxu0 %v7448
  %8040 = vmatmul.mubr.f32.gmra.mxu0 %v7447
  %v8041 = vpop.f32.mrf.mxu0
  %v8042 = vadd.f32 0.0, %v8041
  %v8043 = vpop.f32.mrf.mxu0
  %8044 = vmatprep.mubr.f32.mxu0 %v7451
  %8045 = vmatmul.mubr.f32.gmra.mxu0 %v7450
  %v8046 = vpop.f32.mrf.mxu0
  %v8047 = vadd.f32 0.0, %v8046
  %v8048 = vpop.f32.mrf.mxu0
  %8049 = vmatprep.mubr.f32.mxu0 %v7454
  %8050 = vmatmul.mubr.f32.gmra.mxu0 %v7453
  %v8051 = vpop.f32.mrf.mxu0
  %v8052 = vadd.f32 0.0, %v8051
  %v8053 = vpop.f32.mrf.mxu0
  %8054 = vmatprep.mubr.f32.mxu0 %v7457
  %8055 = vmatmul.mubr.f32.gmra.mxu0 %v7456
  %v8056 = vpop.f32.mrf.mxu0
  %v8057 = vadd.f32 0.0, %v8056
  %v8058 = vpop.f32.mrf.mxu0
  %8059 = vmatprep.mubr.f32.mxu0 %v7460
  %8060 = vmatmul.mubr.f32.gmra.mxu0 %v7459
  %v8061 = vpop.f32.mrf.mxu0
  %v8062 = vadd.f32 0.0, %v8061
  %v8063 = vpop.f32.mrf.mxu0
  %8064 = vmatprep.mubr.f32.mxu0 %v7463
  %8065 = vmatmul.mubr.f32.gmra.mxu0 %v7462
  %v8066 = vpop.f32.mrf.mxu0
  %v8067 = vadd.f32 0.0, %v8066
  %v8068 = vpop.f32.mrf.mxu0
  %8069 = vmatprep.mubr.f32.mxu0 %v7466
  %8070 = vmatmul.mubr.f32.gmra.mxu0 %v7465
  %v8071 = vpop.f32.mrf.mxu0
  %v8072 = vadd.f32 0.0, %v8071
  %v8073 = vpop.f32.mrf.mxu0
  %8074 = vmatprep.mubr.f32.mxu0 %v7469
  %8075 = vmatmul.mubr.f32.gmra.mxu0 %v7468
  %v8076 = vpop.f32.mrf.mxu0
  %v8077 = vadd.f32 0.0, %v8076
  %v8078 = vpop.f32.mrf.mxu0
  %8079 = vmatprep.mubr.f32.mxu0 %v7472
  %8080 = vmatmul.mubr.f32.gmra.mxu0 %v7471
  %v8081 = vpop.f32.mrf.mxu0
  %v8082 = vadd.f32 0.0, %v8081
  %v8083 = vpop.f32.mrf.mxu0
  %8084 = vmatprep.mubr.f32.mxu0 %v7475
  %8085 = vmatmul.mubr.f32.gmra.mxu0 %v7474
  %v8086 = vpop.f32.mrf.mxu0
  %v8087 = vadd.f32 0.0, %v8086
  %v8088 = vpop.f32.mrf.mxu0
  %8089 = vdwg.mxu0
  %8090 = vmatprep.subr.mxu0 0.0
  %8091 = vmatpush1.msra.mxu0 0.0
  %8092 = vmatprep.subr.mxu0 0.0
  %8093 = vmatpush1.msra.mxu0 0.0
  %8094 = vmatprep.subr.mxu0 0.0
  %8095 = vmatpush1.msra.mxu0 0.0
  %8096 = vmatprep.subr.mxu0 0.0
  %8097 = vmatpush1.msra.mxu0 0.0
  %8098 = vmatprep.subr.mxu0 0.0
  %8099 = vmatpush1.msra.mxu0 0.0
  %8100 = vmatprep.subr.mxu0 0.0
  %8101 = vmatpush1.msra.mxu0 0.0
  %8102 = vmatprep.subr.mxu0 0.0
  %8103 = vmatpush1.msra.mxu0 0.0
  %8104 = vmatprep.subr.mxu0 0.0
  %8105 = vmatpush1.msra.mxu0 0.0
  %8106 = vmatprep.subr.mxu0 0.0
  %8107 = vmatpush1.msra.mxu0 0.0
  %8108 = vmatprep.subr.mxu0 0.0
  %8109 = vmatpush1.msra.mxu0 0.0
  %8110 = vmatprep.subr.mxu0 0.0
  %8111 = vmatpush1.msra.mxu0 0.0
  %8112 = vmatprep.subr.mxu0 0.0
  %8113 = vmatpush1.msra.mxu0 0.0
  %8114 = vmatprep.subr.mxu0 0.0
  %8115 = vmatpush1.msra.mxu0 %v7512
  %8116 = vmatprep.subr.mxu0 0.0
  %8117 = vmatpush1.msra.mxu0 %v7511
  %8118 = vmatprep.subr.mxu0 0.0
  %8119 = vmatpush1.msra.mxu0 %v7510
  %8120 = vmatprep.subr.mxu0 0.0
  %8121 = vmatpush1.msra.mxu0 %v7509
  %8122 = vmatprep.subr.mxu0 0.0
  %8123 = vmatpush2.msra.mxu0 0.0
  %8124 = vmatprep.subr.mxu0 0.0
  %8125 = vmatpush2.msra.mxu0 0.0
  %8126 = vmatprep.subr.mxu0 0.0
  %8127 = vmatpush2.msra.mxu0 0.0
  %8128 = vmatprep.subr.mxu0 0.0
  %8129 = vmatpush2.msra.mxu0 0.0
  %8130 = vmatprep.subr.mxu0 0.0
  %8131 = vmatpush2.msra.mxu0 0.0
  %8132 = vmatprep.subr.mxu0 0.0
  %8133 = vmatpush2.msra.mxu0 0.0
  %8134 = vmatprep.subr.mxu0 0.0
  %8135 = vmatpush2.msra.mxu0 0.0
  %8136 = vmatprep.subr.mxu0 0.0
  %8137 = vmatpush2.msra.mxu0 0.0
  %8138 = vmatprep.subr.mxu0 0.0
  %8139 = vmatpush2.msra.mxu0 0.0
  %8140 = vmatprep.subr.mxu0 0.0
  %8141 = vmatpush2.msra.mxu0 0.0
  %8142 = vmatprep.subr.mxu0 0.0
  %8143 = vmatpush2.msra.mxu0 0.0
  %8144 = vmatprep.subr.mxu0 0.0
  %8145 = vmatpush2.msra.mxu0 0.0
  %8146 = vmatprep.subr.mxu0 0.0
  %8147 = vmatpush2.msra.mxu0 0.0
  %8148 = vmatprep.subr.mxu0 0.0
  %8149 = vmatpush2.msra.mxu0 0.0
  %8150 = vmatprep.subr.mxu0 0.0
  %8151 = vmatpush2.msra.mxu0 0.0
  %8152 = vmatprep.subr.mxu0 0.0
  %8153 = vmatpush2.msra.mxu0 0.0
  %8154 = vmatprep.mubr.f32.mxu0 0.0
  %8155 = vmatmul.mubr.f32.gmra.mxu0 %v7514
  %v8156 = vpop.f32.mrf.mxu0
  %v8157 = vadd.f32 %v7772, %v8156
  %v8158 = vpop.f32.mrf.mxu0
  %8159 = vmatprep.mubr.f32.mxu0 0.0
  %8160 = vmatmul.mubr.f32.gmra.mxu0 %v7517
  %v8161 = vpop.f32.mrf.mxu0
  %v8162 = vadd.f32 %v7777, %v8161
  %v8163 = vpop.f32.mrf.mxu0
  %8164 = vmatprep.mubr.f32.mxu0 0.0
  %8165 = vmatmul.mubr.f32.gmra.mxu0 %v7520
  %v8166 = vpop.f32.mrf.mxu0
  %v8167 = vadd.f32 %v7782, %v8166
  %v8168 = vpop.f32.mrf.mxu0
  %8169 = vmatprep.mubr.f32.mxu0 0.0
  %8170 = vmatmul.mubr.f32.gmra.mxu0 %v7523
  %v8171 = vpop.f32.mrf.mxu0
  %v8172 = vadd.f32 %v7787, %v8171
  %v8173 = vpop.f32.mrf.mxu0
  %8174 = vmatprep.mubr.f32.mxu0 0.0
  %8175 = vmatmul.mubr.f32.gmra.mxu0 %v7526
  %v8176 = vpop.f32.mrf.mxu0
  %v8177 = vadd.f32 %v7792, %v8176
  %v8178 = vpop.f32.mrf.mxu0
  %8179 = vmatprep.mubr.f32.mxu0 0.0
  %8180 = vmatmul.mubr.f32.gmra.mxu0 %v7529
  %v8181 = vpop.f32.mrf.mxu0
  %v8182 = vadd.f32 %v7797, %v8181
  %v8183 = vpop.f32.mrf.mxu0
  %8184 = vmatprep.mubr.f32.mxu0 0.0
  %8185 = vmatmul.mubr.f32.gmra.mxu0 %v7532
  %v8186 = vpop.f32.mrf.mxu0
  %v8187 = vadd.f32 %v7802, %v8186
  %v8188 = vpop.f32.mrf.mxu0
  %8189 = vmatprep.mubr.f32.mxu0 0.0
  %8190 = vmatmul.mubr.f32.gmra.mxu0 %v7535
  %v8191 = vpop.f32.mrf.mxu0
  %v8192 = vadd.f32 %v7807, %v8191
  %v8193 = vpop.f32.mrf.mxu0
  %8194 = vmatprep.mubr.f32.mxu0 0.0
  %8195 = vmatmul.mubr.f32.gmra.mxu0 %v7538
  %v8196 = vpop.f32.mrf.mxu0
  %v8197 = vadd.f32 %v7812, %v8196
  %v8198 = vpop.f32.mrf.mxu0
  %8199 = vmatprep.mubr.f32.mxu0 0.0
  %8200 = vmatmul.mubr.f32.gmra.mxu0 %v7541
  %v8201 = vpop.f32.mrf.mxu0
  %v8202 = vadd.f32 %v7817, %v8201
  %v8203 = vpop.f32.mrf.mxu0
  %8204 = vmatprep.mubr.f32.mxu0 0.0
  %8205 = vmatmul.mubr.f32.gmra.mxu0 %v7544
  %v8206 = vpop.f32.mrf.mxu0
  %v8207 = vadd.f32 %v7822, %v8206
  %v8208 = vpop.f32.mrf.mxu0
  %8209 = vmatprep.mubr.f32.mxu0 0.0
  %8210 = vmatmul.mubr.f32.gmra.mxu0 %v7547
  %v8211 = vpop.f32.mrf.mxu0
  %v8212 = vadd.f32 %v7827, %v8211
  %v8213 = vpop.f32.mrf.mxu0
  %8214 = vmatprep.mubr.f32.mxu0 0.0
  %8215 = vmatmul.mubr.f32.gmra.mxu0 %v7550
  %v8216 = vpop.f32.mrf.mxu0
  %v8217 = vadd.f32 %v7832, %v8216
  %v8218 = vpop.f32.mrf.mxu0
  %8219 = vmatprep.mubr.f32.mxu0 0.0
  %8220 = vmatmul.mubr.f32.gmra.mxu0 %v7553
  %v8221 = vpop.f32.mrf.mxu0
  %v8222 = vadd.f32 %v7837, %v8221
  %v8223 = vpop.f32.mrf.mxu0
  %8224 = vmatprep.mubr.f32.mxu0 0.0
  %8225 = vmatmul.mubr.f32.gmra.mxu0 %v7556
  %v8226 = vpop.f32.mrf.mxu0
  %v8227 = vadd.f32 %v7842, %v8226
  %v8228 = vpop.f32.mrf.mxu0
  %8229 = vmatprep.mubr.f32.mxu0 0.0
  %8230 = vmatmul.mubr.f32.gmra.mxu0 %v7559
  %v8231 = vpop.f32.mrf.mxu0
  %v8232 = vadd.f32 %v7847, %v8231
  %v8233 = vpop.f32.mrf.mxu0
  %8234 = vmatprep.mubr.f32.mxu0 0.0
  %8235 = vmatmul.mubr.f32.gmra.mxu0 %v7562
  %v8236 = vpop.f32.mrf.mxu0
  %v8237 = vadd.f32 %v7852, %v8236
  %v8238 = vpop.f32.mrf.mxu0
  %8239 = vmatprep.mubr.f32.mxu0 0.0
  %8240 = vmatmul.mubr.f32.gmra.mxu0 %v7565
  %v8241 = vpop.f32.mrf.mxu0
  %v8242 = vadd.f32 %v7857, %v8241
  %v8243 = vpop.f32.mrf.mxu0
  %8244 = vmatprep.mubr.f32.mxu0 0.0
  %8245 = vmatmul.mubr.f32.gmra.mxu0 %v7568
  %v8246 = vpop.f32.mrf.mxu0
  %v8247 = vadd.f32 %v7862, %v8246
  %v8248 = vpop.f32.mrf.mxu0
  %8249 = vmatprep.mubr.f32.mxu0 0.0
  %8250 = vmatmul.mubr.f32.gmra.mxu0 %v7571
  %v8251 = vpop.f32.mrf.mxu0
  %v8252 = vadd.f32 %v7867, %v8251
  %v8253 = vpop.f32.mrf.mxu0
  %8254 = vmatprep.mubr.f32.mxu0 0.0
  %8255 = vmatmul.mubr.f32.gmra.mxu0 %v7574
  %v8256 = vpop.f32.mrf.mxu0
  %v8257 = vadd.f32 %v7872, %v8256
  %v8258 = vpop.f32.mrf.mxu0
  %8259 = vmatprep.mubr.f32.mxu0 0.0
  %8260 = vmatmul.mubr.f32.gmra.mxu0 %v7577
  %v8261 = vpop.f32.mrf.mxu0
  %v8262 = vadd.f32 %v7877, %v8261
  %v8263 = vpop.f32.mrf.mxu0
  %8264 = vmatprep.mubr.f32.mxu0 0.0
  %8265 = vmatmul.mubr.f32.gmra.mxu0 %v7580
  %v8266 = vpop.f32.mrf.mxu0
  %v8267 = vadd.f32 %v7882, %v8266
  %v8268 = vpop.f32.mrf.mxu0
  %8269 = vmatprep.mubr.f32.mxu0 0.0
  %8270 = vmatmul.mubr.f32.gmra.mxu0 %v7583
  %v8271 = vpop.f32.mrf.mxu0
  %v8272 = vadd.f32 %v7887, %v8271
  %v8273 = vpop.f32.mrf.mxu0
  %8274 = vmatprep.mubr.f32.mxu0 0.0
  %8275 = vmatmul.mubr.f32.gmra.mxu0 %v7586
  %v8276 = vpop.f32.mrf.mxu0
  %v8277 = vadd.f32 %v7892, %v8276
  %v8278 = vpop.f32.mrf.mxu0
  %8279 = vmatprep.mubr.f32.mxu0 0.0
  %8280 = vmatmul.mubr.f32.gmra.mxu0 %v7589
  %v8281 = vpop.f32.mrf.mxu0
  %v8282 = vadd.f32 %v7897, %v8281
  %v8283 = vpop.f32.mrf.mxu0
  %8284 = vmatprep.mubr.f32.mxu0 0.0
  %8285 = vmatmul.mubr.f32.gmra.mxu0 %v7592
  %v8286 = vpop.f32.mrf.mxu0
  %v8287 = vadd.f32 %v7902, %v8286
  %v8288 = vpop.f32.mrf.mxu0
  %8289 = vmatprep.mubr.f32.mxu0 0.0
  %8290 = vmatmul.mubr.f32.gmra.mxu0 %v7595
  %v8291 = vpop.f32.mrf.mxu0
  %v8292 = vadd.f32 %v7907, %v8291
  %v8293 = vpop.f32.mrf.mxu0
  %8294 = vmatprep.mubr.f32.mxu0 0.0
  %8295 = vmatmul.mubr.f32.gmra.mxu0 %v7598
  %v8296 = vpop.f32.mrf.mxu0
  %v8297 = vadd.f32 %v7912, %v8296
  %v8298 = vpop.f32.mrf.mxu0
  %8299 = vmatprep.mubr.f32.mxu0 0.0
  %8300 = vmatmul.mubr.f32.gmra.mxu0 %v7601
  %v8301 = vpop.f32.mrf.mxu0
  %v8302 = vadd.f32 %v7917, %v8301
  %v8303 = vpop.f32.mrf.mxu0
  %8304 = vmatprep.mubr.f32.mxu0 0.0
  %8305 = vmatmul.mubr.f32.gmra.mxu0 %v7604
  %v8306 = vpop.f32.mrf.mxu0
  %v8307 = vadd.f32 %v7922, %v8306
  %v8308 = vpop.f32.mrf.mxu0
  %8309 = vmatprep.mubr.f32.mxu0 0.0
  %8310 = vmatmul.mubr.f32.gmra.mxu0 %v7607
  %v8311 = vpop.f32.mrf.mxu0
  %v8312 = vadd.f32 %v7927, %v8311
  %v8313 = vpop.f32.mrf.mxu0
  %8314 = vmatprep.mubr.f32.mxu0 0.0
  %8315 = vmatmul.mubr.f32.gmra.mxu0 %v7610
  %v8316 = vpop.f32.mrf.mxu0
  %v8317 = vadd.f32 %v7932, %v8316
  %v8318 = vpop.f32.mrf.mxu0
  %8319 = vmatprep.mubr.f32.mxu0 0.0
  %8320 = vmatmul.mubr.f32.gmra.mxu0 %v7613
  %v8321 = vpop.f32.mrf.mxu0
  %v8322 = vadd.f32 %v7937, %v8321
  %v8323 = vpop.f32.mrf.mxu0
  %8324 = vmatprep.mubr.f32.mxu0 0.0
  %8325 = vmatmul.mubr.f32.gmra.mxu0 %v7616
  %v8326 = vpop.f32.mrf.mxu0
  %v8327 = vadd.f32 %v7942, %v8326
  %v8328 = vpop.f32.mrf.mxu0
  %8329 = vmatprep.mubr.f32.mxu0 0.0
  %8330 = vmatmul.mubr.f32.gmra.mxu0 %v7619
  %v8331 = vpop.f32.mrf.mxu0
  %v8332 = vadd.f32 %v7947, %v8331
  %v8333 = vpop.f32.mrf.mxu0
  %8334 = vmatprep.mubr.f32.mxu0 0.0
  %8335 = vmatmul.mubr.f32.gmra.mxu0 %v7622
  %v8336 = vpop.f32.mrf.mxu0
  %v8337 = vadd.f32 %v7952, %v8336
  %v8338 = vpop.f32.mrf.mxu0
  %8339 = vmatprep.mubr.f32.mxu0 0.0
  %8340 = vmatmul.mubr.f32.gmra.mxu0 %v7625
  %v8341 = vpop.f32.mrf.mxu0
  %v8342 = vadd.f32 %v7957, %v8341
  %v8343 = vpop.f32.mrf.mxu0
  %8344 = vmatprep.mubr.f32.mxu0 0.0
  %8345 = vmatmul.mubr.f32.gmra.mxu0 %v7628
  %v8346 = vpop.f32.mrf.mxu0
  %v8347 = vadd.f32 %v7962, %v8346
  %v8348 = vpop.f32.mrf.mxu0
  %8349 = vmatprep.mubr.f32.mxu0 0.0
  %8350 = vmatmul.mubr.f32.gmra.mxu0 %v7631
  %v8351 = vpop.f32.mrf.mxu0
  %v8352 = vadd.f32 %v7967, %v8351
  %v8353 = vpop.f32.mrf.mxu0
  %8354 = vmatprep.mubr.f32.mxu0 0.0
  %8355 = vmatmul.mubr.f32.gmra.mxu0 %v7634
  %v8356 = vpop.f32.mrf.mxu0
  %v8357 = vadd.f32 %v7972, %v8356
  %v8358 = vpop.f32.mrf.mxu0
  %8359 = vmatprep.mubr.f32.mxu0 0.0
  %8360 = vmatmul.mubr.f32.gmra.mxu0 %v7637
  %v8361 = vpop.f32.mrf.mxu0
  %v8362 = vadd.f32 %v7977, %v8361
  %v8363 = vpop.f32.mrf.mxu0
  %8364 = vmatprep.mubr.f32.mxu0 0.0
  %8365 = vmatmul.mubr.f32.gmra.mxu0 %v7640
  %v8366 = vpop.f32.mrf.mxu0
  %v8367 = vadd.f32 %v7982, %v8366
  %v8368 = vpop.f32.mrf.mxu0
  %8369 = vmatprep.mubr.f32.mxu0 0.0
  %8370 = vmatmul.mubr.f32.gmra.mxu0 %v7643
  %v8371 = vpop.f32.mrf.mxu0
  %v8372 = vadd.f32 %v7987, %v8371
  %v8373 = vpop.f32.mrf.mxu0
  %8374 = vmatprep.mubr.f32.mxu0 0.0
  %8375 = vmatmul.mubr.f32.gmra.mxu0 %v7646
  %v8376 = vpop.f32.mrf.mxu0
  %v8377 = vadd.f32 %v7992, %v8376
  %v8378 = vpop.f32.mrf.mxu0
  %8379 = vmatprep.mubr.f32.mxu0 0.0
  %8380 = vmatmul.mubr.f32.gmra.mxu0 %v7649
  %v8381 = vpop.f32.mrf.mxu0
  %v8382 = vadd.f32 %v7997, %v8381
  %v8383 = vpop.f32.mrf.mxu0
  %8384 = vmatprep.mubr.f32.mxu0 0.0
  %8385 = vmatmul.mubr.f32.gmra.mxu0 %v7652
  %v8386 = vpop.f32.mrf.mxu0
  %v8387 = vadd.f32 %v8002, %v8386
  %v8388 = vpop.f32.mrf.mxu0
  %8389 = vmatprep.mubr.f32.mxu0 0.0
  %8390 = vmatmul.mubr.f32.gmra.mxu0 %v7655
  %v8391 = vpop.f32.mrf.mxu0
  %v8392 = vadd.f32 %v8007, %v8391
  %v8393 = vpop.f32.mrf.mxu0
  %8394 = vmatprep.mubr.f32.mxu0 0.0
  %8395 = vmatmul.mubr.f32.gmra.mxu0 %v7658
  %v8396 = vpop.f32.mrf.mxu0
  %v8397 = vadd.f32 %v8012, %v8396
  %v8398 = vpop.f32.mrf.mxu0
  %8399 = vmatprep.mubr.f32.mxu0 0.0
  %8400 = vmatmul.mubr.f32.gmra.mxu0 %v7661
  %v8401 = vpop.f32.mrf.mxu0
  %v8402 = vadd.f32 %v8017, %v8401
  %v8403 = vpop.f32.mrf.mxu0
  %8404 = vmatprep.mubr.f32.mxu0 0.0
  %8405 = vmatmul.mubr.f32.gmra.mxu0 %v7664
  %v8406 = vpop.f32.mrf.mxu0
  %v8407 = vadd.f32 %v8022, %v8406
  %v8408 = vpop.f32.mrf.mxu0
  %8409 = vmatprep.mubr.f32.mxu0 0.0
  %8410 = vmatmul.mubr.f32.gmra.mxu0 %v7667
  %v8411 = vpop.f32.mrf.mxu0
  %v8412 = vadd.f32 %v8027, %v8411
  %v8413 = vpop.f32.mrf.mxu0
  %8414 = vmatprep.mubr.f32.mxu0 0.0
  %8415 = vmatmul.mubr.f32.gmra.mxu0 %v7670
  %v8416 = vpop.f32.mrf.mxu0
  %v8417 = vadd.f32 %v8032, %v8416
  %v8418 = vpop.f32.mrf.mxu0
  %8419 = vmatprep.mubr.f32.mxu0 0.0
  %8420 = vmatmul.mubr.f32.gmra.mxu0 %v7673
  %v8421 = vpop.f32.mrf.mxu0
  %v8422 = vadd.f32 %v8037, %v8421
  %v8423 = vpop.f32.mrf.mxu0
  %8424 = vmatprep.mubr.f32.mxu0 0.0
  %8425 = vmatmul.mubr.f32.gmra.mxu0 %v7676
  %v8426 = vpop.f32.mrf.mxu0
  %v8427 = vadd.f32 %v8042, %v8426
  %v8428 = vpop.f32.mrf.mxu0
  %8429 = vmatprep.mubr.f32.mxu0 0.0
  %8430 = vmatmul.mubr.f32.gmra.mxu0 %v7679
  %v8431 = vpop.f32.mrf.mxu0
  %v8432 = vadd.f32 %v8047, %v8431
  %v8433 = vpop.f32.mrf.mxu0
  %8434 = vmatprep.mubr.f32.mxu0 0.0
  %8435 = vmatmul.mubr.f32.gmra.mxu0 %v7682
  %v8436 = vpop.f32.mrf.mxu0
  %v8437 = vadd.f32 %v8052, %v8436
  %v8438 = vpop.f32.mrf.mxu0
  %8439 = vmatprep.mubr.f32.mxu0 0.0
  %8440 = vmatmul.mubr.f32.gmra.mxu0 %v7685
  %v8441 = vpop.f32.mrf.mxu0
  %v8442 = vadd.f32 %v8057, %v8441
  %v8443 = vpop.f32.mrf.mxu0
  %8444 = vmatprep.mubr.f32.mxu0 0.0
  %8445 = vmatmul.mubr.f32.gmra.mxu0 %v7688
  %v8446 = vpop.f32.mrf.mxu0
  %v8447 = vadd.f32 %v8062, %v8446
  %v8448 = vpop.f32.mrf.mxu0
  %8449 = vmatprep.mubr.f32.mxu0 0.0
  %8450 = vmatmul.mubr.f32.gmra.mxu0 %v7691
  %v8451 = vpop.f32.mrf.mxu0
  %v8452 = vadd.f32 %v8067, %v8451
  %v8453 = vpop.f32.mrf.mxu0
  %8454 = vmatprep.mubr.f32.mxu0 0.0
  %8455 = vmatmul.mubr.f32.gmra.mxu0 %v7694
  %v8456 = vpop.f32.mrf.mxu0
  %v8457 = vadd.f32 %v8072, %v8456
  %v8458 = vpop.f32.mrf.mxu0
  %8459 = vmatprep.mubr.f32.mxu0 0.0
  %8460 = vmatmul.mubr.f32.gmra.mxu0 %v7697
  %v8461 = vpop.f32.mrf.mxu0
  %v8462 = vadd.f32 %v8077, %v8461
  %v8463 = vpop.f32.mrf.mxu0
  %8464 = vmatprep.mubr.f32.mxu0 0.0
  %8465 = vmatmul.mubr.f32.gmra.mxu0 %v7700
  %v8466 = vpop.f32.mrf.mxu0
  %v8467 = vadd.f32 %v8082, %v8466
  %v8468 = vpop.f32.mrf.mxu0
  %8469 = vmatprep.mubr.f32.mxu0 0.0
  %8470 = vmatmul.mubr.f32.gmra.mxu0 %v7703
  %v8471 = vpop.f32.mrf.mxu0
  %v8472 = vadd.f32 %v8087, %v8471
  %v8473 = vpop.f32.mrf.mxu0
  %8474 = vdwg.mxu0
  %v8475 = vsel %vm85, %v8157, 0.0
  %v8476 = vsel %vm85, %v8162, 0.0
  %v8477 = vadd.f32 %v8475, %v8476
  %v8478 = vsel %vm85, %v8167, 0.0
  %v8479 = vadd.f32 %v8477, %v8478
  %v8480 = vsel %vm85, %v8172, 0.0
  %v8481 = vadd.f32 %v8479, %v8480
  %v8482 = vsel %vm85, %v8177, 0.0
  %v8483 = vadd.f32 %v8481, %v8482
  %v8484 = vsel %vm85, %v8182, 0.0
  %v8485 = vadd.f32 %v8483, %v8484
  %v8486 = vsel %vm85, %v8187, 0.0
  %v8487 = vadd.f32 %v8485, %v8486
  %v8488 = vsel %vm85, %v8192, 0.0
  %v8489 = vadd.f32 %v8487, %v8488
  %v8490 = vsel %vm85, %v8197, 0.0
  %v8491 = vadd.f32 %v8489, %v8490
  %v8492 = vsel %vm85, %v8202, 0.0
  %v8493 = vadd.f32 %v8491, %v8492
  %v8494 = vsel %vm85, %v8207, 0.0
  %v8495 = vadd.f32 %v8493, %v8494
  %v8496 = vsel %vm85, %v8212, 0.0
  %v8497 = vadd.f32 %v8495, %v8496
  %v8498 = vsel %vm85, %v8217, 0.0
  %v8499 = vadd.f32 %v8497, %v8498
  %v8500 = vsel %vm85, %v8222, 0.0
  %v8501 = vadd.f32 %v8499, %v8500
  %v8502 = vsel %vm85, %v8227, 0.0
  %v8503 = vadd.f32 %v8501, %v8502
  %v8504 = vsel %vm85, %v8232, 0.0
  %v8505 = vadd.f32 %v8503, %v8504
  %v8506 = vsel %vm85, %v8237, 0.0
  %v8507 = vadd.f32 %v8505, %v8506
  %v8508 = vsel %vm85, %v8242, 0.0
  %v8509 = vadd.f32 %v8507, %v8508
  %v8510 = vsel %vm85, %v8247, 0.0
  %v8511 = vadd.f32 %v8509, %v8510
  %v8512 = vsel %vm85, %v8252, 0.0
  %v8513 = vadd.f32 %v8511, %v8512
  %v8514 = vsel %vm85, %v8257, 0.0
  %v8515 = vadd.f32 %v8513, %v8514
  %v8516 = vsel %vm85, %v8262, 0.0
  %v8517 = vadd.f32 %v8515, %v8516
  %v8518 = vsel %vm85, %v8267, 0.0
  %v8519 = vadd.f32 %v8517, %v8518
  %v8520 = vsel %vm85, %v8272, 0.0
  %v8521 = vadd.f32 %v8519, %v8520
  %v8522 = vsel %vm85, %v8277, 0.0
  %v8523 = vadd.f32 %v8521, %v8522
  %v8524 = vsel %vm85, %v8282, 0.0
  %v8525 = vadd.f32 %v8523, %v8524
  %v8526 = vsel %vm85, %v8287, 0.0
  %v8527 = vadd.f32 %v8525, %v8526
  %v8528 = vsel %vm85, %v8292, 0.0
  %v8529 = vadd.f32 %v8527, %v8528
  %v8530 = vsel %vm85, %v8297, 0.0
  %v8531 = vadd.f32 %v8529, %v8530
  %v8532 = vsel %vm85, %v8302, 0.0
  %v8533 = vadd.f32 %v8531, %v8532
  %v8534 = vsel %vm85, %v8307, 0.0
  %v8535 = vadd.f32 %v8533, %v8534
  %v8536 = vsel %vm85, %v8312, 0.0
  %v8537 = vadd.f32 %v8535, %v8536
  %v8538 = vsel %vm85, %v8317, 0.0
  %v8539 = vadd.f32 %v8537, %v8538
  %v8540 = vsel %vm85, %v8322, 0.0
  %v8541 = vadd.f32 %v8539, %v8540
  %v8542 = vsel %vm85, %v8327, 0.0
  %v8543 = vadd.f32 %v8541, %v8542
  %v8544 = vsel %vm85, %v8332, 0.0
  %v8545 = vadd.f32 %v8543, %v8544
  %v8546 = vsel %vm85, %v8337, 0.0
  %v8547 = vadd.f32 %v8545, %v8546
  %v8548 = vsel %vm85, %v8342, 0.0
  %v8549 = vadd.f32 %v8547, %v8548
  %v8550 = vsel %vm85, %v8347, 0.0
  %v8551 = vadd.f32 %v8549, %v8550
  %v8552 = vsel %vm85, %v8352, 0.0
  %v8553 = vadd.f32 %v8551, %v8552
  %v8554 = vsel %vm85, %v8357, 0.0
  %v8555 = vadd.f32 %v8553, %v8554
  %v8556 = vsel %vm85, %v8362, 0.0
  %v8557 = vadd.f32 %v8555, %v8556
  %v8558 = vsel %vm85, %v8367, 0.0
  %v8559 = vadd.f32 %v8557, %v8558
  %v8560 = vsel %vm85, %v8372, 0.0
  %v8561 = vadd.f32 %v8559, %v8560
  %v8562 = vsel %vm85, %v8377, 0.0
  %v8563 = vadd.f32 %v8561, %v8562
  %v8564 = vsel %vm85, %v8382, 0.0
  %v8565 = vadd.f32 %v8563, %v8564
  %v8566 = vsel %vm85, %v8387, 0.0
  %v8567 = vadd.f32 %v8565, %v8566
  %v8568 = vsel %vm85, %v8392, 0.0
  %v8569 = vadd.f32 %v8567, %v8568
  %v8570 = vsel %vm85, %v8397, 0.0
  %v8571 = vadd.f32 %v8569, %v8570
  %v8572 = vsel %vm85, %v8402, 0.0
  %v8573 = vadd.f32 %v8571, %v8572
  %v8574 = vsel %vm85, %v8407, 0.0
  %v8575 = vadd.f32 %v8573, %v8574
  %v8576 = vsel %vm85, %v8412, 0.0
  %v8577 = vadd.f32 %v8575, %v8576
  %v8578 = vsel %vm85, %v8417, 0.0
  %v8579 = vadd.f32 %v8577, %v8578
  %v8580 = vsel %vm85, %v8422, 0.0
  %v8581 = vadd.f32 %v8579, %v8580
  %v8582 = vsel %vm85, %v8427, 0.0
  %v8583 = vadd.f32 %v8581, %v8582
  %v8584 = vsel %vm85, %v8432, 0.0
  %v8585 = vadd.f32 %v8583, %v8584
  %v8586 = vsel %vm85, %v8437, 0.0
  %v8587 = vadd.f32 %v8585, %v8586
  %v8588 = vsel %vm85, %v8442, 0.0
  %v8589 = vadd.f32 %v8587, %v8588
  %v8590 = vsel %vm85, %v8447, 0.0
  %v8591 = vadd.f32 %v8589, %v8590
  %v8592 = vsel %vm85, %v8452, 0.0
  %v8593 = vadd.f32 %v8591, %v8592
  %v8594 = vsel %vm85, %v8457, 0.0
  %v8595 = vadd.f32 %v8593, %v8594
  %v8596 = vsel %vm85, %v8462, 0.0
  %v8597 = vadd.f32 %v8595, %v8596
  %v8598 = vsel %vm85, %v8467, 0.0
  %v8599 = vadd.f32 %v8597, %v8598
  %v8600 = vsel %vm85, %v8472, 0.0
  %v8601 = vadd.f32 %v8599, %v8600
  %v8602 = vrot.slane %v8601, 4
  %v8603 = vadd.f32 %v8601, %v8602
  %v8604 = vrot.slane %v8603, 2
  %v8605 = vadd.f32 %v8603, %v8604
  %v8606 = vrot.slane %v8605, 1
  %v8607 = vadd.f32 %v8605, %v8606
  %v8608 = vmul.f32 %v8157, %v8157
  %v8609 = vmul.f32 %v8162, %v8162
  %v8610 = vmul.f32 %v8167, %v8167
  %v8611 = vmul.f32 %v8172, %v8172
  %v8612 = vmul.f32 %v8177, %v8177
  %v8613 = vmul.f32 %v8182, %v8182
  %v8614 = vmul.f32 %v8187, %v8187
  %v8615 = vmul.f32 %v8192, %v8192
  %v8616 = vmul.f32 %v8197, %v8197
  %v8617 = vmul.f32 %v8202, %v8202
  %v8618 = vmul.f32 %v8207, %v8207
  %v8619 = vmul.f32 %v8212, %v8212
  %v8620 = vmul.f32 %v8217, %v8217
  %v8621 = vmul.f32 %v8222, %v8222
  %v8622 = vmul.f32 %v8227, %v8227
  %v8623 = vmul.f32 %v8232, %v8232
  %v8624 = vmul.f32 %v8237, %v8237
  %v8625 = vmul.f32 %v8242, %v8242
  %v8626 = vmul.f32 %v8247, %v8247
  %v8627 = vmul.f32 %v8252, %v8252
  %v8628 = vmul.f32 %v8257, %v8257
  %v8629 = vmul.f32 %v8262, %v8262
  %v8630 = vmul.f32 %v8267, %v8267
  %v8631 = vmul.f32 %v8272, %v8272
  %v8632 = vmul.f32 %v8277, %v8277
  %v8633 = vmul.f32 %v8282, %v8282
  %v8634 = vmul.f32 %v8287, %v8287
  %v8635 = vmul.f32 %v8292, %v8292
  %v8636 = vmul.f32 %v8297, %v8297
  %v8637 = vmul.f32 %v8302, %v8302
  %v8638 = vmul.f32 %v8307, %v8307
  %v8639 = vmul.f32 %v8312, %v8312
  %v8640 = vmul.f32 %v8317, %v8317
  %v8641 = vmul.f32 %v8322, %v8322
  %v8642 = vmul.f32 %v8327, %v8327
  %v8643 = vmul.f32 %v8332, %v8332
  %v8644 = vmul.f32 %v8337, %v8337
  %v8645 = vmul.f32 %v8342, %v8342
  %v8646 = vmul.f32 %v8347, %v8347
  %v8647 = vmul.f32 %v8352, %v8352
  %v8648 = vmul.f32 %v8357, %v8357
  %v8649 = vmul.f32 %v8362, %v8362
  %v8650 = vmul.f32 %v8367, %v8367
  %v8651 = vmul.f32 %v8372, %v8372
  %v8652 = vmul.f32 %v8377, %v8377
  %v8653 = vmul.f32 %v8382, %v8382
  %v8654 = vmul.f32 %v8387, %v8387
  %v8655 = vmul.f32 %v8392, %v8392
  %v8656 = vmul.f32 %v8397, %v8397
  %v8657 = vmul.f32 %v8402, %v8402
  %v8658 = vmul.f32 %v8407, %v8407
  %v8659 = vmul.f32 %v8412, %v8412
  %v8660 = vmul.f32 %v8417, %v8417
  %v8661 = vmul.f32 %v8422, %v8422
  %v8662 = vmul.f32 %v8427, %v8427
  %v8663 = vmul.f32 %v8432, %v8432
  %v8664 = vmul.f32 %v8437, %v8437
  %v8665 = vmul.f32 %v8442, %v8442
  %v8666 = vmul.f32 %v8447, %v8447
  %v8667 = vmul.f32 %v8452, %v8452
  %v8668 = vmul.f32 %v8457, %v8457
  %v8669 = vmul.f32 %v8462, %v8462
  %v8670 = vmul.f32 %v8467, %v8467
  %v8671 = vmul.f32 %v8472, %v8472
  %v8672 = vsel %vm85, %v8608, 0.0
  %v8673 = vsel %vm85, %v8609, 0.0
  %v8674 = vadd.f32 %v8672, %v8673
  %v8675 = vsel %vm85, %v8610, 0.0
  %v8676 = vadd.f32 %v8674, %v8675
  %v8677 = vsel %vm85, %v8611, 0.0
  %v8678 = vadd.f32 %v8676, %v8677
  %v8679 = vsel %vm85, %v8612, 0.0
  %v8680 = vadd.f32 %v8678, %v8679
  %v8681 = vsel %vm85, %v8613, 0.0
  %v8682 = vadd.f32 %v8680, %v8681
  %v8683 = vsel %vm85, %v8614, 0.0
  %v8684 = vadd.f32 %v8682, %v8683
  %v8685 = vsel %vm85, %v8615, 0.0
  %v8686 = vadd.f32 %v8684, %v8685
  %v8687 = vsel %vm85, %v8616, 0.0
  %v8688 = vadd.f32 %v8686, %v8687
  %v8689 = vsel %vm85, %v8617, 0.0
  %v8690 = vadd.f32 %v8688, %v8689
  %v8691 = vsel %vm85, %v8618, 0.0
  %v8692 = vadd.f32 %v8690, %v8691
  %v8693 = vsel %vm85, %v8619, 0.0
  %v8694 = vadd.f32 %v8692, %v8693
  %v8695 = vsel %vm85, %v8620, 0.0
  %v8696 = vadd.f32 %v8694, %v8695
  %v8697 = vsel %vm85, %v8621, 0.0
  %v8698 = vadd.f32 %v8696, %v8697
  %v8699 = vsel %vm85, %v8622, 0.0
  %v8700 = vadd.f32 %v8698, %v8699
  %v8701 = vsel %vm85, %v8623, 0.0
  %v8702 = vadd.f32 %v8700, %v8701
  %v8703 = vsel %vm85, %v8624, 0.0
  %v8704 = vadd.f32 %v8702, %v8703
  %v8705 = vsel %vm85, %v8625, 0.0
  %v8706 = vadd.f32 %v8704, %v8705
  %v8707 = vsel %vm85, %v8626, 0.0
  %v8708 = vadd.f32 %v8706, %v8707
  %v8709 = vsel %vm85, %v8627, 0.0
  %v8710 = vadd.f32 %v8708, %v8709
  %v8711 = vsel %vm85, %v8628, 0.0
  %v8712 = vadd.f32 %v8710, %v8711
  %v8713 = vsel %vm85, %v8629, 0.0
  %v8714 = vadd.f32 %v8712, %v8713
  %v8715 = vsel %vm85, %v8630, 0.0
  %v8716 = vadd.f32 %v8714, %v8715
  %v8717 = vsel %vm85, %v8631, 0.0
  %v8718 = vadd.f32 %v8716, %v8717
  %v8719 = vsel %vm85, %v8632, 0.0
  %v8720 = vadd.f32 %v8718, %v8719
  %v8721 = vsel %vm85, %v8633, 0.0
  %v8722 = vadd.f32 %v8720, %v8721
  %v8723 = vsel %vm85, %v8634, 0.0
  %v8724 = vadd.f32 %v8722, %v8723
  %v8725 = vsel %vm85, %v8635, 0.0
  %v8726 = vadd.f32 %v8724, %v8725
  %v8727 = vsel %vm85, %v8636, 0.0
  %v8728 = vadd.f32 %v8726, %v8727
  %v8729 = vsel %vm85, %v8637, 0.0
  %v8730 = vadd.f32 %v8728, %v8729
  %v8731 = vsel %vm85, %v8638, 0.0
  %v8732 = vadd.f32 %v8730, %v8731
  %v8733 = vsel %vm85, %v8639, 0.0
  %v8734 = vadd.f32 %v8732, %v8733
  %v8735 = vsel %vm85, %v8640, 0.0
  %v8736 = vadd.f32 %v8734, %v8735
  %v8737 = vsel %vm85, %v8641, 0.0
  %v8738 = vadd.f32 %v8736, %v8737
  %v8739 = vsel %vm85, %v8642, 0.0
  %v8740 = vadd.f32 %v8738, %v8739
  %v8741 = vsel %vm85, %v8643, 0.0
  %v8742 = vadd.f32 %v8740, %v8741
  %v8743 = vsel %vm85, %v8644, 0.0
  %v8744 = vadd.f32 %v8742, %v8743
  %v8745 = vsel %vm85, %v8645, 0.0
  %v8746 = vadd.f32 %v8744, %v8745
  %v8747 = vsel %vm85, %v8646, 0.0
  %v8748 = vadd.f32 %v8746, %v8747
  %v8749 = vsel %vm85, %v8647, 0.0
  %v8750 = vadd.f32 %v8748, %v8749
  %v8751 = vsel %vm85, %v8648, 0.0
  %v8752 = vadd.f32 %v8750, %v8751
  %v8753 = vsel %vm85, %v8649, 0.0
  %v8754 = vadd.f32 %v8752, %v8753
  %v8755 = vsel %vm85, %v8650, 0.0
  %v8756 = vadd.f32 %v8754, %v8755
  %v8757 = vsel %vm85, %v8651, 0.0
  %v8758 = vadd.f32 %v8756, %v8757
  %v8759 = vsel %vm85, %v8652, 0.0
  %v8760 = vadd.f32 %v8758, %v8759
  %v8761 = vsel %vm85, %v8653, 0.0
  %v8762 = vadd.f32 %v8760, %v8761
  %v8763 = vsel %vm85, %v8654, 0.0
  %v8764 = vadd.f32 %v8762, %v8763
  %v8765 = vsel %vm85, %v8655, 0.0
  %v8766 = vadd.f32 %v8764, %v8765
  %v8767 = vsel %vm85, %v8656, 0.0
  %v8768 = vadd.f32 %v8766, %v8767
  %v8769 = vsel %vm85, %v8657, 0.0
  %v8770 = vadd.f32 %v8768, %v8769
  %v8771 = vsel %vm85, %v8658, 0.0
  %v8772 = vadd.f32 %v8770, %v8771
  %v8773 = vsel %vm85, %v8659, 0.0
  %v8774 = vadd.f32 %v8772, %v8773
  %v8775 = vsel %vm85, %v8660, 0.0
  %v8776 = vadd.f32 %v8774, %v8775
  %v8777 = vsel %vm85, %v8661, 0.0
  %v8778 = vadd.f32 %v8776, %v8777
  %v8779 = vsel %vm85, %v8662, 0.0
  %v8780 = vadd.f32 %v8778, %v8779
  %v8781 = vsel %vm85, %v8663, 0.0
  %v8782 = vadd.f32 %v8780, %v8781
  %v8783 = vsel %vm85, %v8664, 0.0
  %v8784 = vadd.f32 %v8782, %v8783
  %v8785 = vsel %vm85, %v8665, 0.0
  %v8786 = vadd.f32 %v8784, %v8785
  %v8787 = vsel %vm85, %v8666, 0.0
  %v8788 = vadd.f32 %v8786, %v8787
  %v8789 = vsel %vm85, %v8667, 0.0
  %v8790 = vadd.f32 %v8788, %v8789
  %v8791 = vsel %vm85, %v8668, 0.0
  %v8792 = vadd.f32 %v8790, %v8791
  %v8793 = vsel %vm85, %v8669, 0.0
  %v8794 = vadd.f32 %v8792, %v8793
  %v8795 = vsel %vm85, %v8670, 0.0
  %v8796 = vadd.f32 %v8794, %v8795
  %v8797 = vsel %vm85, %v8671, 0.0
  %v8798 = vadd.f32 %v8796, %v8797
  %v8799 = vrot.slane %v8798, 4
  %v8800 = vadd.f32 %v8798, %v8799
  %v8801 = vrot.slane %v8800, 2
  %v8802 = vadd.f32 %v8800, %v8801
  %v8803 = vrot.slane %v8802, 1
  %v8804 = vadd.f32 %v8802, %v8803
  %v8805 = vmul.f32 %v8607, 0.001953125
  %v8806 = vmul.f32 %v8804, 0.001953125
  %v8807 = vmul.f32 %v8805, %v8805
  %v8808 = vsub.f32 %v8806, %v8807
  %v8809 = vadd.f32 %v8808, 1e-05
  %v8810 = vrsqrt.pop %v8809
  %v8811 = vmul.f32 %v8810, %v19
  %v8812 = vmul.f32 %v8805, %v8811
  %v8813 = vsub.f32 %v20, %v8812
  %v8814 = vld [vmem:[%s920 + $0x1] sm:$0xff]
  %v8815 = vld [vmem:[%s920 + $0x9] sm:$0xff]
  %v8816 = vld [vmem:[%s920 + $0x19] sm:$0xff]
  %v8817 = vld [vmem:[%s920 + $0x21] sm:$0xff]
  %v8818 = vld [vmem:[%s920 + $0x31] sm:$0xff]
  %v8819 = vld [vmem:[%s920 + $0x39] sm:$0xff]
  %v8820 = vld [vmem:[%s920 + $0x49] sm:$0xff]
  %v8821 = vld [vmem:[%s920 + $0x51] sm:$0xff]
  %v8822 = vld [vmem:[%s920 + $0x61] sm:$0xff]
  %v8823 = vld [vmem:[%s920 + $0x69] sm:$0xff]
  %v8824 = vld [vmem:[%s920 + $0x79] sm:$0xff]
  %v8825 = vld [vmem:[%s920 + $0x81] sm:$0xff]
  %v8826 = vld [vmem:[%s920 + $0x91] sm:$0xff]
  %v8827 = vld [vmem:[%s920 + $0x99] sm:$0xff]
  %v8828 = vld [vmem:[%s920 + $0xa9] sm:$0xff]
  %v8829 = vld [vmem:[%s920 + $0xb1] sm:$0xff]
  %v8830 = vld [vmem:[%s920 + $0xc1] sm:$0xff]
  %v8831 = vld [vmem:[%s920 + $0xc9] sm:$0xff]
  %v8832 = vld [vmem:[%s920 + $0xd9] sm:$0xff]
  %v8833 = vld [vmem:[%s920 + $0xe1] sm:$0xff]
  %v8834 = vld [vmem:[%s920 + $0xf1] sm:$0xff]
  %v8835 = vld [vmem:[%s920 + $0xf9] sm:$0xff]
  %v8836 = vld [vmem:[%s920 + $0x109] sm:$0xff]
  %v8837 = vld [vmem:[%s920 + $0x111] sm:$0xff]
  %v8838 = vld [vmem:[%s920 + $0x121] sm:$0xff]
  %v8839 = vld [vmem:[%s920 + $0x129] sm:$0xff]
  %v8840 = vld [vmem:[%s920 + $0x139] sm:$0xff]
  %v8841 = vld [vmem:[%s920 + $0x141] sm:$0xff]
  %v8842 = vld [vmem:[%s920 + $0x151] sm:$0xff]
  %v8843 = vld [vmem:[%s920 + $0x159] sm:$0xff]
  %v8844 = vld [vmem:[%s920 + $0x169] sm:$0xff]
  %v8845 = vld [vmem:[%s920 + $0x171] sm:$0xff]
  %v8846 = vld [vmem:[%s920 + $0x1b1] sm:$0xff]
  %v8847 = vld [vmem:[%s920 + $0x1b9] sm:$0xff]
  %v8848 = vld [vmem:[%s920 + $0x1c9] sm:$0xff]
  %v8849 = vld [vmem:[%s920 + $0x1d1] sm:$0xff]
  %v8850 = vld [vmem:[%s920 + $0x1e1] sm:$0xff]
  %v8851 = vld [vmem:[%s920 + $0x1e9] sm:$0xff]
  %v8852 = vld [vmem:[%s920 + $0x1f9] sm:$0xff]
  %v8853 = vld [vmem:[%s920 + $0x201] sm:$0xff]
  %v8854 = vld [vmem:[%s920 + $0x211] sm:$0xff]
  %v8855 = vld [vmem:[%s920 + $0x219] sm:$0xff]
  %v8856 = vld [vmem:[%s920 + $0x229] sm:$0xff]
  %v8857 = vld [vmem:[%s920 + $0x231] sm:$0xff]
  %v8858 = vld [vmem:[%s920 + $0x241] sm:$0xff]
  %v8859 = vld [vmem:[%s920 + $0x249] sm:$0xff]
  %v8860 = vld [vmem:[%s920 + $0x259] sm:$0xff]
  %v8861 = vld [vmem:[%s920 + $0x261] sm:$0xff]
  %v8862 = vld [vmem:[%s920 + $0x271] sm:$0xff]
  %v8863 = vld [vmem:[%s920 + $0x279] sm:$0xff]
  %v8864 = vld [vmem:[%s920 + $0x289] sm:$0xff]
  %v8865 = vld [vmem:[%s920 + $0x291] sm:$0xff]
  %v8866 = vld [vmem:[%s920 + $0x2a1] sm:$0xff]
  %v8867 = vld [vmem:[%s920 + $0x2a9] sm:$0xff]
  %v8868 = vld [vmem:[%s920 + $0x2b9] sm:$0xff]
  %v8869 = vld [vmem:[%s920 + $0x2c1] sm:$0xff]
  %v8870 = vld [vmem:[%s920 + $0x2d1] sm:$0xff]
  %v8871 = vld [vmem:[%s920 + $0x2d9] sm:$0xff]
  %v8872 = vld [vmem:[%s920 + $0x2e9] sm:$0xff]
  %v8873 = vld [vmem:[%s920 + $0x2f1] sm:$0xff]
  %v8874 = vld [vmem:[%s920 + $0x301] sm:$0xff]
  %v8875 = vld [vmem:[%s920 + $0x309] sm:$0xff]
  %v8876 = vld [vmem:[%s920 + $0x319] sm:$0xff]
  %v8877 = vld [vmem:[%s920 + $0x321] sm:$0xff]
  %v8878 = vlaneseq
  %v8879 = vshrl.u32 %v8878, 7
  %v8880 = vsub.s32 0, %v8879
  %v8881 = vrot.slane %v8811, %v8880
  %v8882 = vmul.f32 %v8157, %v8881
  %v8883 = vmul.f32 %v8162, %v8881
  %v8884 = vmul.f32 %v8167, %v8881
  %v8885 = vmul.f32 %v8172, %v8881
  %v8886 = vmul.f32 %v8177, %v8881
  %v8887 = vmul.f32 %v8182, %v8881
  %v8888 = vmul.f32 %v8187, %v8881
  %v8889 = vmul.f32 %v8192, %v8881
  %v8890 = vmul.f32 %v8197, %v8881
  %v8891 = vmul.f32 %v8202, %v8881
  %v8892 = vmul.f32 %v8207, %v8881
  %v8893 = vmul.f32 %v8212, %v8881
  %v8894 = vmul.f32 %v8217, %v8881
  %v8895 = vmul.f32 %v8222, %v8881
  %v8896 = vmul.f32 %v8227, %v8881
  %v8897 = vmul.f32 %v8232, %v8881
  %v8898 = vmul.f32 %v8237, %v8881
  %v8899 = vmul.f32 %v8242, %v8881
  %v8900 = vmul.f32 %v8247, %v8881
  %v8901 = vmul.f32 %v8252, %v8881
  %v8902 = vmul.f32 %v8257, %v8881
  %v8903 = vmul.f32 %v8262, %v8881
  %v8904 = vmul.f32 %v8267, %v8881
  %v8905 = vmul.f32 %v8272, %v8881
  %v8906 = vmul.f32 %v8277, %v8881
  %v8907 = vmul.f32 %v8282, %v8881
  %v8908 = vmul.f32 %v8287, %v8881
  %v8909 = vmul.f32 %v8292, %v8881
  %v8910 = vmul.f32 %v8297, %v8881
  %v8911 = vmul.f32 %v8302, %v8881
  %v8912 = vmul.f32 %v8307, %v8881
  %v8913 = vmul.f32 %v8312, %v8881
  %v8914 = vmul.f32 %v8317, %v8881
  %v8915 = vmul.f32 %v8322, %v8881
  %v8916 = vmul.f32 %v8327, %v8881
  %v8917 = vmul.f32 %v8332, %v8881
  %v8918 = vmul.f32 %v8337, %v8881
  %v8919 = vmul.f32 %v8342, %v8881
  %v8920 = vmul.f32 %v8347, %v8881
  %v8921 = vmul.f32 %v8352, %v8881
  %v8922 = vmul.f32 %v8357, %v8881
  %v8923 = vmul.f32 %v8362, %v8881
  %v8924 = vmul.f32 %v8367, %v8881
  %v8925 = vmul.f32 %v8372, %v8881
  %v8926 = vmul.f32 %v8377, %v8881
  %v8927 = vmul.f32 %v8382, %v8881
  %v8928 = vmul.f32 %v8387, %v8881
  %v8929 = vmul.f32 %v8392, %v8881
  %v8930 = vmul.f32 %v8397, %v8881
  %v8931 = vmul.f32 %v8402, %v8881
  %v8932 = vmul.f32 %v8407, %v8881
  %v8933 = vmul.f32 %v8412, %v8881
  %v8934 = vmul.f32 %v8417, %v8881
  %v8935 = vmul.f32 %v8422, %v8881
  %v8936 = vmul.f32 %v8427, %v8881
  %v8937 = vmul.f32 %v8432, %v8881
  %v8938 = vmul.f32 %v8437, %v8881
  %v8939 = vmul.f32 %v8442, %v8881
  %v8940 = vmul.f32 %v8447, %v8881
  %v8941 = vmul.f32 %v8452, %v8881
  %v8942 = vmul.f32 %v8457, %v8881
  %v8943 = vmul.f32 %v8462, %v8881
  %v8944 = vmul.f32 %v8467, %v8881
  %v8945 = vmul.f32 %v8472, %v8881
  %v8946 = vlaneseq
  %v8947 = vshrl.u32 %v8946, 7
  %v8948 = vsub.s32 0, %v8947
  %v8949 = vrot.slane %v8813, %v8948
  %v8950 = vadd.f32 %v8882, %v8949
  %v8951 = vadd.f32 %v8883, %v8949
  %v8952 = vadd.f32 %v8884, %v8949
  %v8953 = vadd.f32 %v8885, %v8949
  %v8954 = vadd.f32 %v8886, %v8949
  %v8955 = vadd.f32 %v8887, %v8949
  %v8956 = vadd.f32 %v8888, %v8949
  %v8957 = vadd.f32 %v8889, %v8949
  %v8958 = vadd.f32 %v8890, %v8949
  %v8959 = vadd.f32 %v8891, %v8949
  %v8960 = vadd.f32 %v8892, %v8949
  %v8961 = vadd.f32 %v8893, %v8949
  %v8962 = vadd.f32 %v8894, %v8949
  %v8963 = vadd.f32 %v8895, %v8949
  %v8964 = vadd.f32 %v8896, %v8949
  %v8965 = vadd.f32 %v8897, %v8949
  %v8966 = vadd.f32 %v8898, %v8949
  %v8967 = vadd.f32 %v8899, %v8949
  %v8968 = vadd.f32 %v8900, %v8949
  %v8969 = vadd.f32 %v8901, %v8949
  %v8970 = vadd.f32 %v8902, %v8949
  %v8971 = vadd.f32 %v8903, %v8949
  %v8972 = vadd.f32 %v8904, %v8949
  %v8973 = vadd.f32 %v8905, %v8949
  %v8974 = vadd.f32 %v8906, %v8949
  %v8975 = vadd.f32 %v8907, %v8949
  %v8976 = vadd.f32 %v8908, %v8949
  %v8977 = vadd.f32 %v8909, %v8949
  %v8978 = vadd.f32 %v8910, %v8949
  %v8979 = vadd.f32 %v8911, %v8949
  %v8980 = vadd.f32 %v8912, %v8949
  %v8981 = vadd.f32 %v8913, %v8949
  %v8982 = vadd.f32 %v8914, %v8949
  %v8983 = vadd.f32 %v8915, %v8949
  %v8984 = vadd.f32 %v8916, %v8949
  %v8985 = vadd.f32 %v8917, %v8949
  %v8986 = vadd.f32 %v8918, %v8949
  %v8987 = vadd.f32 %v8919, %v8949
  %v8988 = vadd.f32 %v8920, %v8949
  %v8989 = vadd.f32 %v8921, %v8949
  %v8990 = vadd.f32 %v8922, %v8949
  %v8991 = vadd.f32 %v8923, %v8949
  %v8992 = vadd.f32 %v8924, %v8949
  %v8993 = vadd.f32 %v8925, %v8949
  %v8994 = vadd.f32 %v8926, %v8949
  %v8995 = vadd.f32 %v8927, %v8949
  %v8996 = vadd.f32 %v8928, %v8949
  %v8997 = vadd.f32 %v8929, %v8949
  %v8998 = vadd.f32 %v8930, %v8949
  %v8999 = vadd.f32 %v8931, %v8949
  %v9000 = vadd.f32 %v8932, %v8949
  %v9001 = vadd.f32 %v8933, %v8949
  %v9002 = vadd.f32 %v8934, %v8949
  %v9003 = vadd.f32 %v8935, %v8949
  %v9004 = vadd.f32 %v8936, %v8949
  %v9005 = vadd.f32 %v8937, %v8949
  %v9006 = vadd.f32 %v8938, %v8949
  %v9007 = vadd.f32 %v8939, %v8949
  %v9008 = vadd.f32 %v8940, %v8949
  %v9009 = vadd.f32 %v8941, %v8949
  %v9010 = vadd.f32 %v8942, %v8949
  %v9011 = vadd.f32 %v8943, %v8949
  %v9012 = vadd.f32 %v8944, %v8949
  %v9013 = vadd.f32 %v8945, %v8949
  %v9014 = vadd.f32 %v8950, %v8814
  %v9015 = vadd.f32 %v8951, %v8815
  %v9016 = vadd.f32 %v8952, %v8816
  %v9017 = vadd.f32 %v8953, %v8817
  %v9018 = vadd.f32 %v8954, %v8818
  %v9019 = vadd.f32 %v8955, %v8819
  %v9020 = vadd.f32 %v8956, %v8820
  %v9021 = vadd.f32 %v8957, %v8821
  %v9022 = vadd.f32 %v8958, %v8822
  %v9023 = vadd.f32 %v8959, %v8823
  %v9024 = vadd.f32 %v8960, %v8824
  %v9025 = vadd.f32 %v8961, %v8825
  %v9026 = vadd.f32 %v8962, %v8826
  %v9027 = vadd.f32 %v8963, %v8827
  %v9028 = vadd.f32 %v8964, %v8828
  %v9029 = vadd.f32 %v8965, %v8829
  %v9030 = vadd.f32 %v8966, %v8830
  %v9031 = vadd.f32 %v8967, %v8831
  %v9032 = vadd.f32 %v8968, %v8832
  %v9033 = vadd.f32 %v8969, %v8833
  %v9034 = vadd.f32 %v8970, %v8834
  %v9035 = vadd.f32 %v8971, %v8835
  %v9036 = vadd.f32 %v8972, %v8836
  %v9037 = vadd.f32 %v8973, %v8837
  %v9038 = vadd.f32 %v8974, %v8838
  %v9039 = vadd.f32 %v8975, %v8839
  %v9040 = vadd.f32 %v8976, %v8840
  %v9041 = vadd.f32 %v8977, %v8841
  %v9042 = vadd.f32 %v8978, %v8842
  %v9043 = vadd.f32 %v8979, %v8843
  %v9044 = vadd.f32 %v8980, %v8844
  %v9045 = vadd.f32 %v8981, %v8845
  %v9046 = vadd.f32 %v8982, %v8846
  %v9047 = vadd.f32 %v8983, %v8847
  %v9048 = vadd.f32 %v8984, %v8848
  %v9049 = vadd.f32 %v8985, %v8849
  %v9050 = vadd.f32 %v8986, %v8850
  %v9051 = vadd.f32 %v8987, %v8851
  %v9052 = vadd.f32 %v8988, %v8852
  %v9053 = vadd.f32 %v8989, %v8853
  %v9054 = vadd.f32 %v8990, %v8854
  %v9055 = vadd.f32 %v8991, %v8855
  %v9056 = vadd.f32 %v8992, %v8856
  %v9057 = vadd.f32 %v8993, %v8857
  %v9058 = vadd.f32 %v8994, %v8858
  %v9059 = vadd.f32 %v8995, %v8859
  %v9060 = vadd.f32 %v8996, %v8860
  %v9061 = vadd.f32 %v8997, %v8861
  %v9062 = vadd.f32 %v8998, %v8862
  %v9063 = vadd.f32 %v8999, %v8863
  %v9064 = vadd.f32 %v9000, %v8864
  %v9065 = vadd.f32 %v9001, %v8865
  %v9066 = vadd.f32 %v9002, %v8866
  %v9067 = vadd.f32 %v9003, %v8867
  %v9068 = vadd.f32 %v9004, %v8868
  %v9069 = vadd.f32 %v9005, %v8869
  %v9070 = vadd.f32 %v9006, %v8870
  %v9071 = vadd.f32 %v9007, %v8871
  %v9072 = vadd.f32 %v9008, %v8872
  %v9073 = vadd.f32 %v9009, %v8873
  %v9074 = vadd.f32 %v9010, %v8874
  %v9075 = vadd.f32 %v9011, %v8875
  %v9076 = vadd.f32 %v9012, %v8876
  %v9077 = vadd.f32 %v9013, %v8877
  %v9078 = vmax.f32 %v9014, 0.0
  %v9079 = vmax.f32 %v9015, 0.0
  %v9080 = vmax.f32 %v9016, 0.0
  %v9081 = vmax.f32 %v9017, 0.0
  %v9082 = vmax.f32 %v9018, 0.0
  %v9083 = vmax.f32 %v9019, 0.0
  %v9084 = vmax.f32 %v9020, 0.0
  %v9085 = vmax.f32 %v9021, 0.0
  %v9086 = vmax.f32 %v9022, 0.0
  %v9087 = vmax.f32 %v9023, 0.0
  %v9088 = vmax.f32 %v9024, 0.0
  %v9089 = vmax.f32 %v9025, 0.0
  %v9090 = vmax.f32 %v9026, 0.0
  %v9091 = vmax.f32 %v9027, 0.0
  %v9092 = vmax.f32 %v9028, 0.0
  %v9093 = vmax.f32 %v9029, 0.0
  %v9094 = vmax.f32 %v9030, 0.0
  %v9095 = vmax.f32 %v9031, 0.0
  %v9096 = vmax.f32 %v9032, 0.0
  %v9097 = vmax.f32 %v9033, 0.0
  %v9098 = vmax.f32 %v9034, 0.0
  %v9099 = vmax.f32 %v9035, 0.0
  %v9100 = vmax.f32 %v9036, 0.0
  %v9101 = vmax.f32 %v9037, 0.0
  %v9102 = vmax.f32 %v9038, 0.0
  %v9103 = vmax.f32 %v9039, 0.0
  %v9104 = vmax.f32 %v9040, 0.0
  %v9105 = vmax.f32 %v9041, 0.0
  %v9106 = vmax.f32 %v9042, 0.0
  %v9107 = vmax.f32 %v9043, 0.0
  %v9108 = vmax.f32 %v9044, 0.0
  %v9109 = vmax.f32 %v9045, 0.0
  %v9110 = vmax.f32 %v9046, 0.0
  %v9111 = vmax.f32 %v9047, 0.0
  %v9112 = vmax.f32 %v9048, 0.0
  %v9113 = vmax.f32 %v9049, 0.0
  %v9114 = vmax.f32 %v9050, 0.0
  %v9115 = vmax.f32 %v9051, 0.0
  %v9116 = vmax.f32 %v9052, 0.0
  %v9117 = vmax.f32 %v9053, 0.0
  %v9118 = vmax.f32 %v9054, 0.0
  %v9119 = vmax.f32 %v9055, 0.0
  %v9120 = vmax.f32 %v9056, 0.0
  %v9121 = vmax.f32 %v9057, 0.0
  %v9122 = vmax.f32 %v9058, 0.0
  %v9123 = vmax.f32 %v9059, 0.0
  %v9124 = vmax.f32 %v9060, 0.0
  %v9125 = vmax.f32 %v9061, 0.0
  %v9126 = vmax.f32 %v9062, 0.0
  %v9127 = vmax.f32 %v9063, 0.0
  %v9128 = vmax.f32 %v9064, 0.0
  %v9129 = vmax.f32 %v9065, 0.0
  %v9130 = vmax.f32 %v9066, 0.0
  %v9131 = vmax.f32 %v9067, 0.0
  %v9132 = vmax.f32 %v9068, 0.0
  %v9133 = vmax.f32 %v9069, 0.0
  %v9134 = vmax.f32 %v9070, 0.0
  %v9135 = vmax.f32 %v9071, 0.0
  %v9136 = vmax.f32 %v9072, 0.0
  %v9137 = vmax.f32 %v9073, 0.0
  %v9138 = vmax.f32 %v9074, 0.0
  %v9139 = vmax.f32 %v9075, 0.0
  %v9140 = vmax.f32 %v9076, 0.0
  %v9141 = vmax.f32 %v9077, 0.0
  %9142 = vst.msk [vmem:[%s4] sm:$0xff] %vm85, %v9078
  %9143 = vst.msk [vmem:[%s4 + $0x8] sm:$0xff] %vm85, %v9079
  %9144 = vst.msk [vmem:[%s4 + $0x10] sm:$0xff] %vm85, %v9080
  %9145 = vst.msk [vmem:[%s4 + $0x18] sm:$0xff] %vm85, %v9081
  %9146 = vst.msk [vmem:[%s4 + $0x20] sm:$0xff] %vm85, %v9082
  %9147 = vst.msk [vmem:[%s4 + $0x28] sm:$0xff] %vm85, %v9083
  %9148 = vst.msk [vmem:[%s4 + $0x30] sm:$0xff] %vm85, %v9084
  %9149 = vst.msk [vmem:[%s4 + $0x38] sm:$0xff] %vm85, %v9085
  %9150 = vst.msk [vmem:[%s4 + $0x40] sm:$0xff] %vm85, %v9086
  %9151 = vst.msk [vmem:[%s4 + $0x48] sm:$0xff] %vm85, %v9087
  %9152 = vst.msk [vmem:[%s4 + $0x50] sm:$0xff] %vm85, %v9088
  %9153 = vst.msk [vmem:[%s4 + $0x58] sm:$0xff] %vm85, %v9089
  %9154 = vst.msk [vmem:[%s4 + $0x60] sm:$0xff] %vm85, %v9090
  %9155 = vst.msk [vmem:[%s4 + $0x68] sm:$0xff] %vm85, %v9091
  %9156 = vst.msk [vmem:[%s4 + $0x70] sm:$0xff] %vm85, %v9092
  %9157 = vst.msk [vmem:[%s4 + $0x78] sm:$0xff] %vm85, %v9093
  %9158 = vst.msk [vmem:[%s4 + $0x80] sm:$0xff] %vm85, %v9094
  %9159 = vst.msk [vmem:[%s4 + $0x88] sm:$0xff] %vm85, %v9095
  %9160 = vst.msk [vmem:[%s4 + $0x90] sm:$0xff] %vm85, %v9096
  %9161 = vst.msk [vmem:[%s4 + $0x98] sm:$0xff] %vm85, %v9097
  %9162 = vst.msk [vmem:[%s4 + $0xa0] sm:$0xff] %vm85, %v9098
  %9163 = vst.msk [vmem:[%s4 + $0xa8] sm:$0xff] %vm85, %v9099
  %9164 = vst.msk [vmem:[%s4 + $0xb0] sm:$0xff] %vm85, %v9100
  %9165 = vst.msk [vmem:[%s4 + $0xb8] sm:$0xff] %vm85, %v9101
  %9166 = vst.msk [vmem:[%s4 + $0xc0] sm:$0xff] %vm85, %v9102
  %9167 = vst.msk [vmem:[%s4 + $0xc8] sm:$0xff] %vm85, %v9103
  %9168 = vst.msk [vmem:[%s4 + $0xd0] sm:$0xff] %vm85, %v9104
  %9169 = vst.msk [vmem:[%s4 + $0xd8] sm:$0xff] %vm85, %v9105
  %9170 = vst.msk [vmem:[%s4 + $0xe0] sm:$0xff] %vm85, %v9106
  %9171 = vst.msk [vmem:[%s4 + $0xe8] sm:$0xff] %vm85, %v9107
  %9172 = vst.msk [vmem:[%s4 + $0xf0] sm:$0xff] %vm85, %v9108
  %9173 = vst.msk [vmem:[%s4 + $0xf8] sm:$0xff] %vm85, %v9109
  %9174 = vst.msk [vmem:[%s4 + $0x100] sm:$0xff] %vm85, %v9110
  %9175 = vst.msk [vmem:[%s4 + $0x108] sm:$0xff] %vm85, %v9111
  %9176 = vst.msk [vmem:[%s4 + $0x110] sm:$0xff] %vm85, %v9112
  %9177 = vst.msk [vmem:[%s4 + $0x118] sm:$0xff] %vm85, %v9113
  %9178 = vst.msk [vmem:[%s4 + $0x120] sm:$0xff] %vm85, %v9114
  %9179 = vst.msk [vmem:[%s4 + $0x128] sm:$0xff] %vm85, %v9115
  %9180 = vst.msk [vmem:[%s4 + $0x130] sm:$0xff] %vm85, %v9116
  %9181 = vst.msk [vmem:[%s4 + $0x138] sm:$0xff] %vm85, %v9117
  %9182 = vst.msk [vmem:[%s4 + $0x140] sm:$0xff] %vm85, %v9118
  %9183 = vst.msk [vmem:[%s4 + $0x148] sm:$0xff] %vm85, %v9119
  %9184 = vst.msk [vmem:[%s4 + $0x150] sm:$0xff] %vm85, %v9120
  %9185 = vst.msk [vmem:[%s4 + $0x158] sm:$0xff] %vm85, %v9121
  %9186 = vst.msk [vmem:[%s4 + $0x160] sm:$0xff] %vm85, %v9122
  %9187 = vst.msk [vmem:[%s4 + $0x168] sm:$0xff] %vm85, %v9123
  %9188 = vst.msk [vmem:[%s4 + $0x170] sm:$0xff] %vm85, %v9124
  %9189 = vst.msk [vmem:[%s4 + $0x178] sm:$0xff] %vm85, %v9125
  %9190 = vst.msk [vmem:[%s4 + $0x180] sm:$0xff] %vm85, %v9126
  %9191 = vst.msk [vmem:[%s4 + $0x188] sm:$0xff] %vm85, %v9127
  %9192 = vst.msk [vmem:[%s4 + $0x190] sm:$0xff] %vm85, %v9128
  %9193 = vst.msk [vmem:[%s4 + $0x198] sm:$0xff] %vm85, %v9129
  %9194 = vst.msk [vmem:[%s4 + $0x1a0] sm:$0xff] %vm85, %v9130
  %9195 = vst.msk [vmem:[%s4 + $0x1a8] sm:$0xff] %vm85, %v9131
  %9196 = vst.msk [vmem:[%s4 + $0x1b0] sm:$0xff] %vm85, %v9132
  %9197 = vst.msk [vmem:[%s4 + $0x1b8] sm:$0xff] %vm85, %v9133
  %9198 = vst.msk [vmem:[%s4 + $0x1c0] sm:$0xff] %vm85, %v9134
  %9199 = vst.msk [vmem:[%s4 + $0x1c8] sm:$0xff] %vm85, %v9135
  %9200 = vst.msk [vmem:[%s4 + $0x1d0] sm:$0xff] %vm85, %v9136
  %9201 = vst.msk [vmem:[%s4 + $0x1d8] sm:$0xff] %vm85, %v9137
  %9202 = vst.msk [vmem:[%s4 + $0x1e0] sm:$0xff] %vm85, %v9138
  %9203 = vst.msk [vmem:[%s4 + $0x1e8] sm:$0xff] %vm85, %v9139
  %9204 = vst.msk [vmem:[%s4 + $0x1f0] sm:$0xff] %vm85, %v9140
  %9205 = vst.msk [vmem:[%s4 + $0x1f8] sm:$0xff] %vm85, %v9141
  // Predicated region
  $region18: #{tpu_custom_call.1} parent=0 // pred_check
    _
  $region19: #{tpu_custom_call.1} parent=0 // pred_check_branch
    %9207 = sbr.rel (0) target = $region21
  $region20: #{tpu_custom_call.1} parent=0 // pred_region
    _
  $region21: #{tpu_custom_call.1} parent=0 // pred_fallthru
    _
  // Predicated region
  $region22: #{tpu_custom_call.1} parent=0 // pred_check
    _
  $region23: #{tpu_custom_call.1} parent=0 // pred_check_branch
    %9209 = sbr.rel (0) target = $region25
  $region24: #{tpu_custom_call.1} parent=0 // pred_region
    _
  $region25: #{tpu_custom_call.1} parent=0 // pred_fallthru
    _

</llo_original>
